<compile_context>
chip_gen: v5e
topology: v5e:2x2
jax: 0.10.0
libtpu: 0.0.40
codegen_flags: <defaults>
</compile_context>

<pallas_src>
import numpy as np

import jax
import jax.numpy as jnp
from jax.experimental import pallas as pl
from jax.experimental.pallas import tpu as pltpu


IN_H, IN_W = 32, 250  # (freq, time) scaleogram; the shape family for which x.view(64) is valid.


# ---------------------------------------------------------------------------
# One-time parameter prep: constant selection matrices + kernel-ready weights
# ---------------------------------------------------------------------------
def _col_select_matrix(*, win, kw, sw, pw, wp_out):
    """0/1 matrix folding the conv W-taps, W-stride, W-padding and the 2x2 max-pool
    W-offsets into a single matmul.  Column order: (j, dw, wp)."""
    cs = np.zeros((win, kw * 2 * wp_out), np.float32)
    for j in range(kw):
        for dw in range(2):
            for wp in range(wp_out):
                w = sw * (2 * wp + dw) + j - pw
                if 0 <= w < win:
                    cs[w, (j * 2 + dw) * wp_out + wp] = 1.0
    return jnp.asarray(cs, dtype=jnp.bfloat16)


def prepare_params(params):
    """Re-layout the PyTorch-style parameters into kernel-ready form (done once)."""
    w1, b1 = params["conv1"]
    w2, b2 = params["conv2"]
    w3, b3 = params["conv3"]
    w4, b4 = params["conv4"]
    fcw, fcb = params["fc1"]
    bf16, f32 = jnp.bfloat16, jnp.float32
    return {
        # conv weights with K flattened as (kh, cin, kw) to match the in-kernel patch order.
        "cs1": _col_select_matrix(win=250, kw=4, sw=2, pw=2, wp_out=63),
        "w1": jnp.transpose(w1, (0, 2, 1, 3)).reshape(8, 12).astype(bf16),
        "b1": b1.reshape(8, 1).astype(f32),
        "cs2": _col_select_matrix(win=63, kw=3, sw=2, pw=1, wp_out=16),
        "w2": jnp.transpose(w2, (0, 2, 1, 3)).reshape(16, 96).astype(bf16),
        "b2": b2.reshape(16, 1).astype(f32),
        "cs3": _col_select_matrix(win=16, kw=4, sw=2, pw=1, wp_out=4),
        "w3": jnp.transpose(w3, (0, 2, 1, 3)).reshape(32, 192).astype(bf16),
        "b3": b3.reshape(32, 1).astype(f32),
        # conv4 weight with K flattened as (kw, kh, cin) to match the in-kernel a3 flatten.
        "w4": jnp.transpose(w4, (0, 3, 2, 1)).reshape(64, 256).astype(f32),
        "b4": b4.reshape(64, 1).astype(f32),
        "fcw": fcw.astype(f32),
        "fcb": fcb.reshape(3, 1).astype(f32),
    }


# ---------------------------------------------------------------------------
# In-kernel building block: conv2d + maxpool(2,2) + relu on a VMEM-resident value
# ---------------------------------------------------------------------------
def _conv_pool_relu(a, cs, w_re, b, *, cin, hin, kh, kw, sh, ph, hp_out, wp_out):
    """One conv + 2x2-maxpool + relu layer, fully in-register/VMEM.

    a    : (hin*cin, win) bf16 activation, rows ordered (h, c), cols = w.
    cs   : (win, kw*2*wp_out) bf16 0/1 column-selection matrix, cols = (j, dw, wp).
    w_re : (cout, kh*cin*kw) bf16 conv weight, K ordered (i, c, j).
    b    : (cout, 1) f32 bias.
    Returns (hp_out*cout, wp_out) f32 pooled+relu'd activation, rows ordered (h, c).
    """
    cout = w_re.shape[0]
    # Stage 1: all W-taps / W-stride / W-padding / pool W-offsets in one matmul.
    bcols = jnp.dot(a, cs, preferred_element_type=jnp.float32)      # (hin*cin, kw*2*wp)
    bcols = bcols.astype(jnp.bfloat16)                              # exact (0/1 selection)
    # Split per W-tap so K can later be flattened as (i, c, j).
    bs = jnp.stack(
        [bcols[:, j * 2 * wp_out:(j + 1) * 2 * wp_out] for j in range(kw)],
        axis=1)                                                     # (hin*cin, kw, 2*wp)
    zero_blk = jnp.zeros((cin, kw, 2 * wp_out), jnp.bfloat16)

    out_rows = []
    for hp in range(hp_out):                 # pooled output rows (static unroll)
        acc = None
        for dh in range(2):                  # pool H-offset
            oh = 2 * hp + dh                 # pre-pool output row
            taps = []
            for i in range(kh):              # H-taps
                h = sh * oh + i - ph
                if 0 <= h < hin:
                    taps.append(bs[h * cin:(h + 1) * cin])          # (cin, kw, 2*wp)
                else:
                    taps.append(zero_blk)                           # zero padding row
            patch = jnp.stack(taps, axis=0).reshape(kh * cin * kw, 2 * wp_out)
            y = jnp.dot(w_re, patch, preferred_element_type=jnp.float32)   # (cout, 2*wp)
            y = jnp.maximum(y[:, :wp_out], y[:, wp_out:])                  # max over dw
            acc = y if acc is None else jnp.maximum(acc, y)                # max over dh
        out_rows.append(jnp.maximum(acc + b, 0.0))                         # +bias, relu (f32)
    return jnp.concatenate(out_rows, axis=0)                               # (hp_out*cout, wp)


# ---------------------------------------------------------------------------
# The fused forward-pass kernel (single grid step, everything in VMEM)
# ---------------------------------------------------------------------------
def _wave_lead_conv_kernel(x_ref, cs1_ref, w1_ref, b1_ref,
                           cs2_ref, w2_ref, b2_ref,
                           cs3_ref, w3_ref, b3_ref,
                           w4_ref, b4_ref, fcw_ref, fcb_ref, out_ref):
    bf16 = jnp.bfloat16
    f32 = jnp.float32

    a0 = x_ref[...].astype(bf16)                                   # (32, 250)

    # conv1 (1->8, k(3,4), s(1,2), p(1,2)) + maxpool(2,2) + relu   -> (16*8, 63)
    a1 = _conv_pool_relu(a0, cs1_ref[...], w1_ref[...], b1_ref[...],
                         cin=1, hin=32, kh=3, kw=4, sh=1, ph=1,
                         hp_out=16, wp_out=63).astype(bf16)

    # conv2 (8->16, k(4,3), s(2,2), p(1,1)) + maxpool + relu       -> (4*16, 16)
    a2 = _conv_pool_relu(a1, cs2_ref[...], w2_ref[...], b2_ref[...],
                         cin=8, hin=16, kh=4, kw=3, sh=2, ph=1,
                         hp_out=4, wp_out=16).astype(bf16)

    # conv3 (16->32, k(3,4), s(1,2), p(1,1)) + maxpool + relu      -> (2*32, 4), f32
    a3 = _conv_pool_relu(a2, cs3_ref[...], w3_ref[...], b3_ref[...],
                         cin=16, hin=4, kh=3, kw=4, sh=1, ph=1,
                         hp_out=2, wp_out=4)

    # Head: conv4 (kernel covers the whole 2x4 map -> 1x1) + view(64) + fc1 + softmax.
    # a3 rows are (h, c); flatten to K ordered (j, h, c) to match the prepped w4 layout.
    a3v = jnp.concatenate([a3[:, j:j + 1] for j in range(4)], axis=0)      # (256, 1) f32
    y4 = jnp.dot(w4_ref[...], a3v, preferred_element_type=f32) + b4_ref[...]   # (64, 1)
    logits = jnp.dot(fcw_ref[...], y4, preferred_element_type=f32) + fcb_ref[...]  # (3, 1)
    lmax = jnp.max(logits, axis=0, keepdims=True)
    e = jnp.exp(logits - lmax)
    out_ref[...] = (e / jnp.sum(e, axis=0, keepdims=True)).astype(out_ref.dtype)


# ---------------------------------------------------------------------------
# Wrapper: squeeze -> one pallas_call -> reshape
# ---------------------------------------------------------------------------
def wave_lead_conv_forward(x, prep):
    """Forward of Wave_Lead_Conv.  x: (1, 1, 32, 250), (1, 32, 250) or (32, 250)."""
    if x.ndim == 4:
        assert x.shape[0] == 1 and x.shape[1] == 1, "x.view(64) in the reference needs batch == 1"
        x = x[0, 0]
    elif x.ndim == 3:
        assert x.shape[0] == 1
        x = x[0]
    assert x.shape == (IN_H, IN_W)

    args = (x.astype(jnp.float32),
            prep["cs1"], prep["w1"], prep["b1"],
            prep["cs2"], prep["w2"], prep["b2"],
            prep["cs3"], prep["w3"], prep["b3"],
            prep["w4"], prep["b4"], prep["fcw"], prep["fcb"])

    out = pl.pallas_call(
        _wave_lead_conv_kernel,
        out_shape=jax.ShapeDtypeStruct((3, 1), jnp.float32),
        grid=(1,),
        in_specs=[pl.BlockSpec(a.shape, lambda i: (0, 0)) for a in args],
        out_specs=pl.BlockSpec((3, 1), lambda i: (0, 0)),
        compiler_params=pltpu.CompilerParams(dimension_semantics=("arbitrary",)),
    )(*args)
    return out.reshape(3)


# ---------------------------------------------------------------------------
# PyTorch-style init + pure-JAX f32 reference (for the correctness check)
# ---------------------------------------------------------------------------
def init_params(key):
    def conv_init(k, cout, cin, kh, kw):
        k1, k2 = jax.random.split(k)
        bound = 1.0 / (cin * kh * kw) ** 0.5
        w = jax.random.uniform(k1, (cout, cin, kh, kw), jnp.float32, -bound, bound)
        b = jax.random.uniform(k2, (cout,), jnp.float32, -bound, bound)
        return w, b

    k1, k2, k3, k4, k5 = jax.random.split(key, 5)
    kfw, kfb = jax.random.split(k5)
    bound_fc = 1.0 / 64.0 ** 0.5
    return {
        "conv1": conv_init(k1, 8, 1, 3, 4),
        "conv2": conv_init(k2, 16, 8, 4, 3),
        "conv3": conv_init(k3, 32, 16, 3, 4),
        "conv4": conv_init(k4, 64, 32, 2, 4),
        "fc1": (jax.random.uniform(kfw, (3, 64), jnp.float32, -bound_fc, bound_fc),
                jax.random.uniform(kfb, (3,), jnp.float32, -bound_fc, bound_fc)),
    }


def reference_forward(x, params):
    """Plain-JAX f32 replica of the PyTorch module (NCHW, cross-correlation, floor pool)."""
    def conv(t, w, b, stride, padding):
        y = jax.lax.conv_general_dilated(
            t, w, window_strides=stride,
            padding=((padding[0], padding[0]), (padding[1], padding[1])),
            dimension_numbers=("NCHW", "OIHW", "NCHW"))
        return y + b.reshape(1, -1, 1, 1)

    def pool(t):
        return jax.lax.reduce_window(t, -jnp.inf, jax.lax.max,
                                     (1, 1, 2, 2), (1, 1, 2, 2), "VALID")

    y = jax.nn.relu(pool(conv(x, *params["conv1"], (1, 2), (1, 2))))
    y = jax.nn.relu(pool(conv(y, *params["conv2"], (2, 2), (1, 1))))
    y = jax.nn.relu(pool(conv(y, *params["conv3"], (1, 2), (1, 1))))
    y = conv(y, *params["conv4"], (1, 1), (0, 0)).reshape(64)
    fcw, fcb = params["fc1"]
    return jax.nn.softmax(fcw @ y + fcb, axis=0)


if __name__ == "__main__":
    key = jax.random.PRNGKey(0)
    pkey, xkey = jax.random.split(key)
    params = init_params(pkey)
    prep = prepare_params(params)

    # Single-lead scaleogram: (batch=1, C=1, freq=32, time=250) — consistent with the
    # reference's hard-coded x.view(64).
    x = 4.0 * jax.random.normal(xkey, (1, 1, IN_H, IN_W), jnp.float32)

    fwd = jax.jit(wave_lead_conv_forward)
    y = fwd(x, prep)
    jax.block_until_ready(y)

    assert y.shape == (3,) and y.dtype == jnp.float32
    assert abs(float(jnp.sum(y)) - 1.0) < 1e-3        # softmax output sums to 1

    # Verify against the pure-JAX f32 reference (kernel uses bf16 matmul inputs).
    y_ref = reference_forward(x, params)
    np.testing.assert_allclose(np.asarray(y), np.asarray(y_ref), atol=1e-2, rtol=0)

    print("KERNEL_OK")
</pallas_src>

<mosaic_0001>
module attributes {stable_mosaic.version = 11 : i64} {
  func.func @_wave_lead_conv_kernel(%arg0: i32, %arg1: memref<32x250xf32, #tpu.memory_space<vmem>>, %arg2: memref<250x504xbf16, #tpu.memory_space<vmem>>, %arg3: memref<8x12xbf16, #tpu.memory_space<vmem>>, %arg4: memref<8x1xf32, #tpu.memory_space<vmem>>, %arg5: memref<63x96xbf16, #tpu.memory_space<vmem>>, %arg6: memref<16x96xbf16, #tpu.memory_space<vmem>>, %arg7: memref<16x1xf32, #tpu.memory_space<vmem>>, %arg8: memref<16x32xbf16, #tpu.memory_space<vmem>>, %arg9: memref<32x192xbf16, #tpu.memory_space<vmem>>, %arg10: memref<32x1xf32, #tpu.memory_space<vmem>>, %arg11: memref<64x256xf32, #tpu.memory_space<vmem>>, %arg12: memref<64x1xf32, #tpu.memory_space<vmem>>, %arg13: memref<3x64xf32, #tpu.memory_space<vmem>>, %arg14: memref<3x1xf32, #tpu.memory_space<vmem>>, %arg15: memref<3x1xf32, #tpu.memory_space<vmem>>) attributes {dimension_semantics = [#tpu.dimension_semantics<arbitrary>], iteration_bounds = array<i64: 1>, scalar_prefetch = 0 : i64, scratch_operands = 0 : i64, tpu.core_type = #tpu.core_type<tc>, window_params = [{pipeline_mode = #tpu.pipeline_mode<synchronous>, transform_indices = @transform_0, window_bounds = array<i64: 32, 250>}, {pipeline_mode = #tpu.pipeline_mode<synchronous>, transform_indices = @transform_1, window_bounds = array<i64: 250, 504>}, {pipeline_mode = #tpu.pipeline_mode<synchronous>, transform_indices = @transform_2, window_bounds = array<i64: 8, 12>}, {pipeline_mode = #tpu.pipeline_mode<synchronous>, transform_indices = @transform_3, window_bounds = array<i64: 8, 1>}, {pipeline_mode = #tpu.pipeline_mode<synchronous>, transform_indices = @transform_4, window_bounds = array<i64: 63, 96>}, {pipeline_mode = #tpu.pipeline_mode<synchronous>, transform_indices = @transform_5, window_bounds = array<i64: 16, 96>}, {pipeline_mode = #tpu.pipeline_mode<synchronous>, transform_indices = @transform_6, window_bounds = array<i64: 16, 1>}, {pipeline_mode = #tpu.pipeline_mode<synchronous>, transform_indices = @transform_7, window_bounds = array<i64: 16, 32>}, {pipeline_mode = #tpu.pipeline_mode<synchronous>, transform_indices = @transform_8, window_bounds = array<i64: 32, 192>}, {pipeline_mode = #tpu.pipeline_mode<synchronous>, transform_indices = @transform_9, window_bounds = array<i64: 32, 1>}, {pipeline_mode = #tpu.pipeline_mode<synchronous>, transform_indices = @transform_10, window_bounds = array<i64: 64, 256>}, {pipeline_mode = #tpu.pipeline_mode<synchronous>, transform_indices = @transform_11, window_bounds = array<i64: 64, 1>}, {pipeline_mode = #tpu.pipeline_mode<synchronous>, transform_indices = @transform_12, window_bounds = array<i64: 3, 64>}, {pipeline_mode = #tpu.pipeline_mode<synchronous>, transform_indices = @transform_13, window_bounds = array<i64: 3, 1>}, {pipeline_mode = #tpu.pipeline_mode<synchronous>, transform_indices = @transform_14, window_bounds = array<i64: 3, 1>}]} {
    %c0 = arith.constant 0 : index
    %c0_0 = arith.constant 0 : index
    %0 = vector.load %arg1[%c0, %c0_0] : memref<32x250xf32, #tpu.memory_space<vmem>>, vector<32x250xf32>
    %1 = arith.truncf %0 : vector<32x250xf32> to vector<32x250xbf16>
    %c0_1 = arith.constant 0 : index
    %c0_2 = arith.constant 0 : index
    %2 = vector.load %arg2[%c0_1, %c0_2] : memref<250x504xbf16, #tpu.memory_space<vmem>>, vector<250x504xbf16>
    %c0_3 = arith.constant 0 : index
    %c0_4 = arith.constant 0 : index
    %3 = vector.load %arg3[%c0_3, %c0_4] : memref<8x12xbf16, #tpu.memory_space<vmem>>, vector<8x12xbf16>
    %c0_5 = arith.constant 0 : index
    %c0_6 = arith.constant 0 : index
    %4 = vector.load %arg4[%c0_5, %c0_6] : memref<8x1xf32, #tpu.memory_space<vmem>>, vector<8x1xf32>
    %cst = arith.constant dense<0.000000e+00> : vector<32x504xf32>
    %5 = tpu.matmul %1, %2, %cst {dimension_numbers = #tpu.dot_dimension_numbers<[1], [0], [0], [1], [0, 0, 1, 1], [], []>} : vector<32x250xbf16>, vector<250x504xbf16>, vector<32x504xf32> -> vector<32x504xf32>
    %6 = arith.truncf %5 : vector<32x504xf32> to vector<32x504xbf16>
    %7 = vector.extract_strided_slice %6 {offsets = [0, 0], sizes = [32, 126], strides = [1, 1]} : vector<32x504xbf16> to vector<32x126xbf16>
    %8 = vector.extract_strided_slice %6 {offsets = [0, 126], sizes = [32, 126], strides = [1, 1]} : vector<32x504xbf16> to vector<32x126xbf16>
    %9 = vector.extract_strided_slice %6 {offsets = [0, 252], sizes = [32, 126], strides = [1, 1]} : vector<32x504xbf16> to vector<32x126xbf16>
    %10 = vector.extract_strided_slice %6 {offsets = [0, 378], sizes = [32, 126], strides = [1, 1]} : vector<32x504xbf16> to vector<32x126xbf16>
    %11 = vector.shape_cast %7 : vector<32x126xbf16> to vector<32x1x126xbf16>
    %12 = vector.shape_cast %8 : vector<32x126xbf16> to vector<32x1x126xbf16>
    %13 = vector.shape_cast %9 : vector<32x126xbf16> to vector<32x1x126xbf16>
    %14 = vector.shape_cast %10 : vector<32x126xbf16> to vector<32x1x126xbf16>
    %15 = tpu.concatenate %11, %12, %13, %14 in 1 : vector<32x1x126xbf16>, vector<32x1x126xbf16>, vector<32x1x126xbf16>, vector<32x1x126xbf16> -> vector<32x4x126xbf16>
    %cst_7 = arith.constant 0.000000e+00 : bf16
    %16 = vector.broadcast %cst_7 : bf16 to vector<1x4x126xbf16>
    %17 = vector.extract_strided_slice %15 {offsets = [0, 0, 0], sizes = [1, 4, 126], strides = [1, 1, 1]} : vector<32x4x126xbf16> to vector<1x4x126xbf16>
    %18 = vector.extract_strided_slice %15 {offsets = [1, 0, 0], sizes = [1, 4, 126], strides = [1, 1, 1]} : vector<32x4x126xbf16> to vector<1x4x126xbf16>
    %19 = vector.shape_cast %16 : vector<1x4x126xbf16> to vector<1x1x4x126xbf16>
    %20 = vector.shape_cast %17 : vector<1x4x126xbf16> to vector<1x1x4x126xbf16>
    %21 = vector.shape_cast %18 : vector<1x4x126xbf16> to vector<1x1x4x126xbf16>
    %22 = tpu.concatenate %19, %20, %21 in 0 : vector<1x1x4x126xbf16>, vector<1x1x4x126xbf16>, vector<1x1x4x126xbf16> -> vector<3x1x4x126xbf16>
    %23 = vector.shape_cast %22 : vector<3x1x4x126xbf16> to vector<12x126xbf16>
    %cst_8 = arith.constant dense<0.000000e+00> : vector<8x126xf32>
    %24 = tpu.matmul %3, %23, %cst_8 {dimension_numbers = #tpu.dot_dimension_numbers<[1], [0], [0], [1], [0, 0, 1, 1], [], []>} : vector<8x12xbf16>, vector<12x126xbf16>, vector<8x126xf32> -> vector<8x126xf32>
    %25 = vector.extract_strided_slice %24 {offsets = [0, 0], sizes = [8, 63], strides = [1, 1]} : vector<8x126xf32> to vector<8x63xf32>
    %26 = vector.extract_strided_slice %24 {offsets = [0, 63], sizes = [8, 63], strides = [1, 1]} : vector<8x126xf32> to vector<8x63xf32>
    %27 = arith.maximumf %25, %26 : vector<8x63xf32>
    %28 = vector.extract_strided_slice %15 {offsets = [0, 0, 0], sizes = [1, 4, 126], strides = [1, 1, 1]} : vector<32x4x126xbf16> to vector<1x4x126xbf16>
    %29 = vector.extract_strided_slice %15 {offsets = [1, 0, 0], sizes = [1, 4, 126], strides = [1, 1, 1]} : vector<32x4x126xbf16> to vector<1x4x126xbf16>
    %30 = vector.extract_strided_slice %15 {offsets = [2, 0, 0], sizes = [1, 4, 126], strides = [1, 1, 1]} : vector<32x4x126xbf16> to vector<1x4x126xbf16>
    %31 = vector.shape_cast %28 : vector<1x4x126xbf16> to vector<1x1x4x126xbf16>
    %32 = vector.shape_cast %29 : vector<1x4x126xbf16> to vector<1x1x4x126xbf16>
    %33 = vector.shape_cast %30 : vector<1x4x126xbf16> to vector<1x1x4x126xbf16>
    %34 = tpu.concatenate %31, %32, %33 in 0 : vector<1x1x4x126xbf16>, vector<1x1x4x126xbf16>, vector<1x1x4x126xbf16> -> vector<3x1x4x126xbf16>
    %35 = vector.shape_cast %34 : vector<3x1x4x126xbf16> to vector<12x126xbf16>
    %cst_9 = arith.constant dense<0.000000e+00> : vector<8x126xf32>
    %36 = tpu.matmul %3, %35, %cst_9 {dimension_numbers = #tpu.dot_dimension_numbers<[1], [0], [0], [1], [0, 0, 1, 1], [], []>} : vector<8x12xbf16>, vector<12x126xbf16>, vector<8x126xf32> -> vector<8x126xf32>
    %37 = vector.extract_strided_slice %36 {offsets = [0, 0], sizes = [8, 63], strides = [1, 1]} : vector<8x126xf32> to vector<8x63xf32>
    %38 = vector.extract_strided_slice %36 {offsets = [0, 63], sizes = [8, 63], strides = [1, 1]} : vector<8x126xf32> to vector<8x63xf32>
    %39 = arith.maximumf %37, %38 : vector<8x63xf32>
    %40 = arith.maximumf %27, %39 : vector<8x63xf32>
    %41 = vector.broadcast %4 : vector<8x1xf32> to vector<8x63xf32>
    %42 = arith.addf %40, %41 : vector<8x63xf32>
    %cst_10 = arith.constant 0.000000e+00 : f32
    %43 = vector.broadcast %cst_10 : f32 to vector<8x63xf32>
    %44 = arith.maximumf %42, %43 : vector<8x63xf32>
    %45 = vector.extract_strided_slice %15 {offsets = [1, 0, 0], sizes = [1, 4, 126], strides = [1, 1, 1]} : vector<32x4x126xbf16> to vector<1x4x126xbf16>
    %46 = vector.extract_strided_slice %15 {offsets = [2, 0, 0], sizes = [1, 4, 126], strides = [1, 1, 1]} : vector<32x4x126xbf16> to vector<1x4x126xbf16>
    %47 = vector.extract_strided_slice %15 {offsets = [3, 0, 0], sizes = [1, 4, 126], strides = [1, 1, 1]} : vector<32x4x126xbf16> to vector<1x4x126xbf16>
    %48 = vector.shape_cast %45 : vector<1x4x126xbf16> to vector<1x1x4x126xbf16>
    %49 = vector.shape_cast %46 : vector<1x4x126xbf16> to vector<1x1x4x126xbf16>
    %50 = vector.shape_cast %47 : vector<1x4x126xbf16> to vector<1x1x4x126xbf16>
    %51 = tpu.concatenate %48, %49, %50 in 0 : vector<1x1x4x126xbf16>, vector<1x1x4x126xbf16>, vector<1x1x4x126xbf16> -> vector<3x1x4x126xbf16>
    %52 = vector.shape_cast %51 : vector<3x1x4x126xbf16> to vector<12x126xbf16>
    %cst_11 = arith.constant dense<0.000000e+00> : vector<8x126xf32>
    %53 = tpu.matmul %3, %52, %cst_11 {dimension_numbers = #tpu.dot_dimension_numbers<[1], [0], [0], [1], [0, 0, 1, 1], [], []>} : vector<8x12xbf16>, vector<12x126xbf16>, vector<8x126xf32> -> vector<8x126xf32>
    %54 = vector.extract_strided_slice %53 {offsets = [0, 0], sizes = [8, 63], strides = [1, 1]} : vector<8x126xf32> to vector<8x63xf32>
    %55 = vector.extract_strided_slice %53 {offsets = [0, 63], sizes = [8, 63], strides = [1, 1]} : vector<8x126xf32> to vector<8x63xf32>
    %56 = arith.maximumf %54, %55 : vector<8x63xf32>
    %57 = vector.extract_strided_slice %15 {offsets = [2, 0, 0], sizes = [1, 4, 126], strides = [1, 1, 1]} : vector<32x4x126xbf16> to vector<1x4x126xbf16>
    %58 = vector.extract_strided_slice %15 {offsets = [3, 0, 0], sizes = [1, 4, 126], strides = [1, 1, 1]} : vector<32x4x126xbf16> to vector<1x4x126xbf16>
    %59 = vector.extract_strided_slice %15 {offsets = [4, 0, 0], sizes = [1, 4, 126], strides = [1, 1, 1]} : vector<32x4x126xbf16> to vector<1x4x126xbf16>
    %60 = vector.shape_cast %57 : vector<1x4x126xbf16> to vector<1x1x4x126xbf16>
    %61 = vector.shape_cast %58 : vector<1x4x126xbf16> to vector<1x1x4x126xbf16>
    %62 = vector.shape_cast %59 : vector<1x4x126xbf16> to vector<1x1x4x126xbf16>
    %63 = tpu.concatenate %60, %61, %62 in 0 : vector<1x1x4x126xbf16>, vector<1x1x4x126xbf16>, vector<1x1x4x126xbf16> -> vector<3x1x4x126xbf16>
    %64 = vector.shape_cast %63 : vector<3x1x4x126xbf16> to vector<12x126xbf16>
    %cst_12 = arith.constant dense<0.000000e+00> : vector<8x126xf32>
    %65 = tpu.matmul %3, %64, %cst_12 {dimension_numbers = #tpu.dot_dimension_numbers<[1], [0], [0], [1], [0, 0, 1, 1], [], []>} : vector<8x12xbf16>, vector<12x126xbf16>, vector<8x126xf32> -> vector<8x126xf32>
    %66 = vector.extract_strided_slice %65 {offsets = [0, 0], sizes = [8, 63], strides = [1, 1]} : vector<8x126xf32> to vector<8x63xf32>
    %67 = vector.extract_strided_slice %65 {offsets = [0, 63], sizes = [8, 63], strides = [1, 1]} : vector<8x126xf32> to vector<8x63xf32>
    %68 = arith.maximumf %66, %67 : vector<8x63xf32>
    %69 = arith.maximumf %56, %68 : vector<8x63xf32>
    %70 = vector.broadcast %4 : vector<8x1xf32> to vector<8x63xf32>
    %71 = arith.addf %69, %70 : vector<8x63xf32>
    %cst_13 = arith.constant 0.000000e+00 : f32
    %72 = vector.broadcast %cst_13 : f32 to vector<8x63xf32>
    %73 = arith.maximumf %71, %72 : vector<8x63xf32>
    %74 = vector.extract_strided_slice %15 {offsets = [3, 0, 0], sizes = [1, 4, 126], strides = [1, 1, 1]} : vector<32x4x126xbf16> to vector<1x4x126xbf16>
    %75 = vector.extract_strided_slice %15 {offsets = [4, 0, 0], sizes = [1, 4, 126], strides = [1, 1, 1]} : vector<32x4x126xbf16> to vector<1x4x126xbf16>
    %76 = vector.extract_strided_slice %15 {offsets = [5, 0, 0], sizes = [1, 4, 126], strides = [1, 1, 1]} : vector<32x4x126xbf16> to vector<1x4x126xbf16>
    %77 = vector.shape_cast %74 : vector<1x4x126xbf16> to vector<1x1x4x126xbf16>
    %78 = vector.shape_cast %75 : vector<1x4x126xbf16> to vector<1x1x4x126xbf16>
    %79 = vector.shape_cast %76 : vector<1x4x126xbf16> to vector<1x1x4x126xbf16>
    %80 = tpu.concatenate %77, %78, %79 in 0 : vector<1x1x4x126xbf16>, vector<1x1x4x126xbf16>, vector<1x1x4x126xbf16> -> vector<3x1x4x126xbf16>
    %81 = vector.shape_cast %80 : vector<3x1x4x126xbf16> to vector<12x126xbf16>
    %cst_14 = arith.constant dense<0.000000e+00> : vector<8x126xf32>
    %82 = tpu.matmul %3, %81, %cst_14 {dimension_numbers = #tpu.dot_dimension_numbers<[1], [0], [0], [1], [0, 0, 1, 1], [], []>} : vector<8x12xbf16>, vector<12x126xbf16>, vector<8x126xf32> -> vector<8x126xf32>
    %83 = vector.extract_strided_slice %82 {offsets = [0, 0], sizes = [8, 63], strides = [1, 1]} : vector<8x126xf32> to vector<8x63xf32>
    %84 = vector.extract_strided_slice %82 {offsets = [0, 63], sizes = [8, 63], strides = [1, 1]} : vector<8x126xf32> to vector<8x63xf32>
    %85 = arith.maximumf %83, %84 : vector<8x63xf32>
    %86 = vector.extract_strided_slice %15 {offsets = [4, 0, 0], sizes = [1, 4, 126], strides = [1, 1, 1]} : vector<32x4x126xbf16> to vector<1x4x126xbf16>
    %87 = vector.extract_strided_slice %15 {offsets = [5, 0, 0], sizes = [1, 4, 126], strides = [1, 1, 1]} : vector<32x4x126xbf16> to vector<1x4x126xbf16>
    %88 = vector.extract_strided_slice %15 {offsets = [6, 0, 0], sizes = [1, 4, 126], strides = [1, 1, 1]} : vector<32x4x126xbf16> to vector<1x4x126xbf16>
    %89 = vector.shape_cast %86 : vector<1x4x126xbf16> to vector<1x1x4x126xbf16>
    %90 = vector.shape_cast %87 : vector<1x4x126xbf16> to vector<1x1x4x126xbf16>
    %91 = vector.shape_cast %88 : vector<1x4x126xbf16> to vector<1x1x4x126xbf16>
    %92 = tpu.concatenate %89, %90, %91 in 0 : vector<1x1x4x126xbf16>, vector<1x1x4x126xbf16>, vector<1x1x4x126xbf16> -> vector<3x1x4x126xbf16>
    %93 = vector.shape_cast %92 : vector<3x1x4x126xbf16> to vector<12x126xbf16>
    %cst_15 = arith.constant dense<0.000000e+00> : vector<8x126xf32>
    %94 = tpu.matmul %3, %93, %cst_15 {dimension_numbers = #tpu.dot_dimension_numbers<[1], [0], [0], [1], [0, 0, 1, 1], [], []>} : vector<8x12xbf16>, vector<12x126xbf16>, vector<8x126xf32> -> vector<8x126xf32>
    %95 = vector.extract_strided_slice %94 {offsets = [0, 0], sizes = [8, 63], strides = [1, 1]} : vector<8x126xf32> to vector<8x63xf32>
    %96 = vector.extract_strided_slice %94 {offsets = [0, 63], sizes = [8, 63], strides = [1, 1]} : vector<8x126xf32> to vector<8x63xf32>
    %97 = arith.maximumf %95, %96 : vector<8x63xf32>
    %98 = arith.maximumf %85, %97 : vector<8x63xf32>
    %99 = vector.broadcast %4 : vector<8x1xf32> to vector<8x63xf32>
    %100 = arith.addf %98, %99 : vector<8x63xf32>
    %cst_16 = arith.constant 0.000000e+00 : f32
    %101 = vector.broadcast %cst_16 : f32 to vector<8x63xf32>
    %102 = arith.maximumf %100, %101 : vector<8x63xf32>
    %103 = vector.extract_strided_slice %15 {offsets = [5, 0, 0], sizes = [1, 4, 126], strides = [1, 1, 1]} : vector<32x4x126xbf16> to vector<1x4x126xbf16>
    %104 = vector.extract_strided_slice %15 {offsets = [6, 0, 0], sizes = [1, 4, 126], strides = [1, 1, 1]} : vector<32x4x126xbf16> to vector<1x4x126xbf16>
    %105 = vector.extract_strided_slice %15 {offsets = [7, 0, 0], sizes = [1, 4, 126], strides = [1, 1, 1]} : vector<32x4x126xbf16> to vector<1x4x126xbf16>
    %106 = vector.shape_cast %103 : vector<1x4x126xbf16> to vector<1x1x4x126xbf16>
    %107 = vector.shape_cast %104 : vector<1x4x126xbf16> to vector<1x1x4x126xbf16>
    %108 = vector.shape_cast %105 : vector<1x4x126xbf16> to vector<1x1x4x126xbf16>
    %109 = tpu.concatenate %106, %107, %108 in 0 : vector<1x1x4x126xbf16>, vector<1x1x4x126xbf16>, vector<1x1x4x126xbf16> -> vector<3x1x4x126xbf16>
    %110 = vector.shape_cast %109 : vector<3x1x4x126xbf16> to vector<12x126xbf16>
    %cst_17 = arith.constant dense<0.000000e+00> : vector<8x126xf32>
    %111 = tpu.matmul %3, %110, %cst_17 {dimension_numbers = #tpu.dot_dimension_numbers<[1], [0], [0], [1], [0, 0, 1, 1], [], []>} : vector<8x12xbf16>, vector<12x126xbf16>, vector<8x126xf32> -> vector<8x126xf32>
    %112 = vector.extract_strided_slice %111 {offsets = [0, 0], sizes = [8, 63], strides = [1, 1]} : vector<8x126xf32> to vector<8x63xf32>
    %113 = vector.extract_strided_slice %111 {offsets = [0, 63], sizes = [8, 63], strides = [1, 1]} : vector<8x126xf32> to vector<8x63xf32>
    %114 = arith.maximumf %112, %113 : vector<8x63xf32>
    %115 = vector.extract_strided_slice %15 {offsets = [6, 0, 0], sizes = [1, 4, 126], strides = [1, 1, 1]} : vector<32x4x126xbf16> to vector<1x4x126xbf16>
    %116 = vector.extract_strided_slice %15 {offsets = [7, 0, 0], sizes = [1, 4, 126], strides = [1, 1, 1]} : vector<32x4x126xbf16> to vector<1x4x126xbf16>
    %117 = vector.extract_strided_slice %15 {offsets = [8, 0, 0], sizes = [1, 4, 126], strides = [1, 1, 1]} : vector<32x4x126xbf16> to vector<1x4x126xbf16>
    %118 = vector.shape_cast %115 : vector<1x4x126xbf16> to vector<1x1x4x126xbf16>
    %119 = vector.shape_cast %116 : vector<1x4x126xbf16> to vector<1x1x4x126xbf16>
    %120 = vector.shape_cast %117 : vector<1x4x126xbf16> to vector<1x1x4x126xbf16>
    %121 = tpu.concatenate %118, %119, %120 in 0 : vector<1x1x4x126xbf16>, vector<1x1x4x126xbf16>, vector<1x1x4x126xbf16> -> vector<3x1x4x126xbf16>
    %122 = vector.shape_cast %121 : vector<3x1x4x126xbf16> to vector<12x126xbf16>
    %cst_18 = arith.constant dense<0.000000e+00> : vector<8x126xf32>
    %123 = tpu.matmul %3, %122, %cst_18 {dimension_numbers = #tpu.dot_dimension_numbers<[1], [0], [0], [1], [0, 0, 1, 1], [], []>} : vector<8x12xbf16>, vector<12x126xbf16>, vector<8x126xf32> -> vector<8x126xf32>
    %124 = vector.extract_strided_slice %123 {offsets = [0, 0], sizes = [8, 63], strides = [1, 1]} : vector<8x126xf32> to vector<8x63xf32>
    %125 = vector.extract_strided_slice %123 {offsets = [0, 63], sizes = [8, 63], strides = [1, 1]} : vector<8x126xf32> to vector<8x63xf32>
    %126 = arith.maximumf %124, %125 : vector<8x63xf32>
    %127 = arith.maximumf %114, %126 : vector<8x63xf32>
    %128 = vector.broadcast %4 : vector<8x1xf32> to vector<8x63xf32>
    %129 = arith.addf %127, %128 : vector<8x63xf32>
    %cst_19 = arith.constant 0.000000e+00 : f32
    %130 = vector.broadcast %cst_19 : f32 to vector<8x63xf32>
    %131 = arith.maximumf %129, %130 : vector<8x63xf32>
    %132 = vector.extract_strided_slice %15 {offsets = [7, 0, 0], sizes = [1, 4, 126], strides = [1, 1, 1]} : vector<32x4x126xbf16> to vector<1x4x126xbf16>
    %133 = vector.extract_strided_slice %15 {offsets = [8, 0, 0], sizes = [1, 4, 126], strides = [1, 1, 1]} : vector<32x4x126xbf16> to vector<1x4x126xbf16>
    %134 = vector.extract_strided_slice %15 {offsets = [9, 0, 0], sizes = [1, 4, 126], strides = [1, 1, 1]} : vector<32x4x126xbf16> to vector<1x4x126xbf16>
    %135 = vector.shape_cast %132 : vector<1x4x126xbf16> to vector<1x1x4x126xbf16>
    %136 = vector.shape_cast %133 : vector<1x4x126xbf16> to vector<1x1x4x126xbf16>
    %137 = vector.shape_cast %134 : vector<1x4x126xbf16> to vector<1x1x4x126xbf16>
    %138 = tpu.concatenate %135, %136, %137 in 0 : vector<1x1x4x126xbf16>, vector<1x1x4x126xbf16>, vector<1x1x4x126xbf16> -> vector<3x1x4x126xbf16>
    %139 = vector.shape_cast %138 : vector<3x1x4x126xbf16> to vector<12x126xbf16>
    %cst_20 = arith.constant dense<0.000000e+00> : vector<8x126xf32>
    %140 = tpu.matmul %3, %139, %cst_20 {dimension_numbers = #tpu.dot_dimension_numbers<[1], [0], [0], [1], [0, 0, 1, 1], [], []>} : vector<8x12xbf16>, vector<12x126xbf16>, vector<8x126xf32> -> vector<8x126xf32>
    %141 = vector.extract_strided_slice %140 {offsets = [0, 0], sizes = [8, 63], strides = [1, 1]} : vector<8x126xf32> to vector<8x63xf32>
    %142 = vector.extract_strided_slice %140 {offsets = [0, 63], sizes = [8, 63], strides = [1, 1]} : vector<8x126xf32> to vector<8x63xf32>
    %143 = arith.maximumf %141, %142 : vector<8x63xf32>
    %144 = vector.extract_strided_slice %15 {offsets = [8, 0, 0], sizes = [1, 4, 126], strides = [1, 1, 1]} : vector<32x4x126xbf16> to vector<1x4x126xbf16>
    %145 = vector.extract_strided_slice %15 {offsets = [9, 0, 0], sizes = [1, 4, 126], strides = [1, 1, 1]} : vector<32x4x126xbf16> to vector<1x4x126xbf16>
    %146 = vector.extract_strided_slice %15 {offsets = [10, 0, 0], sizes = [1, 4, 126], strides = [1, 1, 1]} : vector<32x4x126xbf16> to vector<1x4x126xbf16>
    %147 = vector.shape_cast %144 : vector<1x4x126xbf16> to vector<1x1x4x126xbf16>
    %148 = vector.shape_cast %145 : vector<1x4x126xbf16> to vector<1x1x4x126xbf16>
    %149 = vector.shape_cast %146 : vector<1x4x126xbf16> to vector<1x1x4x126xbf16>
    %150 = tpu.concatenate %147, %148, %149 in 0 : vector<1x1x4x126xbf16>, vector<1x1x4x126xbf16>, vector<1x1x4x126xbf16> -> vector<3x1x4x126xbf16>
    %151 = vector.shape_cast %150 : vector<3x1x4x126xbf16> to vector<12x126xbf16>
    %cst_21 = arith.constant dense<0.000000e+00> : vector<8x126xf32>
    %152 = tpu.matmul %3, %151, %cst_21 {dimension_numbers = #tpu.dot_dimension_numbers<[1], [0], [0], [1], [0, 0, 1, 1], [], []>} : vector<8x12xbf16>, vector<12x126xbf16>, vector<8x126xf32> -> vector<8x126xf32>
    %153 = vector.extract_strided_slice %152 {offsets = [0, 0], sizes = [8, 63], strides = [1, 1]} : vector<8x126xf32> to vector<8x63xf32>
    %154 = vector.extract_strided_slice %152 {offsets = [0, 63], sizes = [8, 63], strides = [1, 1]} : vector<8x126xf32> to vector<8x63xf32>
    %155 = arith.maximumf %153, %154 : vector<8x63xf32>
    %156 = arith.maximumf %143, %155 : vector<8x63xf32>
    %157 = vector.broadcast %4 : vector<8x1xf32> to vector<8x63xf32>
    %158 = arith.addf %156, %157 : vector<8x63xf32>
    %cst_22 = arith.constant 0.000000e+00 : f32
    %159 = vector.broadcast %cst_22 : f32 to vector<8x63xf32>
    %160 = arith.maximumf %158, %159 : vector<8x63xf32>
    %161 = vector.extract_strided_slice %15 {offsets = [9, 0, 0], sizes = [1, 4, 126], strides = [1, 1, 1]} : vector<32x4x126xbf16> to vector<1x4x126xbf16>
    %162 = vector.extract_strided_slice %15 {offsets = [10, 0, 0], sizes = [1, 4, 126], strides = [1, 1, 1]} : vector<32x4x126xbf16> to vector<1x4x126xbf16>
    %163 = vector.extract_strided_slice %15 {offsets = [11, 0, 0], sizes = [1, 4, 126], strides = [1, 1, 1]} : vector<32x4x126xbf16> to vector<1x4x126xbf16>
    %164 = vector.shape_cast %161 : vector<1x4x126xbf16> to vector<1x1x4x126xbf16>
    %165 = vector.shape_cast %162 : vector<1x4x126xbf16> to vector<1x1x4x126xbf16>
    %166 = vector.shape_cast %163 : vector<1x4x126xbf16> to vector<1x1x4x126xbf16>
    %167 = tpu.concatenate %164, %165, %166 in 0 : vector<1x1x4x126xbf16>, vector<1x1x4x126xbf16>, vector<1x1x4x126xbf16> -> vector<3x1x4x126xbf16>
    %168 = vector.shape_cast %167 : vector<3x1x4x126xbf16> to vector<12x126xbf16>
    %cst_23 = arith.constant dense<0.000000e+00> : vector<8x126xf32>
    %169 = tpu.matmul %3, %168, %cst_23 {dimension_numbers = #tpu.dot_dimension_numbers<[1], [0], [0], [1], [0, 0, 1, 1], [], []>} : vector<8x12xbf16>, vector<12x126xbf16>, vector<8x126xf32> -> vector<8x126xf32>
    %170 = vector.extract_strided_slice %169 {offsets = [0, 0], sizes = [8, 63], strides = [1, 1]} : vector<8x126xf32> to vector<8x63xf32>
    %171 = vector.extract_strided_slice %169 {offsets = [0, 63], sizes = [8, 63], strides = [1, 1]} : vector<8x126xf32> to vector<8x63xf32>
    %172 = arith.maximumf %170, %171 : vector<8x63xf32>
    %173 = vector.extract_strided_slice %15 {offsets = [10, 0, 0], sizes = [1, 4, 126], strides = [1, 1, 1]} : vector<32x4x126xbf16> to vector<1x4x126xbf16>
    %174 = vector.extract_strided_slice %15 {offsets = [11, 0, 0], sizes = [1, 4, 126], strides = [1, 1, 1]} : vector<32x4x126xbf16> to vector<1x4x126xbf16>
    %175 = vector.extract_strided_slice %15 {offsets = [12, 0, 0], sizes = [1, 4, 126], strides = [1, 1, 1]} : vector<32x4x126xbf16> to vector<1x4x126xbf16>
    %176 = vector.shape_cast %173 : vector<1x4x126xbf16> to vector<1x1x4x126xbf16>
    %177 = vector.shape_cast %174 : vector<1x4x126xbf16> to vector<1x1x4x126xbf16>
    %178 = vector.shape_cast %175 : vector<1x4x126xbf16> to vector<1x1x4x126xbf16>
    %179 = tpu.concatenate %176, %177, %178 in 0 : vector<1x1x4x126xbf16>, vector<1x1x4x126xbf16>, vector<1x1x4x126xbf16> -> vector<3x1x4x126xbf16>
    %180 = vector.shape_cast %179 : vector<3x1x4x126xbf16> to vector<12x126xbf16>
    %cst_24 = arith.constant dense<0.000000e+00> : vector<8x126xf32>
    %181 = tpu.matmul %3, %180, %cst_24 {dimension_numbers = #tpu.dot_dimension_numbers<[1], [0], [0], [1], [0, 0, 1, 1], [], []>} : vector<8x12xbf16>, vector<12x126xbf16>, vector<8x126xf32> -> vector<8x126xf32>
    %182 = vector.extract_strided_slice %181 {offsets = [0, 0], sizes = [8, 63], strides = [1, 1]} : vector<8x126xf32> to vector<8x63xf32>
    %183 = vector.extract_strided_slice %181 {offsets = [0, 63], sizes = [8, 63], strides = [1, 1]} : vector<8x126xf32> to vector<8x63xf32>
    %184 = arith.maximumf %182, %183 : vector<8x63xf32>
    %185 = arith.maximumf %172, %184 : vector<8x63xf32>
    %186 = vector.broadcast %4 : vector<8x1xf32> to vector<8x63xf32>
    %187 = arith.addf %185, %186 : vector<8x63xf32>
    %cst_25 = arith.constant 0.000000e+00 : f32
    %188 = vector.broadcast %cst_25 : f32 to vector<8x63xf32>
    %189 = arith.maximumf %187, %188 : vector<8x63xf32>
    %190 = vector.extract_strided_slice %15 {offsets = [11, 0, 0], sizes = [1, 4, 126], strides = [1, 1, 1]} : vector<32x4x126xbf16> to vector<1x4x126xbf16>
    %191 = vector.extract_strided_slice %15 {offsets = [12, 0, 0], sizes = [1, 4, 126], strides = [1, 1, 1]} : vector<32x4x126xbf16> to vector<1x4x126xbf16>
    %192 = vector.extract_strided_slice %15 {offsets = [13, 0, 0], sizes = [1, 4, 126], strides = [1, 1, 1]} : vector<32x4x126xbf16> to vector<1x4x126xbf16>
    %193 = vector.shape_cast %190 : vector<1x4x126xbf16> to vector<1x1x4x126xbf16>
    %194 = vector.shape_cast %191 : vector<1x4x126xbf16> to vector<1x1x4x126xbf16>
    %195 = vector.shape_cast %192 : vector<1x4x126xbf16> to vector<1x1x4x126xbf16>
    %196 = tpu.concatenate %193, %194, %195 in 0 : vector<1x1x4x126xbf16>, vector<1x1x4x126xbf16>, vector<1x1x4x126xbf16> -> vector<3x1x4x126xbf16>
    %197 = vector.shape_cast %196 : vector<3x1x4x126xbf16> to vector<12x126xbf16>
    %cst_26 = arith.constant dense<0.000000e+00> : vector<8x126xf32>
    %198 = tpu.matmul %3, %197, %cst_26 {dimension_numbers = #tpu.dot_dimension_numbers<[1], [0], [0], [1], [0, 0, 1, 1], [], []>} : vector<8x12xbf16>, vector<12x126xbf16>, vector<8x126xf32> -> vector<8x126xf32>
    %199 = vector.extract_strided_slice %198 {offsets = [0, 0], sizes = [8, 63], strides = [1, 1]} : vector<8x126xf32> to vector<8x63xf32>
    %200 = vector.extract_strided_slice %198 {offsets = [0, 63], sizes = [8, 63], strides = [1, 1]} : vector<8x126xf32> to vector<8x63xf32>
    %201 = arith.maximumf %199, %200 : vector<8x63xf32>
    %202 = vector.extract_strided_slice %15 {offsets = [12, 0, 0], sizes = [1, 4, 126], strides = [1, 1, 1]} : vector<32x4x126xbf16> to vector<1x4x126xbf16>
    %203 = vector.extract_strided_slice %15 {offsets = [13, 0, 0], sizes = [1, 4, 126], strides = [1, 1, 1]} : vector<32x4x126xbf16> to vector<1x4x126xbf16>
    %204 = vector.extract_strided_slice %15 {offsets = [14, 0, 0], sizes = [1, 4, 126], strides = [1, 1, 1]} : vector<32x4x126xbf16> to vector<1x4x126xbf16>
    %205 = vector.shape_cast %202 : vector<1x4x126xbf16> to vector<1x1x4x126xbf16>
    %206 = vector.shape_cast %203 : vector<1x4x126xbf16> to vector<1x1x4x126xbf16>
    %207 = vector.shape_cast %204 : vector<1x4x126xbf16> to vector<1x1x4x126xbf16>
    %208 = tpu.concatenate %205, %206, %207 in 0 : vector<1x1x4x126xbf16>, vector<1x1x4x126xbf16>, vector<1x1x4x126xbf16> -> vector<3x1x4x126xbf16>
    %209 = vector.shape_cast %208 : vector<3x1x4x126xbf16> to vector<12x126xbf16>
    %cst_27 = arith.constant dense<0.000000e+00> : vector<8x126xf32>
    %210 = tpu.matmul %3, %209, %cst_27 {dimension_numbers = #tpu.dot_dimension_numbers<[1], [0], [0], [1], [0, 0, 1, 1], [], []>} : vector<8x12xbf16>, vector<12x126xbf16>, vector<8x126xf32> -> vector<8x126xf32>
    %211 = vector.extract_strided_slice %210 {offsets = [0, 0], sizes = [8, 63], strides = [1, 1]} : vector<8x126xf32> to vector<8x63xf32>
    %212 = vector.extract_strided_slice %210 {offsets = [0, 63], sizes = [8, 63], strides = [1, 1]} : vector<8x126xf32> to vector<8x63xf32>
    %213 = arith.maximumf %211, %212 : vector<8x63xf32>
    %214 = arith.maximumf %201, %213 : vector<8x63xf32>
    %215 = vector.broadcast %4 : vector<8x1xf32> to vector<8x63xf32>
    %216 = arith.addf %214, %215 : vector<8x63xf32>
    %cst_28 = arith.constant 0.000000e+00 : f32
    %217 = vector.broadcast %cst_28 : f32 to vector<8x63xf32>
    %218 = arith.maximumf %216, %217 : vector<8x63xf32>
    %219 = vector.extract_strided_slice %15 {offsets = [13, 0, 0], sizes = [1, 4, 126], strides = [1, 1, 1]} : vector<32x4x126xbf16> to vector<1x4x126xbf16>
    %220 = vector.extract_strided_slice %15 {offsets = [14, 0, 0], sizes = [1, 4, 126], strides = [1, 1, 1]} : vector<32x4x126xbf16> to vector<1x4x126xbf16>
    %221 = vector.extract_strided_slice %15 {offsets = [15, 0, 0], sizes = [1, 4, 126], strides = [1, 1, 1]} : vector<32x4x126xbf16> to vector<1x4x126xbf16>
    %222 = vector.shape_cast %219 : vector<1x4x126xbf16> to vector<1x1x4x126xbf16>
    %223 = vector.shape_cast %220 : vector<1x4x126xbf16> to vector<1x1x4x126xbf16>
    %224 = vector.shape_cast %221 : vector<1x4x126xbf16> to vector<1x1x4x126xbf16>
    %225 = tpu.concatenate %222, %223, %224 in 0 : vector<1x1x4x126xbf16>, vector<1x1x4x126xbf16>, vector<1x1x4x126xbf16> -> vector<3x1x4x126xbf16>
    %226 = vector.shape_cast %225 : vector<3x1x4x126xbf16> to vector<12x126xbf16>
    %cst_29 = arith.constant dense<0.000000e+00> : vector<8x126xf32>
    %227 = tpu.matmul %3, %226, %cst_29 {dimension_numbers = #tpu.dot_dimension_numbers<[1], [0], [0], [1], [0, 0, 1, 1], [], []>} : vector<8x12xbf16>, vector<12x126xbf16>, vector<8x126xf32> -> vector<8x126xf32>
    %228 = vector.extract_strided_slice %227 {offsets = [0, 0], sizes = [8, 63], strides = [1, 1]} : vector<8x126xf32> to vector<8x63xf32>
    %229 = vector.extract_strided_slice %227 {offsets = [0, 63], sizes = [8, 63], strides = [1, 1]} : vector<8x126xf32> to vector<8x63xf32>
    %230 = arith.maximumf %228, %229 : vector<8x63xf32>
    %231 = vector.extract_strided_slice %15 {offsets = [14, 0, 0], sizes = [1, 4, 126], strides = [1, 1, 1]} : vector<32x4x126xbf16> to vector<1x4x126xbf16>
    %232 = vector.extract_strided_slice %15 {offsets = [15, 0, 0], sizes = [1, 4, 126], strides = [1, 1, 1]} : vector<32x4x126xbf16> to vector<1x4x126xbf16>
    %233 = vector.extract_strided_slice %15 {offsets = [16, 0, 0], sizes = [1, 4, 126], strides = [1, 1, 1]} : vector<32x4x126xbf16> to vector<1x4x126xbf16>
    %234 = vector.shape_cast %231 : vector<1x4x126xbf16> to vector<1x1x4x126xbf16>
    %235 = vector.shape_cast %232 : vector<1x4x126xbf16> to vector<1x1x4x126xbf16>
    %236 = vector.shape_cast %233 : vector<1x4x126xbf16> to vector<1x1x4x126xbf16>
    %237 = tpu.concatenate %234, %235, %236 in 0 : vector<1x1x4x126xbf16>, vector<1x1x4x126xbf16>, vector<1x1x4x126xbf16> -> vector<3x1x4x126xbf16>
    %238 = vector.shape_cast %237 : vector<3x1x4x126xbf16> to vector<12x126xbf16>
    %cst_30 = arith.constant dense<0.000000e+00> : vector<8x126xf32>
    %239 = tpu.matmul %3, %238, %cst_30 {dimension_numbers = #tpu.dot_dimension_numbers<[1], [0], [0], [1], [0, 0, 1, 1], [], []>} : vector<8x12xbf16>, vector<12x126xbf16>, vector<8x126xf32> -> vector<8x126xf32>
    %240 = vector.extract_strided_slice %239 {offsets = [0, 0], sizes = [8, 63], strides = [1, 1]} : vector<8x126xf32> to vector<8x63xf32>
    %241 = vector.extract_strided_slice %239 {offsets = [0, 63], sizes = [8, 63], strides = [1, 1]} : vector<8x126xf32> to vector<8x63xf32>
    %242 = arith.maximumf %240, %241 : vector<8x63xf32>
    %243 = arith.maximumf %230, %242 : vector<8x63xf32>
    %244 = vector.broadcast %4 : vector<8x1xf32> to vector<8x63xf32>
    %245 = arith.addf %243, %244 : vector<8x63xf32>
    %cst_31 = arith.constant 0.000000e+00 : f32
    %246 = vector.broadcast %cst_31 : f32 to vector<8x63xf32>
    %247 = arith.maximumf %245, %246 : vector<8x63xf32>
    %248 = vector.extract_strided_slice %15 {offsets = [15, 0, 0], sizes = [1, 4, 126], strides = [1, 1, 1]} : vector<32x4x126xbf16> to vector<1x4x126xbf16>
    %249 = vector.extract_strided_slice %15 {offsets = [16, 0, 0], sizes = [1, 4, 126], strides = [1, 1, 1]} : vector<32x4x126xbf16> to vector<1x4x126xbf16>
    %250 = vector.extract_strided_slice %15 {offsets = [17, 0, 0], sizes = [1, 4, 126], strides = [1, 1, 1]} : vector<32x4x126xbf16> to vector<1x4x126xbf16>
    %251 = vector.shape_cast %248 : vector<1x4x126xbf16> to vector<1x1x4x126xbf16>
    %252 = vector.shape_cast %249 : vector<1x4x126xbf16> to vector<1x1x4x126xbf16>
    %253 = vector.shape_cast %250 : vector<1x4x126xbf16> to vector<1x1x4x126xbf16>
    %254 = tpu.concatenate %251, %252, %253 in 0 : vector<1x1x4x126xbf16>, vector<1x1x4x126xbf16>, vector<1x1x4x126xbf16> -> vector<3x1x4x126xbf16>
    %255 = vector.shape_cast %254 : vector<3x1x4x126xbf16> to vector<12x126xbf16>
    %cst_32 = arith.constant dense<0.000000e+00> : vector<8x126xf32>
    %256 = tpu.matmul %3, %255, %cst_32 {dimension_numbers = #tpu.dot_dimension_numbers<[1], [0], [0], [1], [0, 0, 1, 1], [], []>} : vector<8x12xbf16>, vector<12x126xbf16>, vector<8x126xf32> -> vector<8x126xf32>
    %257 = vector.extract_strided_slice %256 {offsets = [0, 0], sizes = [8, 63], strides = [1, 1]} : vector<8x126xf32> to vector<8x63xf32>
    %258 = vector.extract_strided_slice %256 {offsets = [0, 63], sizes = [8, 63], strides = [1, 1]} : vector<8x126xf32> to vector<8x63xf32>
    %259 = arith.maximumf %257, %258 : vector<8x63xf32>
    %260 = vector.extract_strided_slice %15 {offsets = [16, 0, 0], sizes = [1, 4, 126], strides = [1, 1, 1]} : vector<32x4x126xbf16> to vector<1x4x126xbf16>
    %261 = vector.extract_strided_slice %15 {offsets = [17, 0, 0], sizes = [1, 4, 126], strides = [1, 1, 1]} : vector<32x4x126xbf16> to vector<1x4x126xbf16>
    %262 = vector.extract_strided_slice %15 {offsets = [18, 0, 0], sizes = [1, 4, 126], strides = [1, 1, 1]} : vector<32x4x126xbf16> to vector<1x4x126xbf16>
    %263 = vector.shape_cast %260 : vector<1x4x126xbf16> to vector<1x1x4x126xbf16>
    %264 = vector.shape_cast %261 : vector<1x4x126xbf16> to vector<1x1x4x126xbf16>
    %265 = vector.shape_cast %262 : vector<1x4x126xbf16> to vector<1x1x4x126xbf16>
    %266 = tpu.concatenate %263, %264, %265 in 0 : vector<1x1x4x126xbf16>, vector<1x1x4x126xbf16>, vector<1x1x4x126xbf16> -> vector<3x1x4x126xbf16>
    %267 = vector.shape_cast %266 : vector<3x1x4x126xbf16> to vector<12x126xbf16>
    %cst_33 = arith.constant dense<0.000000e+00> : vector<8x126xf32>
    %268 = tpu.matmul %3, %267, %cst_33 {dimension_numbers = #tpu.dot_dimension_numbers<[1], [0], [0], [1], [0, 0, 1, 1], [], []>} : vector<8x12xbf16>, vector<12x126xbf16>, vector<8x126xf32> -> vector<8x126xf32>
    %269 = vector.extract_strided_slice %268 {offsets = [0, 0], sizes = [8, 63], strides = [1, 1]} : vector<8x126xf32> to vector<8x63xf32>
    %270 = vector.extract_strided_slice %268 {offsets = [0, 63], sizes = [8, 63], strides = [1, 1]} : vector<8x126xf32> to vector<8x63xf32>
    %271 = arith.maximumf %269, %270 : vector<8x63xf32>
    %272 = arith.maximumf %259, %271 : vector<8x63xf32>
    %273 = vector.broadcast %4 : vector<8x1xf32> to vector<8x63xf32>
    %274 = arith.addf %272, %273 : vector<8x63xf32>
    %cst_34 = arith.constant 0.000000e+00 : f32
    %275 = vector.broadcast %cst_34 : f32 to vector<8x63xf32>
    %276 = arith.maximumf %274, %275 : vector<8x63xf32>
    %277 = vector.extract_strided_slice %15 {offsets = [17, 0, 0], sizes = [1, 4, 126], strides = [1, 1, 1]} : vector<32x4x126xbf16> to vector<1x4x126xbf16>
    %278 = vector.extract_strided_slice %15 {offsets = [18, 0, 0], sizes = [1, 4, 126], strides = [1, 1, 1]} : vector<32x4x126xbf16> to vector<1x4x126xbf16>
    %279 = vector.extract_strided_slice %15 {offsets = [19, 0, 0], sizes = [1, 4, 126], strides = [1, 1, 1]} : vector<32x4x126xbf16> to vector<1x4x126xbf16>
    %280 = vector.shape_cast %277 : vector<1x4x126xbf16> to vector<1x1x4x126xbf16>
    %281 = vector.shape_cast %278 : vector<1x4x126xbf16> to vector<1x1x4x126xbf16>
    %282 = vector.shape_cast %279 : vector<1x4x126xbf16> to vector<1x1x4x126xbf16>
    %283 = tpu.concatenate %280, %281, %282 in 0 : vector<1x1x4x126xbf16>, vector<1x1x4x126xbf16>, vector<1x1x4x126xbf16> -> vector<3x1x4x126xbf16>
    %284 = vector.shape_cast %283 : vector<3x1x4x126xbf16> to vector<12x126xbf16>
    %cst_35 = arith.constant dense<0.000000e+00> : vector<8x126xf32>
    %285 = tpu.matmul %3, %284, %cst_35 {dimension_numbers = #tpu.dot_dimension_numbers<[1], [0], [0], [1], [0, 0, 1, 1], [], []>} : vector<8x12xbf16>, vector<12x126xbf16>, vector<8x126xf32> -> vector<8x126xf32>
    %286 = vector.extract_strided_slice %285 {offsets = [0, 0], sizes = [8, 63], strides = [1, 1]} : vector<8x126xf32> to vector<8x63xf32>
    %287 = vector.extract_strided_slice %285 {offsets = [0, 63], sizes = [8, 63], strides = [1, 1]} : vector<8x126xf32> to vector<8x63xf32>
    %288 = arith.maximumf %286, %287 : vector<8x63xf32>
    %289 = vector.extract_strided_slice %15 {offsets = [18, 0, 0], sizes = [1, 4, 126], strides = [1, 1, 1]} : vector<32x4x126xbf16> to vector<1x4x126xbf16>
    %290 = vector.extract_strided_slice %15 {offsets = [19, 0, 0], sizes = [1, 4, 126], strides = [1, 1, 1]} : vector<32x4x126xbf16> to vector<1x4x126xbf16>
    %291 = vector.extract_strided_slice %15 {offsets = [20, 0, 0], sizes = [1, 4, 126], strides = [1, 1, 1]} : vector<32x4x126xbf16> to vector<1x4x126xbf16>
    %292 = vector.shape_cast %289 : vector<1x4x126xbf16> to vector<1x1x4x126xbf16>
    %293 = vector.shape_cast %290 : vector<1x4x126xbf16> to vector<1x1x4x126xbf16>
    %294 = vector.shape_cast %291 : vector<1x4x126xbf16> to vector<1x1x4x126xbf16>
    %295 = tpu.concatenate %292, %293, %294 in 0 : vector<1x1x4x126xbf16>, vector<1x1x4x126xbf16>, vector<1x1x4x126xbf16> -> vector<3x1x4x126xbf16>
    %296 = vector.shape_cast %295 : vector<3x1x4x126xbf16> to vector<12x126xbf16>
    %cst_36 = arith.constant dense<0.000000e+00> : vector<8x126xf32>
    %297 = tpu.matmul %3, %296, %cst_36 {dimension_numbers = #tpu.dot_dimension_numbers<[1], [0], [0], [1], [0, 0, 1, 1], [], []>} : vector<8x12xbf16>, vector<12x126xbf16>, vector<8x126xf32> -> vector<8x126xf32>
    %298 = vector.extract_strided_slice %297 {offsets = [0, 0], sizes = [8, 63], strides = [1, 1]} : vector<8x126xf32> to vector<8x63xf32>
    %299 = vector.extract_strided_slice %297 {offsets = [0, 63], sizes = [8, 63], strides = [1, 1]} : vector<8x126xf32> to vector<8x63xf32>
    %300 = arith.maximumf %298, %299 : vector<8x63xf32>
    %301 = arith.maximumf %288, %300 : vector<8x63xf32>
    %302 = vector.broadcast %4 : vector<8x1xf32> to vector<8x63xf32>
    %303 = arith.addf %301, %302 : vector<8x63xf32>
    %cst_37 = arith.constant 0.000000e+00 : f32
    %304 = vector.broadcast %cst_37 : f32 to vector<8x63xf32>
    %305 = arith.maximumf %303, %304 : vector<8x63xf32>
    %306 = vector.extract_strided_slice %15 {offsets = [19, 0, 0], sizes = [1, 4, 126], strides = [1, 1, 1]} : vector<32x4x126xbf16> to vector<1x4x126xbf16>
    %307 = vector.extract_strided_slice %15 {offsets = [20, 0, 0], sizes = [1, 4, 126], strides = [1, 1, 1]} : vector<32x4x126xbf16> to vector<1x4x126xbf16>
    %308 = vector.extract_strided_slice %15 {offsets = [21, 0, 0], sizes = [1, 4, 126], strides = [1, 1, 1]} : vector<32x4x126xbf16> to vector<1x4x126xbf16>
    %309 = vector.shape_cast %306 : vector<1x4x126xbf16> to vector<1x1x4x126xbf16>
    %310 = vector.shape_cast %307 : vector<1x4x126xbf16> to vector<1x1x4x126xbf16>
    %311 = vector.shape_cast %308 : vector<1x4x126xbf16> to vector<1x1x4x126xbf16>
    %312 = tpu.concatenate %309, %310, %311 in 0 : vector<1x1x4x126xbf16>, vector<1x1x4x126xbf16>, vector<1x1x4x126xbf16> -> vector<3x1x4x126xbf16>
    %313 = vector.shape_cast %312 : vector<3x1x4x126xbf16> to vector<12x126xbf16>
    %cst_38 = arith.constant dense<0.000000e+00> : vector<8x126xf32>
    %314 = tpu.matmul %3, %313, %cst_38 {dimension_numbers = #tpu.dot_dimension_numbers<[1], [0], [0], [1], [0, 0, 1, 1], [], []>} : vector<8x12xbf16>, vector<12x126xbf16>, vector<8x126xf32> -> vector<8x126xf32>
    %315 = vector.extract_strided_slice %314 {offsets = [0, 0], sizes = [8, 63], strides = [1, 1]} : vector<8x126xf32> to vector<8x63xf32>
    %316 = vector.extract_strided_slice %314 {offsets = [0, 63], sizes = [8, 63], strides = [1, 1]} : vector<8x126xf32> to vector<8x63xf32>
    %317 = arith.maximumf %315, %316 : vector<8x63xf32>
    %318 = vector.extract_strided_slice %15 {offsets = [20, 0, 0], sizes = [1, 4, 126], strides = [1, 1, 1]} : vector<32x4x126xbf16> to vector<1x4x126xbf16>
    %319 = vector.extract_strided_slice %15 {offsets = [21, 0, 0], sizes = [1, 4, 126], strides = [1, 1, 1]} : vector<32x4x126xbf16> to vector<1x4x126xbf16>
    %320 = vector.extract_strided_slice %15 {offsets = [22, 0, 0], sizes = [1, 4, 126], strides = [1, 1, 1]} : vector<32x4x126xbf16> to vector<1x4x126xbf16>
    %321 = vector.shape_cast %318 : vector<1x4x126xbf16> to vector<1x1x4x126xbf16>
    %322 = vector.shape_cast %319 : vector<1x4x126xbf16> to vector<1x1x4x126xbf16>
    %323 = vector.shape_cast %320 : vector<1x4x126xbf16> to vector<1x1x4x126xbf16>
    %324 = tpu.concatenate %321, %322, %323 in 0 : vector<1x1x4x126xbf16>, vector<1x1x4x126xbf16>, vector<1x1x4x126xbf16> -> vector<3x1x4x126xbf16>
    %325 = vector.shape_cast %324 : vector<3x1x4x126xbf16> to vector<12x126xbf16>
    %cst_39 = arith.constant dense<0.000000e+00> : vector<8x126xf32>
    %326 = tpu.matmul %3, %325, %cst_39 {dimension_numbers = #tpu.dot_dimension_numbers<[1], [0], [0], [1], [0, 0, 1, 1], [], []>} : vector<8x12xbf16>, vector<12x126xbf16>, vector<8x126xf32> -> vector<8x126xf32>
    %327 = vector.extract_strided_slice %326 {offsets = [0, 0], sizes = [8, 63], strides = [1, 1]} : vector<8x126xf32> to vector<8x63xf32>
    %328 = vector.extract_strided_slice %326 {offsets = [0, 63], sizes = [8, 63], strides = [1, 1]} : vector<8x126xf32> to vector<8x63xf32>
    %329 = arith.maximumf %327, %328 : vector<8x63xf32>
    %330 = arith.maximumf %317, %329 : vector<8x63xf32>
    %331 = vector.broadcast %4 : vector<8x1xf32> to vector<8x63xf32>
    %332 = arith.addf %330, %331 : vector<8x63xf32>
    %cst_40 = arith.constant 0.000000e+00 : f32
    %333 = vector.broadcast %cst_40 : f32 to vector<8x63xf32>
    %334 = arith.maximumf %332, %333 : vector<8x63xf32>
    %335 = vector.extract_strided_slice %15 {offsets = [21, 0, 0], sizes = [1, 4, 126], strides = [1, 1, 1]} : vector<32x4x126xbf16> to vector<1x4x126xbf16>
    %336 = vector.extract_strided_slice %15 {offsets = [22, 0, 0], sizes = [1, 4, 126], strides = [1, 1, 1]} : vector<32x4x126xbf16> to vector<1x4x126xbf16>
    %337 = vector.extract_strided_slice %15 {offsets = [23, 0, 0], sizes = [1, 4, 126], strides = [1, 1, 1]} : vector<32x4x126xbf16> to vector<1x4x126xbf16>
    %338 = vector.shape_cast %335 : vector<1x4x126xbf16> to vector<1x1x4x126xbf16>
    %339 = vector.shape_cast %336 : vector<1x4x126xbf16> to vector<1x1x4x126xbf16>
    %340 = vector.shape_cast %337 : vector<1x4x126xbf16> to vector<1x1x4x126xbf16>
    %341 = tpu.concatenate %338, %339, %340 in 0 : vector<1x1x4x126xbf16>, vector<1x1x4x126xbf16>, vector<1x1x4x126xbf16> -> vector<3x1x4x126xbf16>
    %342 = vector.shape_cast %341 : vector<3x1x4x126xbf16> to vector<12x126xbf16>
    %cst_41 = arith.constant dense<0.000000e+00> : vector<8x126xf32>
    %343 = tpu.matmul %3, %342, %cst_41 {dimension_numbers = #tpu.dot_dimension_numbers<[1], [0], [0], [1], [0, 0, 1, 1], [], []>} : vector<8x12xbf16>, vector<12x126xbf16>, vector<8x126xf32> -> vector<8x126xf32>
    %344 = vector.extract_strided_slice %343 {offsets = [0, 0], sizes = [8, 63], strides = [1, 1]} : vector<8x126xf32> to vector<8x63xf32>
    %345 = vector.extract_strided_slice %343 {offsets = [0, 63], sizes = [8, 63], strides = [1, 1]} : vector<8x126xf32> to vector<8x63xf32>
    %346 = arith.maximumf %344, %345 : vector<8x63xf32>
    %347 = vector.extract_strided_slice %15 {offsets = [22, 0, 0], sizes = [1, 4, 126], strides = [1, 1, 1]} : vector<32x4x126xbf16> to vector<1x4x126xbf16>
    %348 = vector.extract_strided_slice %15 {offsets = [23, 0, 0], sizes = [1, 4, 126], strides = [1, 1, 1]} : vector<32x4x126xbf16> to vector<1x4x126xbf16>
    %349 = vector.extract_strided_slice %15 {offsets = [24, 0, 0], sizes = [1, 4, 126], strides = [1, 1, 1]} : vector<32x4x126xbf16> to vector<1x4x126xbf16>
    %350 = vector.shape_cast %347 : vector<1x4x126xbf16> to vector<1x1x4x126xbf16>
    %351 = vector.shape_cast %348 : vector<1x4x126xbf16> to vector<1x1x4x126xbf16>
    %352 = vector.shape_cast %349 : vector<1x4x126xbf16> to vector<1x1x4x126xbf16>
    %353 = tpu.concatenate %350, %351, %352 in 0 : vector<1x1x4x126xbf16>, vector<1x1x4x126xbf16>, vector<1x1x4x126xbf16> -> vector<3x1x4x126xbf16>
    %354 = vector.shape_cast %353 : vector<3x1x4x126xbf16> to vector<12x126xbf16>
    %cst_42 = arith.constant dense<0.000000e+00> : vector<8x126xf32>
    %355 = tpu.matmul %3, %354, %cst_42 {dimension_numbers = #tpu.dot_dimension_numbers<[1], [0], [0], [1], [0, 0, 1, 1], [], []>} : vector<8x12xbf16>, vector<12x126xbf16>, vector<8x126xf32> -> vector<8x126xf32>
    %356 = vector.extract_strided_slice %355 {offsets = [0, 0], sizes = [8, 63], strides = [1, 1]} : vector<8x126xf32> to vector<8x63xf32>
    %357 = vector.extract_strided_slice %355 {offsets = [0, 63], sizes = [8, 63], strides = [1, 1]} : vector<8x126xf32> to vector<8x63xf32>
    %358 = arith.maximumf %356, %357 : vector<8x63xf32>
    %359 = arith.maximumf %346, %358 : vector<8x63xf32>
    %360 = vector.broadcast %4 : vector<8x1xf32> to vector<8x63xf32>
    %361 = arith.addf %359, %360 : vector<8x63xf32>
    %cst_43 = arith.constant 0.000000e+00 : f32
    %362 = vector.broadcast %cst_43 : f32 to vector<8x63xf32>
    %363 = arith.maximumf %361, %362 : vector<8x63xf32>
    %364 = vector.extract_strided_slice %15 {offsets = [23, 0, 0], sizes = [1, 4, 126], strides = [1, 1, 1]} : vector<32x4x126xbf16> to vector<1x4x126xbf16>
    %365 = vector.extract_strided_slice %15 {offsets = [24, 0, 0], sizes = [1, 4, 126], strides = [1, 1, 1]} : vector<32x4x126xbf16> to vector<1x4x126xbf16>
    %366 = vector.extract_strided_slice %15 {offsets = [25, 0, 0], sizes = [1, 4, 126], strides = [1, 1, 1]} : vector<32x4x126xbf16> to vector<1x4x126xbf16>
    %367 = vector.shape_cast %364 : vector<1x4x126xbf16> to vector<1x1x4x126xbf16>
    %368 = vector.shape_cast %365 : vector<1x4x126xbf16> to vector<1x1x4x126xbf16>
    %369 = vector.shape_cast %366 : vector<1x4x126xbf16> to vector<1x1x4x126xbf16>
    %370 = tpu.concatenate %367, %368, %369 in 0 : vector<1x1x4x126xbf16>, vector<1x1x4x126xbf16>, vector<1x1x4x126xbf16> -> vector<3x1x4x126xbf16>
    %371 = vector.shape_cast %370 : vector<3x1x4x126xbf16> to vector<12x126xbf16>
    %cst_44 = arith.constant dense<0.000000e+00> : vector<8x126xf32>
    %372 = tpu.matmul %3, %371, %cst_44 {dimension_numbers = #tpu.dot_dimension_numbers<[1], [0], [0], [1], [0, 0, 1, 1], [], []>} : vector<8x12xbf16>, vector<12x126xbf16>, vector<8x126xf32> -> vector<8x126xf32>
    %373 = vector.extract_strided_slice %372 {offsets = [0, 0], sizes = [8, 63], strides = [1, 1]} : vector<8x126xf32> to vector<8x63xf32>
    %374 = vector.extract_strided_slice %372 {offsets = [0, 63], sizes = [8, 63], strides = [1, 1]} : vector<8x126xf32> to vector<8x63xf32>
    %375 = arith.maximumf %373, %374 : vector<8x63xf32>
    %376 = vector.extract_strided_slice %15 {offsets = [24, 0, 0], sizes = [1, 4, 126], strides = [1, 1, 1]} : vector<32x4x126xbf16> to vector<1x4x126xbf16>
    %377 = vector.extract_strided_slice %15 {offsets = [25, 0, 0], sizes = [1, 4, 126], strides = [1, 1, 1]} : vector<32x4x126xbf16> to vector<1x4x126xbf16>
    %378 = vector.extract_strided_slice %15 {offsets = [26, 0, 0], sizes = [1, 4, 126], strides = [1, 1, 1]} : vector<32x4x126xbf16> to vector<1x4x126xbf16>
    %379 = vector.shape_cast %376 : vector<1x4x126xbf16> to vector<1x1x4x126xbf16>
    %380 = vector.shape_cast %377 : vector<1x4x126xbf16> to vector<1x1x4x126xbf16>
    %381 = vector.shape_cast %378 : vector<1x4x126xbf16> to vector<1x1x4x126xbf16>
    %382 = tpu.concatenate %379, %380, %381 in 0 : vector<1x1x4x126xbf16>, vector<1x1x4x126xbf16>, vector<1x1x4x126xbf16> -> vector<3x1x4x126xbf16>
    %383 = vector.shape_cast %382 : vector<3x1x4x126xbf16> to vector<12x126xbf16>
    %cst_45 = arith.constant dense<0.000000e+00> : vector<8x126xf32>
    %384 = tpu.matmul %3, %383, %cst_45 {dimension_numbers = #tpu.dot_dimension_numbers<[1], [0], [0], [1], [0, 0, 1, 1], [], []>} : vector<8x12xbf16>, vector<12x126xbf16>, vector<8x126xf32> -> vector<8x126xf32>
    %385 = vector.extract_strided_slice %384 {offsets = [0, 0], sizes = [8, 63], strides = [1, 1]} : vector<8x126xf32> to vector<8x63xf32>
    %386 = vector.extract_strided_slice %384 {offsets = [0, 63], sizes = [8, 63], strides = [1, 1]} : vector<8x126xf32> to vector<8x63xf32>
    %387 = arith.maximumf %385, %386 : vector<8x63xf32>
    %388 = arith.maximumf %375, %387 : vector<8x63xf32>
    %389 = vector.broadcast %4 : vector<8x1xf32> to vector<8x63xf32>
    %390 = arith.addf %388, %389 : vector<8x63xf32>
    %cst_46 = arith.constant 0.000000e+00 : f32
    %391 = vector.broadcast %cst_46 : f32 to vector<8x63xf32>
    %392 = arith.maximumf %390, %391 : vector<8x63xf32>
    %393 = vector.extract_strided_slice %15 {offsets = [25, 0, 0], sizes = [1, 4, 126], strides = [1, 1, 1]} : vector<32x4x126xbf16> to vector<1x4x126xbf16>
    %394 = vector.extract_strided_slice %15 {offsets = [26, 0, 0], sizes = [1, 4, 126], strides = [1, 1, 1]} : vector<32x4x126xbf16> to vector<1x4x126xbf16>
    %395 = vector.extract_strided_slice %15 {offsets = [27, 0, 0], sizes = [1, 4, 126], strides = [1, 1, 1]} : vector<32x4x126xbf16> to vector<1x4x126xbf16>
    %396 = vector.shape_cast %393 : vector<1x4x126xbf16> to vector<1x1x4x126xbf16>
    %397 = vector.shape_cast %394 : vector<1x4x126xbf16> to vector<1x1x4x126xbf16>
    %398 = vector.shape_cast %395 : vector<1x4x126xbf16> to vector<1x1x4x126xbf16>
    %399 = tpu.concatenate %396, %397, %398 in 0 : vector<1x1x4x126xbf16>, vector<1x1x4x126xbf16>, vector<1x1x4x126xbf16> -> vector<3x1x4x126xbf16>
    %400 = vector.shape_cast %399 : vector<3x1x4x126xbf16> to vector<12x126xbf16>
    %cst_47 = arith.constant dense<0.000000e+00> : vector<8x126xf32>
    %401 = tpu.matmul %3, %400, %cst_47 {dimension_numbers = #tpu.dot_dimension_numbers<[1], [0], [0], [1], [0, 0, 1, 1], [], []>} : vector<8x12xbf16>, vector<12x126xbf16>, vector<8x126xf32> -> vector<8x126xf32>
    %402 = vector.extract_strided_slice %401 {offsets = [0, 0], sizes = [8, 63], strides = [1, 1]} : vector<8x126xf32> to vector<8x63xf32>
    %403 = vector.extract_strided_slice %401 {offsets = [0, 63], sizes = [8, 63], strides = [1, 1]} : vector<8x126xf32> to vector<8x63xf32>
    %404 = arith.maximumf %402, %403 : vector<8x63xf32>
    %405 = vector.extract_strided_slice %15 {offsets = [26, 0, 0], sizes = [1, 4, 126], strides = [1, 1, 1]} : vector<32x4x126xbf16> to vector<1x4x126xbf16>
    %406 = vector.extract_strided_slice %15 {offsets = [27, 0, 0], sizes = [1, 4, 126], strides = [1, 1, 1]} : vector<32x4x126xbf16> to vector<1x4x126xbf16>
    %407 = vector.extract_strided_slice %15 {offsets = [28, 0, 0], sizes = [1, 4, 126], strides = [1, 1, 1]} : vector<32x4x126xbf16> to vector<1x4x126xbf16>
    %408 = vector.shape_cast %405 : vector<1x4x126xbf16> to vector<1x1x4x126xbf16>
    %409 = vector.shape_cast %406 : vector<1x4x126xbf16> to vector<1x1x4x126xbf16>
    %410 = vector.shape_cast %407 : vector<1x4x126xbf16> to vector<1x1x4x126xbf16>
    %411 = tpu.concatenate %408, %409, %410 in 0 : vector<1x1x4x126xbf16>, vector<1x1x4x126xbf16>, vector<1x1x4x126xbf16> -> vector<3x1x4x126xbf16>
    %412 = vector.shape_cast %411 : vector<3x1x4x126xbf16> to vector<12x126xbf16>
    %cst_48 = arith.constant dense<0.000000e+00> : vector<8x126xf32>
    %413 = tpu.matmul %3, %412, %cst_48 {dimension_numbers = #tpu.dot_dimension_numbers<[1], [0], [0], [1], [0, 0, 1, 1], [], []>} : vector<8x12xbf16>, vector<12x126xbf16>, vector<8x126xf32> -> vector<8x126xf32>
    %414 = vector.extract_strided_slice %413 {offsets = [0, 0], sizes = [8, 63], strides = [1, 1]} : vector<8x126xf32> to vector<8x63xf32>
    %415 = vector.extract_strided_slice %413 {offsets = [0, 63], sizes = [8, 63], strides = [1, 1]} : vector<8x126xf32> to vector<8x63xf32>
    %416 = arith.maximumf %414, %415 : vector<8x63xf32>
    %417 = arith.maximumf %404, %416 : vector<8x63xf32>
    %418 = vector.broadcast %4 : vector<8x1xf32> to vector<8x63xf32>
    %419 = arith.addf %417, %418 : vector<8x63xf32>
    %cst_49 = arith.constant 0.000000e+00 : f32
    %420 = vector.broadcast %cst_49 : f32 to vector<8x63xf32>
    %421 = arith.maximumf %419, %420 : vector<8x63xf32>
    %422 = vector.extract_strided_slice %15 {offsets = [27, 0, 0], sizes = [1, 4, 126], strides = [1, 1, 1]} : vector<32x4x126xbf16> to vector<1x4x126xbf16>
    %423 = vector.extract_strided_slice %15 {offsets = [28, 0, 0], sizes = [1, 4, 126], strides = [1, 1, 1]} : vector<32x4x126xbf16> to vector<1x4x126xbf16>
    %424 = vector.extract_strided_slice %15 {offsets = [29, 0, 0], sizes = [1, 4, 126], strides = [1, 1, 1]} : vector<32x4x126xbf16> to vector<1x4x126xbf16>
    %425 = vector.shape_cast %422 : vector<1x4x126xbf16> to vector<1x1x4x126xbf16>
    %426 = vector.shape_cast %423 : vector<1x4x126xbf16> to vector<1x1x4x126xbf16>
    %427 = vector.shape_cast %424 : vector<1x4x126xbf16> to vector<1x1x4x126xbf16>
    %428 = tpu.concatenate %425, %426, %427 in 0 : vector<1x1x4x126xbf16>, vector<1x1x4x126xbf16>, vector<1x1x4x126xbf16> -> vector<3x1x4x126xbf16>
    %429 = vector.shape_cast %428 : vector<3x1x4x126xbf16> to vector<12x126xbf16>
    %cst_50 = arith.constant dense<0.000000e+00> : vector<8x126xf32>
    %430 = tpu.matmul %3, %429, %cst_50 {dimension_numbers = #tpu.dot_dimension_numbers<[1], [0], [0], [1], [0, 0, 1, 1], [], []>} : vector<8x12xbf16>, vector<12x126xbf16>, vector<8x126xf32> -> vector<8x126xf32>
    %431 = vector.extract_strided_slice %430 {offsets = [0, 0], sizes = [8, 63], strides = [1, 1]} : vector<8x126xf32> to vector<8x63xf32>
    %432 = vector.extract_strided_slice %430 {offsets = [0, 63], sizes = [8, 63], strides = [1, 1]} : vector<8x126xf32> to vector<8x63xf32>
    %433 = arith.maximumf %431, %432 : vector<8x63xf32>
    %434 = vector.extract_strided_slice %15 {offsets = [28, 0, 0], sizes = [1, 4, 126], strides = [1, 1, 1]} : vector<32x4x126xbf16> to vector<1x4x126xbf16>
    %435 = vector.extract_strided_slice %15 {offsets = [29, 0, 0], sizes = [1, 4, 126], strides = [1, 1, 1]} : vector<32x4x126xbf16> to vector<1x4x126xbf16>
    %436 = vector.extract_strided_slice %15 {offsets = [30, 0, 0], sizes = [1, 4, 126], strides = [1, 1, 1]} : vector<32x4x126xbf16> to vector<1x4x126xbf16>
    %437 = vector.shape_cast %434 : vector<1x4x126xbf16> to vector<1x1x4x126xbf16>
    %438 = vector.shape_cast %435 : vector<1x4x126xbf16> to vector<1x1x4x126xbf16>
    %439 = vector.shape_cast %436 : vector<1x4x126xbf16> to vector<1x1x4x126xbf16>
    %440 = tpu.concatenate %437, %438, %439 in 0 : vector<1x1x4x126xbf16>, vector<1x1x4x126xbf16>, vector<1x1x4x126xbf16> -> vector<3x1x4x126xbf16>
    %441 = vector.shape_cast %440 : vector<3x1x4x126xbf16> to vector<12x126xbf16>
    %cst_51 = arith.constant dense<0.000000e+00> : vector<8x126xf32>
    %442 = tpu.matmul %3, %441, %cst_51 {dimension_numbers = #tpu.dot_dimension_numbers<[1], [0], [0], [1], [0, 0, 1, 1], [], []>} : vector<8x12xbf16>, vector<12x126xbf16>, vector<8x126xf32> -> vector<8x126xf32>
    %443 = vector.extract_strided_slice %442 {offsets = [0, 0], sizes = [8, 63], strides = [1, 1]} : vector<8x126xf32> to vector<8x63xf32>
    %444 = vector.extract_strided_slice %442 {offsets = [0, 63], sizes = [8, 63], strides = [1, 1]} : vector<8x126xf32> to vector<8x63xf32>
    %445 = arith.maximumf %443, %444 : vector<8x63xf32>
    %446 = arith.maximumf %433, %445 : vector<8x63xf32>
    %447 = vector.broadcast %4 : vector<8x1xf32> to vector<8x63xf32>
    %448 = arith.addf %446, %447 : vector<8x63xf32>
    %cst_52 = arith.constant 0.000000e+00 : f32
    %449 = vector.broadcast %cst_52 : f32 to vector<8x63xf32>
    %450 = arith.maximumf %448, %449 : vector<8x63xf32>
    %451 = vector.extract_strided_slice %15 {offsets = [29, 0, 0], sizes = [1, 4, 126], strides = [1, 1, 1]} : vector<32x4x126xbf16> to vector<1x4x126xbf16>
    %452 = vector.extract_strided_slice %15 {offsets = [30, 0, 0], sizes = [1, 4, 126], strides = [1, 1, 1]} : vector<32x4x126xbf16> to vector<1x4x126xbf16>
    %453 = vector.extract_strided_slice %15 {offsets = [31, 0, 0], sizes = [1, 4, 126], strides = [1, 1, 1]} : vector<32x4x126xbf16> to vector<1x4x126xbf16>
    %454 = vector.shape_cast %451 : vector<1x4x126xbf16> to vector<1x1x4x126xbf16>
    %455 = vector.shape_cast %452 : vector<1x4x126xbf16> to vector<1x1x4x126xbf16>
    %456 = vector.shape_cast %453 : vector<1x4x126xbf16> to vector<1x1x4x126xbf16>
    %457 = tpu.concatenate %454, %455, %456 in 0 : vector<1x1x4x126xbf16>, vector<1x1x4x126xbf16>, vector<1x1x4x126xbf16> -> vector<3x1x4x126xbf16>
    %458 = vector.shape_cast %457 : vector<3x1x4x126xbf16> to vector<12x126xbf16>
    %cst_53 = arith.constant dense<0.000000e+00> : vector<8x126xf32>
    %459 = tpu.matmul %3, %458, %cst_53 {dimension_numbers = #tpu.dot_dimension_numbers<[1], [0], [0], [1], [0, 0, 1, 1], [], []>} : vector<8x12xbf16>, vector<12x126xbf16>, vector<8x126xf32> -> vector<8x126xf32>
    %460 = vector.extract_strided_slice %459 {offsets = [0, 0], sizes = [8, 63], strides = [1, 1]} : vector<8x126xf32> to vector<8x63xf32>
    %461 = vector.extract_strided_slice %459 {offsets = [0, 63], sizes = [8, 63], strides = [1, 1]} : vector<8x126xf32> to vector<8x63xf32>
    %462 = arith.maximumf %460, %461 : vector<8x63xf32>
    %463 = vector.extract_strided_slice %15 {offsets = [30, 0, 0], sizes = [1, 4, 126], strides = [1, 1, 1]} : vector<32x4x126xbf16> to vector<1x4x126xbf16>
    %464 = vector.extract_strided_slice %15 {offsets = [31, 0, 0], sizes = [1, 4, 126], strides = [1, 1, 1]} : vector<32x4x126xbf16> to vector<1x4x126xbf16>
    %465 = vector.shape_cast %463 : vector<1x4x126xbf16> to vector<1x1x4x126xbf16>
    %466 = vector.shape_cast %464 : vector<1x4x126xbf16> to vector<1x1x4x126xbf16>
    %467 = vector.shape_cast %16 : vector<1x4x126xbf16> to vector<1x1x4x126xbf16>
    %468 = tpu.concatenate %465, %466, %467 in 0 : vector<1x1x4x126xbf16>, vector<1x1x4x126xbf16>, vector<1x1x4x126xbf16> -> vector<3x1x4x126xbf16>
    %469 = vector.shape_cast %468 : vector<3x1x4x126xbf16> to vector<12x126xbf16>
    %cst_54 = arith.constant dense<0.000000e+00> : vector<8x126xf32>
    %470 = tpu.matmul %3, %469, %cst_54 {dimension_numbers = #tpu.dot_dimension_numbers<[1], [0], [0], [1], [0, 0, 1, 1], [], []>} : vector<8x12xbf16>, vector<12x126xbf16>, vector<8x126xf32> -> vector<8x126xf32>
    %471 = vector.extract_strided_slice %470 {offsets = [0, 0], sizes = [8, 63], strides = [1, 1]} : vector<8x126xf32> to vector<8x63xf32>
    %472 = vector.extract_strided_slice %470 {offsets = [0, 63], sizes = [8, 63], strides = [1, 1]} : vector<8x126xf32> to vector<8x63xf32>
    %473 = arith.maximumf %471, %472 : vector<8x63xf32>
    %474 = arith.maximumf %462, %473 : vector<8x63xf32>
    %475 = vector.broadcast %4 : vector<8x1xf32> to vector<8x63xf32>
    %476 = arith.addf %474, %475 : vector<8x63xf32>
    %cst_55 = arith.constant 0.000000e+00 : f32
    %477 = vector.broadcast %cst_55 : f32 to vector<8x63xf32>
    %478 = arith.maximumf %476, %477 : vector<8x63xf32>
    %479 = tpu.concatenate %44, %73, %102, %131, %160, %189, %218, %247, %276, %305, %334, %363, %392, %421, %450, %478 in 0 : vector<8x63xf32>, vector<8x63xf32>, vector<8x63xf32>, vector<8x63xf32>, vector<8x63xf32>, vector<8x63xf32>, vector<8x63xf32>, vector<8x63xf32>, vector<8x63xf32>, vector<8x63xf32>, vector<8x63xf32>, vector<8x63xf32>, vector<8x63xf32>, vector<8x63xf32>, vector<8x63xf32>, vector<8x63xf32> -> vector<128x63xf32>
    %480 = arith.truncf %479 : vector<128x63xf32> to vector<128x63xbf16>
    %c0_56 = arith.constant 0 : index
    %c0_57 = arith.constant 0 : index
    %481 = vector.load %arg5[%c0_56, %c0_57] : memref<63x96xbf16, #tpu.memory_space<vmem>>, vector<63x96xbf16>
    %c0_58 = arith.constant 0 : index
    %c0_59 = arith.constant 0 : index
    %482 = vector.load %arg6[%c0_58, %c0_59] : memref<16x96xbf16, #tpu.memory_space<vmem>>, vector<16x96xbf16>
    %c0_60 = arith.constant 0 : index
    %c0_61 = arith.constant 0 : index
    %483 = vector.load %arg7[%c0_60, %c0_61] : memref<16x1xf32, #tpu.memory_space<vmem>>, vector<16x1xf32>
    %cst_62 = arith.constant dense<0.000000e+00> : vector<128x96xf32>
    %484 = tpu.matmul %480, %481, %cst_62 {dimension_numbers = #tpu.dot_dimension_numbers<[1], [0], [0], [1], [0, 0, 1, 1], [], []>} : vector<128x63xbf16>, vector<63x96xbf16>, vector<128x96xf32> -> vector<128x96xf32>
    %485 = arith.truncf %484 : vector<128x96xf32> to vector<128x96xbf16>
    %486 = vector.extract_strided_slice %485 {offsets = [0, 0], sizes = [128, 32], strides = [1, 1]} : vector<128x96xbf16> to vector<128x32xbf16>
    %487 = vector.extract_strided_slice %485 {offsets = [0, 32], sizes = [128, 32], strides = [1, 1]} : vector<128x96xbf16> to vector<128x32xbf16>
    %488 = vector.extract_strided_slice %485 {offsets = [0, 64], sizes = [128, 32], strides = [1, 1]} : vector<128x96xbf16> to vector<128x32xbf16>
    %489 = vector.shape_cast %486 : vector<128x32xbf16> to vector<128x1x32xbf16>
    %490 = vector.shape_cast %487 : vector<128x32xbf16> to vector<128x1x32xbf16>
    %491 = vector.shape_cast %488 : vector<128x32xbf16> to vector<128x1x32xbf16>
    %492 = tpu.concatenate %489, %490, %491 in 1 : vector<128x1x32xbf16>, vector<128x1x32xbf16>, vector<128x1x32xbf16> -> vector<128x3x32xbf16>
    %cst_63 = arith.constant 0.000000e+00 : bf16
    %493 = vector.broadcast %cst_63 : bf16 to vector<8x3x32xbf16>
    %494 = vector.extract_strided_slice %492 {offsets = [0, 0, 0], sizes = [8, 3, 32], strides = [1, 1, 1]} : vector<128x3x32xbf16> to vector<8x3x32xbf16>
    %495 = vector.extract_strided_slice %492 {offsets = [8, 0, 0], sizes = [8, 3, 32], strides = [1, 1, 1]} : vector<128x3x32xbf16> to vector<8x3x32xbf16>
    %496 = vector.extract_strided_slice %492 {offsets = [16, 0, 0], sizes = [8, 3, 32], strides = [1, 1, 1]} : vector<128x3x32xbf16> to vector<8x3x32xbf16>
    %497 = vector.shape_cast %493 : vector<8x3x32xbf16> to vector<1x8x3x32xbf16>
    %498 = vector.shape_cast %494 : vector<8x3x32xbf16> to vector<1x8x3x32xbf16>
    %499 = vector.shape_cast %495 : vector<8x3x32xbf16> to vector<1x8x3x32xbf16>
    %500 = vector.shape_cast %496 : vector<8x3x32xbf16> to vector<1x8x3x32xbf16>
    %501 = tpu.concatenate %497, %498, %499, %500 in 0 : vector<1x8x3x32xbf16>, vector<1x8x3x32xbf16>, vector<1x8x3x32xbf16>, vector<1x8x3x32xbf16> -> vector<4x8x3x32xbf16>
    %502 = vector.shape_cast %501 : vector<4x8x3x32xbf16> to vector<96x32xbf16>
    %cst_64 = arith.constant dense<0.000000e+00> : vector<16x32xf32>
    %503 = tpu.matmul %482, %502, %cst_64 {dimension_numbers = #tpu.dot_dimension_numbers<[1], [0], [0], [1], [0, 0, 1, 1], [], []>} : vector<16x96xbf16>, vector<96x32xbf16>, vector<16x32xf32> -> vector<16x32xf32>
    %504 = vector.extract_strided_slice %503 {offsets = [0, 0], sizes = [16, 16], strides = [1, 1]} : vector<16x32xf32> to vector<16x16xf32>
    %505 = vector.extract_strided_slice %503 {offsets = [0, 16], sizes = [16, 16], strides = [1, 1]} : vector<16x32xf32> to vector<16x16xf32>
    %506 = arith.maximumf %504, %505 : vector<16x16xf32>
    %507 = vector.extract_strided_slice %492 {offsets = [8, 0, 0], sizes = [8, 3, 32], strides = [1, 1, 1]} : vector<128x3x32xbf16> to vector<8x3x32xbf16>
    %508 = vector.extract_strided_slice %492 {offsets = [16, 0, 0], sizes = [8, 3, 32], strides = [1, 1, 1]} : vector<128x3x32xbf16> to vector<8x3x32xbf16>
    %509 = vector.extract_strided_slice %492 {offsets = [24, 0, 0], sizes = [8, 3, 32], strides = [1, 1, 1]} : vector<128x3x32xbf16> to vector<8x3x32xbf16>
    %510 = vector.extract_strided_slice %492 {offsets = [32, 0, 0], sizes = [8, 3, 32], strides = [1, 1, 1]} : vector<128x3x32xbf16> to vector<8x3x32xbf16>
    %511 = vector.shape_cast %507 : vector<8x3x32xbf16> to vector<1x8x3x32xbf16>
    %512 = vector.shape_cast %508 : vector<8x3x32xbf16> to vector<1x8x3x32xbf16>
    %513 = vector.shape_cast %509 : vector<8x3x32xbf16> to vector<1x8x3x32xbf16>
    %514 = vector.shape_cast %510 : vector<8x3x32xbf16> to vector<1x8x3x32xbf16>
    %515 = tpu.concatenate %511, %512, %513, %514 in 0 : vector<1x8x3x32xbf16>, vector<1x8x3x32xbf16>, vector<1x8x3x32xbf16>, vector<1x8x3x32xbf16> -> vector<4x8x3x32xbf16>
    %516 = vector.shape_cast %515 : vector<4x8x3x32xbf16> to vector<96x32xbf16>
    %cst_65 = arith.constant dense<0.000000e+00> : vector<16x32xf32>
    %517 = tpu.matmul %482, %516, %cst_65 {dimension_numbers = #tpu.dot_dimension_numbers<[1], [0], [0], [1], [0, 0, 1, 1], [], []>} : vector<16x96xbf16>, vector<96x32xbf16>, vector<16x32xf32> -> vector<16x32xf32>
    %518 = vector.extract_strided_slice %517 {offsets = [0, 0], sizes = [16, 16], strides = [1, 1]} : vector<16x32xf32> to vector<16x16xf32>
    %519 = vector.extract_strided_slice %517 {offsets = [0, 16], sizes = [16, 16], strides = [1, 1]} : vector<16x32xf32> to vector<16x16xf32>
    %520 = arith.maximumf %518, %519 : vector<16x16xf32>
    %521 = arith.maximumf %506, %520 : vector<16x16xf32>
    %522 = vector.broadcast %483 : vector<16x1xf32> to vector<16x16xf32>
    %523 = arith.addf %521, %522 : vector<16x16xf32>
    %cst_66 = arith.constant 0.000000e+00 : f32
    %524 = vector.broadcast %cst_66 : f32 to vector<16x16xf32>
    %525 = arith.maximumf %523, %524 : vector<16x16xf32>
    %526 = vector.extract_strided_slice %492 {offsets = [24, 0, 0], sizes = [8, 3, 32], strides = [1, 1, 1]} : vector<128x3x32xbf16> to vector<8x3x32xbf16>
    %527 = vector.extract_strided_slice %492 {offsets = [32, 0, 0], sizes = [8, 3, 32], strides = [1, 1, 1]} : vector<128x3x32xbf16> to vector<8x3x32xbf16>
    %528 = vector.extract_strided_slice %492 {offsets = [40, 0, 0], sizes = [8, 3, 32], strides = [1, 1, 1]} : vector<128x3x32xbf16> to vector<8x3x32xbf16>
    %529 = vector.extract_strided_slice %492 {offsets = [48, 0, 0], sizes = [8, 3, 32], strides = [1, 1, 1]} : vector<128x3x32xbf16> to vector<8x3x32xbf16>
    %530 = vector.shape_cast %526 : vector<8x3x32xbf16> to vector<1x8x3x32xbf16>
    %531 = vector.shape_cast %527 : vector<8x3x32xbf16> to vector<1x8x3x32xbf16>
    %532 = vector.shape_cast %528 : vector<8x3x32xbf16> to vector<1x8x3x32xbf16>
    %533 = vector.shape_cast %529 : vector<8x3x32xbf16> to vector<1x8x3x32xbf16>
    %534 = tpu.concatenate %530, %531, %532, %533 in 0 : vector<1x8x3x32xbf16>, vector<1x8x3x32xbf16>, vector<1x8x3x32xbf16>, vector<1x8x3x32xbf16> -> vector<4x8x3x32xbf16>
    %535 = vector.shape_cast %534 : vector<4x8x3x32xbf16> to vector<96x32xbf16>
    %cst_67 = arith.constant dense<0.000000e+00> : vector<16x32xf32>
    %536 = tpu.matmul %482, %535, %cst_67 {dimension_numbers = #tpu.dot_dimension_numbers<[1], [0], [0], [1], [0, 0, 1, 1], [], []>} : vector<16x96xbf16>, vector<96x32xbf16>, vector<16x32xf32> -> vector<16x32xf32>
    %537 = vector.extract_strided_slice %536 {offsets = [0, 0], sizes = [16, 16], strides = [1, 1]} : vector<16x32xf32> to vector<16x16xf32>
    %538 = vector.extract_strided_slice %536 {offsets = [0, 16], sizes = [16, 16], strides = [1, 1]} : vector<16x32xf32> to vector<16x16xf32>
    %539 = arith.maximumf %537, %538 : vector<16x16xf32>
    %540 = vector.extract_strided_slice %492 {offsets = [40, 0, 0], sizes = [8, 3, 32], strides = [1, 1, 1]} : vector<128x3x32xbf16> to vector<8x3x32xbf16>
    %541 = vector.extract_strided_slice %492 {offsets = [48, 0, 0], sizes = [8, 3, 32], strides = [1, 1, 1]} : vector<128x3x32xbf16> to vector<8x3x32xbf16>
    %542 = vector.extract_strided_slice %492 {offsets = [56, 0, 0], sizes = [8, 3, 32], strides = [1, 1, 1]} : vector<128x3x32xbf16> to vector<8x3x32xbf16>
    %543 = vector.extract_strided_slice %492 {offsets = [64, 0, 0], sizes = [8, 3, 32], strides = [1, 1, 1]} : vector<128x3x32xbf16> to vector<8x3x32xbf16>
    %544 = vector.shape_cast %540 : vector<8x3x32xbf16> to vector<1x8x3x32xbf16>
    %545 = vector.shape_cast %541 : vector<8x3x32xbf16> to vector<1x8x3x32xbf16>
    %546 = vector.shape_cast %542 : vector<8x3x32xbf16> to vector<1x8x3x32xbf16>
    %547 = vector.shape_cast %543 : vector<8x3x32xbf16> to vector<1x8x3x32xbf16>
    %548 = tpu.concatenate %544, %545, %546, %547 in 0 : vector<1x8x3x32xbf16>, vector<1x8x3x32xbf16>, vector<1x8x3x32xbf16>, vector<1x8x3x32xbf16> -> vector<4x8x3x32xbf16>
    %549 = vector.shape_cast %548 : vector<4x8x3x32xbf16> to vector<96x32xbf16>
    %cst_68 = arith.constant dense<0.000000e+00> : vector<16x32xf32>
    %550 = tpu.matmul %482, %549, %cst_68 {dimension_numbers = #tpu.dot_dimension_numbers<[1], [0], [0], [1], [0, 0, 1, 1], [], []>} : vector<16x96xbf16>, vector<96x32xbf16>, vector<16x32xf32> -> vector<16x32xf32>
    %551 = vector.extract_strided_slice %550 {offsets = [0, 0], sizes = [16, 16], strides = [1, 1]} : vector<16x32xf32> to vector<16x16xf32>
    %552 = vector.extract_strided_slice %550 {offsets = [0, 16], sizes = [16, 16], strides = [1, 1]} : vector<16x32xf32> to vector<16x16xf32>
    %553 = arith.maximumf %551, %552 : vector<16x16xf32>
    %554 = arith.maximumf %539, %553 : vector<16x16xf32>
    %555 = vector.broadcast %483 : vector<16x1xf32> to vector<16x16xf32>
    %556 = arith.addf %554, %555 : vector<16x16xf32>
    %cst_69 = arith.constant 0.000000e+00 : f32
    %557 = vector.broadcast %cst_69 : f32 to vector<16x16xf32>
    %558 = arith.maximumf %556, %557 : vector<16x16xf32>
    %559 = vector.extract_strided_slice %492 {offsets = [56, 0, 0], sizes = [8, 3, 32], strides = [1, 1, 1]} : vector<128x3x32xbf16> to vector<8x3x32xbf16>
    %560 = vector.extract_strided_slice %492 {offsets = [64, 0, 0], sizes = [8, 3, 32], strides = [1, 1, 1]} : vector<128x3x32xbf16> to vector<8x3x32xbf16>
    %561 = vector.extract_strided_slice %492 {offsets = [72, 0, 0], sizes = [8, 3, 32], strides = [1, 1, 1]} : vector<128x3x32xbf16> to vector<8x3x32xbf16>
    %562 = vector.extract_strided_slice %492 {offsets = [80, 0, 0], sizes = [8, 3, 32], strides = [1, 1, 1]} : vector<128x3x32xbf16> to vector<8x3x32xbf16>
    %563 = vector.shape_cast %559 : vector<8x3x32xbf16> to vector<1x8x3x32xbf16>
    %564 = vector.shape_cast %560 : vector<8x3x32xbf16> to vector<1x8x3x32xbf16>
    %565 = vector.shape_cast %561 : vector<8x3x32xbf16> to vector<1x8x3x32xbf16>
    %566 = vector.shape_cast %562 : vector<8x3x32xbf16> to vector<1x8x3x32xbf16>
    %567 = tpu.concatenate %563, %564, %565, %566 in 0 : vector<1x8x3x32xbf16>, vector<1x8x3x32xbf16>, vector<1x8x3x32xbf16>, vector<1x8x3x32xbf16> -> vector<4x8x3x32xbf16>
    %568 = vector.shape_cast %567 : vector<4x8x3x32xbf16> to vector<96x32xbf16>
    %cst_70 = arith.constant dense<0.000000e+00> : vector<16x32xf32>
    %569 = tpu.matmul %482, %568, %cst_70 {dimension_numbers = #tpu.dot_dimension_numbers<[1], [0], [0], [1], [0, 0, 1, 1], [], []>} : vector<16x96xbf16>, vector<96x32xbf16>, vector<16x32xf32> -> vector<16x32xf32>
    %570 = vector.extract_strided_slice %569 {offsets = [0, 0], sizes = [16, 16], strides = [1, 1]} : vector<16x32xf32> to vector<16x16xf32>
    %571 = vector.extract_strided_slice %569 {offsets = [0, 16], sizes = [16, 16], strides = [1, 1]} : vector<16x32xf32> to vector<16x16xf32>
    %572 = arith.maximumf %570, %571 : vector<16x16xf32>
    %573 = vector.extract_strided_slice %492 {offsets = [72, 0, 0], sizes = [8, 3, 32], strides = [1, 1, 1]} : vector<128x3x32xbf16> to vector<8x3x32xbf16>
    %574 = vector.extract_strided_slice %492 {offsets = [80, 0, 0], sizes = [8, 3, 32], strides = [1, 1, 1]} : vector<128x3x32xbf16> to vector<8x3x32xbf16>
    %575 = vector.extract_strided_slice %492 {offsets = [88, 0, 0], sizes = [8, 3, 32], strides = [1, 1, 1]} : vector<128x3x32xbf16> to vector<8x3x32xbf16>
    %576 = vector.extract_strided_slice %492 {offsets = [96, 0, 0], sizes = [8, 3, 32], strides = [1, 1, 1]} : vector<128x3x32xbf16> to vector<8x3x32xbf16>
    %577 = vector.shape_cast %573 : vector<8x3x32xbf16> to vector<1x8x3x32xbf16>
    %578 = vector.shape_cast %574 : vector<8x3x32xbf16> to vector<1x8x3x32xbf16>
    %579 = vector.shape_cast %575 : vector<8x3x32xbf16> to vector<1x8x3x32xbf16>
    %580 = vector.shape_cast %576 : vector<8x3x32xbf16> to vector<1x8x3x32xbf16>
    %581 = tpu.concatenate %577, %578, %579, %580 in 0 : vector<1x8x3x32xbf16>, vector<1x8x3x32xbf16>, vector<1x8x3x32xbf16>, vector<1x8x3x32xbf16> -> vector<4x8x3x32xbf16>
    %582 = vector.shape_cast %581 : vector<4x8x3x32xbf16> to vector<96x32xbf16>
    %cst_71 = arith.constant dense<0.000000e+00> : vector<16x32xf32>
    %583 = tpu.matmul %482, %582, %cst_71 {dimension_numbers = #tpu.dot_dimension_numbers<[1], [0], [0], [1], [0, 0, 1, 1], [], []>} : vector<16x96xbf16>, vector<96x32xbf16>, vector<16x32xf32> -> vector<16x32xf32>
    %584 = vector.extract_strided_slice %583 {offsets = [0, 0], sizes = [16, 16], strides = [1, 1]} : vector<16x32xf32> to vector<16x16xf32>
    %585 = vector.extract_strided_slice %583 {offsets = [0, 16], sizes = [16, 16], strides = [1, 1]} : vector<16x32xf32> to vector<16x16xf32>
    %586 = arith.maximumf %584, %585 : vector<16x16xf32>
    %587 = arith.maximumf %572, %586 : vector<16x16xf32>
    %588 = vector.broadcast %483 : vector<16x1xf32> to vector<16x16xf32>
    %589 = arith.addf %587, %588 : vector<16x16xf32>
    %cst_72 = arith.constant 0.000000e+00 : f32
    %590 = vector.broadcast %cst_72 : f32 to vector<16x16xf32>
    %591 = arith.maximumf %589, %590 : vector<16x16xf32>
    %592 = vector.extract_strided_slice %492 {offsets = [88, 0, 0], sizes = [8, 3, 32], strides = [1, 1, 1]} : vector<128x3x32xbf16> to vector<8x3x32xbf16>
    %593 = vector.extract_strided_slice %492 {offsets = [96, 0, 0], sizes = [8, 3, 32], strides = [1, 1, 1]} : vector<128x3x32xbf16> to vector<8x3x32xbf16>
    %594 = vector.extract_strided_slice %492 {offsets = [104, 0, 0], sizes = [8, 3, 32], strides = [1, 1, 1]} : vector<128x3x32xbf16> to vector<8x3x32xbf16>
    %595 = vector.extract_strided_slice %492 {offsets = [112, 0, 0], sizes = [8, 3, 32], strides = [1, 1, 1]} : vector<128x3x32xbf16> to vector<8x3x32xbf16>
    %596 = vector.shape_cast %592 : vector<8x3x32xbf16> to vector<1x8x3x32xbf16>
    %597 = vector.shape_cast %593 : vector<8x3x32xbf16> to vector<1x8x3x32xbf16>
    %598 = vector.shape_cast %594 : vector<8x3x32xbf16> to vector<1x8x3x32xbf16>
    %599 = vector.shape_cast %595 : vector<8x3x32xbf16> to vector<1x8x3x32xbf16>
    %600 = tpu.concatenate %596, %597, %598, %599 in 0 : vector<1x8x3x32xbf16>, vector<1x8x3x32xbf16>, vector<1x8x3x32xbf16>, vector<1x8x3x32xbf16> -> vector<4x8x3x32xbf16>
    %601 = vector.shape_cast %600 : vector<4x8x3x32xbf16> to vector<96x32xbf16>
    %cst_73 = arith.constant dense<0.000000e+00> : vector<16x32xf32>
    %602 = tpu.matmul %482, %601, %cst_73 {dimension_numbers = #tpu.dot_dimension_numbers<[1], [0], [0], [1], [0, 0, 1, 1], [], []>} : vector<16x96xbf16>, vector<96x32xbf16>, vector<16x32xf32> -> vector<16x32xf32>
    %603 = vector.extract_strided_slice %602 {offsets = [0, 0], sizes = [16, 16], strides = [1, 1]} : vector<16x32xf32> to vector<16x16xf32>
    %604 = vector.extract_strided_slice %602 {offsets = [0, 16], sizes = [16, 16], strides = [1, 1]} : vector<16x32xf32> to vector<16x16xf32>
    %605 = arith.maximumf %603, %604 : vector<16x16xf32>
    %606 = vector.extract_strided_slice %492 {offsets = [104, 0, 0], sizes = [8, 3, 32], strides = [1, 1, 1]} : vector<128x3x32xbf16> to vector<8x3x32xbf16>
    %607 = vector.extract_strided_slice %492 {offsets = [112, 0, 0], sizes = [8, 3, 32], strides = [1, 1, 1]} : vector<128x3x32xbf16> to vector<8x3x32xbf16>
    %608 = vector.extract_strided_slice %492 {offsets = [120, 0, 0], sizes = [8, 3, 32], strides = [1, 1, 1]} : vector<128x3x32xbf16> to vector<8x3x32xbf16>
    %609 = vector.shape_cast %606 : vector<8x3x32xbf16> to vector<1x8x3x32xbf16>
    %610 = vector.shape_cast %607 : vector<8x3x32xbf16> to vector<1x8x3x32xbf16>
    %611 = vector.shape_cast %608 : vector<8x3x32xbf16> to vector<1x8x3x32xbf16>
    %612 = vector.shape_cast %493 : vector<8x3x32xbf16> to vector<1x8x3x32xbf16>
    %613 = tpu.concatenate %609, %610, %611, %612 in 0 : vector<1x8x3x32xbf16>, vector<1x8x3x32xbf16>, vector<1x8x3x32xbf16>, vector<1x8x3x32xbf16> -> vector<4x8x3x32xbf16>
    %614 = vector.shape_cast %613 : vector<4x8x3x32xbf16> to vector<96x32xbf16>
    %cst_74 = arith.constant dense<0.000000e+00> : vector<16x32xf32>
    %615 = tpu.matmul %482, %614, %cst_74 {dimension_numbers = #tpu.dot_dimension_numbers<[1], [0], [0], [1], [0, 0, 1, 1], [], []>} : vector<16x96xbf16>, vector<96x32xbf16>, vector<16x32xf32> -> vector<16x32xf32>
    %616 = vector.extract_strided_slice %615 {offsets = [0, 0], sizes = [16, 16], strides = [1, 1]} : vector<16x32xf32> to vector<16x16xf32>
    %617 = vector.extract_strided_slice %615 {offsets = [0, 16], sizes = [16, 16], strides = [1, 1]} : vector<16x32xf32> to vector<16x16xf32>
    %618 = arith.maximumf %616, %617 : vector<16x16xf32>
    %619 = arith.maximumf %605, %618 : vector<16x16xf32>
    %620 = vector.broadcast %483 : vector<16x1xf32> to vector<16x16xf32>
    %621 = arith.addf %619, %620 : vector<16x16xf32>
    %cst_75 = arith.constant 0.000000e+00 : f32
    %622 = vector.broadcast %cst_75 : f32 to vector<16x16xf32>
    %623 = arith.maximumf %621, %622 : vector<16x16xf32>
    %624 = tpu.concatenate %525, %558, %591, %623 in 0 : vector<16x16xf32>, vector<16x16xf32>, vector<16x16xf32>, vector<16x16xf32> -> vector<64x16xf32>
    %625 = arith.truncf %624 : vector<64x16xf32> to vector<64x16xbf16>
    %c0_76 = arith.constant 0 : index
    %c0_77 = arith.constant 0 : index
    %626 = vector.load %arg8[%c0_76, %c0_77] : memref<16x32xbf16, #tpu.memory_space<vmem>>, vector<16x32xbf16>
    %c0_78 = arith.constant 0 : index
    %c0_79 = arith.constant 0 : index
    %627 = vector.load %arg9[%c0_78, %c0_79] : memref<32x192xbf16, #tpu.memory_space<vmem>>, vector<32x192xbf16>
    %c0_80 = arith.constant 0 : index
    %c0_81 = arith.constant 0 : index
    %628 = vector.load %arg10[%c0_80, %c0_81] : memref<32x1xf32, #tpu.memory_space<vmem>>, vector<32x1xf32>
    %cst_82 = arith.constant dense<0.000000e+00> : vector<64x32xf32>
    %629 = tpu.matmul %625, %626, %cst_82 {dimension_numbers = #tpu.dot_dimension_numbers<[1], [0], [0], [1], [0, 0, 1, 1], [], []>} : vector<64x16xbf16>, vector<16x32xbf16>, vector<64x32xf32> -> vector<64x32xf32>
    %630 = arith.truncf %629 : vector<64x32xf32> to vector<64x32xbf16>
    %631 = vector.extract_strided_slice %630 {offsets = [0, 0], sizes = [64, 8], strides = [1, 1]} : vector<64x32xbf16> to vector<64x8xbf16>
    %632 = vector.extract_strided_slice %630 {offsets = [0, 8], sizes = [64, 8], strides = [1, 1]} : vector<64x32xbf16> to vector<64x8xbf16>
    %633 = vector.extract_strided_slice %630 {offsets = [0, 16], sizes = [64, 8], strides = [1, 1]} : vector<64x32xbf16> to vector<64x8xbf16>
    %634 = vector.extract_strided_slice %630 {offsets = [0, 24], sizes = [64, 8], strides = [1, 1]} : vector<64x32xbf16> to vector<64x8xbf16>
    %635 = vector.shape_cast %631 : vector<64x8xbf16> to vector<64x1x8xbf16>
    %636 = vector.shape_cast %632 : vector<64x8xbf16> to vector<64x1x8xbf16>
    %637 = vector.shape_cast %633 : vector<64x8xbf16> to vector<64x1x8xbf16>
    %638 = vector.shape_cast %634 : vector<64x8xbf16> to vector<64x1x8xbf16>
    %639 = tpu.concatenate %635, %636, %637, %638 in 1 : vector<64x1x8xbf16>, vector<64x1x8xbf16>, vector<64x1x8xbf16>, vector<64x1x8xbf16> -> vector<64x4x8xbf16>
    %cst_83 = arith.constant 0.000000e+00 : bf16
    %640 = vector.broadcast %cst_83 : bf16 to vector<16x4x8xbf16>
    %641 = vector.extract_strided_slice %639 {offsets = [0, 0, 0], sizes = [16, 4, 8], strides = [1, 1, 1]} : vector<64x4x8xbf16> to vector<16x4x8xbf16>
    %642 = vector.extract_strided_slice %639 {offsets = [16, 0, 0], sizes = [16, 4, 8], strides = [1, 1, 1]} : vector<64x4x8xbf16> to vector<16x4x8xbf16>
    %643 = vector.shape_cast %640 : vector<16x4x8xbf16> to vector<1x16x4x8xbf16>
    %644 = vector.shape_cast %641 : vector<16x4x8xbf16> to vector<1x16x4x8xbf16>
    %645 = vector.shape_cast %642 : vector<16x4x8xbf16> to vector<1x16x4x8xbf16>
    %646 = tpu.concatenate %643, %644, %645 in 0 : vector<1x16x4x8xbf16>, vector<1x16x4x8xbf16>, vector<1x16x4x8xbf16> -> vector<3x16x4x8xbf16>
    %647 = vector.shape_cast %646 : vector<3x16x4x8xbf16> to vector<192x8xbf16>
    %cst_84 = arith.constant dense<0.000000e+00> : vector<32x8xf32>
    %648 = tpu.matmul %627, %647, %cst_84 {dimension_numbers = #tpu.dot_dimension_numbers<[1], [0], [0], [1], [0, 0, 1, 1], [], []>} : vector<32x192xbf16>, vector<192x8xbf16>, vector<32x8xf32> -> vector<32x8xf32>
    %649 = vector.extract_strided_slice %648 {offsets = [0, 0], sizes = [32, 4], strides = [1, 1]} : vector<32x8xf32> to vector<32x4xf32>
    %650 = vector.extract_strided_slice %648 {offsets = [0, 4], sizes = [32, 4], strides = [1, 1]} : vector<32x8xf32> to vector<32x4xf32>
    %651 = arith.maximumf %649, %650 : vector<32x4xf32>
    %652 = vector.extract_strided_slice %639 {offsets = [0, 0, 0], sizes = [16, 4, 8], strides = [1, 1, 1]} : vector<64x4x8xbf16> to vector<16x4x8xbf16>
    %653 = vector.extract_strided_slice %639 {offsets = [16, 0, 0], sizes = [16, 4, 8], strides = [1, 1, 1]} : vector<64x4x8xbf16> to vector<16x4x8xbf16>
    %654 = vector.extract_strided_slice %639 {offsets = [32, 0, 0], sizes = [16, 4, 8], strides = [1, 1, 1]} : vector<64x4x8xbf16> to vector<16x4x8xbf16>
    %655 = vector.shape_cast %652 : vector<16x4x8xbf16> to vector<1x16x4x8xbf16>
    %656 = vector.shape_cast %653 : vector<16x4x8xbf16> to vector<1x16x4x8xbf16>
    %657 = vector.shape_cast %654 : vector<16x4x8xbf16> to vector<1x16x4x8xbf16>
    %658 = tpu.concatenate %655, %656, %657 in 0 : vector<1x16x4x8xbf16>, vector<1x16x4x8xbf16>, vector<1x16x4x8xbf16> -> vector<3x16x4x8xbf16>
    %659 = vector.shape_cast %658 : vector<3x16x4x8xbf16> to vector<192x8xbf16>
    %cst_85 = arith.constant dense<0.000000e+00> : vector<32x8xf32>
    %660 = tpu.matmul %627, %659, %cst_85 {dimension_numbers = #tpu.dot_dimension_numbers<[1], [0], [0], [1], [0, 0, 1, 1], [], []>} : vector<32x192xbf16>, vector<192x8xbf16>, vector<32x8xf32> -> vector<32x8xf32>
    %661 = vector.extract_strided_slice %660 {offsets = [0, 0], sizes = [32, 4], strides = [1, 1]} : vector<32x8xf32> to vector<32x4xf32>
    %662 = vector.extract_strided_slice %660 {offsets = [0, 4], sizes = [32, 4], strides = [1, 1]} : vector<32x8xf32> to vector<32x4xf32>
    %663 = arith.maximumf %661, %662 : vector<32x4xf32>
    %664 = arith.maximumf %651, %663 : vector<32x4xf32>
    %665 = vector.broadcast %628 : vector<32x1xf32> to vector<32x4xf32>
    %666 = arith.addf %664, %665 : vector<32x4xf32>
    %cst_86 = arith.constant 0.000000e+00 : f32
    %667 = vector.broadcast %cst_86 : f32 to vector<32x4xf32>
    %668 = arith.maximumf %666, %667 : vector<32x4xf32>
    %669 = vector.extract_strided_slice %639 {offsets = [16, 0, 0], sizes = [16, 4, 8], strides = [1, 1, 1]} : vector<64x4x8xbf16> to vector<16x4x8xbf16>
    %670 = vector.extract_strided_slice %639 {offsets = [32, 0, 0], sizes = [16, 4, 8], strides = [1, 1, 1]} : vector<64x4x8xbf16> to vector<16x4x8xbf16>
    %671 = vector.extract_strided_slice %639 {offsets = [48, 0, 0], sizes = [16, 4, 8], strides = [1, 1, 1]} : vector<64x4x8xbf16> to vector<16x4x8xbf16>
    %672 = vector.shape_cast %669 : vector<16x4x8xbf16> to vector<1x16x4x8xbf16>
    %673 = vector.shape_cast %670 : vector<16x4x8xbf16> to vector<1x16x4x8xbf16>
    %674 = vector.shape_cast %671 : vector<16x4x8xbf16> to vector<1x16x4x8xbf16>
    %675 = tpu.concatenate %672, %673, %674 in 0 : vector<1x16x4x8xbf16>, vector<1x16x4x8xbf16>, vector<1x16x4x8xbf16> -> vector<3x16x4x8xbf16>
    %676 = vector.shape_cast %675 : vector<3x16x4x8xbf16> to vector<192x8xbf16>
    %cst_87 = arith.constant dense<0.000000e+00> : vector<32x8xf32>
    %677 = tpu.matmul %627, %676, %cst_87 {dimension_numbers = #tpu.dot_dimension_numbers<[1], [0], [0], [1], [0, 0, 1, 1], [], []>} : vector<32x192xbf16>, vector<192x8xbf16>, vector<32x8xf32> -> vector<32x8xf32>
    %678 = vector.extract_strided_slice %677 {offsets = [0, 0], sizes = [32, 4], strides = [1, 1]} : vector<32x8xf32> to vector<32x4xf32>
    %679 = vector.extract_strided_slice %677 {offsets = [0, 4], sizes = [32, 4], strides = [1, 1]} : vector<32x8xf32> to vector<32x4xf32>
    %680 = arith.maximumf %678, %679 : vector<32x4xf32>
    %681 = vector.extract_strided_slice %639 {offsets = [32, 0, 0], sizes = [16, 4, 8], strides = [1, 1, 1]} : vector<64x4x8xbf16> to vector<16x4x8xbf16>
    %682 = vector.extract_strided_slice %639 {offsets = [48, 0, 0], sizes = [16, 4, 8], strides = [1, 1, 1]} : vector<64x4x8xbf16> to vector<16x4x8xbf16>
    %683 = vector.shape_cast %681 : vector<16x4x8xbf16> to vector<1x16x4x8xbf16>
    %684 = vector.shape_cast %682 : vector<16x4x8xbf16> to vector<1x16x4x8xbf16>
    %685 = vector.shape_cast %640 : vector<16x4x8xbf16> to vector<1x16x4x8xbf16>
    %686 = tpu.concatenate %683, %684, %685 in 0 : vector<1x16x4x8xbf16>, vector<1x16x4x8xbf16>, vector<1x16x4x8xbf16> -> vector<3x16x4x8xbf16>
    %687 = vector.shape_cast %686 : vector<3x16x4x8xbf16> to vector<192x8xbf16>
    %cst_88 = arith.constant dense<0.000000e+00> : vector<32x8xf32>
    %688 = tpu.matmul %627, %687, %cst_88 {dimension_numbers = #tpu.dot_dimension_numbers<[1], [0], [0], [1], [0, 0, 1, 1], [], []>} : vector<32x192xbf16>, vector<192x8xbf16>, vector<32x8xf32> -> vector<32x8xf32>
    %689 = vector.extract_strided_slice %688 {offsets = [0, 0], sizes = [32, 4], strides = [1, 1]} : vector<32x8xf32> to vector<32x4xf32>
    %690 = vector.extract_strided_slice %688 {offsets = [0, 4], sizes = [32, 4], strides = [1, 1]} : vector<32x8xf32> to vector<32x4xf32>
    %691 = arith.maximumf %689, %690 : vector<32x4xf32>
    %692 = arith.maximumf %680, %691 : vector<32x4xf32>
    %693 = vector.broadcast %628 : vector<32x1xf32> to vector<32x4xf32>
    %694 = arith.addf %692, %693 : vector<32x4xf32>
    %cst_89 = arith.constant 0.000000e+00 : f32
    %695 = vector.broadcast %cst_89 : f32 to vector<32x4xf32>
    %696 = arith.maximumf %694, %695 : vector<32x4xf32>
    %697 = tpu.concatenate %668, %696 in 0 : vector<32x4xf32>, vector<32x4xf32> -> vector<64x4xf32>
    %698 = vector.extract_strided_slice %697 {offsets = [0, 0], sizes = [64, 1], strides = [1, 1]} : vector<64x4xf32> to vector<64x1xf32>
    %699 = vector.extract_strided_slice %697 {offsets = [0, 1], sizes = [64, 1], strides = [1, 1]} : vector<64x4xf32> to vector<64x1xf32>
    %700 = vector.extract_strided_slice %697 {offsets = [0, 2], sizes = [64, 1], strides = [1, 1]} : vector<64x4xf32> to vector<64x1xf32>
    %701 = vector.extract_strided_slice %697 {offsets = [0, 3], sizes = [64, 1], strides = [1, 1]} : vector<64x4xf32> to vector<64x1xf32>
    %702 = tpu.concatenate %698, %699, %700, %701 in 0 : vector<64x1xf32>, vector<64x1xf32>, vector<64x1xf32>, vector<64x1xf32> -> vector<256x1xf32>
    %c0_90 = arith.constant 0 : index
    %c0_91 = arith.constant 0 : index
    %703 = vector.load %arg11[%c0_90, %c0_91] : memref<64x256xf32, #tpu.memory_space<vmem>>, vector<64x256xf32>
    %cst_92 = arith.constant dense<0.000000e+00> : vector<64x1xf32>
    %704 = tpu.matmul %703, %702, %cst_92 {dimension_numbers = #tpu.dot_dimension_numbers<[1], [0], [0], [1], [0, 0, 1, 1], [], []>} : vector<64x256xf32>, vector<256x1xf32>, vector<64x1xf32> -> vector<64x1xf32>
    %c0_93 = arith.constant 0 : index
    %c0_94 = arith.constant 0 : index
    %705 = vector.load %arg12[%c0_93, %c0_94] : memref<64x1xf32, #tpu.memory_space<vmem>>, vector<64x1xf32>
    %706 = arith.addf %704, %705 : vector<64x1xf32>
    %c0_95 = arith.constant 0 : index
    %c0_96 = arith.constant 0 : index
    %707 = vector.load %arg13[%c0_95, %c0_96] : memref<3x64xf32, #tpu.memory_space<vmem>>, vector<3x64xf32>
    %cst_97 = arith.constant dense<0.000000e+00> : vector<3x1xf32>
    %708 = tpu.matmul %707, %706, %cst_97 {dimension_numbers = #tpu.dot_dimension_numbers<[1], [0], [0], [1], [0, 0, 1, 1], [], []>} : vector<3x64xf32>, vector<64x1xf32>, vector<3x1xf32> -> vector<3x1xf32>
    %c0_98 = arith.constant 0 : index
    %c0_99 = arith.constant 0 : index
    %709 = vector.load %arg14[%c0_98, %c0_99] : memref<3x1xf32, #tpu.memory_space<vmem>>, vector<3x1xf32>
    %710 = arith.addf %708, %709 : vector<3x1xf32>
    %cst_100 = arith.constant dense<0xFF800000> : vector<1xf32>
    %711 = vector.multi_reduction <maximumf>, %710, %cst_100 [0] : vector<3x1xf32> to vector<1xf32>
    %712 = vector.shape_cast %711 : vector<1xf32> to vector<1x1xf32>
    %713 = vector.broadcast %712 : vector<1x1xf32> to vector<3x1xf32>
    %714 = arith.subf %710, %713 : vector<3x1xf32>
    %715 = math.exp %714 : vector<3x1xf32>
    %cst_101 = arith.constant dense<0.000000e+00> : vector<1xf32>
    %716 = vector.multi_reduction <add>, %715, %cst_101 [0] : vector<3x1xf32> to vector<1xf32>
    %717 = vector.shape_cast %716 : vector<1xf32> to vector<1x1xf32>
    %718 = vector.broadcast %717 : vector<1x1xf32> to vector<3x1xf32>
    %719 = arith.divf %715, %718 : vector<3x1xf32>
    %c0_102 = arith.constant 0 : index
    %c0_103 = arith.constant 0 : index
    %720 = vector.load %arg15[%c0_102, %c0_103] : memref<3x1xf32, #tpu.memory_space<vmem>>, vector<3x1xf32>
    tpu.vector_store %arg15[%c0_102, %c0_103], %719 {strides = array<i32>} : memref<3x1xf32, #tpu.memory_space<vmem>>, vector<3x1xf32>,
    return
  }
  func.func @transform_0(%arg0: i32) -> (i32, i32) {
    %c0_i32 = arith.constant 0 : i32
    %c0_i32_0 = arith.constant 0 : i32
    %c0_i32_1 = arith.constant 0 : i32
    return %c0_i32, %c0_i32_0 : i32, i32
  }
  func.func @transform_1(%arg0: i32) -> (i32, i32) {
    %c0_i32 = arith.constant 0 : i32
    %c0_i32_0 = arith.constant 0 : i32
    %c0_i32_1 = arith.constant 0 : i32
    return %c0_i32, %c0_i32_0 : i32, i32
  }
  func.func @transform_2(%arg0: i32) -> (i32, i32) {
    %c0_i32 = arith.constant 0 : i32
    %c0_i32_0 = arith.constant 0 : i32
    %c0_i32_1 = arith.constant 0 : i32
    return %c0_i32, %c0_i32_0 : i32, i32
  }
  func.func @transform_3(%arg0: i32) -> (i32, i32) {
    %c0_i32 = arith.constant 0 : i32
    %c0_i32_0 = arith.constant 0 : i32
    %c0_i32_1 = arith.constant 0 : i32
    return %c0_i32, %c0_i32_0 : i32, i32
  }
  func.func @transform_4(%arg0: i32) -> (i32, i32) {
    %c0_i32 = arith.constant 0 : i32
    %c0_i32_0 = arith.constant 0 : i32
    %c0_i32_1 = arith.constant 0 : i32
    return %c0_i32, %c0_i32_0 : i32, i32
  }
  func.func @transform_5(%arg0: i32) -> (i32, i32) {
    %c0_i32 = arith.constant 0 : i32
    %c0_i32_0 = arith.constant 0 : i32
    %c0_i32_1 = arith.constant 0 : i32
    return %c0_i32, %c0_i32_0 : i32, i32
  }
  func.func @transform_6(%arg0: i32) -> (i32, i32) {
    %c0_i32 = arith.constant 0 : i32
    %c0_i32_0 = arith.constant 0 : i32
    %c0_i32_1 = arith.constant 0 : i32
    return %c0_i32, %c0_i32_0 : i32, i32
  }
  func.func @transform_7(%arg0: i32) -> (i32, i32) {
    %c0_i32 = arith.constant 0 : i32
    %c0_i32_0 = arith.constant 0 : i32
    %c0_i32_1 = arith.constant 0 : i32
    return %c0_i32, %c0_i32_0 : i32, i32
  }
  func.func @transform_8(%arg0: i32) -> (i32, i32) {
    %c0_i32 = arith.constant 0 : i32
    %c0_i32_0 = arith.constant 0 : i32
    %c0_i32_1 = arith.constant 0 : i32
    return %c0_i32, %c0_i32_0 : i32, i32
  }
  func.func @transform_9(%arg0: i32) -> (i32, i32) {
    %c0_i32 = arith.constant 0 : i32
    %c0_i32_0 = arith.constant 0 : i32
    %c0_i32_1 = arith.constant 0 : i32
    return %c0_i32, %c0_i32_0 : i32, i32
  }
  func.func @transform_10(%arg0: i32) -> (i32, i32) {
    %c0_i32 = arith.constant 0 : i32
    %c0_i32_0 = arith.constant 0 : i32
    %c0_i32_1 = arith.constant 0 : i32
    return %c0_i32, %c0_i32_0 : i32, i32
  }
  func.func @transform_11(%arg0: i32) -> (i32, i32) {
    %c0_i32 = arith.constant 0 : i32
    %c0_i32_0 = arith.constant 0 : i32
    %c0_i32_1 = arith.constant 0 : i32
    return %c0_i32, %c0_i32_0 : i32, i32
  }
  func.func @transform_12(%arg0: i32) -> (i32, i32) {
    %c0_i32 = arith.constant 0 : i32
    %c0_i32_0 = arith.constant 0 : i32
    %c0_i32_1 = arith.constant 0 : i32
    return %c0_i32, %c0_i32_0 : i32, i32
  }
  func.func @transform_13(%arg0: i32) -> (i32, i32) {
    %c0_i32 = arith.constant 0 : i32
    %c0_i32_0 = arith.constant 0 : i32
    %c0_i32_1 = arith.constant 0 : i32
    return %c0_i32, %c0_i32_0 : i32, i32
  }
  func.func @transform_14(%arg0: i32) -> (i32, i32) {
    %c0_i32 = arith.constant 0 : i32
    %c0_i32_0 = arith.constant 0 : i32
    %c0_i32_1 = arith.constant 0 : i32
    return %c0_i32, %c0_i32_0 : i32, i32
  }
}

</mosaic_0001>

<llo_original>
// kernel: wave_lead_conv_forward.1
$region0: #{wave_lead_conv_forward.1}
  #allocation0 [shape = 'u32[]', space=smem, size = 0x4, offset = 0x4, fixed_abs, tag = 'smem constant byte address 0x4 - core index']
  #allocation1 [shape = 'u32[72,128]{1,0:T(1,128)}', space=vmem, size = 0x9000, scoped, tag = 'internal scratch']
  %s0 = inlined_call_operand.vmem [shape: f32[32,250], index: 0, kind: input, shape index: {}]
  %s1 = inlined_call_operand.vmem [shape: bf16[250,504], index: 1, kind: input, shape index: {}]
  %s2 = inlined_call_operand.vmem [shape: bf16[8,12], index: 2, kind: input, shape index: {}]
  %s3 = inlined_call_operand.vmem [shape: f32[8,1], index: 3, kind: input, shape index: {}]
  %s4 = inlined_call_operand.vmem [shape: bf16[63,96], index: 4, kind: input, shape index: {}]
  %s5 = inlined_call_operand.vmem [shape: bf16[16,96], index: 5, kind: input, shape index: {}]
  %s6 = inlined_call_operand.vmem [shape: f32[16,1], index: 6, kind: input, shape index: {}]
  %s7 = inlined_call_operand.vmem [shape: bf16[16,32], index: 7, kind: input, shape index: {}]
  %s8 = inlined_call_operand.vmem [shape: bf16[32,192], index: 8, kind: input, shape index: {}]
  %s9 = inlined_call_operand.vmem [shape: f32[32,1], index: 9, kind: input, shape index: {}]
  %s10 = inlined_call_operand.vmem [shape: f32[64,256], index: 10, kind: input, shape index: {}]
  %s11 = inlined_call_operand.vmem [shape: f32[64,1], index: 11, kind: input, shape index: {}]
  %s12 = inlined_call_operand.vmem [shape: f32[3,64], index: 12, kind: input, shape index: {}]
  %s13 = inlined_call_operand.vmem [shape: f32[3,1], index: 13, kind: input, shape index: {}]
  %s14 = inlined_call_operand.vmem [shape: f32[3,1], index: 14, kind: output, shape index: {}]
  %s15 = sld [smem:[#allocation0]]
  $region66: #{wave_lead_conv_forward.1} parent=0
    _
  %s17 = ssub.s32 1, %s15
  %s18 = scalar_select 0, %s17, %s15
  // Predicated region
  $region2: #{wave_lead_conv_forward.1} parent=0 // pred_check
    _
  $region3: #{wave_lead_conv_forward.1} parent=0 // pred_check_branch
    %20 = sbr.rel (0) target = $region5
  $region4: #{wave_lead_conv_forward.1} parent=0 // pred_region
    _
  $region5: #{wave_lead_conv_forward.1} parent=0 // pred_fallthru
    _
  // Predicated region
  $region6: #{wave_lead_conv_forward.1} parent=0 // pred_check
    _
  $region7: #{wave_lead_conv_forward.1} parent=0 // pred_check_branch
    %22 = sbr.rel (0) target = $region9
  $region8: #{wave_lead_conv_forward.1} parent=0 // pred_region
    _
  $region9: #{wave_lead_conv_forward.1} parent=0 // pred_fallthru
    _
  // Predicated region
  $region10: #{wave_lead_conv_forward.1} parent=0 // pred_check
    _
  $region11: #{wave_lead_conv_forward.1} parent=0 // pred_check_branch
    %24 = sbr.rel (0) target = $region13
  $region12: #{wave_lead_conv_forward.1} parent=0 // pred_region
    _
  $region13: #{wave_lead_conv_forward.1} parent=0 // pred_fallthru
    _
  // Predicated region
  $region14: #{wave_lead_conv_forward.1} parent=0 // pred_check
    _
  $region15: #{wave_lead_conv_forward.1} parent=0 // pred_check_branch
    %26 = sbr.rel (0) target = $region17
  $region16: #{wave_lead_conv_forward.1} parent=0 // pred_region
    _
  $region17: #{wave_lead_conv_forward.1} parent=0 // pred_fallthru
    _
  // Predicated region
  $region18: #{wave_lead_conv_forward.1} parent=0 // pred_check
    _
  $region19: #{wave_lead_conv_forward.1} parent=0 // pred_check_branch
    %28 = sbr.rel (0) target = $region21
  $region20: #{wave_lead_conv_forward.1} parent=0 // pred_region
    _
  $region21: #{wave_lead_conv_forward.1} parent=0 // pred_fallthru
    _
  // Predicated region
  $region22: #{wave_lead_conv_forward.1} parent=0 // pred_check
    _
  $region23: #{wave_lead_conv_forward.1} parent=0 // pred_check_branch
    %30 = sbr.rel (0) target = $region25
  $region24: #{wave_lead_conv_forward.1} parent=0 // pred_region
    _
  $region25: #{wave_lead_conv_forward.1} parent=0 // pred_fallthru
    _
  // Predicated region
  $region26: #{wave_lead_conv_forward.1} parent=0 // pred_check
    _
  $region27: #{wave_lead_conv_forward.1} parent=0 // pred_check_branch
    %32 = sbr.rel (0) target = $region29
  $region28: #{wave_lead_conv_forward.1} parent=0 // pred_region
    _
  $region29: #{wave_lead_conv_forward.1} parent=0 // pred_fallthru
    _
  // Predicated region
  $region30: #{wave_lead_conv_forward.1} parent=0 // pred_check
    _
  $region31: #{wave_lead_conv_forward.1} parent=0 // pred_check_branch
    %34 = sbr.rel (0) target = $region33
  $region32: #{wave_lead_conv_forward.1} parent=0 // pred_region
    _
  $region33: #{wave_lead_conv_forward.1} parent=0 // pred_fallthru
    _
  // Predicated region
  $region34: #{wave_lead_conv_forward.1} parent=0 // pred_check
    _
  $region35: #{wave_lead_conv_forward.1} parent=0 // pred_check_branch
    %36 = sbr.rel (0) target = $region37
  $region36: #{wave_lead_conv_forward.1} parent=0 // pred_region
    _
  $region37: #{wave_lead_conv_forward.1} parent=0 // pred_fallthru
    _
  // Predicated region
  $region38: #{wave_lead_conv_forward.1} parent=0 // pred_check
    _
  $region39: #{wave_lead_conv_forward.1} parent=0 // pred_check_branch
    %38 = sbr.rel (0) target = $region41
  $region40: #{wave_lead_conv_forward.1} parent=0 // pred_region
    _
  $region41: #{wave_lead_conv_forward.1} parent=0 // pred_fallthru
    _
  // Predicated region
  $region42: #{wave_lead_conv_forward.1} parent=0 // pred_check
    _
  $region43: #{wave_lead_conv_forward.1} parent=0 // pred_check_branch
    %40 = sbr.rel (0) target = $region45
  $region44: #{wave_lead_conv_forward.1} parent=0 // pred_region
    _
  $region45: #{wave_lead_conv_forward.1} parent=0 // pred_fallthru
    _
  // Predicated region
  $region46: #{wave_lead_conv_forward.1} parent=0 // pred_check
    _
  $region47: #{wave_lead_conv_forward.1} parent=0 // pred_check_branch
    %42 = sbr.rel (0) target = $region49
  $region48: #{wave_lead_conv_forward.1} parent=0 // pred_region
    _
  $region49: #{wave_lead_conv_forward.1} parent=0 // pred_fallthru
    _
  // Predicated region
  $region50: #{wave_lead_conv_forward.1} parent=0 // pred_check
    _
  $region51: #{wave_lead_conv_forward.1} parent=0 // pred_check_branch
    %44 = sbr.rel (0) target = $region53
  $region52: #{wave_lead_conv_forward.1} parent=0 // pred_region
    _
  $region53: #{wave_lead_conv_forward.1} parent=0 // pred_fallthru
    _
  // Predicated region
  $region54: #{wave_lead_conv_forward.1} parent=0 // pred_check
    _
  $region55: #{wave_lead_conv_forward.1} parent=0 // pred_check_branch
    %46 = sbr.rel (0) target = $region57
  $region56: #{wave_lead_conv_forward.1} parent=0 // pred_region
    _
  $region57: #{wave_lead_conv_forward.1} parent=0 // pred_fallthru
    _
  %v48 = vld [vmem:[%s0] sm:$0xff]
  %v49 = vld [vmem:[%s0 + $0x8] sm:$0xff]
  %v50 = vld [vmem:[%s0 + $0x10] sm:$0xff]
  %v51 = vld [vmem:[%s0 + $0x18] sm:$0xff]
  %v52 = vld [vmem:[%s0 + $0x20] sm:$0xff]
  %v53 = vld [vmem:[%s0 + $0x28] sm:$0xff]
  %v54 = vld [vmem:[%s0 + $0x30] sm:$0xff]
  %v55 = vld [vmem:[%s0 + $0x38] sm:$0xff]
  %v56 = vpack.c.bf16 %v50, %v48
  %v57 = vpack.c.bf16 %v51, %v49
  %v58 = vpack.c.bf16 %v54, %v52
  %v59 = vpack.c.bf16 %v55, %v53
  %v60 = vld [vmem:[%s1] sm:$0xff]
  %v61 = vld [vmem:[%s1 + $0x8] sm:$0xff]
  %v62 = vld [vmem:[%s1 + $0x10] sm:$0xff]
  %v63 = vld [vmem:[%s1 + $0x18] sm:$0xff]
  %v64 = vld [vmem:[%s1 + $0x20] sm:$0xff]
  %v65 = vld [vmem:[%s1 + $0x28] sm:$0xff]
  %v66 = vld [vmem:[%s1 + $0x30] sm:$0xff]
  %v67 = vld [vmem:[%s1 + $0x38] sm:$0xff]
  %v68 = vld [vmem:[%s1 + $0x40] sm:$0xff]
  %v69 = vld [vmem:[%s1 + $0x48] sm:$0xff]
  %v70 = vld [vmem:[%s1 + $0x50] sm:$0xff]
  %v71 = vld [vmem:[%s1 + $0x58] sm:$0xff]
  %v72 = vld [vmem:[%s1 + $0x60] sm:$0xff]
  %v73 = vld [vmem:[%s1 + $0x68] sm:$0xff]
  %v74 = vld [vmem:[%s1 + $0x70] sm:$0xff]
  %v75 = vld [vmem:[%s1 + $0x78] sm:$0xff]
  %v76 = vld [vmem:[%s1 + $0x80] sm:$0xff]
  %v77 = vld [vmem:[%s1 + $0x88] sm:$0xff]
  %v78 = vld [vmem:[%s1 + $0x90] sm:$0xff]
  %v79 = vld [vmem:[%s1 + $0x98] sm:$0xff]
  %v80 = vld [vmem:[%s1 + $0xa0] sm:$0xff]
  %v81 = vld [vmem:[%s1 + $0xa8] sm:$0xff]
  %v82 = vld [vmem:[%s1 + $0xb0] sm:$0xff]
  %v83 = vld [vmem:[%s1 + $0xb8] sm:$0xff]
  %v84 = vld [vmem:[%s1 + $0xc0] sm:$0xff]
  %v85 = vld [vmem:[%s1 + $0xc8] sm:$0xff]
  %v86 = vld [vmem:[%s1 + $0xd0] sm:$0xff]
  %v87 = vld [vmem:[%s1 + $0xd8] sm:$0xff]
  %v88 = vld [vmem:[%s1 + $0xe0] sm:$0xff]
  %v89 = vld [vmem:[%s1 + $0xe8] sm:$0xff]
  %v90 = vld [vmem:[%s1 + $0xf0] sm:$0xff]
  %v91 = vld [vmem:[%s1 + $0xf8] sm:$0xff]
  %v92 = vld [vmem:[%s1 + $0x100] sm:$0xff]
  %v93 = vld [vmem:[%s1 + $0x108] sm:$0xff]
  %v94 = vld [vmem:[%s1 + $0x110] sm:$0xff]
  %v95 = vld [vmem:[%s1 + $0x118] sm:$0xff]
  %v96 = vld [vmem:[%s1 + $0x120] sm:$0xff]
  %v97 = vld [vmem:[%s1 + $0x128] sm:$0xff]
  %v98 = vld [vmem:[%s1 + $0x130] sm:$0xff]
  %v99 = vld [vmem:[%s1 + $0x138] sm:$0xff]
  %v100 = vld [vmem:[%s1 + $0x140] sm:$0xff]
  %v101 = vld [vmem:[%s1 + $0x148] sm:$0xff]
  %v102 = vld [vmem:[%s1 + $0x150] sm:$0xff]
  %v103 = vld [vmem:[%s1 + $0x158] sm:$0xff]
  %v104 = vld [vmem:[%s1 + $0x160] sm:$0xff]
  %v105 = vld [vmem:[%s1 + $0x168] sm:$0xff]
  %v106 = vld [vmem:[%s1 + $0x170] sm:$0xff]
  %v107 = vld [vmem:[%s1 + $0x178] sm:$0xff]
  %v108 = vld [vmem:[%s1 + $0x180] sm:$0xff]
  %v109 = vld [vmem:[%s1 + $0x188] sm:$0xff]
  %v110 = vld [vmem:[%s1 + $0x190] sm:$0xff]
  %v111 = vld [vmem:[%s1 + $0x198] sm:$0xff]
  %v112 = vld [vmem:[%s1 + $0x1a0] sm:$0xff]
  %v113 = vld [vmem:[%s1 + $0x1a8] sm:$0xff]
  %v114 = vld [vmem:[%s1 + $0x1b0] sm:$0xff]
  %v115 = vld [vmem:[%s1 + $0x1b8] sm:$0xff]
  %v116 = vld [vmem:[%s1 + $0x1c0] sm:$0xff]
  %v117 = vld [vmem:[%s1 + $0x1c8] sm:$0xff]
  %v118 = vld [vmem:[%s1 + $0x1d0] sm:$0xff]
  %v119 = vld [vmem:[%s1 + $0x1d8] sm:$0xff]
  %v120 = vld [vmem:[%s1 + $0x1e0] sm:$0xff]
  %v121 = vld [vmem:[%s1 + $0x1e8] sm:$0xff]
  %v122 = vld [vmem:[%s1 + $0x1f0] sm:$0x11]
  %v123 = vld [vmem:[%s1 + $0x1f8] sm:$0x11]
  %v124 = vld [vmem:[%s2] sm:$0xf]
  %v125 = vld [vmem:[%s3] sm:$0xff]
  %v190 = vunpack.c.l.b16 %v60
  %v191 = vunpack.c.h.b16 %v60
  %v192 = vunpack.c.l.b16 %v61
  %v193 = vunpack.c.h.b16 %v61
  %v194 = vunpack.c.l.b16 %v62
  %v195 = vunpack.c.h.b16 %v62
  %v196 = vunpack.c.l.b16 %v63
  %v197 = vunpack.c.h.b16 %v63
  %v198 = vunpack.c.l.b16 %v64
  %v199 = vunpack.c.h.b16 %v64
  %v200 = vunpack.c.l.b16 %v65
  %v201 = vunpack.c.h.b16 %v65
  %v202 = vunpack.c.l.b16 %v66
  %v203 = vunpack.c.h.b16 %v66
  %v204 = vunpack.c.l.b16 %v67
  %v205 = vunpack.c.h.b16 %v67
  %v206 = vunpack.c.l.b16 %v68
  %v207 = vunpack.c.h.b16 %v68
  %v208 = vunpack.c.l.b16 %v69
  %v209 = vunpack.c.h.b16 %v69
  %v210 = vunpack.c.l.b16 %v70
  %v211 = vunpack.c.h.b16 %v70
  %v212 = vunpack.c.l.b16 %v71
  %v213 = vunpack.c.h.b16 %v71
  %v214 = vunpack.c.l.b16 %v72
  %v215 = vunpack.c.h.b16 %v72
  %v216 = vunpack.c.l.b16 %v73
  %v217 = vunpack.c.h.b16 %v73
  %v218 = vunpack.c.l.b16 %v74
  %v219 = vunpack.c.h.b16 %v74
  %v220 = vunpack.c.l.b16 %v75
  %v221 = vunpack.c.h.b16 %v75
  %v222 = vunpack.c.l.b16 %v76
  %v223 = vunpack.c.h.b16 %v76
  %v224 = vunpack.c.l.b16 %v77
  %v225 = vunpack.c.h.b16 %v77
  %v226 = vunpack.c.l.b16 %v78
  %v227 = vunpack.c.h.b16 %v78
  %v228 = vunpack.c.l.b16 %v79
  %v229 = vunpack.c.h.b16 %v79
  %v230 = vunpack.c.l.b16 %v80
  %v231 = vunpack.c.h.b16 %v80
  %v232 = vunpack.c.l.b16 %v81
  %v233 = vunpack.c.h.b16 %v81
  %v234 = vunpack.c.l.b16 %v82
  %v235 = vunpack.c.h.b16 %v82
  %v236 = vunpack.c.l.b16 %v83
  %v237 = vunpack.c.h.b16 %v83
  %v238 = vunpack.c.l.b16 %v84
  %v239 = vunpack.c.h.b16 %v84
  %v240 = vunpack.c.l.b16 %v85
  %v241 = vunpack.c.h.b16 %v85
  %v242 = vunpack.c.l.b16 %v86
  %v243 = vunpack.c.h.b16 %v86
  %v244 = vunpack.c.l.b16 %v87
  %v245 = vunpack.c.h.b16 %v87
  %v246 = vunpack.c.l.b16 %v88
  %v247 = vunpack.c.h.b16 %v88
  %v248 = vunpack.c.l.b16 %v89
  %v249 = vunpack.c.h.b16 %v89
  %v250 = vunpack.c.l.b16 %v90
  %v251 = vunpack.c.h.b16 %v90
  %v252 = vunpack.c.l.b16 %v91
  %v253 = vunpack.c.h.b16 %v91
  %v254 = vunpack.c.l.b16 %v92
  %v255 = vunpack.c.h.b16 %v92
  %v256 = vunpack.c.l.b16 %v93
  %v257 = vunpack.c.h.b16 %v93
  %v258 = vunpack.c.l.b16 %v94
  %v259 = vunpack.c.h.b16 %v94
  %v260 = vunpack.c.l.b16 %v95
  %v261 = vunpack.c.h.b16 %v95
  %v262 = vunpack.c.l.b16 %v96
  %v263 = vunpack.c.h.b16 %v96
  %v264 = vunpack.c.l.b16 %v97
  %v265 = vunpack.c.h.b16 %v97
  %v266 = vunpack.c.l.b16 %v98
  %v267 = vunpack.c.h.b16 %v98
  %v268 = vunpack.c.l.b16 %v99
  %v269 = vunpack.c.h.b16 %v99
  %v270 = vunpack.c.l.b16 %v100
  %v271 = vunpack.c.h.b16 %v100
  %v272 = vunpack.c.l.b16 %v101
  %v273 = vunpack.c.h.b16 %v101
  %v274 = vunpack.c.l.b16 %v102
  %v275 = vunpack.c.h.b16 %v102
  %v276 = vunpack.c.l.b16 %v103
  %v277 = vunpack.c.h.b16 %v103
  %v278 = vunpack.c.l.b16 %v104
  %v279 = vunpack.c.h.b16 %v104
  %v280 = vunpack.c.l.b16 %v105
  %v281 = vunpack.c.h.b16 %v105
  %v282 = vunpack.c.l.b16 %v106
  %v283 = vunpack.c.h.b16 %v106
  %v284 = vunpack.c.l.b16 %v107
  %v285 = vunpack.c.h.b16 %v107
  %v286 = vunpack.c.l.b16 %v108
  %v287 = vunpack.c.h.b16 %v108
  %v288 = vunpack.c.l.b16 %v109
  %v289 = vunpack.c.h.b16 %v109
  %v290 = vunpack.c.l.b16 %v110
  %v291 = vunpack.c.h.b16 %v110
  %v292 = vunpack.c.l.b16 %v111
  %v293 = vunpack.c.h.b16 %v111
  %v294 = vunpack.c.l.b16 %v112
  %v295 = vunpack.c.h.b16 %v112
  %v296 = vunpack.c.l.b16 %v113
  %v297 = vunpack.c.h.b16 %v113
  %v298 = vunpack.c.l.b16 %v114
  %v299 = vunpack.c.h.b16 %v114
  %v300 = vunpack.c.l.b16 %v115
  %v301 = vunpack.c.h.b16 %v115
  %v302 = vunpack.c.l.b16 %v116
  %v303 = vunpack.c.h.b16 %v116
  %v304 = vunpack.c.l.b16 %v117
  %v305 = vunpack.c.h.b16 %v117
  %v306 = vunpack.c.l.b16 %v118
  %v307 = vunpack.c.h.b16 %v118
  %v308 = vunpack.c.l.b16 %v119
  %v309 = vunpack.c.h.b16 %v119
  %v310 = vunpack.c.l.b16 %v120
  %v311 = vunpack.c.h.b16 %v120
  %v312 = vunpack.c.l.b16 %v121
  %v313 = vunpack.c.h.b16 %v121
  %v314 = vunpack.c.l.b16 %v122
  %v315 = vunpack.c.h.b16 %v122
  %v316 = vunpack.c.l.b16 %v123
  %v317 = vunpack.c.h.b16 %v123
  %v318 = vpack.c.b16 %v194, %v190
  %v319 = vpack.c.b16 %v195, %v191
  %v320 = vpack.c.b16 %v196, %v192
  %v321 = vpack.c.b16 %v197, %v193
  %v322 = vpack.c.b16 %v202, %v198
  %v323 = vpack.c.b16 %v203, %v199
  %v324 = vpack.c.b16 %v204, %v200
  %v325 = vpack.c.b16 %v205, %v201
  %v326 = vpack.c.b16 %v210, %v206
  %v327 = vpack.c.b16 %v211, %v207
  %v328 = vpack.c.b16 %v212, %v208
  %v329 = vpack.c.b16 %v213, %v209
  %v330 = vpack.c.b16 %v218, %v214
  %v331 = vpack.c.b16 %v219, %v215
  %v332 = vpack.c.b16 %v220, %v216
  %v333 = vpack.c.b16 %v221, %v217
  %v334 = vpack.c.b16 %v226, %v222
  %v335 = vpack.c.b16 %v227, %v223
  %v336 = vpack.c.b16 %v228, %v224
  %v337 = vpack.c.b16 %v229, %v225
  %v338 = vpack.c.b16 %v234, %v230
  %v339 = vpack.c.b16 %v235, %v231
  %v340 = vpack.c.b16 %v236, %v232
  %v341 = vpack.c.b16 %v237, %v233
  %v342 = vpack.c.b16 %v242, %v238
  %v343 = vpack.c.b16 %v243, %v239
  %v344 = vpack.c.b16 %v244, %v240
  %v345 = vpack.c.b16 %v245, %v241
  %v346 = vpack.c.b16 %v250, %v246
  %v347 = vpack.c.b16 %v251, %v247
  %v348 = vpack.c.b16 %v252, %v248
  %v349 = vpack.c.b16 %v253, %v249
  %v350 = vpack.c.b16 %v258, %v254
  %v351 = vpack.c.b16 %v259, %v255
  %v352 = vpack.c.b16 %v260, %v256
  %v353 = vpack.c.b16 %v261, %v257
  %v354 = vpack.c.b16 %v266, %v262
  %v355 = vpack.c.b16 %v267, %v263
  %v356 = vpack.c.b16 %v268, %v264
  %v357 = vpack.c.b16 %v269, %v265
  %v358 = vpack.c.b16 %v274, %v270
  %v359 = vpack.c.b16 %v275, %v271
  %v360 = vpack.c.b16 %v276, %v272
  %v361 = vpack.c.b16 %v277, %v273
  %v362 = vpack.c.b16 %v282, %v278
  %v363 = vpack.c.b16 %v283, %v279
  %v364 = vpack.c.b16 %v284, %v280
  %v365 = vpack.c.b16 %v285, %v281
  %v366 = vpack.c.b16 %v290, %v286
  %v367 = vpack.c.b16 %v291, %v287
  %v368 = vpack.c.b16 %v292, %v288
  %v369 = vpack.c.b16 %v293, %v289
  %v370 = vpack.c.b16 %v298, %v294
  %v371 = vpack.c.b16 %v299, %v295
  %v372 = vpack.c.b16 %v300, %v296
  %v373 = vpack.c.b16 %v301, %v297
  %v374 = vpack.c.b16 %v306, %v302
  %v375 = vpack.c.b16 %v307, %v303
  %v376 = vpack.c.b16 %v308, %v304
  %v377 = vpack.c.b16 %v309, %v305
  %v378 = vpack.c.b16 %v314, %v310
  %v379 = vpack.c.b16 %v315, %v311
  %v380 = vpack.c.b16 %v316, %v312
  %v381 = vpack.c.b16 %v317, %v313
  %vm442 = vcmask 998400
  %v444 = vsel %vm442, %v57, 0
  %v447 = vsel %vm442, %v59, 0
  %vm449 = vcmask 1044480
  %v451 = vsel %vm449, %v378, 0
  %v454 = vsel %vm449, %v379, 0
  %v457 = vsel %vm449, %v380, 0
  %v460 = vsel %vm449, %v381, 0
  %462 = vmatpush.bf16.msra.mxu0 %v346
  %463 = vmatpush.bf16.msra.mxu0 %v342
  %464 = vmatpush.bf16.msra.mxu0 %v338
  %465 = vmatpush.bf16.msra.mxu0 %v334
  %466 = vmatpush.bf16.msra.mxu0 %v330
  %467 = vmatpush.bf16.msra.mxu0 %v326
  %468 = vmatpush.bf16.msra.mxu0 %v322
  %469 = vmatpush.bf16.msra.mxu0 %v318
  %470 = vmatmul.bf16.gmra.mxu0 %v56
  %v471 = vpop.f32.mrf.mxu0
  %v472 = vadd.f32 0.0, %v471
  %v473 = vpop.f32.mrf.mxu0
  %v474 = vadd.f32 0.0, %v473
  %475 = vmatmul.bf16.gmra.mxu0 %v58
  %v476 = vpop.f32.mrf.mxu0
  %v477 = vadd.f32 0.0, %v476
  %v478 = vpop.f32.mrf.mxu0
  %v479 = vadd.f32 0.0, %v478
  %480 = vdwg.mxu0
  %481 = vmatpush.bf16.msra.mxu0 %v451
  %482 = vmatpush.bf16.msra.mxu0 %v374
  %483 = vmatpush.bf16.msra.mxu0 %v370
  %484 = vmatpush.bf16.msra.mxu0 %v366
  %485 = vmatpush.bf16.msra.mxu0 %v362
  %486 = vmatpush.bf16.msra.mxu0 %v358
  %487 = vmatpush.bf16.msra.mxu0 %v354
  %488 = vmatpush.bf16.msra.mxu0 %v350
  %489 = vmatmul.bf16.gmra.mxu0 %v444
  %v490 = vpop.f32.mrf.mxu0
  %v491 = vadd.f32 %v472, %v490
  %v492 = vpop.f32.mrf.mxu0
  %v493 = vadd.f32 %v474, %v492
  %494 = vmatmul.bf16.gmra.mxu0 %v447
  %v495 = vpop.f32.mrf.mxu0
  %v496 = vadd.f32 %v477, %v495
  %v497 = vpop.f32.mrf.mxu0
  %v498 = vadd.f32 %v479, %v497
  %499 = vdwg.mxu0
  %500 = vmatpush.bf16.msra.mxu0 %v347
  %501 = vmatpush.bf16.msra.mxu0 %v343
  %502 = vmatpush.bf16.msra.mxu0 %v339
  %503 = vmatpush.bf16.msra.mxu0 %v335
  %504 = vmatpush.bf16.msra.mxu0 %v331
  %505 = vmatpush.bf16.msra.mxu0 %v327
  %506 = vmatpush.bf16.msra.mxu0 %v323
  %507 = vmatpush.bf16.msra.mxu0 %v319
  %508 = vmatmul.bf16.gmra.mxu0 %v56
  %v509 = vpop.f32.mrf.mxu0
  %v510 = vadd.f32 0.0, %v509
  %v511 = vpop.f32.mrf.mxu0
  %v512 = vadd.f32 0.0, %v511
  %513 = vmatmul.bf16.gmra.mxu0 %v58
  %v514 = vpop.f32.mrf.mxu0
  %v515 = vadd.f32 0.0, %v514
  %v516 = vpop.f32.mrf.mxu0
  %v517 = vadd.f32 0.0, %v516
  %518 = vdwg.mxu0
  %519 = vmatpush.bf16.msra.mxu0 %v454
  %520 = vmatpush.bf16.msra.mxu0 %v375
  %521 = vmatpush.bf16.msra.mxu0 %v371
  %522 = vmatpush.bf16.msra.mxu0 %v367
  %523 = vmatpush.bf16.msra.mxu0 %v363
  %524 = vmatpush.bf16.msra.mxu0 %v359
  %525 = vmatpush.bf16.msra.mxu0 %v355
  %526 = vmatpush.bf16.msra.mxu0 %v351
  %527 = vmatmul.bf16.gmra.mxu0 %v444
  %v528 = vpop.f32.mrf.mxu0
  %v529 = vadd.f32 %v510, %v528
  %v530 = vpop.f32.mrf.mxu0
  %v531 = vadd.f32 %v512, %v530
  %532 = vmatmul.bf16.gmra.mxu0 %v447
  %v533 = vpop.f32.mrf.mxu0
  %v534 = vadd.f32 %v515, %v533
  %v535 = vpop.f32.mrf.mxu0
  %v536 = vadd.f32 %v517, %v535
  %537 = vdwg.mxu0
  %538 = vmatpush.bf16.msra.mxu0 %v348
  %539 = vmatpush.bf16.msra.mxu0 %v344
  %540 = vmatpush.bf16.msra.mxu0 %v340
  %541 = vmatpush.bf16.msra.mxu0 %v336
  %542 = vmatpush.bf16.msra.mxu0 %v332
  %543 = vmatpush.bf16.msra.mxu0 %v328
  %544 = vmatpush.bf16.msra.mxu0 %v324
  %545 = vmatpush.bf16.msra.mxu0 %v320
  %546 = vmatmul.bf16.gmra.mxu0 %v56
  %v547 = vpop.f32.mrf.mxu0
  %v548 = vadd.f32 0.0, %v547
  %v549 = vpop.f32.mrf.mxu0
  %v550 = vadd.f32 0.0, %v549
  %551 = vmatmul.bf16.gmra.mxu0 %v58
  %v552 = vpop.f32.mrf.mxu0
  %v553 = vadd.f32 0.0, %v552
  %v554 = vpop.f32.mrf.mxu0
  %v555 = vadd.f32 0.0, %v554
  %556 = vdwg.mxu0
  %557 = vmatpush.bf16.msra.mxu0 %v457
  %558 = vmatpush.bf16.msra.mxu0 %v376
  %559 = vmatpush.bf16.msra.mxu0 %v372
  %560 = vmatpush.bf16.msra.mxu0 %v368
  %561 = vmatpush.bf16.msra.mxu0 %v364
  %562 = vmatpush.bf16.msra.mxu0 %v360
  %563 = vmatpush.bf16.msra.mxu0 %v356
  %564 = vmatpush.bf16.msra.mxu0 %v352
  %565 = vmatmul.bf16.gmra.mxu0 %v444
  %v566 = vpop.f32.mrf.mxu0
  %v567 = vadd.f32 %v548, %v566
  %v568 = vpop.f32.mrf.mxu0
  %v569 = vadd.f32 %v550, %v568
  %570 = vmatmul.bf16.gmra.mxu0 %v447
  %v571 = vpop.f32.mrf.mxu0
  %v572 = vadd.f32 %v553, %v571
  %v573 = vpop.f32.mrf.mxu0
  %v574 = vadd.f32 %v555, %v573
  %575 = vdwg.mxu0
  %576 = vmatpush.bf16.msra.mxu0 %v349
  %577 = vmatpush.bf16.msra.mxu0 %v345
  %578 = vmatpush.bf16.msra.mxu0 %v341
  %579 = vmatpush.bf16.msra.mxu0 %v337
  %580 = vmatpush.bf16.msra.mxu0 %v333
  %581 = vmatpush.bf16.msra.mxu0 %v329
  %582 = vmatpush.bf16.msra.mxu0 %v325
  %583 = vmatpush.bf16.msra.mxu0 %v321
  %584 = vmatmul.bf16.gmra.mxu0 %v56
  %v585 = vpop.f32.mrf.mxu0
  %v586 = vadd.f32 0.0, %v585
  %v587 = vpop.f32.mrf.mxu0
  %v588 = vadd.f32 0.0, %v587
  %589 = vmatmul.bf16.gmra.mxu0 %v58
  %v590 = vpop.f32.mrf.mxu0
  %v591 = vadd.f32 0.0, %v590
  %v592 = vpop.f32.mrf.mxu0
  %v593 = vadd.f32 0.0, %v592
  %594 = vdwg.mxu0
  %595 = vmatpush.bf16.msra.mxu0 %v460
  %596 = vmatpush.bf16.msra.mxu0 %v377
  %597 = vmatpush.bf16.msra.mxu0 %v373
  %598 = vmatpush.bf16.msra.mxu0 %v369
  %599 = vmatpush.bf16.msra.mxu0 %v365
  %600 = vmatpush.bf16.msra.mxu0 %v361
  %601 = vmatpush.bf16.msra.mxu0 %v357
  %602 = vmatpush.bf16.msra.mxu0 %v353
  %603 = vmatmul.bf16.gmra.mxu0 %v444
  %v604 = vpop.f32.mrf.mxu0
  %v605 = vadd.f32 %v586, %v604
  %v606 = vpop.f32.mrf.mxu0
  %v607 = vadd.f32 %v588, %v606
  %608 = vmatmul.bf16.gmra.mxu0 %v447
  %v609 = vpop.f32.mrf.mxu0
  %v610 = vadd.f32 %v591, %v609
  %v611 = vpop.f32.mrf.mxu0
  %v612 = vadd.f32 %v593, %v611
  %613 = vdwg.mxu0
  %v614 = vpack.c.bf16 %v529, %v491
  %v615 = vpack.c.bf16 %v605, %v567
  %v616 = vpack.c.bf16 %v531, %v493
  %v617 = vpack.c.bf16 %v607, %v569
  %v618 = vpack.c.bf16 %v534, %v496
  %v619 = vpack.c.bf16 %v610, %v572
  %v620 = vpack.c.bf16 %v536, %v498
  %v621 = vpack.c.bf16 %v612, %v574
  %v626 = vrot.slane %v614, 3
  %v627 = vrot.slane %v616, 3
  %v628 = vrot.slane %v618, 3
  %v629 = vrot.slane %v620, 3
  %vm630 = vcmask 1040384
  %v633 = vsel %vm630, %v614, %v626
  %vm635 = vcmask 1041409
  %v636 = vsel %vm635, %v614, %v626
  %v638 = vrot.slane %v636, 1
  %vm639 = vcmask 1042434
  %v640 = vsel %vm639, %v614, %v626
  %v642 = vrot.slane %v640, 2
  %vm643 = vcmask 1043459
  %v644 = vsel %vm643, %v614, %v626
  %v646 = vrot.slane %v644, 3
  %v649 = vsel %vm630, %v616, %v627
  %v651 = vsel %vm635, %v616, %v627
  %v653 = vrot.slane %v651, 1
  %v654 = vsel %vm639, %v616, %v627
  %v656 = vrot.slane %v654, 2
  %v657 = vsel %vm643, %v616, %v627
  %v659 = vrot.slane %v657, 3
  %v662 = vsel %vm630, %v618, %v628
  %v664 = vsel %vm635, %v618, %v628
  %v666 = vrot.slane %v664, 1
  %v667 = vsel %vm639, %v618, %v628
  %v669 = vrot.slane %v667, 2
  %v670 = vsel %vm643, %v618, %v628
  %v672 = vrot.slane %v670, 3
  %v675 = vsel %vm630, %v620, %v629
  %v677 = vsel %vm635, %v620, %v629
  %v679 = vrot.slane %v677, 1
  %v680 = vsel %vm639, %v620, %v629
  %v682 = vrot.slane %v680, 2
  %v683 = vsel %vm643, %v620, %v629
  %v685 = vrot.slane %v683, 3
  %v686 = vunpack.i.l.s16 %v633
  %v687 = vunpack.i.h.s16 %v633
  %v688 = vunpack.i.l.s16 %v638
  %v689 = vunpack.i.h.s16 %v638
  %v690 = vunpack.i.l.s16 %v642
  %v691 = vunpack.i.h.s16 %v642
  %v692 = vunpack.i.l.s16 %v646
  %v693 = vunpack.i.h.s16 %v646
  %v694 = vunpack.i.l.s16 %v649
  %v695 = vunpack.i.h.s16 %v649
  %v696 = vunpack.i.l.s16 %v653
  %v697 = vunpack.i.h.s16 %v653
  %v698 = vunpack.i.l.s16 %v656
  %v699 = vunpack.i.h.s16 %v656
  %v700 = vunpack.i.l.s16 %v659
  %v701 = vunpack.i.h.s16 %v659
  %v702 = vunpack.i.l.s16 %v662
  %v703 = vunpack.i.h.s16 %v662
  %v704 = vunpack.i.l.s16 %v666
  %v705 = vunpack.i.h.s16 %v666
  %v706 = vunpack.i.l.s16 %v669
  %v707 = vunpack.i.h.s16 %v669
  %v708 = vunpack.i.l.s16 %v672
  %v709 = vunpack.i.h.s16 %v672
  %v710 = vunpack.i.l.s16 %v675
  %v711 = vunpack.i.h.s16 %v675
  %v712 = vunpack.i.l.s16 %v679
  %v713 = vunpack.i.h.s16 %v679
  %v714 = vunpack.i.l.s16 %v682
  %v715 = vunpack.i.h.s16 %v682
  %v716 = vunpack.i.l.s16 %v685
  %v717 = vunpack.i.h.s16 %v685
  %v722 = vrot.slane %v615, 6
  %v723 = vrot.slane %v615, 1
  %v724 = vrot.slane %v617, 6
  %v725 = vrot.slane %v617, 1
  %v726 = vrot.slane %v619, 6
  %v727 = vrot.slane %v619, 1
  %v728 = vrot.slane %v621, 6
  %v729 = vrot.slane %v621, 1
  %v732 = vsel %vm639, %v722, %v723
  %vm733 = vcmask 1041408
  %v734 = vsel %vm733, %v633, %v732
  %v736 = vsel %vm643, %v722, %v723
  %vm737 = vcmask 1042433
  %v738 = vsel %vm737, %v636, %v736
  %v740 = vrot.slane %v738, 1
  %vm741 = vcmask 1044484
  %v742 = vsel %vm741, %v722, %v723
  %vm743 = vcmask 1043458
  %v744 = vsel %vm743, %v640, %v742
  %v746 = vrot.slane %v744, 2
  %vm747 = vcmask 1045509
  %v748 = vsel %vm747, %v722, %v723
  %vm749 = vcmask 1044483
  %v750 = vsel %vm749, %v644, %v748
  %v752 = vrot.slane %v750, 3
  %v755 = vsel %vm639, %v724, %v725
  %v756 = vsel %vm733, %v649, %v755
  %v758 = vsel %vm643, %v724, %v725
  %v759 = vsel %vm737, %v651, %v758
  %v761 = vrot.slane %v759, 1
  %v762 = vsel %vm741, %v724, %v725
  %v763 = vsel %vm743, %v654, %v762
  %v765 = vrot.slane %v763, 2
  %v766 = vsel %vm747, %v724, %v725
  %v767 = vsel %vm749, %v657, %v766
  %v769 = vrot.slane %v767, 3
  %v772 = vsel %vm639, %v726, %v727
  %v773 = vsel %vm733, %v662, %v772
  %v775 = vsel %vm643, %v726, %v727
  %v776 = vsel %vm737, %v664, %v775
  %v778 = vrot.slane %v776, 1
  %v779 = vsel %vm741, %v726, %v727
  %v780 = vsel %vm743, %v667, %v779
  %v782 = vrot.slane %v780, 2
  %v783 = vsel %vm747, %v726, %v727
  %v784 = vsel %vm749, %v670, %v783
  %v786 = vrot.slane %v784, 3
  %v789 = vsel %vm639, %v728, %v729
  %v790 = vsel %vm733, %v675, %v789
  %v792 = vsel %vm643, %v728, %v729
  %v793 = vsel %vm737, %v677, %v792
  %v795 = vrot.slane %v793, 1
  %v796 = vsel %vm741, %v728, %v729
  %v797 = vsel %vm743, %v680, %v796
  %v799 = vrot.slane %v797, 2
  %v800 = vsel %vm747, %v728, %v729
  %v801 = vsel %vm749, %v683, %v800
  %v803 = vrot.slane %v801, 3
  %v804 = vunpack.i.l.s16 %v734
  %v805 = vunpack.i.h.s16 %v734
  %v806 = vunpack.i.l.s16 %v740
  %v807 = vunpack.i.h.s16 %v740
  %v808 = vunpack.i.l.s16 %v746
  %v809 = vunpack.i.h.s16 %v746
  %v810 = vunpack.i.l.s16 %v752
  %v811 = vunpack.i.h.s16 %v752
  %v812 = vunpack.i.l.s16 %v756
  %v813 = vunpack.i.h.s16 %v756
  %v814 = vunpack.i.l.s16 %v761
  %v815 = vunpack.i.h.s16 %v761
  %v816 = vunpack.i.l.s16 %v765
  %v817 = vunpack.i.h.s16 %v765
  %v818 = vunpack.i.l.s16 %v769
  %v819 = vunpack.i.h.s16 %v769
  %v820 = vunpack.i.l.s16 %v773
  %v821 = vunpack.i.h.s16 %v773
  %v822 = vunpack.i.l.s16 %v778
  %v823 = vunpack.i.h.s16 %v778
  %v824 = vunpack.i.l.s16 %v782
  %v825 = vunpack.i.h.s16 %v782
  %v826 = vunpack.i.l.s16 %v786
  %v827 = vunpack.i.h.s16 %v786
  %v828 = vunpack.i.l.s16 %v790
  %v829 = vunpack.i.h.s16 %v790
  %v830 = vunpack.i.l.s16 %v795
  %v831 = vunpack.i.h.s16 %v795
  %v832 = vunpack.i.l.s16 %v799
  %v833 = vunpack.i.h.s16 %v799
  %v834 = vunpack.i.l.s16 %v803
  %v835 = vunpack.i.h.s16 %v803
  %v836 = vpack.i.b16 %v805, %v804
  %v837 = vpack.i.b16 %v807, %v806
  %v838 = vpack.i.b16 %v809, %v808
  %v839 = vpack.i.b16 %v811, %v810
  %v840 = vpack.i.b16 %v813, %v812
  %v841 = vpack.i.b16 %v815, %v814
  %v842 = vpack.i.b16 %v817, %v816
  %v843 = vpack.i.b16 %v819, %v818
  %v844 = vpack.i.b16 %v821, %v820
  %v845 = vpack.i.b16 %v823, %v822
  %v846 = vpack.i.b16 %v825, %v824
  %v847 = vpack.i.b16 %v827, %v826
  %v848 = vpack.i.b16 %v829, %v828
  %v849 = vpack.i.b16 %v831, %v830
  %v850 = vpack.i.b16 %v833, %v832
  %v851 = vpack.i.b16 %v835, %v834
  %852 = vrot.lane.b32.xlu0 %v836, 4
  %v853 = vpop.permute.xlu0 %852
  %854 = vrot.lane.b32.xlu0 %v837, 4
  %v855 = vpop.permute.xlu0 %854
  %856 = vrot.lane.b32.xlu0 %v838, 4
  %v857 = vpop.permute.xlu0 %856
  %858 = vrot.lane.b32.xlu0 %v839, 4
  %v859 = vpop.permute.xlu0 %858
  %860 = vrot.lane.b32.xlu0 %v840, 4
  %v861 = vpop.permute.xlu0 %860
  %862 = vrot.lane.b32.xlu0 %v841, 4
  %v863 = vpop.permute.xlu0 %862
  %864 = vrot.lane.b32.xlu0 %v842, 4
  %v865 = vpop.permute.xlu0 %864
  %866 = vrot.lane.b32.xlu0 %v843, 4
  %v867 = vpop.permute.xlu0 %866
  %868 = vrot.lane.b32.xlu0 %v844, 4
  %v869 = vpop.permute.xlu0 %868
  %870 = vrot.lane.b32.xlu0 %v845, 4
  %v871 = vpop.permute.xlu0 %870
  %872 = vrot.lane.b32.xlu0 %v846, 4
  %v873 = vpop.permute.xlu0 %872
  %874 = vrot.lane.b32.xlu0 %v847, 4
  %v875 = vpop.permute.xlu0 %874
  %876 = vrot.lane.b32.xlu0 %v848, 4
  %v877 = vpop.permute.xlu0 %876
  %878 = vrot.lane.b32.xlu0 %v849, 4
  %v879 = vpop.permute.xlu0 %878
  %880 = vrot.lane.b32.xlu0 %v850, 4
  %v881 = vpop.permute.xlu0 %880
  %882 = vrot.lane.b32.xlu0 %v851, 4
  %v883 = vpop.permute.xlu0 %882
  %v884 = vrot.slane %v853, 1
  %v885 = vrot.slane %v855, 1
  %v886 = vrot.slane %v857, 1
  %v887 = vrot.slane %v859, 1
  %v888 = vrot.slane %v861, 1
  %v889 = vrot.slane %v863, 1
  %v890 = vrot.slane %v865, 1
  %v891 = vrot.slane %v867, 1
  %v892 = vrot.slane %v869, 1
  %v893 = vrot.slane %v871, 1
  %v894 = vrot.slane %v873, 1
  %v895 = vrot.slane %v875, 1
  %v896 = vrot.slane %v877, 1
  %v897 = vrot.slane %v879, 1
  %v898 = vrot.slane %v881, 1
  %v899 = vrot.slane %v883, 1
  %v900 = vrot.slane %v853, 2
  %v901 = vrot.slane %v855, 2
  %v902 = vrot.slane %v857, 2
  %v903 = vrot.slane %v859, 2
  %v904 = vrot.slane %v861, 2
  %v905 = vrot.slane %v863, 2
  %v906 = vrot.slane %v865, 2
  %v907 = vrot.slane %v867, 2
  %v908 = vrot.slane %v869, 2
  %v909 = vrot.slane %v871, 2
  %v910 = vrot.slane %v873, 2
  %v911 = vrot.slane %v875, 2
  %v912 = vrot.slane %v877, 2
  %v913 = vrot.slane %v879, 2
  %v914 = vrot.slane %v881, 2
  %v915 = vrot.slane %v883, 2
  %vm916 = vcmask 31744
  %v917 = vsel %vm916, %v884, %v900
  %v918 = vsel %vm916, %v885, %v901
  %v919 = vsel %vm916, %v886, %v902
  %v920 = vsel %vm916, %v887, %v903
  %v921 = vsel %vm916, %v888, %v904
  %v922 = vsel %vm916, %v889, %v905
  %v923 = vsel %vm916, %v890, %v906
  %v924 = vsel %vm916, %v891, %v907
  %v925 = vsel %vm916, %v892, %v908
  %v926 = vsel %vm916, %v893, %v909
  %v927 = vsel %vm916, %v894, %v910
  %v928 = vsel %vm916, %v895, %v911
  %v929 = vsel %vm916, %v896, %v912
  %v930 = vsel %vm916, %v897, %v913
  %v931 = vsel %vm916, %v898, %v914
  %v932 = vsel %vm916, %v899, %v915
  %v933 = vunpack.i.l.s16 %v917
  %v934 = vunpack.i.h.s16 %v917
  %v935 = vunpack.i.l.s16 %v918
  %v936 = vunpack.i.h.s16 %v918
  %v937 = vunpack.i.l.s16 %v919
  %v938 = vunpack.i.h.s16 %v919
  %v939 = vunpack.i.l.s16 %v920
  %v940 = vunpack.i.h.s16 %v920
  %v941 = vunpack.i.l.s16 %v921
  %v942 = vunpack.i.h.s16 %v921
  %v943 = vunpack.i.l.s16 %v922
  %v944 = vunpack.i.h.s16 %v922
  %v945 = vunpack.i.l.s16 %v923
  %v946 = vunpack.i.h.s16 %v923
  %v947 = vunpack.i.l.s16 %v924
  %v948 = vunpack.i.h.s16 %v924
  %v949 = vunpack.i.l.s16 %v925
  %v950 = vunpack.i.h.s16 %v925
  %v951 = vunpack.i.l.s16 %v926
  %v952 = vunpack.i.h.s16 %v926
  %v953 = vunpack.i.l.s16 %v927
  %v954 = vunpack.i.h.s16 %v927
  %v955 = vunpack.i.l.s16 %v928
  %v956 = vunpack.i.h.s16 %v928
  %v957 = vunpack.i.l.s16 %v929
  %v958 = vunpack.i.h.s16 %v929
  %v959 = vunpack.i.l.s16 %v930
  %v960 = vunpack.i.h.s16 %v930
  %v961 = vunpack.i.l.s16 %v931
  %v962 = vunpack.i.h.s16 %v931
  %v963 = vunpack.i.l.s16 %v932
  %v964 = vunpack.i.h.s16 %v932
  %v965 = vrot.slane %v615, 3
  %v966 = vrot.slane %v617, 3
  %v967 = vrot.slane %v619, 3
  %v968 = vrot.slane %v621, 3
  %v971 = vsel %vm630, %v615, %v965
  %v973 = vsel %vm635, %v615, %v965
  %v975 = vrot.slane %v973, 1
  %v976 = vsel %vm639, %v615, %v965
  %v978 = vrot.slane %v976, 2
  %v979 = vsel %vm643, %v615, %v965
  %v981 = vrot.slane %v979, 3
  %v984 = vsel %vm630, %v617, %v966
  %v986 = vsel %vm635, %v617, %v966
  %v988 = vrot.slane %v986, 1
  %v989 = vsel %vm639, %v617, %v966
  %v991 = vrot.slane %v989, 2
  %v992 = vsel %vm643, %v617, %v966
  %v994 = vrot.slane %v992, 3
  %v997 = vsel %vm630, %v619, %v967
  %v999 = vsel %vm635, %v619, %v967
  %v1001 = vrot.slane %v999, 1
  %v1002 = vsel %vm639, %v619, %v967
  %v1004 = vrot.slane %v1002, 2
  %v1005 = vsel %vm643, %v619, %v967
  %v1007 = vrot.slane %v1005, 3
  %v1010 = vsel %vm630, %v621, %v968
  %v1012 = vsel %vm635, %v621, %v968
  %v1014 = vrot.slane %v1012, 1
  %v1015 = vsel %vm639, %v621, %v968
  %v1017 = vrot.slane %v1015, 2
  %v1018 = vsel %vm643, %v621, %v968
  %v1020 = vrot.slane %v1018, 3
  %v1021 = vunpack.i.l.s16 %v971
  %v1022 = vunpack.i.h.s16 %v971
  %v1023 = vunpack.i.l.s16 %v975
  %v1024 = vunpack.i.h.s16 %v975
  %v1025 = vunpack.i.l.s16 %v978
  %v1026 = vunpack.i.h.s16 %v978
  %v1027 = vunpack.i.l.s16 %v981
  %v1028 = vunpack.i.h.s16 %v981
  %v1029 = vunpack.i.l.s16 %v984
  %v1030 = vunpack.i.h.s16 %v984
  %v1031 = vunpack.i.l.s16 %v988
  %v1032 = vunpack.i.h.s16 %v988
  %v1033 = vunpack.i.l.s16 %v991
  %v1034 = vunpack.i.h.s16 %v991
  %v1035 = vunpack.i.l.s16 %v994
  %v1036 = vunpack.i.h.s16 %v994
  %v1037 = vunpack.i.l.s16 %v997
  %v1038 = vunpack.i.h.s16 %v997
  %v1039 = vunpack.i.l.s16 %v1001
  %v1040 = vunpack.i.h.s16 %v1001
  %v1041 = vunpack.i.l.s16 %v1004
  %v1042 = vunpack.i.h.s16 %v1004
  %v1043 = vunpack.i.l.s16 %v1007
  %v1044 = vunpack.i.h.s16 %v1007
  %v1045 = vunpack.i.l.s16 %v1010
  %v1046 = vunpack.i.h.s16 %v1010
  %v1047 = vunpack.i.l.s16 %v1014
  %v1048 = vunpack.i.h.s16 %v1014
  %v1049 = vunpack.i.l.s16 %v1017
  %v1050 = vunpack.i.h.s16 %v1017
  %v1051 = vunpack.i.l.s16 %v1020
  %v1052 = vunpack.i.h.s16 %v1020
  %v1053 = vpack.i.b16 %v686, %v686
  %v1054 = vpack.i.b16 %v687, %v687
  %v1055 = vpack.i.b16 %v688, %v688
  %v1056 = vpack.i.b16 %v689, %v689
  %v1057 = vpack.i.b16 %v690, %v690
  %v1058 = vpack.i.b16 %v691, %v691
  %v1059 = vpack.i.b16 %v692, %v692
  %v1060 = vpack.i.b16 %v693, %v693
  %v1061 = vpack.i.b16 %v694, %v694
  %v1062 = vpack.i.b16 %v695, %v695
  %v1063 = vpack.i.b16 %v696, %v696
  %v1064 = vpack.i.b16 %v697, %v697
  %v1065 = vpack.i.b16 %v698, %v698
  %v1066 = vpack.i.b16 %v699, %v699
  %v1067 = vpack.i.b16 %v700, %v700
  %v1068 = vpack.i.b16 %v701, %v701
  %v1069 = vpack.i.b16 %v702, %v702
  %v1070 = vpack.i.b16 %v703, %v703
  %v1071 = vpack.i.b16 %v704, %v704
  %v1072 = vpack.i.b16 %v705, %v705
  %v1073 = vpack.i.b16 %v706, %v706
  %v1074 = vpack.i.b16 %v707, %v707
  %v1075 = vpack.i.b16 %v708, %v708
  %v1076 = vpack.i.b16 %v709, %v709
  %v1077 = vpack.i.b16 %v710, %v710
  %v1078 = vpack.i.b16 %v711, %v711
  %v1079 = vpack.i.b16 %v712, %v712
  %v1080 = vpack.i.b16 %v713, %v713
  %v1081 = vpack.i.b16 %v714, %v714
  %v1082 = vpack.i.b16 %v715, %v715
  %v1083 = vpack.i.b16 %v716, %v716
  %v1084 = vpack.i.b16 %v717, %v717
  %v1085 = vperm.slane %v1053, 0
  %v1086 = vperm.slane %v1054, 0
  %v1087 = vperm.slane %v1055, 0
  %v1088 = vperm.slane %v1056, 0
  %v1089 = vperm.slane %v1057, 0
  %v1090 = vperm.slane %v1058, 0
  %v1091 = vperm.slane %v1059, 0
  %v1092 = vperm.slane %v1060, 0
  %v1093 = vperm.slane %v1061, 0
  %v1094 = vperm.slane %v1062, 0
  %v1095 = vperm.slane %v1063, 0
  %v1096 = vperm.slane %v1064, 0
  %v1097 = vperm.slane %v1065, 0
  %v1098 = vperm.slane %v1066, 0
  %v1099 = vperm.slane %v1067, 0
  %v1100 = vperm.slane %v1068, 0
  %v1101 = vperm.slane %v1069, 0
  %v1102 = vperm.slane %v1070, 0
  %v1103 = vperm.slane %v1071, 0
  %v1104 = vperm.slane %v1072, 0
  %v1105 = vperm.slane %v1073, 0
  %v1106 = vperm.slane %v1074, 0
  %v1107 = vperm.slane %v1075, 0
  %v1108 = vperm.slane %v1076, 0
  %v1109 = vperm.slane %v1077, 0
  %v1110 = vperm.slane %v1078, 0
  %v1111 = vperm.slane %v1079, 0
  %v1112 = vperm.slane %v1080, 0
  %v1113 = vperm.slane %v1081, 0
  %v1114 = vperm.slane %v1082, 0
  %v1115 = vperm.slane %v1083, 0
  %v1116 = vperm.slane %v1084, 0
  %v1149 = vperm.slane %v1053, 1
  %v1150 = vperm.slane %v1054, 1
  %v1151 = vperm.slane %v1055, 1
  %v1152 = vperm.slane %v1056, 1
  %v1153 = vperm.slane %v1057, 1
  %v1154 = vperm.slane %v1058, 1
  %v1155 = vperm.slane %v1059, 1
  %v1156 = vperm.slane %v1060, 1
  %v1157 = vperm.slane %v1061, 1
  %v1158 = vperm.slane %v1062, 1
  %v1159 = vperm.slane %v1063, 1
  %v1160 = vperm.slane %v1064, 1
  %v1161 = vperm.slane %v1065, 1
  %v1162 = vperm.slane %v1066, 1
  %v1163 = vperm.slane %v1067, 1
  %v1164 = vperm.slane %v1068, 1
  %v1165 = vperm.slane %v1069, 1
  %v1166 = vperm.slane %v1070, 1
  %v1167 = vperm.slane %v1071, 1
  %v1168 = vperm.slane %v1072, 1
  %v1169 = vperm.slane %v1073, 1
  %v1170 = vperm.slane %v1074, 1
  %v1171 = vperm.slane %v1075, 1
  %v1172 = vperm.slane %v1076, 1
  %v1173 = vperm.slane %v1077, 1
  %v1174 = vperm.slane %v1078, 1
  %v1175 = vperm.slane %v1079, 1
  %v1176 = vperm.slane %v1080, 1
  %v1177 = vperm.slane %v1081, 1
  %v1178 = vperm.slane %v1082, 1
  %v1179 = vperm.slane %v1083, 1
  %v1180 = vperm.slane %v1084, 1
  %1181 = vrot.lane.b32.xlu0 %v1085, 2
  %v1182 = vpop.permute.xlu0 %1181
  %1183 = vrot.lane.b32.xlu0 %v1149, 2
  %v1184 = vpop.permute.xlu0 %1183
  %1185 = vrot.lane.b32.xlu0 %v1086, 2
  %v1186 = vpop.permute.xlu0 %1185
  %1187 = vrot.lane.b32.xlu0 %v1150, 2
  %v1188 = vpop.permute.xlu0 %1187
  %1189 = vrot.lane.b32.xlu0 %v1087, 2
  %v1190 = vpop.permute.xlu0 %1189
  %1191 = vrot.lane.b32.xlu0 %v1151, 2
  %v1192 = vpop.permute.xlu0 %1191
  %1193 = vrot.lane.b32.xlu0 %v1088, 2
  %v1194 = vpop.permute.xlu0 %1193
  %1195 = vrot.lane.b32.xlu0 %v1152, 2
  %v1196 = vpop.permute.xlu0 %1195
  %1197 = vrot.lane.b32.xlu0 %v1089, 2
  %v1198 = vpop.permute.xlu0 %1197
  %1199 = vrot.lane.b32.xlu0 %v1153, 2
  %v1200 = vpop.permute.xlu0 %1199
  %1201 = vrot.lane.b32.xlu0 %v1090, 2
  %v1202 = vpop.permute.xlu0 %1201
  %1203 = vrot.lane.b32.xlu0 %v1154, 2
  %v1204 = vpop.permute.xlu0 %1203
  %1205 = vrot.lane.b32.xlu0 %v1091, 2
  %v1206 = vpop.permute.xlu0 %1205
  %1207 = vrot.lane.b32.xlu0 %v1155, 2
  %v1208 = vpop.permute.xlu0 %1207
  %1209 = vrot.lane.b32.xlu0 %v1092, 2
  %v1210 = vpop.permute.xlu0 %1209
  %1211 = vrot.lane.b32.xlu0 %v1156, 2
  %v1212 = vpop.permute.xlu0 %1211
  %1213 = vrot.lane.b32.xlu0 %v1093, 2
  %v1214 = vpop.permute.xlu0 %1213
  %1215 = vrot.lane.b32.xlu0 %v1157, 2
  %v1216 = vpop.permute.xlu0 %1215
  %1217 = vrot.lane.b32.xlu0 %v1094, 2
  %v1218 = vpop.permute.xlu0 %1217
  %1219 = vrot.lane.b32.xlu0 %v1158, 2
  %v1220 = vpop.permute.xlu0 %1219
  %1221 = vrot.lane.b32.xlu0 %v1095, 2
  %v1222 = vpop.permute.xlu0 %1221
  %1223 = vrot.lane.b32.xlu0 %v1159, 2
  %v1224 = vpop.permute.xlu0 %1223
  %1225 = vrot.lane.b32.xlu0 %v1096, 2
  %v1226 = vpop.permute.xlu0 %1225
  %1227 = vrot.lane.b32.xlu0 %v1160, 2
  %v1228 = vpop.permute.xlu0 %1227
  %1229 = vrot.lane.b32.xlu0 %v1097, 2
  %v1230 = vpop.permute.xlu0 %1229
  %1231 = vrot.lane.b32.xlu0 %v1161, 2
  %v1232 = vpop.permute.xlu0 %1231
  %1233 = vrot.lane.b32.xlu0 %v1098, 2
  %v1234 = vpop.permute.xlu0 %1233
  %1235 = vrot.lane.b32.xlu0 %v1162, 2
  %v1236 = vpop.permute.xlu0 %1235
  %1237 = vrot.lane.b32.xlu0 %v1099, 2
  %v1238 = vpop.permute.xlu0 %1237
  %1239 = vrot.lane.b32.xlu0 %v1163, 2
  %v1240 = vpop.permute.xlu0 %1239
  %1241 = vrot.lane.b32.xlu0 %v1100, 2
  %v1242 = vpop.permute.xlu0 %1241
  %1243 = vrot.lane.b32.xlu0 %v1164, 2
  %v1244 = vpop.permute.xlu0 %1243
  %1245 = vrot.lane.b32.xlu0 %v1101, 2
  %v1246 = vpop.permute.xlu0 %1245
  %1247 = vrot.lane.b32.xlu0 %v1165, 2
  %v1248 = vpop.permute.xlu0 %1247
  %1249 = vrot.lane.b32.xlu0 %v1102, 2
  %v1250 = vpop.permute.xlu0 %1249
  %1251 = vrot.lane.b32.xlu0 %v1166, 2
  %v1252 = vpop.permute.xlu0 %1251
  %1253 = vrot.lane.b32.xlu0 %v1103, 2
  %v1254 = vpop.permute.xlu0 %1253
  %1255 = vrot.lane.b32.xlu0 %v1167, 2
  %v1256 = vpop.permute.xlu0 %1255
  %1257 = vrot.lane.b32.xlu0 %v1104, 2
  %v1258 = vpop.permute.xlu0 %1257
  %1259 = vrot.lane.b32.xlu0 %v1168, 2
  %v1260 = vpop.permute.xlu0 %1259
  %1261 = vrot.lane.b32.xlu0 %v1105, 2
  %v1262 = vpop.permute.xlu0 %1261
  %1263 = vrot.lane.b32.xlu0 %v1169, 2
  %v1264 = vpop.permute.xlu0 %1263
  %1265 = vrot.lane.b32.xlu0 %v1106, 2
  %v1266 = vpop.permute.xlu0 %1265
  %1267 = vrot.lane.b32.xlu0 %v1170, 2
  %v1268 = vpop.permute.xlu0 %1267
  %1269 = vrot.lane.b32.xlu0 %v1107, 2
  %v1270 = vpop.permute.xlu0 %1269
  %1271 = vrot.lane.b32.xlu0 %v1171, 2
  %v1272 = vpop.permute.xlu0 %1271
  %1273 = vrot.lane.b32.xlu0 %v1108, 2
  %v1274 = vpop.permute.xlu0 %1273
  %1275 = vrot.lane.b32.xlu0 %v1172, 2
  %v1276 = vpop.permute.xlu0 %1275
  %1277 = vrot.lane.b32.xlu0 %v1109, 2
  %v1278 = vpop.permute.xlu0 %1277
  %1279 = vrot.lane.b32.xlu0 %v1173, 2
  %v1280 = vpop.permute.xlu0 %1279
  %1281 = vrot.lane.b32.xlu0 %v1110, 2
  %v1282 = vpop.permute.xlu0 %1281
  %1283 = vrot.lane.b32.xlu0 %v1174, 2
  %v1284 = vpop.permute.xlu0 %1283
  %1285 = vrot.lane.b32.xlu0 %v1111, 2
  %v1286 = vpop.permute.xlu0 %1285
  %1287 = vrot.lane.b32.xlu0 %v1175, 2
  %v1288 = vpop.permute.xlu0 %1287
  %1289 = vrot.lane.b32.xlu0 %v1112, 2
  %v1290 = vpop.permute.xlu0 %1289
  %1291 = vrot.lane.b32.xlu0 %v1176, 2
  %v1292 = vpop.permute.xlu0 %1291
  %1293 = vrot.lane.b32.xlu0 %v1113, 2
  %v1294 = vpop.permute.xlu0 %1293
  %1295 = vrot.lane.b32.xlu0 %v1177, 2
  %v1296 = vpop.permute.xlu0 %1295
  %1297 = vrot.lane.b32.xlu0 %v1114, 2
  %v1298 = vpop.permute.xlu0 %1297
  %1299 = vrot.lane.b32.xlu0 %v1178, 2
  %v1300 = vpop.permute.xlu0 %1299
  %1301 = vrot.lane.b32.xlu0 %v1115, 2
  %v1302 = vpop.permute.xlu0 %1301
  %1303 = vrot.lane.b32.xlu0 %v1179, 2
  %v1304 = vpop.permute.xlu0 %1303
  %1305 = vrot.lane.b32.xlu0 %v1116, 2
  %v1306 = vpop.permute.xlu0 %1305
  %1307 = vrot.lane.b32.xlu0 %v1180, 2
  %v1308 = vpop.permute.xlu0 %1307
  %vm1309 = vcmask 15360
  %v1310 = vsel %vm1309, %v1182, %v1184
  %v1311 = vsel %vm1309, %v1186, %v1188
  %v1312 = vsel %vm1309, %v1190, %v1192
  %v1313 = vsel %vm1309, %v1194, %v1196
  %v1314 = vsel %vm1309, %v1198, %v1200
  %v1315 = vsel %vm1309, %v1202, %v1204
  %v1316 = vsel %vm1309, %v1206, %v1208
  %v1317 = vsel %vm1309, %v1210, %v1212
  %v1318 = vsel %vm1309, %v1214, %v1216
  %v1319 = vsel %vm1309, %v1218, %v1220
  %v1320 = vsel %vm1309, %v1222, %v1224
  %v1321 = vsel %vm1309, %v1226, %v1228
  %v1322 = vsel %vm1309, %v1230, %v1232
  %v1323 = vsel %vm1309, %v1234, %v1236
  %v1324 = vsel %vm1309, %v1238, %v1240
  %v1325 = vsel %vm1309, %v1242, %v1244
  %v1326 = vsel %vm1309, %v1246, %v1248
  %v1327 = vsel %vm1309, %v1250, %v1252
  %v1328 = vsel %vm1309, %v1254, %v1256
  %v1329 = vsel %vm1309, %v1258, %v1260
  %v1330 = vsel %vm1309, %v1262, %v1264
  %v1331 = vsel %vm1309, %v1266, %v1268
  %v1332 = vsel %vm1309, %v1270, %v1272
  %v1333 = vsel %vm1309, %v1274, %v1276
  %v1334 = vsel %vm1309, %v1278, %v1280
  %v1335 = vsel %vm1309, %v1282, %v1284
  %v1336 = vsel %vm1309, %v1286, %v1288
  %v1337 = vsel %vm1309, %v1290, %v1292
  %v1338 = vsel %vm1309, %v1294, %v1296
  %v1339 = vsel %vm1309, %v1298, %v1300
  %v1340 = vsel %vm1309, %v1302, %v1304
  %v1341 = vsel %vm1309, %v1306, %v1308
  %v1374 = vpack.i.b16 %v933, %v933
  %v1375 = vpack.i.b16 %v934, %v934
  %v1376 = vpack.i.b16 %v935, %v935
  %v1377 = vpack.i.b16 %v936, %v936
  %v1378 = vpack.i.b16 %v937, %v937
  %v1379 = vpack.i.b16 %v938, %v938
  %v1380 = vpack.i.b16 %v939, %v939
  %v1381 = vpack.i.b16 %v940, %v940
  %v1382 = vpack.i.b16 %v941, %v941
  %v1383 = vpack.i.b16 %v942, %v942
  %v1384 = vpack.i.b16 %v943, %v943
  %v1385 = vpack.i.b16 %v944, %v944
  %v1386 = vpack.i.b16 %v945, %v945
  %v1387 = vpack.i.b16 %v946, %v946
  %v1388 = vpack.i.b16 %v947, %v947
  %v1389 = vpack.i.b16 %v948, %v948
  %v1390 = vpack.i.b16 %v949, %v949
  %v1391 = vpack.i.b16 %v950, %v950
  %v1392 = vpack.i.b16 %v951, %v951
  %v1393 = vpack.i.b16 %v952, %v952
  %v1394 = vpack.i.b16 %v953, %v953
  %v1395 = vpack.i.b16 %v954, %v954
  %v1396 = vpack.i.b16 %v955, %v955
  %v1397 = vpack.i.b16 %v956, %v956
  %v1398 = vpack.i.b16 %v957, %v957
  %v1399 = vpack.i.b16 %v958, %v958
  %v1400 = vpack.i.b16 %v959, %v959
  %v1401 = vpack.i.b16 %v960, %v960
  %v1402 = vpack.i.b16 %v961, %v961
  %v1403 = vpack.i.b16 %v962, %v962
  %v1404 = vpack.i.b16 %v963, %v963
  %v1405 = vpack.i.b16 %v964, %v964
  %v1406 = vperm.slane %v1374, 0
  %v1407 = vperm.slane %v1375, 0
  %v1408 = vperm.slane %v1376, 0
  %v1409 = vperm.slane %v1377, 0
  %v1410 = vperm.slane %v1378, 0
  %v1411 = vperm.slane %v1379, 0
  %v1412 = vperm.slane %v1380, 0
  %v1413 = vperm.slane %v1381, 0
  %v1414 = vperm.slane %v1382, 0
  %v1415 = vperm.slane %v1383, 0
  %v1416 = vperm.slane %v1384, 0
  %v1417 = vperm.slane %v1385, 0
  %v1418 = vperm.slane %v1386, 0
  %v1419 = vperm.slane %v1387, 0
  %v1420 = vperm.slane %v1388, 0
  %v1421 = vperm.slane %v1389, 0
  %v1422 = vperm.slane %v1390, 0
  %v1423 = vperm.slane %v1391, 0
  %v1424 = vperm.slane %v1392, 0
  %v1425 = vperm.slane %v1393, 0
  %v1426 = vperm.slane %v1394, 0
  %v1427 = vperm.slane %v1395, 0
  %v1428 = vperm.slane %v1396, 0
  %v1429 = vperm.slane %v1397, 0
  %v1430 = vperm.slane %v1398, 0
  %v1431 = vperm.slane %v1399, 0
  %v1432 = vperm.slane %v1400, 0
  %v1433 = vperm.slane %v1401, 0
  %v1434 = vperm.slane %v1402, 0
  %v1435 = vperm.slane %v1403, 0
  %v1436 = vperm.slane %v1404, 0
  %v1437 = vperm.slane %v1405, 0
  %v1438 = vpack.i.b16 %v1021, %v1021
  %v1439 = vpack.i.b16 %v1022, %v1022
  %v1440 = vpack.i.b16 %v1023, %v1023
  %v1441 = vpack.i.b16 %v1024, %v1024
  %v1442 = vpack.i.b16 %v1025, %v1025
  %v1443 = vpack.i.b16 %v1026, %v1026
  %v1444 = vpack.i.b16 %v1027, %v1027
  %v1445 = vpack.i.b16 %v1028, %v1028
  %v1446 = vpack.i.b16 %v1029, %v1029
  %v1447 = vpack.i.b16 %v1030, %v1030
  %v1448 = vpack.i.b16 %v1031, %v1031
  %v1449 = vpack.i.b16 %v1032, %v1032
  %v1450 = vpack.i.b16 %v1033, %v1033
  %v1451 = vpack.i.b16 %v1034, %v1034
  %v1452 = vpack.i.b16 %v1035, %v1035
  %v1453 = vpack.i.b16 %v1036, %v1036
  %v1454 = vpack.i.b16 %v1037, %v1037
  %v1455 = vpack.i.b16 %v1038, %v1038
  %v1456 = vpack.i.b16 %v1039, %v1039
  %v1457 = vpack.i.b16 %v1040, %v1040
  %v1458 = vpack.i.b16 %v1041, %v1041
  %v1459 = vpack.i.b16 %v1042, %v1042
  %v1460 = vpack.i.b16 %v1043, %v1043
  %v1461 = vpack.i.b16 %v1044, %v1044
  %v1462 = vpack.i.b16 %v1045, %v1045
  %v1463 = vpack.i.b16 %v1046, %v1046
  %v1464 = vpack.i.b16 %v1047, %v1047
  %v1465 = vpack.i.b16 %v1048, %v1048
  %v1466 = vpack.i.b16 %v1049, %v1049
  %v1467 = vpack.i.b16 %v1050, %v1050
  %v1468 = vpack.i.b16 %v1051, %v1051
  %v1469 = vpack.i.b16 %v1052, %v1052
  %v1470 = vperm.slane %v1438, 0
  %v1471 = vperm.slane %v1438, 1
  %v1472 = vperm.slane %v1439, 0
  %v1473 = vperm.slane %v1439, 1
  %v1474 = vperm.slane %v1440, 0
  %v1475 = vperm.slane %v1440, 1
  %v1476 = vperm.slane %v1441, 0
  %v1477 = vperm.slane %v1441, 1
  %v1478 = vperm.slane %v1442, 0
  %v1479 = vperm.slane %v1442, 1
  %v1480 = vperm.slane %v1443, 0
  %v1481 = vperm.slane %v1443, 1
  %v1482 = vperm.slane %v1444, 0
  %v1483 = vperm.slane %v1444, 1
  %v1484 = vperm.slane %v1445, 0
  %v1485 = vperm.slane %v1445, 1
  %v1486 = vperm.slane %v1446, 0
  %v1487 = vperm.slane %v1446, 1
  %v1488 = vperm.slane %v1447, 0
  %v1489 = vperm.slane %v1447, 1
  %v1490 = vperm.slane %v1448, 0
  %v1491 = vperm.slane %v1448, 1
  %v1492 = vperm.slane %v1449, 0
  %v1493 = vperm.slane %v1449, 1
  %v1494 = vperm.slane %v1450, 0
  %v1495 = vperm.slane %v1450, 1
  %v1496 = vperm.slane %v1451, 0
  %v1497 = vperm.slane %v1451, 1
  %v1498 = vperm.slane %v1452, 0
  %v1499 = vperm.slane %v1452, 1
  %v1500 = vperm.slane %v1453, 0
  %v1501 = vperm.slane %v1453, 1
  %v1502 = vperm.slane %v1454, 0
  %v1503 = vperm.slane %v1454, 1
  %v1504 = vperm.slane %v1455, 0
  %v1505 = vperm.slane %v1455, 1
  %v1506 = vperm.slane %v1456, 0
  %v1507 = vperm.slane %v1456, 1
  %v1508 = vperm.slane %v1457, 0
  %v1509 = vperm.slane %v1457, 1
  %v1510 = vperm.slane %v1458, 0
  %v1511 = vperm.slane %v1458, 1
  %v1512 = vperm.slane %v1459, 0
  %v1513 = vperm.slane %v1459, 1
  %v1514 = vperm.slane %v1460, 0
  %v1515 = vperm.slane %v1460, 1
  %v1516 = vperm.slane %v1461, 0
  %v1517 = vperm.slane %v1461, 1
  %v1518 = vperm.slane %v1462, 0
  %v1519 = vperm.slane %v1462, 1
  %v1520 = vperm.slane %v1463, 0
  %v1521 = vperm.slane %v1463, 1
  %v1522 = vperm.slane %v1464, 0
  %v1523 = vperm.slane %v1464, 1
  %v1524 = vperm.slane %v1465, 0
  %v1525 = vperm.slane %v1465, 1
  %v1526 = vperm.slane %v1466, 0
  %v1527 = vperm.slane %v1466, 1
  %v1528 = vperm.slane %v1467, 0
  %v1529 = vperm.slane %v1467, 1
  %v1530 = vperm.slane %v1468, 0
  %v1531 = vperm.slane %v1468, 1
  %v1532 = vperm.slane %v1469, 0
  %v1533 = vperm.slane %v1469, 1
  %1534 = vrot.lane.b32.xlu0 %v1470, 6
  %v1535 = vpop.permute.xlu0 %1534
  %1536 = vrot.lane.b32.xlu0 %v1471, 6
  %v1537 = vpop.permute.xlu0 %1536
  %1538 = vrot.lane.b32.xlu0 %v1472, 6
  %v1539 = vpop.permute.xlu0 %1538
  %1540 = vrot.lane.b32.xlu0 %v1473, 6
  %v1541 = vpop.permute.xlu0 %1540
  %1542 = vrot.lane.b32.xlu0 %v1474, 6
  %v1543 = vpop.permute.xlu0 %1542
  %1544 = vrot.lane.b32.xlu0 %v1475, 6
  %v1545 = vpop.permute.xlu0 %1544
  %1546 = vrot.lane.b32.xlu0 %v1476, 6
  %v1547 = vpop.permute.xlu0 %1546
  %1548 = vrot.lane.b32.xlu0 %v1477, 6
  %v1549 = vpop.permute.xlu0 %1548
  %1550 = vrot.lane.b32.xlu0 %v1478, 6
  %v1551 = vpop.permute.xlu0 %1550
  %1552 = vrot.lane.b32.xlu0 %v1479, 6
  %v1553 = vpop.permute.xlu0 %1552
  %1554 = vrot.lane.b32.xlu0 %v1480, 6
  %v1555 = vpop.permute.xlu0 %1554
  %1556 = vrot.lane.b32.xlu0 %v1481, 6
  %v1557 = vpop.permute.xlu0 %1556
  %1558 = vrot.lane.b32.xlu0 %v1482, 6
  %v1559 = vpop.permute.xlu0 %1558
  %1560 = vrot.lane.b32.xlu0 %v1483, 6
  %v1561 = vpop.permute.xlu0 %1560
  %1562 = vrot.lane.b32.xlu0 %v1484, 6
  %v1563 = vpop.permute.xlu0 %1562
  %1564 = vrot.lane.b32.xlu0 %v1485, 6
  %v1565 = vpop.permute.xlu0 %1564
  %1566 = vrot.lane.b32.xlu0 %v1486, 6
  %v1567 = vpop.permute.xlu0 %1566
  %1568 = vrot.lane.b32.xlu0 %v1487, 6
  %v1569 = vpop.permute.xlu0 %1568
  %1570 = vrot.lane.b32.xlu0 %v1488, 6
  %v1571 = vpop.permute.xlu0 %1570
  %1572 = vrot.lane.b32.xlu0 %v1489, 6
  %v1573 = vpop.permute.xlu0 %1572
  %1574 = vrot.lane.b32.xlu0 %v1490, 6
  %v1575 = vpop.permute.xlu0 %1574
  %1576 = vrot.lane.b32.xlu0 %v1491, 6
  %v1577 = vpop.permute.xlu0 %1576
  %1578 = vrot.lane.b32.xlu0 %v1492, 6
  %v1579 = vpop.permute.xlu0 %1578
  %1580 = vrot.lane.b32.xlu0 %v1493, 6
  %v1581 = vpop.permute.xlu0 %1580
  %1582 = vrot.lane.b32.xlu0 %v1494, 6
  %v1583 = vpop.permute.xlu0 %1582
  %1584 = vrot.lane.b32.xlu0 %v1495, 6
  %v1585 = vpop.permute.xlu0 %1584
  %1586 = vrot.lane.b32.xlu0 %v1496, 6
  %v1587 = vpop.permute.xlu0 %1586
  %1588 = vrot.lane.b32.xlu0 %v1497, 6
  %v1589 = vpop.permute.xlu0 %1588
  %1590 = vrot.lane.b32.xlu0 %v1498, 6
  %v1591 = vpop.permute.xlu0 %1590
  %1592 = vrot.lane.b32.xlu0 %v1499, 6
  %v1593 = vpop.permute.xlu0 %1592
  %1594 = vrot.lane.b32.xlu0 %v1500, 6
  %v1595 = vpop.permute.xlu0 %1594
  %1596 = vrot.lane.b32.xlu0 %v1501, 6
  %v1597 = vpop.permute.xlu0 %1596
  %1598 = vrot.lane.b32.xlu0 %v1502, 6
  %v1599 = vpop.permute.xlu0 %1598
  %1600 = vrot.lane.b32.xlu0 %v1503, 6
  %v1601 = vpop.permute.xlu0 %1600
  %1602 = vrot.lane.b32.xlu0 %v1504, 6
  %v1603 = vpop.permute.xlu0 %1602
  %1604 = vrot.lane.b32.xlu0 %v1505, 6
  %v1605 = vpop.permute.xlu0 %1604
  %1606 = vrot.lane.b32.xlu0 %v1506, 6
  %v1607 = vpop.permute.xlu0 %1606
  %1608 = vrot.lane.b32.xlu0 %v1507, 6
  %v1609 = vpop.permute.xlu0 %1608
  %1610 = vrot.lane.b32.xlu0 %v1508, 6
  %v1611 = vpop.permute.xlu0 %1610
  %1612 = vrot.lane.b32.xlu0 %v1509, 6
  %v1613 = vpop.permute.xlu0 %1612
  %1614 = vrot.lane.b32.xlu0 %v1510, 6
  %v1615 = vpop.permute.xlu0 %1614
  %1616 = vrot.lane.b32.xlu0 %v1511, 6
  %v1617 = vpop.permute.xlu0 %1616
  %1618 = vrot.lane.b32.xlu0 %v1512, 6
  %v1619 = vpop.permute.xlu0 %1618
  %1620 = vrot.lane.b32.xlu0 %v1513, 6
  %v1621 = vpop.permute.xlu0 %1620
  %1622 = vrot.lane.b32.xlu0 %v1514, 6
  %v1623 = vpop.permute.xlu0 %1622
  %1624 = vrot.lane.b32.xlu0 %v1515, 6
  %v1625 = vpop.permute.xlu0 %1624
  %1626 = vrot.lane.b32.xlu0 %v1516, 6
  %v1627 = vpop.permute.xlu0 %1626
  %1628 = vrot.lane.b32.xlu0 %v1517, 6
  %v1629 = vpop.permute.xlu0 %1628
  %1630 = vrot.lane.b32.xlu0 %v1518, 6
  %v1631 = vpop.permute.xlu0 %1630
  %1632 = vrot.lane.b32.xlu0 %v1519, 6
  %v1633 = vpop.permute.xlu0 %1632
  %1634 = vrot.lane.b32.xlu0 %v1520, 6
  %v1635 = vpop.permute.xlu0 %1634
  %1636 = vrot.lane.b32.xlu0 %v1521, 6
  %v1637 = vpop.permute.xlu0 %1636
  %1638 = vrot.lane.b32.xlu0 %v1522, 6
  %v1639 = vpop.permute.xlu0 %1638
  %1640 = vrot.lane.b32.xlu0 %v1523, 6
  %v1641 = vpop.permute.xlu0 %1640
  %1642 = vrot.lane.b32.xlu0 %v1524, 6
  %v1643 = vpop.permute.xlu0 %1642
  %1644 = vrot.lane.b32.xlu0 %v1525, 6
  %v1645 = vpop.permute.xlu0 %1644
  %1646 = vrot.lane.b32.xlu0 %v1526, 6
  %v1647 = vpop.permute.xlu0 %1646
  %1648 = vrot.lane.b32.xlu0 %v1527, 6
  %v1649 = vpop.permute.xlu0 %1648
  %1650 = vrot.lane.b32.xlu0 %v1528, 6
  %v1651 = vpop.permute.xlu0 %1650
  %1652 = vrot.lane.b32.xlu0 %v1529, 6
  %v1653 = vpop.permute.xlu0 %1652
  %1654 = vrot.lane.b32.xlu0 %v1530, 6
  %v1655 = vpop.permute.xlu0 %1654
  %1656 = vrot.lane.b32.xlu0 %v1531, 6
  %v1657 = vpop.permute.xlu0 %1656
  %1658 = vrot.lane.b32.xlu0 %v1532, 6
  %v1659 = vpop.permute.xlu0 %1658
  %1660 = vrot.lane.b32.xlu0 %v1533, 6
  %v1661 = vpop.permute.xlu0 %1660
  %vm1662 = vcmask 48128
  %v1663 = vsel %vm1662, %v1535, %v1537
  %v1664 = vsel %vm1662, %v1539, %v1541
  %v1665 = vsel %vm1662, %v1543, %v1545
  %v1666 = vsel %vm1662, %v1547, %v1549
  %v1667 = vsel %vm1662, %v1551, %v1553
  %v1668 = vsel %vm1662, %v1555, %v1557
  %v1669 = vsel %vm1662, %v1559, %v1561
  %v1670 = vsel %vm1662, %v1563, %v1565
  %v1671 = vsel %vm1662, %v1567, %v1569
  %v1672 = vsel %vm1662, %v1571, %v1573
  %v1673 = vsel %vm1662, %v1575, %v1577
  %v1674 = vsel %vm1662, %v1579, %v1581
  %v1675 = vsel %vm1662, %v1583, %v1585
  %v1676 = vsel %vm1662, %v1587, %v1589
  %v1677 = vsel %vm1662, %v1591, %v1593
  %v1678 = vsel %vm1662, %v1595, %v1597
  %v1679 = vsel %vm1662, %v1599, %v1601
  %v1680 = vsel %vm1662, %v1603, %v1605
  %v1681 = vsel %vm1662, %v1607, %v1609
  %v1682 = vsel %vm1662, %v1611, %v1613
  %v1683 = vsel %vm1662, %v1615, %v1617
  %v1684 = vsel %vm1662, %v1619, %v1621
  %v1685 = vsel %vm1662, %v1623, %v1625
  %v1686 = vsel %vm1662, %v1627, %v1629
  %v1687 = vsel %vm1662, %v1631, %v1633
  %v1688 = vsel %vm1662, %v1635, %v1637
  %v1689 = vsel %vm1662, %v1639, %v1641
  %v1690 = vsel %vm1662, %v1643, %v1645
  %v1691 = vsel %vm1662, %v1647, %v1649
  %v1692 = vsel %vm1662, %v1651, %v1653
  %v1693 = vsel %vm1662, %v1655, %v1657
  %v1694 = vsel %vm1662, %v1659, %v1661
  %vm1727 = vcmask 1040384
  %vm1728 = vsmask.f32 256
  %vm1729 = vmand %vm1727, %vm1728
  %v1730 = vsel %vm1729, %v1085, %v1310
  %v1731 = vsel %vm1729, %v1086, %v1311
  %v1732 = vsel %vm1729, %v1087, %v1312
  %v1733 = vsel %vm1729, %v1088, %v1313
  %v1734 = vsel %vm1729, %v1089, %v1314
  %v1735 = vsel %vm1729, %v1090, %v1315
  %v1736 = vsel %vm1729, %v1091, %v1316
  %v1737 = vsel %vm1729, %v1092, %v1317
  %v1738 = vsel %vm1729, %v1093, %v1318
  %v1739 = vsel %vm1729, %v1094, %v1319
  %v1740 = vsel %vm1729, %v1095, %v1320
  %v1741 = vsel %vm1729, %v1096, %v1321
  %v1742 = vsel %vm1729, %v1097, %v1322
  %v1743 = vsel %vm1729, %v1098, %v1323
  %v1744 = vsel %vm1729, %v1099, %v1324
  %v1745 = vsel %vm1729, %v1100, %v1325
  %v1746 = vsel %vm1729, %v1101, %v1326
  %v1747 = vsel %vm1729, %v1102, %v1327
  %v1748 = vsel %vm1729, %v1103, %v1328
  %v1749 = vsel %vm1729, %v1104, %v1329
  %v1750 = vsel %vm1729, %v1105, %v1330
  %v1751 = vsel %vm1729, %v1106, %v1331
  %v1752 = vsel %vm1729, %v1107, %v1332
  %v1753 = vsel %vm1729, %v1108, %v1333
  %v1754 = vsel %vm1729, %v1109, %v1334
  %v1755 = vsel %vm1729, %v1110, %v1335
  %v1756 = vsel %vm1729, %v1111, %v1336
  %v1757 = vsel %vm1729, %v1112, %v1337
  %v1758 = vsel %vm1729, %v1113, %v1338
  %v1759 = vsel %vm1729, %v1114, %v1339
  %v1760 = vsel %vm1729, %v1115, %v1340
  %v1761 = vsel %vm1729, %v1116, %v1341
  %v1764 = vsel %vm630, %v1730, %v1406
  %v1768 = vsel %vm630, %v1731, %v1407
  %v1772 = vsel %vm630, %v1732, %v1408
  %v1776 = vsel %vm630, %v1733, %v1409
  %v1780 = vsel %vm630, %v1734, %v1410
  %v1784 = vsel %vm630, %v1735, %v1411
  %v1788 = vsel %vm630, %v1736, %v1412
  %v1792 = vsel %vm630, %v1737, %v1413
  %v1796 = vsel %vm630, %v1738, %v1414
  %v1800 = vsel %vm630, %v1739, %v1415
  %v1804 = vsel %vm630, %v1740, %v1416
  %v1808 = vsel %vm630, %v1741, %v1417
  %v1812 = vsel %vm630, %v1742, %v1418
  %v1816 = vsel %vm630, %v1743, %v1419
  %v1820 = vsel %vm630, %v1744, %v1420
  %v1824 = vsel %vm630, %v1745, %v1421
  %v1828 = vsel %vm630, %v1746, %v1422
  %v1832 = vsel %vm630, %v1747, %v1423
  %v1836 = vsel %vm630, %v1748, %v1424
  %v1840 = vsel %vm630, %v1749, %v1425
  %v1844 = vsel %vm630, %v1750, %v1426
  %v1848 = vsel %vm630, %v1751, %v1427
  %v1852 = vsel %vm630, %v1752, %v1428
  %v1856 = vsel %vm630, %v1753, %v1429
  %v1860 = vsel %vm630, %v1754, %v1430
  %v1864 = vsel %vm630, %v1755, %v1431
  %v1868 = vsel %vm630, %v1756, %v1432
  %v1872 = vsel %vm630, %v1757, %v1433
  %v1876 = vsel %vm630, %v1758, %v1434
  %v1880 = vsel %vm630, %v1759, %v1435
  %v1884 = vsel %vm630, %v1760, %v1436
  %v1888 = vsel %vm630, %v1761, %v1437
  %vm1890 = vcmask 1041408
  %vm1891 = vsmask.f32 1280
  %vm1892 = vmand %vm1890, %vm1891
  %v1893 = vsel %vm1892, %v1764, %v1663
  %v1894 = vsel %vm1892, %v1768, %v1664
  %v1895 = vsel %vm1892, %v1772, %v1665
  %v1896 = vsel %vm1892, %v1776, %v1666
  %v1897 = vsel %vm1892, %v1780, %v1667
  %v1898 = vsel %vm1892, %v1784, %v1668
  %v1899 = vsel %vm1892, %v1788, %v1669
  %v1900 = vsel %vm1892, %v1792, %v1670
  %v1901 = vsel %vm1892, %v1796, %v1671
  %v1902 = vsel %vm1892, %v1800, %v1672
  %v1903 = vsel %vm1892, %v1804, %v1673
  %v1904 = vsel %vm1892, %v1808, %v1674
  %v1905 = vsel %vm1892, %v1812, %v1675
  %v1906 = vsel %vm1892, %v1816, %v1676
  %v1907 = vsel %vm1892, %v1820, %v1677
  %v1908 = vsel %vm1892, %v1824, %v1678
  %v1909 = vsel %vm1892, %v1828, %v1679
  %v1910 = vsel %vm1892, %v1832, %v1680
  %v1911 = vsel %vm1892, %v1836, %v1681
  %v1912 = vsel %vm1892, %v1840, %v1682
  %v1913 = vsel %vm1892, %v1844, %v1683
  %v1914 = vsel %vm1892, %v1848, %v1684
  %v1915 = vsel %vm1892, %v1852, %v1685
  %v1916 = vsel %vm1892, %v1856, %v1686
  %v1917 = vsel %vm1892, %v1860, %v1687
  %v1918 = vsel %vm1892, %v1864, %v1688
  %v1919 = vsel %vm1892, %v1868, %v1689
  %v1920 = vsel %vm1892, %v1872, %v1690
  %v1921 = vsel %vm1892, %v1876, %v1691
  %v1922 = vsel %vm1892, %v1880, %v1692
  %v1923 = vsel %vm1892, %v1884, %v1693
  %v1924 = vsel %vm1892, %v1888, %v1694
  %1926 = vst [vmem:[#allocation1] ss:$4 sm:$0xff] 0
  %s1928 = scalar_lea.vmem [#allocation1], 1
  %1929 = vst [vmem:[%s1928] ss:$4 sm:$0xff] %v1893
  %s1931 = scalar_lea.vmem [#allocation1], 2
  %1932 = vst [vmem:[%s1931] ss:$4 sm:$0xff] %v1894
  %v1933 = vld.sshfl [vmem:[#allocation1] sm:$0xff pattern:$0x73625140]
  %vm1934 = vcmask 97280
  %v1936 = vsel %vm1934, %v124, 0
  %vm1938 = vcmask 1045504
  %v1939 = vsel %vm1938, %v1933, 0
  %1941 = vmatpush.bf16.msra.mxu0 0
  %1942 = vmatpush.bf16.msra.mxu0 0
  %1943 = vmatpush.bf16.msra.mxu0 0
  %1944 = vmatpush.bf16.msra.mxu0 0
  %1945 = vmatpush.bf16.msra.mxu0 0
  %1946 = vmatpush.bf16.msra.mxu0 0
  %1947 = vmatpush.bf16.msra.mxu0 0
  %1948 = vmatpush.bf16.msra.mxu0 %v1939
  %1949 = vmatmul.bf16.gmra.mxu0 %v1936
  %v1950 = vpop.f32.mrf.mxu0
  %v1951 = vadd.f32 0.0, %v1950
  %v1952 = vpop.f32.mrf.mxu0
  %1953 = vdwg.mxu0
  %1955 = vrot.lane.b32.xlu0 %v1951, 65
  %v1956 = vpop.permute.xlu0 %1955
  %v1958 = vmax.f32 %v1951, %v1956
  %1959 = vst [vmem:[#allocation1] ss:$4 sm:$0xff] %v1893
  %s1960 = scalar_lea.vmem [#allocation1], 1
  %1961 = vst [vmem:[%s1960] ss:$4 sm:$0xff] %v1894
  %s1963 = scalar_lea.vmem [#allocation1], 2
  %1964 = vst [vmem:[%s1963] ss:$4 sm:$0xff] %v1895
  %v1965 = vld.sshfl [vmem:[#allocation1] sm:$0xff pattern:$0x73625140]
  %v1966 = vsel %vm1938, %v1965, 0
  %1968 = vmatpush.bf16.msra.mxu0 0
  %1969 = vmatpush.bf16.msra.mxu0 0
  %1970 = vmatpush.bf16.msra.mxu0 0
  %1971 = vmatpush.bf16.msra.mxu0 0
  %1972 = vmatpush.bf16.msra.mxu0 0
  %1973 = vmatpush.bf16.msra.mxu0 0
  %1974 = vmatpush.bf16.msra.mxu0 0
  %1975 = vmatpush.bf16.msra.mxu0 %v1966
  %1976 = vmatmul.bf16.gmra.mxu0 %v1936
  %v1977 = vpop.f32.mrf.mxu0
  %v1978 = vadd.f32 0.0, %v1977
  %v1979 = vpop.f32.mrf.mxu0
  %1980 = vdwg.mxu0
  %1982 = vrot.lane.b32.xlu0 %v1978, 65
  %v1983 = vpop.permute.xlu0 %1982
  %v1985 = vmax.f32 %v1978, %v1983
  %v1986 = vmax.f32 %v1958, %v1985
  %1988 = vset.pattern.permute.xlu0 0
  %1989 = vperm.xlu0 %1988, %v125
  %v1990 = vpop.permute.xlu0 %1989
  %v1992 = vadd.f32 %v1986, %v1990
  %v1993 = vmax.f32 %v1992, 0.0
  %1994 = vst [vmem:[#allocation1] ss:$4 sm:$0xff] %v1894
  %s1995 = scalar_lea.vmem [#allocation1], 1
  %1996 = vst [vmem:[%s1995] ss:$4 sm:$0xff] %v1895
  %s1998 = scalar_lea.vmem [#allocation1], 2
  %1999 = vst [vmem:[%s1998] ss:$4 sm:$0xff] %v1896
  %v2000 = vld.sshfl [vmem:[#allocation1] sm:$0xff pattern:$0x73625140]
  %v2001 = vsel %vm1938, %v2000, 0
  %2003 = vmatpush.bf16.msra.mxu0 0
  %2004 = vmatpush.bf16.msra.mxu0 0
  %2005 = vmatpush.bf16.msra.mxu0 0
  %2006 = vmatpush.bf16.msra.mxu0 0
  %2007 = vmatpush.bf16.msra.mxu0 0
  %2008 = vmatpush.bf16.msra.mxu0 0
  %2009 = vmatpush.bf16.msra.mxu0 0
  %2010 = vmatpush.bf16.msra.mxu0 %v2001
  %2011 = vmatmul.bf16.gmra.mxu0 %v1936
  %v2012 = vpop.f32.mrf.mxu0
  %v2013 = vadd.f32 0.0, %v2012
  %v2014 = vpop.f32.mrf.mxu0
  %2015 = vdwg.mxu0
  %2017 = vrot.lane.b32.xlu0 %v2013, 65
  %v2018 = vpop.permute.xlu0 %2017
  %v2020 = vmax.f32 %v2013, %v2018
  %2021 = vst [vmem:[#allocation1] ss:$4 sm:$0xff] %v1895
  %s2022 = scalar_lea.vmem [#allocation1], 1
  %2023 = vst [vmem:[%s2022] ss:$4 sm:$0xff] %v1896
  %s2025 = scalar_lea.vmem [#allocation1], 2
  %2026 = vst [vmem:[%s2025] ss:$4 sm:$0xff] %v1897
  %v2027 = vld.sshfl [vmem:[#allocation1] sm:$0xff pattern:$0x73625140]
  %v2028 = vsel %vm1938, %v2027, 0
  %2030 = vmatpush.bf16.msra.mxu0 0
  %2031 = vmatpush.bf16.msra.mxu0 0
  %2032 = vmatpush.bf16.msra.mxu0 0
  %2033 = vmatpush.bf16.msra.mxu0 0
  %2034 = vmatpush.bf16.msra.mxu0 0
  %2035 = vmatpush.bf16.msra.mxu0 0
  %2036 = vmatpush.bf16.msra.mxu0 0
  %2037 = vmatpush.bf16.msra.mxu0 %v2028
  %2038 = vmatmul.bf16.gmra.mxu0 %v1936
  %v2039 = vpop.f32.mrf.mxu0
  %v2040 = vadd.f32 0.0, %v2039
  %v2041 = vpop.f32.mrf.mxu0
  %2042 = vdwg.mxu0
  %2044 = vrot.lane.b32.xlu0 %v2040, 65
  %v2045 = vpop.permute.xlu0 %2044
  %v2047 = vmax.f32 %v2040, %v2045
  %v2048 = vmax.f32 %v2020, %v2047
  %v2049 = vadd.f32 %v2048, %v1990
  %v2050 = vmax.f32 %v2049, 0.0
  %2051 = vst [vmem:[#allocation1] ss:$4 sm:$0xff] %v1896
  %s2052 = scalar_lea.vmem [#allocation1], 1
  %2053 = vst [vmem:[%s2052] ss:$4 sm:$0xff] %v1897
  %s2055 = scalar_lea.vmem [#allocation1], 2
  %2056 = vst [vmem:[%s2055] ss:$4 sm:$0xff] %v1898
  %v2057 = vld.sshfl [vmem:[#allocation1] sm:$0xff pattern:$0x73625140]
  %v2058 = vsel %vm1938, %v2057, 0
  %2060 = vmatpush.bf16.msra.mxu0 0
  %2061 = vmatpush.bf16.msra.mxu0 0
  %2062 = vmatpush.bf16.msra.mxu0 0
  %2063 = vmatpush.bf16.msra.mxu0 0
  %2064 = vmatpush.bf16.msra.mxu0 0
  %2065 = vmatpush.bf16.msra.mxu0 0
  %2066 = vmatpush.bf16.msra.mxu0 0
  %2067 = vmatpush.bf16.msra.mxu0 %v2058
  %2068 = vmatmul.bf16.gmra.mxu0 %v1936
  %v2069 = vpop.f32.mrf.mxu0
  %v2070 = vadd.f32 0.0, %v2069
  %v2071 = vpop.f32.mrf.mxu0
  %2072 = vdwg.mxu0
  %2074 = vrot.lane.b32.xlu0 %v2070, 65
  %v2075 = vpop.permute.xlu0 %2074
  %v2077 = vmax.f32 %v2070, %v2075
  %2078 = vst [vmem:[#allocation1] ss:$4 sm:$0xff] %v1897
  %s2079 = scalar_lea.vmem [#allocation1], 1
  %2080 = vst [vmem:[%s2079] ss:$4 sm:$0xff] %v1898
  %s2082 = scalar_lea.vmem [#allocation1], 2
  %2083 = vst [vmem:[%s2082] ss:$4 sm:$0xff] %v1899
  %v2084 = vld.sshfl [vmem:[#allocation1] sm:$0xff pattern:$0x73625140]
  %v2085 = vsel %vm1938, %v2084, 0
  %2087 = vmatpush.bf16.msra.mxu0 0
  %2088 = vmatpush.bf16.msra.mxu0 0
  %2089 = vmatpush.bf16.msra.mxu0 0
  %2090 = vmatpush.bf16.msra.mxu0 0
  %2091 = vmatpush.bf16.msra.mxu0 0
  %2092 = vmatpush.bf16.msra.mxu0 0
  %2093 = vmatpush.bf16.msra.mxu0 0
  %2094 = vmatpush.bf16.msra.mxu0 %v2085
  %2095 = vmatmul.bf16.gmra.mxu0 %v1936
  %v2096 = vpop.f32.mrf.mxu0
  %v2097 = vadd.f32 0.0, %v2096
  %v2098 = vpop.f32.mrf.mxu0
  %2099 = vdwg.mxu0
  %2101 = vrot.lane.b32.xlu0 %v2097, 65
  %v2102 = vpop.permute.xlu0 %2101
  %v2104 = vmax.f32 %v2097, %v2102
  %v2105 = vmax.f32 %v2077, %v2104
  %v2106 = vadd.f32 %v2105, %v1990
  %v2107 = vmax.f32 %v2106, 0.0
  %2108 = vst [vmem:[#allocation1] ss:$4 sm:$0xff] %v1898
  %s2109 = scalar_lea.vmem [#allocation1], 1
  %2110 = vst [vmem:[%s2109] ss:$4 sm:$0xff] %v1899
  %s2112 = scalar_lea.vmem [#allocation1], 2
  %2113 = vst [vmem:[%s2112] ss:$4 sm:$0xff] %v1900
  %v2114 = vld.sshfl [vmem:[#allocation1] sm:$0xff pattern:$0x73625140]
  %v2115 = vsel %vm1938, %v2114, 0
  %2117 = vmatpush.bf16.msra.mxu0 0
  %2118 = vmatpush.bf16.msra.mxu0 0
  %2119 = vmatpush.bf16.msra.mxu0 0
  %2120 = vmatpush.bf16.msra.mxu0 0
  %2121 = vmatpush.bf16.msra.mxu0 0
  %2122 = vmatpush.bf16.msra.mxu0 0
  %2123 = vmatpush.bf16.msra.mxu0 0
  %2124 = vmatpush.bf16.msra.mxu0 %v2115
  %2125 = vmatmul.bf16.gmra.mxu0 %v1936
  %v2126 = vpop.f32.mrf.mxu0
  %v2127 = vadd.f32 0.0, %v2126
  %v2128 = vpop.f32.mrf.mxu0
  %2129 = vdwg.mxu0
  %2131 = vrot.lane.b32.xlu0 %v2127, 65
  %v2132 = vpop.permute.xlu0 %2131
  %v2134 = vmax.f32 %v2127, %v2132
  %2135 = vst [vmem:[#allocation1] ss:$4 sm:$0xff] %v1899
  %s2136 = scalar_lea.vmem [#allocation1], 1
  %2137 = vst [vmem:[%s2136] ss:$4 sm:$0xff] %v1900
  %s2139 = scalar_lea.vmem [#allocation1], 2
  %2140 = vst [vmem:[%s2139] ss:$4 sm:$0xff] %v1901
  %v2141 = vld.sshfl [vmem:[#allocation1] sm:$0xff pattern:$0x73625140]
  %v2142 = vsel %vm1938, %v2141, 0
  %2144 = vmatpush.bf16.msra.mxu0 0
  %2145 = vmatpush.bf16.msra.mxu0 0
  %2146 = vmatpush.bf16.msra.mxu0 0
  %2147 = vmatpush.bf16.msra.mxu0 0
  %2148 = vmatpush.bf16.msra.mxu0 0
  %2149 = vmatpush.bf16.msra.mxu0 0
  %2150 = vmatpush.bf16.msra.mxu0 0
  %2151 = vmatpush.bf16.msra.mxu0 %v2142
  %2152 = vmatmul.bf16.gmra.mxu0 %v1936
  %v2153 = vpop.f32.mrf.mxu0
  %v2154 = vadd.f32 0.0, %v2153
  %v2155 = vpop.f32.mrf.mxu0
  %2156 = vdwg.mxu0
  %2158 = vrot.lane.b32.xlu0 %v2154, 65
  %v2159 = vpop.permute.xlu0 %2158
  %v2161 = vmax.f32 %v2154, %v2159
  %v2162 = vmax.f32 %v2134, %v2161
  %v2163 = vadd.f32 %v2162, %v1990
  %v2164 = vmax.f32 %v2163, 0.0
  %2165 = vst [vmem:[#allocation1] ss:$4 sm:$0xff] %v1900
  %s2166 = scalar_lea.vmem [#allocation1], 1
  %2167 = vst [vmem:[%s2166] ss:$4 sm:$0xff] %v1901
  %s2169 = scalar_lea.vmem [#allocation1], 2
  %2170 = vst [vmem:[%s2169] ss:$4 sm:$0xff] %v1902
  %v2171 = vld.sshfl [vmem:[#allocation1] sm:$0xff pattern:$0x73625140]
  %v2172 = vsel %vm1938, %v2171, 0
  %2174 = vmatpush.bf16.msra.mxu0 0
  %2175 = vmatpush.bf16.msra.mxu0 0
  %2176 = vmatpush.bf16.msra.mxu0 0
  %2177 = vmatpush.bf16.msra.mxu0 0
  %2178 = vmatpush.bf16.msra.mxu0 0
  %2179 = vmatpush.bf16.msra.mxu0 0
  %2180 = vmatpush.bf16.msra.mxu0 0
  %2181 = vmatpush.bf16.msra.mxu0 %v2172
  %2182 = vmatmul.bf16.gmra.mxu0 %v1936
  %v2183 = vpop.f32.mrf.mxu0
  %v2184 = vadd.f32 0.0, %v2183
  %v2185 = vpop.f32.mrf.mxu0
  %2186 = vdwg.mxu0
  %2188 = vrot.lane.b32.xlu0 %v2184, 65
  %v2189 = vpop.permute.xlu0 %2188
  %v2191 = vmax.f32 %v2184, %v2189
  %2192 = vst [vmem:[#allocation1] ss:$4 sm:$0xff] %v1901
  %s2193 = scalar_lea.vmem [#allocation1], 1
  %2194 = vst [vmem:[%s2193] ss:$4 sm:$0xff] %v1902
  %s2196 = scalar_lea.vmem [#allocation1], 2
  %2197 = vst [vmem:[%s2196] ss:$4 sm:$0xff] %v1903
  %v2198 = vld.sshfl [vmem:[#allocation1] sm:$0xff pattern:$0x73625140]
  %v2199 = vsel %vm1938, %v2198, 0
  %2201 = vmatpush.bf16.msra.mxu0 0
  %2202 = vmatpush.bf16.msra.mxu0 0
  %2203 = vmatpush.bf16.msra.mxu0 0
  %2204 = vmatpush.bf16.msra.mxu0 0
  %2205 = vmatpush.bf16.msra.mxu0 0
  %2206 = vmatpush.bf16.msra.mxu0 0
  %2207 = vmatpush.bf16.msra.mxu0 0
  %2208 = vmatpush.bf16.msra.mxu0 %v2199
  %2209 = vmatmul.bf16.gmra.mxu0 %v1936
  %v2210 = vpop.f32.mrf.mxu0
  %v2211 = vadd.f32 0.0, %v2210
  %v2212 = vpop.f32.mrf.mxu0
  %2213 = vdwg.mxu0
  %2215 = vrot.lane.b32.xlu0 %v2211, 65
  %v2216 = vpop.permute.xlu0 %2215
  %v2218 = vmax.f32 %v2211, %v2216
  %v2219 = vmax.f32 %v2191, %v2218
  %v2220 = vadd.f32 %v2219, %v1990
  %v2221 = vmax.f32 %v2220, 0.0
  %2222 = vst [vmem:[#allocation1] ss:$4 sm:$0xff] %v1902
  %s2223 = scalar_lea.vmem [#allocation1], 1
  %2224 = vst [vmem:[%s2223] ss:$4 sm:$0xff] %v1903
  %s2226 = scalar_lea.vmem [#allocation1], 2
  %2227 = vst [vmem:[%s2226] ss:$4 sm:$0xff] %v1904
  %v2228 = vld.sshfl [vmem:[#allocation1] sm:$0xff pattern:$0x73625140]
  %v2229 = vsel %vm1938, %v2228, 0
  %2231 = vmatpush.bf16.msra.mxu0 0
  %2232 = vmatpush.bf16.msra.mxu0 0
  %2233 = vmatpush.bf16.msra.mxu0 0
  %2234 = vmatpush.bf16.msra.mxu0 0
  %2235 = vmatpush.bf16.msra.mxu0 0
  %2236 = vmatpush.bf16.msra.mxu0 0
  %2237 = vmatpush.bf16.msra.mxu0 0
  %2238 = vmatpush.bf16.msra.mxu0 %v2229
  %2239 = vmatmul.bf16.gmra.mxu0 %v1936
  %v2240 = vpop.f32.mrf.mxu0
  %v2241 = vadd.f32 0.0, %v2240
  %v2242 = vpop.f32.mrf.mxu0
  %2243 = vdwg.mxu0
  %2245 = vrot.lane.b32.xlu0 %v2241, 65
  %v2246 = vpop.permute.xlu0 %2245
  %v2248 = vmax.f32 %v2241, %v2246
  %2249 = vst [vmem:[#allocation1] ss:$4 sm:$0xff] %v1903
  %s2250 = scalar_lea.vmem [#allocation1], 1
  %2251 = vst [vmem:[%s2250] ss:$4 sm:$0xff] %v1904
  %s2253 = scalar_lea.vmem [#allocation1], 2
  %2254 = vst [vmem:[%s2253] ss:$4 sm:$0xff] %v1905
  %v2255 = vld.sshfl [vmem:[#allocation1] sm:$0xff pattern:$0x73625140]
  %v2256 = vsel %vm1938, %v2255, 0
  %2258 = vmatpush.bf16.msra.mxu0 0
  %2259 = vmatpush.bf16.msra.mxu0 0
  %2260 = vmatpush.bf16.msra.mxu0 0
  %2261 = vmatpush.bf16.msra.mxu0 0
  %2262 = vmatpush.bf16.msra.mxu0 0
  %2263 = vmatpush.bf16.msra.mxu0 0
  %2264 = vmatpush.bf16.msra.mxu0 0
  %2265 = vmatpush.bf16.msra.mxu0 %v2256
  %2266 = vmatmul.bf16.gmra.mxu0 %v1936
  %v2267 = vpop.f32.mrf.mxu0
  %v2268 = vadd.f32 0.0, %v2267
  %v2269 = vpop.f32.mrf.mxu0
  %2270 = vdwg.mxu0
  %2272 = vrot.lane.b32.xlu0 %v2268, 65
  %v2273 = vpop.permute.xlu0 %2272
  %v2275 = vmax.f32 %v2268, %v2273
  %v2276 = vmax.f32 %v2248, %v2275
  %v2277 = vadd.f32 %v2276, %v1990
  %v2278 = vmax.f32 %v2277, 0.0
  %2279 = vst [vmem:[#allocation1] ss:$4 sm:$0xff] %v1904
  %s2280 = scalar_lea.vmem [#allocation1], 1
  %2281 = vst [vmem:[%s2280] ss:$4 sm:$0xff] %v1905
  %s2283 = scalar_lea.vmem [#allocation1], 2
  %2284 = vst [vmem:[%s2283] ss:$4 sm:$0xff] %v1906
  %v2285 = vld.sshfl [vmem:[#allocation1] sm:$0xff pattern:$0x73625140]
  %v2286 = vsel %vm1938, %v2285, 0
  %2288 = vmatpush.bf16.msra.mxu0 0
  %2289 = vmatpush.bf16.msra.mxu0 0
  %2290 = vmatpush.bf16.msra.mxu0 0
  %2291 = vmatpush.bf16.msra.mxu0 0
  %2292 = vmatpush.bf16.msra.mxu0 0
  %2293 = vmatpush.bf16.msra.mxu0 0
  %2294 = vmatpush.bf16.msra.mxu0 0
  %2295 = vmatpush.bf16.msra.mxu0 %v2286
  %2296 = vmatmul.bf16.gmra.mxu0 %v1936
  %v2297 = vpop.f32.mrf.mxu0
  %v2298 = vadd.f32 0.0, %v2297
  %v2299 = vpop.f32.mrf.mxu0
  %2300 = vdwg.mxu0
  %2302 = vrot.lane.b32.xlu0 %v2298, 65
  %v2303 = vpop.permute.xlu0 %2302
  %v2305 = vmax.f32 %v2298, %v2303
  %2306 = vst [vmem:[#allocation1] ss:$4 sm:$0xff] %v1905
  %s2307 = scalar_lea.vmem [#allocation1], 1
  %2308 = vst [vmem:[%s2307] ss:$4 sm:$0xff] %v1906
  %s2310 = scalar_lea.vmem [#allocation1], 2
  %2311 = vst [vmem:[%s2310] ss:$4 sm:$0xff] %v1907
  %v2312 = vld.sshfl [vmem:[#allocation1] sm:$0xff pattern:$0x73625140]
  %v2313 = vsel %vm1938, %v2312, 0
  %2315 = vmatpush.bf16.msra.mxu0 0
  %2316 = vmatpush.bf16.msra.mxu0 0
  %2317 = vmatpush.bf16.msra.mxu0 0
  %2318 = vmatpush.bf16.msra.mxu0 0
  %2319 = vmatpush.bf16.msra.mxu0 0
  %2320 = vmatpush.bf16.msra.mxu0 0
  %2321 = vmatpush.bf16.msra.mxu0 0
  %2322 = vmatpush.bf16.msra.mxu0 %v2313
  %2323 = vmatmul.bf16.gmra.mxu0 %v1936
  %v2324 = vpop.f32.mrf.mxu0
  %v2325 = vadd.f32 0.0, %v2324
  %v2326 = vpop.f32.mrf.mxu0
  %2327 = vdwg.mxu0
  %2329 = vrot.lane.b32.xlu0 %v2325, 65
  %v2330 = vpop.permute.xlu0 %2329
  %v2332 = vmax.f32 %v2325, %v2330
  %v2333 = vmax.f32 %v2305, %v2332
  %v2334 = vadd.f32 %v2333, %v1990
  %v2335 = vmax.f32 %v2334, 0.0
  %2336 = vst [vmem:[#allocation1] ss:$4 sm:$0xff] %v1906
  %s2337 = scalar_lea.vmem [#allocation1], 1
  %2338 = vst [vmem:[%s2337] ss:$4 sm:$0xff] %v1907
  %s2340 = scalar_lea.vmem [#allocation1], 2
  %2341 = vst [vmem:[%s2340] ss:$4 sm:$0xff] %v1908
  %v2342 = vld.sshfl [vmem:[#allocation1] sm:$0xff pattern:$0x73625140]
  %v2343 = vsel %vm1938, %v2342, 0
  %2345 = vmatpush.bf16.msra.mxu0 0
  %2346 = vmatpush.bf16.msra.mxu0 0
  %2347 = vmatpush.bf16.msra.mxu0 0
  %2348 = vmatpush.bf16.msra.mxu0 0
  %2349 = vmatpush.bf16.msra.mxu0 0
  %2350 = vmatpush.bf16.msra.mxu0 0
  %2351 = vmatpush.bf16.msra.mxu0 0
  %2352 = vmatpush.bf16.msra.mxu0 %v2343
  %2353 = vmatmul.bf16.gmra.mxu0 %v1936
  %v2354 = vpop.f32.mrf.mxu0
  %v2355 = vadd.f32 0.0, %v2354
  %v2356 = vpop.f32.mrf.mxu0
  %2357 = vdwg.mxu0
  %2359 = vrot.lane.b32.xlu0 %v2355, 65
  %v2360 = vpop.permute.xlu0 %2359
  %v2362 = vmax.f32 %v2355, %v2360
  %2363 = vst [vmem:[#allocation1] ss:$4 sm:$0xff] %v1907
  %s2364 = scalar_lea.vmem [#allocation1], 1
  %2365 = vst [vmem:[%s2364] ss:$4 sm:$0xff] %v1908
  %s2367 = scalar_lea.vmem [#allocation1], 2
  %2368 = vst [vmem:[%s2367] ss:$4 sm:$0xff] %v1909
  %v2369 = vld.sshfl [vmem:[#allocation1] sm:$0xff pattern:$0x73625140]
  %v2370 = vsel %vm1938, %v2369, 0
  %2372 = vmatpush.bf16.msra.mxu0 0
  %2373 = vmatpush.bf16.msra.mxu0 0
  %2374 = vmatpush.bf16.msra.mxu0 0
  %2375 = vmatpush.bf16.msra.mxu0 0
  %2376 = vmatpush.bf16.msra.mxu0 0
  %2377 = vmatpush.bf16.msra.mxu0 0
  %2378 = vmatpush.bf16.msra.mxu0 0
  %2379 = vmatpush.bf16.msra.mxu0 %v2370
  %2380 = vmatmul.bf16.gmra.mxu0 %v1936
  %v2381 = vpop.f32.mrf.mxu0
  %v2382 = vadd.f32 0.0, %v2381
  %v2383 = vpop.f32.mrf.mxu0
  %2384 = vdwg.mxu0
  %2386 = vrot.lane.b32.xlu0 %v2382, 65
  %v2387 = vpop.permute.xlu0 %2386
  %v2389 = vmax.f32 %v2382, %v2387
  %v2390 = vmax.f32 %v2362, %v2389
  %v2391 = vadd.f32 %v2390, %v1990
  %v2392 = vmax.f32 %v2391, 0.0
  %2393 = vst [vmem:[#allocation1] ss:$4 sm:$0xff] %v1908
  %s2394 = scalar_lea.vmem [#allocation1], 1
  %2395 = vst [vmem:[%s2394] ss:$4 sm:$0xff] %v1909
  %s2397 = scalar_lea.vmem [#allocation1], 2
  %2398 = vst [vmem:[%s2397] ss:$4 sm:$0xff] %v1910
  %v2399 = vld.sshfl [vmem:[#allocation1] sm:$0xff pattern:$0x73625140]
  %v2400 = vsel %vm1938, %v2399, 0
  %2402 = vmatpush.bf16.msra.mxu0 0
  %2403 = vmatpush.bf16.msra.mxu0 0
  %2404 = vmatpush.bf16.msra.mxu0 0
  %2405 = vmatpush.bf16.msra.mxu0 0
  %2406 = vmatpush.bf16.msra.mxu0 0
  %2407 = vmatpush.bf16.msra.mxu0 0
  %2408 = vmatpush.bf16.msra.mxu0 0
  %2409 = vmatpush.bf16.msra.mxu0 %v2400
  %2410 = vmatmul.bf16.gmra.mxu0 %v1936
  %v2411 = vpop.f32.mrf.mxu0
  %v2412 = vadd.f32 0.0, %v2411
  %v2413 = vpop.f32.mrf.mxu0
  %2414 = vdwg.mxu0
  %2416 = vrot.lane.b32.xlu0 %v2412, 65
  %v2417 = vpop.permute.xlu0 %2416
  %v2419 = vmax.f32 %v2412, %v2417
  %2420 = vst [vmem:[#allocation1] ss:$4 sm:$0xff] %v1909
  %s2421 = scalar_lea.vmem [#allocation1], 1
  %2422 = vst [vmem:[%s2421] ss:$4 sm:$0xff] %v1910
  %s2424 = scalar_lea.vmem [#allocation1], 2
  %2425 = vst [vmem:[%s2424] ss:$4 sm:$0xff] %v1911
  %v2426 = vld.sshfl [vmem:[#allocation1] sm:$0xff pattern:$0x73625140]
  %v2427 = vsel %vm1938, %v2426, 0
  %2429 = vmatpush.bf16.msra.mxu0 0
  %2430 = vmatpush.bf16.msra.mxu0 0
  %2431 = vmatpush.bf16.msra.mxu0 0
  %2432 = vmatpush.bf16.msra.mxu0 0
  %2433 = vmatpush.bf16.msra.mxu0 0
  %2434 = vmatpush.bf16.msra.mxu0 0
  %2435 = vmatpush.bf16.msra.mxu0 0
  %2436 = vmatpush.bf16.msra.mxu0 %v2427
  %2437 = vmatmul.bf16.gmra.mxu0 %v1936
  %v2438 = vpop.f32.mrf.mxu0
  %v2439 = vadd.f32 0.0, %v2438
  %v2440 = vpop.f32.mrf.mxu0
  %2441 = vdwg.mxu0
  %2443 = vrot.lane.b32.xlu0 %v2439, 65
  %v2444 = vpop.permute.xlu0 %2443
  %v2446 = vmax.f32 %v2439, %v2444
  %v2447 = vmax.f32 %v2419, %v2446
  %v2448 = vadd.f32 %v2447, %v1990
  %v2449 = vmax.f32 %v2448, 0.0
  %2450 = vst [vmem:[#allocation1] ss:$4 sm:$0xff] %v1910
  %s2451 = scalar_lea.vmem [#allocation1], 1
  %2452 = vst [vmem:[%s2451] ss:$4 sm:$0xff] %v1911
  %s2454 = scalar_lea.vmem [#allocation1], 2
  %2455 = vst [vmem:[%s2454] ss:$4 sm:$0xff] %v1912
  %v2456 = vld.sshfl [vmem:[#allocation1] sm:$0xff pattern:$0x73625140]
  %v2457 = vsel %vm1938, %v2456, 0
  %2459 = vmatpush.bf16.msra.mxu0 0
  %2460 = vmatpush.bf16.msra.mxu0 0
  %2461 = vmatpush.bf16.msra.mxu0 0
  %2462 = vmatpush.bf16.msra.mxu0 0
  %2463 = vmatpush.bf16.msra.mxu0 0
  %2464 = vmatpush.bf16.msra.mxu0 0
  %2465 = vmatpush.bf16.msra.mxu0 0
  %2466 = vmatpush.bf16.msra.mxu0 %v2457
  %2467 = vmatmul.bf16.gmra.mxu0 %v1936
  %v2468 = vpop.f32.mrf.mxu0
  %v2469 = vadd.f32 0.0, %v2468
  %v2470 = vpop.f32.mrf.mxu0
  %2471 = vdwg.mxu0
  %2473 = vrot.lane.b32.xlu0 %v2469, 65
  %v2474 = vpop.permute.xlu0 %2473
  %v2476 = vmax.f32 %v2469, %v2474
  %2477 = vst [vmem:[#allocation1] ss:$4 sm:$0xff] %v1911
  %s2478 = scalar_lea.vmem [#allocation1], 1
  %2479 = vst [vmem:[%s2478] ss:$4 sm:$0xff] %v1912
  %s2481 = scalar_lea.vmem [#allocation1], 2
  %2482 = vst [vmem:[%s2481] ss:$4 sm:$0xff] %v1913
  %v2483 = vld.sshfl [vmem:[#allocation1] sm:$0xff pattern:$0x73625140]
  %v2484 = vsel %vm1938, %v2483, 0
  %2486 = vmatpush.bf16.msra.mxu0 0
  %2487 = vmatpush.bf16.msra.mxu0 0
  %2488 = vmatpush.bf16.msra.mxu0 0
  %2489 = vmatpush.bf16.msra.mxu0 0
  %2490 = vmatpush.bf16.msra.mxu0 0
  %2491 = vmatpush.bf16.msra.mxu0 0
  %2492 = vmatpush.bf16.msra.mxu0 0
  %2493 = vmatpush.bf16.msra.mxu0 %v2484
  %2494 = vmatmul.bf16.gmra.mxu0 %v1936
  %v2495 = vpop.f32.mrf.mxu0
  %v2496 = vadd.f32 0.0, %v2495
  %v2497 = vpop.f32.mrf.mxu0
  %2498 = vdwg.mxu0
  %2500 = vrot.lane.b32.xlu0 %v2496, 65
  %v2501 = vpop.permute.xlu0 %2500
  %v2503 = vmax.f32 %v2496, %v2501
  %v2504 = vmax.f32 %v2476, %v2503
  %v2505 = vadd.f32 %v2504, %v1990
  %v2506 = vmax.f32 %v2505, 0.0
  %2507 = vst [vmem:[#allocation1] ss:$4 sm:$0xff] %v1912
  %s2508 = scalar_lea.vmem [#allocation1], 1
  %2509 = vst [vmem:[%s2508] ss:$4 sm:$0xff] %v1913
  %s2511 = scalar_lea.vmem [#allocation1], 2
  %2512 = vst [vmem:[%s2511] ss:$4 sm:$0xff] %v1914
  %v2513 = vld.sshfl [vmem:[#allocation1] sm:$0xff pattern:$0x73625140]
  %v2514 = vsel %vm1938, %v2513, 0
  %2516 = vmatpush.bf16.msra.mxu0 0
  %2517 = vmatpush.bf16.msra.mxu0 0
  %2518 = vmatpush.bf16.msra.mxu0 0
  %2519 = vmatpush.bf16.msra.mxu0 0
  %2520 = vmatpush.bf16.msra.mxu0 0
  %2521 = vmatpush.bf16.msra.mxu0 0
  %2522 = vmatpush.bf16.msra.mxu0 0
  %2523 = vmatpush.bf16.msra.mxu0 %v2514
  %2524 = vmatmul.bf16.gmra.mxu0 %v1936
  %v2525 = vpop.f32.mrf.mxu0
  %v2526 = vadd.f32 0.0, %v2525
  %v2527 = vpop.f32.mrf.mxu0
  %2528 = vdwg.mxu0
  %2530 = vrot.lane.b32.xlu0 %v2526, 65
  %v2531 = vpop.permute.xlu0 %2530
  %v2533 = vmax.f32 %v2526, %v2531
  %2534 = vst [vmem:[#allocation1] ss:$4 sm:$0xff] %v1913
  %s2535 = scalar_lea.vmem [#allocation1], 1
  %2536 = vst [vmem:[%s2535] ss:$4 sm:$0xff] %v1914
  %s2538 = scalar_lea.vmem [#allocation1], 2
  %2539 = vst [vmem:[%s2538] ss:$4 sm:$0xff] %v1915
  %v2540 = vld.sshfl [vmem:[#allocation1] sm:$0xff pattern:$0x73625140]
  %v2541 = vsel %vm1938, %v2540, 0
  %2543 = vmatpush.bf16.msra.mxu0 0
  %2544 = vmatpush.bf16.msra.mxu0 0
  %2545 = vmatpush.bf16.msra.mxu0 0
  %2546 = vmatpush.bf16.msra.mxu0 0
  %2547 = vmatpush.bf16.msra.mxu0 0
  %2548 = vmatpush.bf16.msra.mxu0 0
  %2549 = vmatpush.bf16.msra.mxu0 0
  %2550 = vmatpush.bf16.msra.mxu0 %v2541
  %2551 = vmatmul.bf16.gmra.mxu0 %v1936
  %v2552 = vpop.f32.mrf.mxu0
  %v2553 = vadd.f32 0.0, %v2552
  %v2554 = vpop.f32.mrf.mxu0
  %2555 = vdwg.mxu0
  %2557 = vrot.lane.b32.xlu0 %v2553, 65
  %v2558 = vpop.permute.xlu0 %2557
  %v2560 = vmax.f32 %v2553, %v2558
  %v2561 = vmax.f32 %v2533, %v2560
  %v2562 = vadd.f32 %v2561, %v1990
  %v2563 = vmax.f32 %v2562, 0.0
  %2564 = vst [vmem:[#allocation1] ss:$4 sm:$0xff] %v1914
  %s2565 = scalar_lea.vmem [#allocation1], 1
  %2566 = vst [vmem:[%s2565] ss:$4 sm:$0xff] %v1915
  %s2568 = scalar_lea.vmem [#allocation1], 2
  %2569 = vst [vmem:[%s2568] ss:$4 sm:$0xff] %v1916
  %v2570 = vld.sshfl [vmem:[#allocation1] sm:$0xff pattern:$0x73625140]
  %v2571 = vsel %vm1938, %v2570, 0
  %2573 = vmatpush.bf16.msra.mxu0 0
  %2574 = vmatpush.bf16.msra.mxu0 0
  %2575 = vmatpush.bf16.msra.mxu0 0
  %2576 = vmatpush.bf16.msra.mxu0 0
  %2577 = vmatpush.bf16.msra.mxu0 0
  %2578 = vmatpush.bf16.msra.mxu0 0
  %2579 = vmatpush.bf16.msra.mxu0 0
  %2580 = vmatpush.bf16.msra.mxu0 %v2571
  %2581 = vmatmul.bf16.gmra.mxu0 %v1936
  %v2582 = vpop.f32.mrf.mxu0
  %v2583 = vadd.f32 0.0, %v2582
  %v2584 = vpop.f32.mrf.mxu0
  %2585 = vdwg.mxu0
  %2587 = vrot.lane.b32.xlu0 %v2583, 65
  %v2588 = vpop.permute.xlu0 %2587
  %v2590 = vmax.f32 %v2583, %v2588
  %2591 = vst [vmem:[#allocation1] ss:$4 sm:$0xff] %v1915
  %s2592 = scalar_lea.vmem [#allocation1], 1
  %2593 = vst [vmem:[%s2592] ss:$4 sm:$0xff] %v1916
  %s2595 = scalar_lea.vmem [#allocation1], 2
  %2596 = vst [vmem:[%s2595] ss:$4 sm:$0xff] %v1917
  %v2597 = vld.sshfl [vmem:[#allocation1] sm:$0xff pattern:$0x73625140]
  %v2598 = vsel %vm1938, %v2597, 0
  %2600 = vmatpush.bf16.msra.mxu0 0
  %2601 = vmatpush.bf16.msra.mxu0 0
  %2602 = vmatpush.bf16.msra.mxu0 0
  %2603 = vmatpush.bf16.msra.mxu0 0
  %2604 = vmatpush.bf16.msra.mxu0 0
  %2605 = vmatpush.bf16.msra.mxu0 0
  %2606 = vmatpush.bf16.msra.mxu0 0
  %2607 = vmatpush.bf16.msra.mxu0 %v2598
  %2608 = vmatmul.bf16.gmra.mxu0 %v1936
  %v2609 = vpop.f32.mrf.mxu0
  %v2610 = vadd.f32 0.0, %v2609
  %v2611 = vpop.f32.mrf.mxu0
  %2612 = vdwg.mxu0
  %2614 = vrot.lane.b32.xlu0 %v2610, 65
  %v2615 = vpop.permute.xlu0 %2614
  %v2617 = vmax.f32 %v2610, %v2615
  %v2618 = vmax.f32 %v2590, %v2617
  %v2619 = vadd.f32 %v2618, %v1990
  %v2620 = vmax.f32 %v2619, 0.0
  %2621 = vst [vmem:[#allocation1] ss:$4 sm:$0xff] %v1916
  %s2622 = scalar_lea.vmem [#allocation1], 1
  %2623 = vst [vmem:[%s2622] ss:$4 sm:$0xff] %v1917
  %s2625 = scalar_lea.vmem [#allocation1], 2
  %2626 = vst [vmem:[%s2625] ss:$4 sm:$0xff] %v1918
  %v2627 = vld.sshfl [vmem:[#allocation1] sm:$0xff pattern:$0x73625140]
  %v2628 = vsel %vm1938, %v2627, 0
  %2630 = vmatpush.bf16.msra.mxu0 0
  %2631 = vmatpush.bf16.msra.mxu0 0
  %2632 = vmatpush.bf16.msra.mxu0 0
  %2633 = vmatpush.bf16.msra.mxu0 0
  %2634 = vmatpush.bf16.msra.mxu0 0
  %2635 = vmatpush.bf16.msra.mxu0 0
  %2636 = vmatpush.bf16.msra.mxu0 0
  %2637 = vmatpush.bf16.msra.mxu0 %v2628
  %2638 = vmatmul.bf16.gmra.mxu0 %v1936
  %v2639 = vpop.f32.mrf.mxu0
  %v2640 = vadd.f32 0.0, %v2639
  %v2641 = vpop.f32.mrf.mxu0
  %2642 = vdwg.mxu0
  %2644 = vrot.lane.b32.xlu0 %v2640, 65
  %v2645 = vpop.permute.xlu0 %2644
  %v2647 = vmax.f32 %v2640, %v2645
  %2648 = vst [vmem:[#allocation1] ss:$4 sm:$0xff] %v1917
  %s2649 = scalar_lea.vmem [#allocation1], 1
  %2650 = vst [vmem:[%s2649] ss:$4 sm:$0xff] %v1918
  %s2652 = scalar_lea.vmem [#allocation1], 2
  %2653 = vst [vmem:[%s2652] ss:$4 sm:$0xff] %v1919
  %v2654 = vld.sshfl [vmem:[#allocation1] sm:$0xff pattern:$0x73625140]
  %v2655 = vsel %vm1938, %v2654, 0
  %2657 = vmatpush.bf16.msra.mxu0 0
  %2658 = vmatpush.bf16.msra.mxu0 0
  %2659 = vmatpush.bf16.msra.mxu0 0
  %2660 = vmatpush.bf16.msra.mxu0 0
  %2661 = vmatpush.bf16.msra.mxu0 0
  %2662 = vmatpush.bf16.msra.mxu0 0
  %2663 = vmatpush.bf16.msra.mxu0 0
  %2664 = vmatpush.bf16.msra.mxu0 %v2655
  %2665 = vmatmul.bf16.gmra.mxu0 %v1936
  %v2666 = vpop.f32.mrf.mxu0
  %v2667 = vadd.f32 0.0, %v2666
  %v2668 = vpop.f32.mrf.mxu0
  %2669 = vdwg.mxu0
  %2671 = vrot.lane.b32.xlu0 %v2667, 65
  %v2672 = vpop.permute.xlu0 %2671
  %v2674 = vmax.f32 %v2667, %v2672
  %v2675 = vmax.f32 %v2647, %v2674
  %v2676 = vadd.f32 %v2675, %v1990
  %v2677 = vmax.f32 %v2676, 0.0
  %2678 = vst [vmem:[#allocation1] ss:$4 sm:$0xff] %v1918
  %s2679 = scalar_lea.vmem [#allocation1], 1
  %2680 = vst [vmem:[%s2679] ss:$4 sm:$0xff] %v1919
  %s2682 = scalar_lea.vmem [#allocation1], 2
  %2683 = vst [vmem:[%s2682] ss:$4 sm:$0xff] %v1920
  %v2684 = vld.sshfl [vmem:[#allocation1] sm:$0xff pattern:$0x73625140]
  %v2685 = vsel %vm1938, %v2684, 0
  %2687 = vmatpush.bf16.msra.mxu0 0
  %2688 = vmatpush.bf16.msra.mxu0 0
  %2689 = vmatpush.bf16.msra.mxu0 0
  %2690 = vmatpush.bf16.msra.mxu0 0
  %2691 = vmatpush.bf16.msra.mxu0 0
  %2692 = vmatpush.bf16.msra.mxu0 0
  %2693 = vmatpush.bf16.msra.mxu0 0
  %2694 = vmatpush.bf16.msra.mxu0 %v2685
  %2695 = vmatmul.bf16.gmra.mxu0 %v1936
  %v2696 = vpop.f32.mrf.mxu0
  %v2697 = vadd.f32 0.0, %v2696
  %v2698 = vpop.f32.mrf.mxu0
  %2699 = vdwg.mxu0
  %2701 = vrot.lane.b32.xlu0 %v2697, 65
  %v2702 = vpop.permute.xlu0 %2701
  %v2704 = vmax.f32 %v2697, %v2702
  %2705 = vst [vmem:[#allocation1] ss:$4 sm:$0xff] %v1919
  %s2706 = scalar_lea.vmem [#allocation1], 1
  %2707 = vst [vmem:[%s2706] ss:$4 sm:$0xff] %v1920
  %s2709 = scalar_lea.vmem [#allocation1], 2
  %2710 = vst [vmem:[%s2709] ss:$4 sm:$0xff] %v1921
  %v2711 = vld.sshfl [vmem:[#allocation1] sm:$0xff pattern:$0x73625140]
  %v2712 = vsel %vm1938, %v2711, 0
  %2714 = vmatpush.bf16.msra.mxu0 0
  %2715 = vmatpush.bf16.msra.mxu0 0
  %2716 = vmatpush.bf16.msra.mxu0 0
  %2717 = vmatpush.bf16.msra.mxu0 0
  %2718 = vmatpush.bf16.msra.mxu0 0
  %2719 = vmatpush.bf16.msra.mxu0 0
  %2720 = vmatpush.bf16.msra.mxu0 0
  %2721 = vmatpush.bf16.msra.mxu0 %v2712
  %2722 = vmatmul.bf16.gmra.mxu0 %v1936
  %v2723 = vpop.f32.mrf.mxu0
  %v2724 = vadd.f32 0.0, %v2723
  %v2725 = vpop.f32.mrf.mxu0
  %2726 = vdwg.mxu0
  %2728 = vrot.lane.b32.xlu0 %v2724, 65
  %v2729 = vpop.permute.xlu0 %2728
  %v2731 = vmax.f32 %v2724, %v2729
  %v2732 = vmax.f32 %v2704, %v2731
  %v2733 = vadd.f32 %v2732, %v1990
  %v2734 = vmax.f32 %v2733, 0.0
  %2735 = vst [vmem:[#allocation1] ss:$4 sm:$0xff] %v1920
  %s2736 = scalar_lea.vmem [#allocation1], 1
  %2737 = vst [vmem:[%s2736] ss:$4 sm:$0xff] %v1921
  %s2739 = scalar_lea.vmem [#allocation1], 2
  %2740 = vst [vmem:[%s2739] ss:$4 sm:$0xff] %v1922
  %v2741 = vld.sshfl [vmem:[#allocation1] sm:$0xff pattern:$0x73625140]
  %v2742 = vsel %vm1938, %v2741, 0
  %2744 = vmatpush.bf16.msra.mxu0 0
  %2745 = vmatpush.bf16.msra.mxu0 0
  %2746 = vmatpush.bf16.msra.mxu0 0
  %2747 = vmatpush.bf16.msra.mxu0 0
  %2748 = vmatpush.bf16.msra.mxu0 0
  %2749 = vmatpush.bf16.msra.mxu0 0
  %2750 = vmatpush.bf16.msra.mxu0 0
  %2751 = vmatpush.bf16.msra.mxu0 %v2742
  %2752 = vmatmul.bf16.gmra.mxu0 %v1936
  %v2753 = vpop.f32.mrf.mxu0
  %v2754 = vadd.f32 0.0, %v2753
  %v2755 = vpop.f32.mrf.mxu0
  %2756 = vdwg.mxu0
  %2758 = vrot.lane.b32.xlu0 %v2754, 65
  %v2759 = vpop.permute.xlu0 %2758
  %v2761 = vmax.f32 %v2754, %v2759
  %2762 = vst [vmem:[#allocation1] ss:$4 sm:$0xff] %v1921
  %s2763 = scalar_lea.vmem [#allocation1], 1
  %2764 = vst [vmem:[%s2763] ss:$4 sm:$0xff] %v1922
  %s2766 = scalar_lea.vmem [#allocation1], 2
  %2767 = vst [vmem:[%s2766] ss:$4 sm:$0xff] %v1923
  %v2768 = vld.sshfl [vmem:[#allocation1] sm:$0xff pattern:$0x73625140]
  %v2769 = vsel %vm1938, %v2768, 0
  %2771 = vmatpush.bf16.msra.mxu0 0
  %2772 = vmatpush.bf16.msra.mxu0 0
  %2773 = vmatpush.bf16.msra.mxu0 0
  %2774 = vmatpush.bf16.msra.mxu0 0
  %2775 = vmatpush.bf16.msra.mxu0 0
  %2776 = vmatpush.bf16.msra.mxu0 0
  %2777 = vmatpush.bf16.msra.mxu0 0
  %2778 = vmatpush.bf16.msra.mxu0 %v2769
  %2779 = vmatmul.bf16.gmra.mxu0 %v1936
  %v2780 = vpop.f32.mrf.mxu0
  %v2781 = vadd.f32 0.0, %v2780
  %v2782 = vpop.f32.mrf.mxu0
  %2783 = vdwg.mxu0
  %2785 = vrot.lane.b32.xlu0 %v2781, 65
  %v2786 = vpop.permute.xlu0 %2785
  %v2788 = vmax.f32 %v2781, %v2786
  %v2789 = vmax.f32 %v2761, %v2788
  %v2790 = vadd.f32 %v2789, %v1990
  %v2791 = vmax.f32 %v2790, 0.0
  %2792 = vst [vmem:[#allocation1] ss:$4 sm:$0xff] %v1922
  %s2793 = scalar_lea.vmem [#allocation1], 1
  %2794 = vst [vmem:[%s2793] ss:$4 sm:$0xff] %v1923
  %s2796 = scalar_lea.vmem [#allocation1], 2
  %2797 = vst [vmem:[%s2796] ss:$4 sm:$0xff] %v1924
  %v2798 = vld.sshfl [vmem:[#allocation1] sm:$0xff pattern:$0x73625140]
  %v2799 = vsel %vm1938, %v2798, 0
  %2801 = vmatpush.bf16.msra.mxu0 0
  %2802 = vmatpush.bf16.msra.mxu0 0
  %2803 = vmatpush.bf16.msra.mxu0 0
  %2804 = vmatpush.bf16.msra.mxu0 0
  %2805 = vmatpush.bf16.msra.mxu0 0
  %2806 = vmatpush.bf16.msra.mxu0 0
  %2807 = vmatpush.bf16.msra.mxu0 0
  %2808 = vmatpush.bf16.msra.mxu0 %v2799
  %2809 = vmatmul.bf16.gmra.mxu0 %v1936
  %v2810 = vpop.f32.mrf.mxu0
  %v2811 = vadd.f32 0.0, %v2810
  %v2812 = vpop.f32.mrf.mxu0
  %2813 = vdwg.mxu0
  %2815 = vrot.lane.b32.xlu0 %v2811, 65
  %v2816 = vpop.permute.xlu0 %2815
  %v2818 = vmax.f32 %v2811, %v2816
  %2819 = vst [vmem:[#allocation1] ss:$4 sm:$0xff] %v1923
  %s2820 = scalar_lea.vmem [#allocation1], 1
  %2821 = vst [vmem:[%s2820] ss:$4 sm:$0xff] %v1924
  %s2822 = scalar_lea.vmem [#allocation1], 2
  %2823 = vst [vmem:[%s2822] ss:$4 sm:$0xff] 0
  %v2824 = vld.sshfl [vmem:[#allocation1] sm:$0xff pattern:$0x73625140]
  %v2825 = vsel %vm1938, %v2824, 0
  %2827 = vmatpush.bf16.msra.mxu0 0
  %2828 = vmatpush.bf16.msra.mxu0 0
  %2829 = vmatpush.bf16.msra.mxu0 0
  %2830 = vmatpush.bf16.msra.mxu0 0
  %2831 = vmatpush.bf16.msra.mxu0 0
  %2832 = vmatpush.bf16.msra.mxu0 0
  %2833 = vmatpush.bf16.msra.mxu0 0
  %2834 = vmatpush.bf16.msra.mxu0 %v2825
  %2835 = vmatmul.bf16.gmra.mxu0 %v1936
  %v2836 = vpop.f32.mrf.mxu0
  %v2837 = vadd.f32 0.0, %v2836
  %v2838 = vpop.f32.mrf.mxu0
  %2839 = vdwg.mxu0
  %2841 = vrot.lane.b32.xlu0 %v2837, 65
  %v2842 = vpop.permute.xlu0 %2841
  %v2844 = vmax.f32 %v2837, %v2842
  %v2845 = vmax.f32 %v2818, %v2844
  %v2846 = vadd.f32 %v2845, %v1990
  %v2847 = vmax.f32 %v2846, 0.0
  %v2848 = vpack.c.bf16 %v2050, %v1993
  %v2849 = vpack.c.bf16 %v2164, %v2107
  %v2850 = vpack.c.bf16 %v2278, %v2221
  %v2851 = vpack.c.bf16 %v2392, %v2335
  %v2852 = vpack.c.bf16 %v2506, %v2449
  %v2853 = vpack.c.bf16 %v2620, %v2563
  %v2854 = vpack.c.bf16 %v2734, %v2677
  %v2855 = vpack.c.bf16 %v2847, %v2791
  %v2856 = vld [vmem:[%s4] sm:$0xf]
  %v2857 = vld [vmem:[%s4 + $0x4] sm:$0xf]
  %v2858 = vld [vmem:[%s4 + $0x8] sm:$0xf]
  %v2859 = vld [vmem:[%s4 + $0xc] sm:$0xf]
  %v2860 = vld [vmem:[%s4 + $0x10] sm:$0xf]
  %v2861 = vld [vmem:[%s4 + $0x14] sm:$0xf]
  %v2862 = vld [vmem:[%s4 + $0x18] sm:$0xf]
  %v2863 = vld [vmem:[%s4 + $0x1c] sm:$0xf]
  %v2864 = vld [vmem:[%s5] sm:$0xf]
  %v2865 = vld [vmem:[%s5 + $0x4] sm:$0xf]
  %v2866 = vld [vmem:[%s6] sm:$0xff]
  %v2867 = vld [vmem:[%s6 + $0x8] sm:$0xff]
  %v2876 = vunpack.c.l.b16 %v2856
  %v2877 = vunpack.c.l.b16 %v2857
  %v2878 = vunpack.c.l.b16 %v2858
  %v2879 = vunpack.c.l.b16 %v2859
  %v2880 = vunpack.c.l.b16 %v2860
  %v2881 = vunpack.c.l.b16 %v2861
  %v2882 = vunpack.c.l.b16 %v2862
  %v2883 = vunpack.c.l.b16 %v2863
  %v2884 = vpack.c.b16 %v2877, %v2876
  %v2885 = vpack.c.b16 %v2879, %v2878
  %v2886 = vpack.c.b16 %v2881, %v2880
  %v2887 = vpack.c.b16 %v2883, %v2882
  %vm2891 = vcmask 515072
  %v2893 = vsel %vm2891, %v2848, 0
  %v2896 = vsel %vm2891, %v2849, 0
  %v2899 = vsel %vm2891, %v2850, 0
  %v2902 = vsel %vm2891, %v2851, 0
  %v2905 = vsel %vm2891, %v2852, 0
  %v2908 = vsel %vm2891, %v2853, 0
  %v2911 = vsel %vm2891, %v2854, 0
  %v2914 = vsel %vm2891, %v2855, 0
  %vm2916 = vcmask 1046528
  %vm2917 = vcmask 1047552
  %v2918 = vsel %vm2916, 4294967295, 65535
  %v2919 = vsel %vm2917, %v2918, 0
  %v2921 = vand.u32 %v2887, %v2919
  %2923 = vmatpush.bf16.msra.mxu0 0
  %2924 = vmatpush.bf16.msra.mxu0 0
  %2925 = vmatpush.bf16.msra.mxu0 0
  %2926 = vmatpush.bf16.msra.mxu0 0
  %2927 = vmatpush.bf16.msra.mxu0 %v2921
  %2928 = vmatpush.bf16.msra.mxu0 %v2886
  %2929 = vmatpush.bf16.msra.mxu0 %v2885
  %2930 = vmatpush.bf16.msra.mxu0 %v2884
  %2931 = vmatmul.bf16.gmra.mxu0 %v2893
  %v2932 = vpop.f32.mrf.mxu0
  %v2933 = vadd.f32 0.0, %v2932
  %v2934 = vpop.f32.mrf.mxu0
  %v2935 = vadd.f32 0.0, %v2934
  %2936 = vmatmul.bf16.gmra.mxu0 %v2896
  %v2937 = vpop.f32.mrf.mxu0
  %v2938 = vadd.f32 0.0, %v2937
  %v2939 = vpop.f32.mrf.mxu0
  %v2940 = vadd.f32 0.0, %v2939
  %2941 = vmatmul.bf16.gmra.mxu0 %v2899
  %v2942 = vpop.f32.mrf.mxu0
  %v2943 = vadd.f32 0.0, %v2942
  %v2944 = vpop.f32.mrf.mxu0
  %v2945 = vadd.f32 0.0, %v2944
  %2946 = vmatmul.bf16.gmra.mxu0 %v2902
  %v2947 = vpop.f32.mrf.mxu0
  %v2948 = vadd.f32 0.0, %v2947
  %v2949 = vpop.f32.mrf.mxu0
  %v2950 = vadd.f32 0.0, %v2949
  %2951 = vmatmul.bf16.gmra.mxu0 %v2905
  %v2952 = vpop.f32.mrf.mxu0
  %v2953 = vadd.f32 0.0, %v2952
  %v2954 = vpop.f32.mrf.mxu0
  %v2955 = vadd.f32 0.0, %v2954
  %2956 = vmatmul.bf16.gmra.mxu0 %v2908
  %v2957 = vpop.f32.mrf.mxu0
  %v2958 = vadd.f32 0.0, %v2957
  %v2959 = vpop.f32.mrf.mxu0
  %v2960 = vadd.f32 0.0, %v2959
  %2961 = vmatmul.bf16.gmra.mxu0 %v2911
  %v2962 = vpop.f32.mrf.mxu0
  %v2963 = vadd.f32 0.0, %v2962
  %v2964 = vpop.f32.mrf.mxu0
  %v2965 = vadd.f32 0.0, %v2964
  %2966 = vmatmul.bf16.gmra.mxu0 %v2914
  %v2967 = vpop.f32.mrf.mxu0
  %v2968 = vadd.f32 0.0, %v2967
  %v2969 = vpop.f32.mrf.mxu0
  %v2970 = vadd.f32 0.0, %v2969
  %2971 = vdwg.mxu0
  %v2972 = vpack.c.bf16 %v2933, %v2933
  %v2973 = vpack.c.bf16 %v2935, %v2935
  %v2974 = vpack.c.bf16 %v2938, %v2938
  %v2975 = vpack.c.bf16 %v2940, %v2940
  %v2976 = vpack.c.bf16 %v2943, %v2943
  %v2977 = vpack.c.bf16 %v2945, %v2945
  %v2978 = vpack.c.bf16 %v2948, %v2948
  %v2979 = vpack.c.bf16 %v2950, %v2950
  %v2980 = vpack.c.bf16 %v2953, %v2953
  %v2981 = vpack.c.bf16 %v2955, %v2955
  %v2982 = vpack.c.bf16 %v2958, %v2958
  %v2983 = vpack.c.bf16 %v2960, %v2960
  %v2984 = vpack.c.bf16 %v2963, %v2963
  %v2985 = vpack.c.bf16 %v2965, %v2965
  %v2986 = vpack.c.bf16 %v2968, %v2968
  %v2987 = vpack.c.bf16 %v2970, %v2970
  %v3004 = vrot.slane %v2972, 3
  %v3005 = vrot.slane %v2973, 3
  %v3006 = vrot.slane %v2974, 3
  %v3007 = vrot.slane %v2975, 3
  %v3008 = vrot.slane %v2976, 3
  %v3009 = vrot.slane %v2977, 3
  %v3010 = vrot.slane %v2978, 3
  %v3011 = vrot.slane %v2979, 3
  %v3012 = vrot.slane %v2980, 3
  %v3013 = vrot.slane %v2981, 3
  %v3014 = vrot.slane %v2982, 3
  %v3015 = vrot.slane %v2983, 3
  %v3016 = vrot.slane %v2984, 3
  %v3017 = vrot.slane %v2985, 3
  %v3018 = vrot.slane %v2986, 3
  %v3019 = vrot.slane %v2987, 3
  %v3022 = vsel %vm630, %v2972, %v3004
  %v3024 = vsel %vm635, %v2972, %v3004
  %v3026 = vrot.slane %v3024, 1
  %v3027 = vsel %vm639, %v2972, %v3004
  %v3029 = vrot.slane %v3027, 2
  %v3030 = vsel %vm643, %v2972, %v3004
  %v3032 = vrot.slane %v3030, 3
  %v3035 = vsel %vm630, %v2973, %v3005
  %v3037 = vsel %vm635, %v2973, %v3005
  %v3039 = vrot.slane %v3037, 1
  %v3040 = vsel %vm639, %v2973, %v3005
  %v3042 = vrot.slane %v3040, 2
  %v3043 = vsel %vm643, %v2973, %v3005
  %v3045 = vrot.slane %v3043, 3
  %v3048 = vsel %vm630, %v2974, %v3006
  %v3050 = vsel %vm635, %v2974, %v3006
  %v3052 = vrot.slane %v3050, 1
  %v3053 = vsel %vm639, %v2974, %v3006
  %v3055 = vrot.slane %v3053, 2
  %v3056 = vsel %vm643, %v2974, %v3006
  %v3058 = vrot.slane %v3056, 3
  %v3061 = vsel %vm630, %v2975, %v3007
  %v3063 = vsel %vm635, %v2975, %v3007
  %v3065 = vrot.slane %v3063, 1
  %v3066 = vsel %vm639, %v2975, %v3007
  %v3068 = vrot.slane %v3066, 2
  %v3069 = vsel %vm643, %v2975, %v3007
  %v3071 = vrot.slane %v3069, 3
  %v3074 = vsel %vm630, %v2976, %v3008
  %v3076 = vsel %vm635, %v2976, %v3008
  %v3078 = vrot.slane %v3076, 1
  %v3079 = vsel %vm639, %v2976, %v3008
  %v3081 = vrot.slane %v3079, 2
  %v3082 = vsel %vm643, %v2976, %v3008
  %v3084 = vrot.slane %v3082, 3
  %v3087 = vsel %vm630, %v2977, %v3009
  %v3089 = vsel %vm635, %v2977, %v3009
  %v3091 = vrot.slane %v3089, 1
  %v3092 = vsel %vm639, %v2977, %v3009
  %v3094 = vrot.slane %v3092, 2
  %v3095 = vsel %vm643, %v2977, %v3009
  %v3097 = vrot.slane %v3095, 3
  %v3100 = vsel %vm630, %v2978, %v3010
  %v3102 = vsel %vm635, %v2978, %v3010
  %v3104 = vrot.slane %v3102, 1
  %v3105 = vsel %vm639, %v2978, %v3010
  %v3107 = vrot.slane %v3105, 2
  %v3108 = vsel %vm643, %v2978, %v3010
  %v3110 = vrot.slane %v3108, 3
  %v3113 = vsel %vm630, %v2979, %v3011
  %v3115 = vsel %vm635, %v2979, %v3011
  %v3117 = vrot.slane %v3115, 1
  %v3118 = vsel %vm639, %v2979, %v3011
  %v3120 = vrot.slane %v3118, 2
  %v3121 = vsel %vm643, %v2979, %v3011
  %v3123 = vrot.slane %v3121, 3
  %v3126 = vsel %vm630, %v2980, %v3012
  %v3128 = vsel %vm635, %v2980, %v3012
  %v3130 = vrot.slane %v3128, 1
  %v3131 = vsel %vm639, %v2980, %v3012
  %v3133 = vrot.slane %v3131, 2
  %v3134 = vsel %vm643, %v2980, %v3012
  %v3136 = vrot.slane %v3134, 3
  %v3139 = vsel %vm630, %v2981, %v3013
  %v3141 = vsel %vm635, %v2981, %v3013
  %v3143 = vrot.slane %v3141, 1
  %v3144 = vsel %vm639, %v2981, %v3013
  %v3146 = vrot.slane %v3144, 2
  %v3147 = vsel %vm643, %v2981, %v3013
  %v3149 = vrot.slane %v3147, 3
  %v3152 = vsel %vm630, %v2982, %v3014
  %v3154 = vsel %vm635, %v2982, %v3014
  %v3156 = vrot.slane %v3154, 1
  %v3157 = vsel %vm639, %v2982, %v3014
  %v3159 = vrot.slane %v3157, 2
  %v3160 = vsel %vm643, %v2982, %v3014
  %v3162 = vrot.slane %v3160, 3
  %v3165 = vsel %vm630, %v2983, %v3015
  %v3167 = vsel %vm635, %v2983, %v3015
  %v3169 = vrot.slane %v3167, 1
  %v3170 = vsel %vm639, %v2983, %v3015
  %v3172 = vrot.slane %v3170, 2
  %v3173 = vsel %vm643, %v2983, %v3015
  %v3175 = vrot.slane %v3173, 3
  %v3178 = vsel %vm630, %v2984, %v3016
  %v3180 = vsel %vm635, %v2984, %v3016
  %v3182 = vrot.slane %v3180, 1
  %v3183 = vsel %vm639, %v2984, %v3016
  %v3185 = vrot.slane %v3183, 2
  %v3186 = vsel %vm643, %v2984, %v3016
  %v3188 = vrot.slane %v3186, 3
  %v3191 = vsel %vm630, %v2985, %v3017
  %v3193 = vsel %vm635, %v2985, %v3017
  %v3195 = vrot.slane %v3193, 1
  %v3196 = vsel %vm639, %v2985, %v3017
  %v3198 = vrot.slane %v3196, 2
  %v3199 = vsel %vm643, %v2985, %v3017
  %v3201 = vrot.slane %v3199, 3
  %v3204 = vsel %vm630, %v2986, %v3018
  %v3206 = vsel %vm635, %v2986, %v3018
  %v3208 = vrot.slane %v3206, 1
  %v3209 = vsel %vm639, %v2986, %v3018
  %v3211 = vrot.slane %v3209, 2
  %v3212 = vsel %vm643, %v2986, %v3018
  %v3214 = vrot.slane %v3212, 3
  %v3217 = vsel %vm630, %v2987, %v3019
  %v3219 = vsel %vm635, %v2987, %v3019
  %v3221 = vrot.slane %v3219, 1
  %v3222 = vsel %vm639, %v2987, %v3019
  %v3224 = vrot.slane %v3222, 2
  %v3225 = vsel %vm643, %v2987, %v3019
  %v3227 = vrot.slane %v3225, 3
  %v3228 = vunpack.i.l.s16 %v3022
  %v3229 = vunpack.i.h.s16 %v3022
  %v3230 = vunpack.i.l.s16 %v3026
  %v3231 = vunpack.i.h.s16 %v3026
  %v3232 = vunpack.i.l.s16 %v3029
  %v3233 = vunpack.i.h.s16 %v3029
  %v3234 = vunpack.i.l.s16 %v3032
  %v3235 = vunpack.i.h.s16 %v3032
  %v3236 = vunpack.i.l.s16 %v3035
  %v3237 = vunpack.i.h.s16 %v3035
  %v3238 = vunpack.i.l.s16 %v3039
  %v3239 = vunpack.i.h.s16 %v3039
  %v3240 = vunpack.i.l.s16 %v3042
  %v3241 = vunpack.i.h.s16 %v3042
  %v3242 = vunpack.i.l.s16 %v3045
  %v3243 = vunpack.i.h.s16 %v3045
  %v3244 = vunpack.i.l.s16 %v3048
  %v3245 = vunpack.i.h.s16 %v3048
  %v3246 = vunpack.i.l.s16 %v3052
  %v3247 = vunpack.i.h.s16 %v3052
  %v3248 = vunpack.i.l.s16 %v3055
  %v3249 = vunpack.i.h.s16 %v3055
  %v3250 = vunpack.i.l.s16 %v3058
  %v3251 = vunpack.i.h.s16 %v3058
  %v3252 = vunpack.i.l.s16 %v3061
  %v3253 = vunpack.i.h.s16 %v3061
  %v3254 = vunpack.i.l.s16 %v3065
  %v3255 = vunpack.i.h.s16 %v3065
  %v3256 = vunpack.i.l.s16 %v3068
  %v3257 = vunpack.i.h.s16 %v3068
  %v3258 = vunpack.i.l.s16 %v3071
  %v3259 = vunpack.i.h.s16 %v3071
  %v3260 = vunpack.i.l.s16 %v3074
  %v3261 = vunpack.i.h.s16 %v3074
  %v3262 = vunpack.i.l.s16 %v3078
  %v3263 = vunpack.i.h.s16 %v3078
  %v3264 = vunpack.i.l.s16 %v3081
  %v3265 = vunpack.i.h.s16 %v3081
  %v3266 = vunpack.i.l.s16 %v3084
  %v3267 = vunpack.i.h.s16 %v3084
  %v3268 = vunpack.i.l.s16 %v3087
  %v3269 = vunpack.i.h.s16 %v3087
  %v3270 = vunpack.i.l.s16 %v3091
  %v3271 = vunpack.i.h.s16 %v3091
  %v3272 = vunpack.i.l.s16 %v3094
  %v3273 = vunpack.i.h.s16 %v3094
  %v3274 = vunpack.i.l.s16 %v3097
  %v3275 = vunpack.i.h.s16 %v3097
  %v3276 = vunpack.i.l.s16 %v3100
  %v3277 = vunpack.i.h.s16 %v3100
  %v3278 = vunpack.i.l.s16 %v3104
  %v3279 = vunpack.i.h.s16 %v3104
  %v3280 = vunpack.i.l.s16 %v3107
  %v3281 = vunpack.i.h.s16 %v3107
  %v3282 = vunpack.i.l.s16 %v3110
  %v3283 = vunpack.i.h.s16 %v3110
  %v3284 = vunpack.i.l.s16 %v3113
  %v3285 = vunpack.i.h.s16 %v3113
  %v3286 = vunpack.i.l.s16 %v3117
  %v3287 = vunpack.i.h.s16 %v3117
  %v3288 = vunpack.i.l.s16 %v3120
  %v3289 = vunpack.i.h.s16 %v3120
  %v3290 = vunpack.i.l.s16 %v3123
  %v3291 = vunpack.i.h.s16 %v3123
  %v3292 = vunpack.i.l.s16 %v3126
  %v3293 = vunpack.i.h.s16 %v3126
  %v3294 = vunpack.i.l.s16 %v3130
  %v3295 = vunpack.i.h.s16 %v3130
  %v3296 = vunpack.i.l.s16 %v3133
  %v3297 = vunpack.i.h.s16 %v3133
  %v3298 = vunpack.i.l.s16 %v3136
  %v3299 = vunpack.i.h.s16 %v3136
  %v3300 = vunpack.i.l.s16 %v3139
  %v3301 = vunpack.i.h.s16 %v3139
  %v3302 = vunpack.i.l.s16 %v3143
  %v3303 = vunpack.i.h.s16 %v3143
  %v3304 = vunpack.i.l.s16 %v3146
  %v3305 = vunpack.i.h.s16 %v3146
  %v3306 = vunpack.i.l.s16 %v3149
  %v3307 = vunpack.i.h.s16 %v3149
  %v3308 = vunpack.i.l.s16 %v3152
  %v3309 = vunpack.i.h.s16 %v3152
  %v3310 = vunpack.i.l.s16 %v3156
  %v3311 = vunpack.i.h.s16 %v3156
  %v3312 = vunpack.i.l.s16 %v3159
  %v3313 = vunpack.i.h.s16 %v3159
  %v3314 = vunpack.i.l.s16 %v3162
  %v3315 = vunpack.i.h.s16 %v3162
  %v3316 = vunpack.i.l.s16 %v3165
  %v3317 = vunpack.i.h.s16 %v3165
  %v3318 = vunpack.i.l.s16 %v3169
  %v3319 = vunpack.i.h.s16 %v3169
  %v3320 = vunpack.i.l.s16 %v3172
  %v3321 = vunpack.i.h.s16 %v3172
  %v3322 = vunpack.i.l.s16 %v3175
  %v3323 = vunpack.i.h.s16 %v3175
  %v3324 = vunpack.i.l.s16 %v3178
  %v3325 = vunpack.i.h.s16 %v3178
  %v3326 = vunpack.i.l.s16 %v3182
  %v3327 = vunpack.i.h.s16 %v3182
  %v3328 = vunpack.i.l.s16 %v3185
  %v3329 = vunpack.i.h.s16 %v3185
  %v3330 = vunpack.i.l.s16 %v3188
  %v3331 = vunpack.i.h.s16 %v3188
  %v3332 = vunpack.i.l.s16 %v3191
  %v3333 = vunpack.i.h.s16 %v3191
  %v3334 = vunpack.i.l.s16 %v3195
  %v3335 = vunpack.i.h.s16 %v3195
  %v3336 = vunpack.i.l.s16 %v3198
  %v3337 = vunpack.i.h.s16 %v3198
  %v3338 = vunpack.i.l.s16 %v3201
  %v3339 = vunpack.i.h.s16 %v3201
  %v3340 = vunpack.i.l.s16 %v3204
  %v3341 = vunpack.i.h.s16 %v3204
  %v3342 = vunpack.i.l.s16 %v3208
  %v3343 = vunpack.i.h.s16 %v3208
  %v3344 = vunpack.i.l.s16 %v3211
  %v3345 = vunpack.i.h.s16 %v3211
  %v3346 = vunpack.i.l.s16 %v3214
  %v3347 = vunpack.i.h.s16 %v3214
  %v3348 = vunpack.i.l.s16 %v3217
  %v3349 = vunpack.i.h.s16 %v3217
  %v3350 = vunpack.i.l.s16 %v3221
  %v3351 = vunpack.i.h.s16 %v3221
  %v3352 = vunpack.i.l.s16 %v3224
  %v3353 = vunpack.i.h.s16 %v3224
  %v3354 = vunpack.i.l.s16 %v3227
  %v3355 = vunpack.i.h.s16 %v3227
  %v3356 = vpack.i.b16 %v3228, %v3228
  %v3357 = vpack.i.b16 %v3229, %v3229
  %v3358 = vpack.i.b16 %v3230, %v3230
  %v3359 = vpack.i.b16 %v3231, %v3231
  %v3360 = vpack.i.b16 %v3232, %v3232
  %v3361 = vpack.i.b16 %v3233, %v3233
  %v3362 = vpack.i.b16 %v3234, %v3234
  %v3363 = vpack.i.b16 %v3235, %v3235
  %v3364 = vpack.i.b16 %v3236, %v3236
  %v3365 = vpack.i.b16 %v3237, %v3237
  %v3366 = vpack.i.b16 %v3238, %v3238
  %v3367 = vpack.i.b16 %v3239, %v3239
  %v3368 = vpack.i.b16 %v3240, %v3240
  %v3369 = vpack.i.b16 %v3241, %v3241
  %v3370 = vpack.i.b16 %v3242, %v3242
  %v3371 = vpack.i.b16 %v3243, %v3243
  %v3372 = vpack.i.b16 %v3244, %v3244
  %v3373 = vpack.i.b16 %v3245, %v3245
  %v3374 = vpack.i.b16 %v3246, %v3246
  %v3375 = vpack.i.b16 %v3247, %v3247
  %v3376 = vpack.i.b16 %v3248, %v3248
  %v3377 = vpack.i.b16 %v3249, %v3249
  %v3378 = vpack.i.b16 %v3250, %v3250
  %v3379 = vpack.i.b16 %v3251, %v3251
  %v3380 = vpack.i.b16 %v3252, %v3252
  %v3381 = vpack.i.b16 %v3253, %v3253
  %v3382 = vpack.i.b16 %v3254, %v3254
  %v3383 = vpack.i.b16 %v3255, %v3255
  %v3384 = vpack.i.b16 %v3256, %v3256
  %v3385 = vpack.i.b16 %v3257, %v3257
  %v3386 = vpack.i.b16 %v3258, %v3258
  %v3387 = vpack.i.b16 %v3259, %v3259
  %v3388 = vpack.i.b16 %v3260, %v3260
  %v3389 = vpack.i.b16 %v3261, %v3261
  %v3390 = vpack.i.b16 %v3262, %v3262
  %v3391 = vpack.i.b16 %v3263, %v3263
  %v3392 = vpack.i.b16 %v3264, %v3264
  %v3393 = vpack.i.b16 %v3265, %v3265
  %v3394 = vpack.i.b16 %v3266, %v3266
  %v3395 = vpack.i.b16 %v3267, %v3267
  %v3396 = vpack.i.b16 %v3268, %v3268
  %v3397 = vpack.i.b16 %v3269, %v3269
  %v3398 = vpack.i.b16 %v3270, %v3270
  %v3399 = vpack.i.b16 %v3271, %v3271
  %v3400 = vpack.i.b16 %v3272, %v3272
  %v3401 = vpack.i.b16 %v3273, %v3273
  %v3402 = vpack.i.b16 %v3274, %v3274
  %v3403 = vpack.i.b16 %v3275, %v3275
  %v3404 = vpack.i.b16 %v3276, %v3276
  %v3405 = vpack.i.b16 %v3277, %v3277
  %v3406 = vpack.i.b16 %v3278, %v3278
  %v3407 = vpack.i.b16 %v3279, %v3279
  %v3408 = vpack.i.b16 %v3280, %v3280
  %v3409 = vpack.i.b16 %v3281, %v3281
  %v3410 = vpack.i.b16 %v3282, %v3282
  %v3411 = vpack.i.b16 %v3283, %v3283
  %v3412 = vpack.i.b16 %v3284, %v3284
  %v3413 = vpack.i.b16 %v3285, %v3285
  %v3414 = vpack.i.b16 %v3286, %v3286
  %v3415 = vpack.i.b16 %v3287, %v3287
  %v3416 = vpack.i.b16 %v3288, %v3288
  %v3417 = vpack.i.b16 %v3289, %v3289
  %v3418 = vpack.i.b16 %v3290, %v3290
  %v3419 = vpack.i.b16 %v3291, %v3291
  %v3420 = vpack.i.b16 %v3292, %v3292
  %v3421 = vpack.i.b16 %v3293, %v3293
  %v3422 = vpack.i.b16 %v3294, %v3294
  %v3423 = vpack.i.b16 %v3295, %v3295
  %v3424 = vpack.i.b16 %v3296, %v3296
  %v3425 = vpack.i.b16 %v3297, %v3297
  %v3426 = vpack.i.b16 %v3298, %v3298
  %v3427 = vpack.i.b16 %v3299, %v3299
  %v3428 = vpack.i.b16 %v3300, %v3300
  %v3429 = vpack.i.b16 %v3301, %v3301
  %v3430 = vpack.i.b16 %v3302, %v3302
  %v3431 = vpack.i.b16 %v3303, %v3303
  %v3432 = vpack.i.b16 %v3304, %v3304
  %v3433 = vpack.i.b16 %v3305, %v3305
  %v3434 = vpack.i.b16 %v3306, %v3306
  %v3435 = vpack.i.b16 %v3307, %v3307
  %v3436 = vpack.i.b16 %v3308, %v3308
  %v3437 = vpack.i.b16 %v3309, %v3309
  %v3438 = vpack.i.b16 %v3310, %v3310
  %v3439 = vpack.i.b16 %v3311, %v3311
  %v3440 = vpack.i.b16 %v3312, %v3312
  %v3441 = vpack.i.b16 %v3313, %v3313
  %v3442 = vpack.i.b16 %v3314, %v3314
  %v3443 = vpack.i.b16 %v3315, %v3315
  %v3444 = vpack.i.b16 %v3316, %v3316
  %v3445 = vpack.i.b16 %v3317, %v3317
  %v3446 = vpack.i.b16 %v3318, %v3318
  %v3447 = vpack.i.b16 %v3319, %v3319
  %v3448 = vpack.i.b16 %v3320, %v3320
  %v3449 = vpack.i.b16 %v3321, %v3321
  %v3450 = vpack.i.b16 %v3322, %v3322
  %v3451 = vpack.i.b16 %v3323, %v3323
  %v3452 = vpack.i.b16 %v3324, %v3324
  %v3453 = vpack.i.b16 %v3325, %v3325
  %v3454 = vpack.i.b16 %v3326, %v3326
  %v3455 = vpack.i.b16 %v3327, %v3327
  %v3456 = vpack.i.b16 %v3328, %v3328
  %v3457 = vpack.i.b16 %v3329, %v3329
  %v3458 = vpack.i.b16 %v3330, %v3330
  %v3459 = vpack.i.b16 %v3331, %v3331
  %v3460 = vpack.i.b16 %v3332, %v3332
  %v3461 = vpack.i.b16 %v3333, %v3333
  %v3462 = vpack.i.b16 %v3334, %v3334
  %v3463 = vpack.i.b16 %v3335, %v3335
  %v3464 = vpack.i.b16 %v3336, %v3336
  %v3465 = vpack.i.b16 %v3337, %v3337
  %v3466 = vpack.i.b16 %v3338, %v3338
  %v3467 = vpack.i.b16 %v3339, %v3339
  %v3468 = vpack.i.b16 %v3340, %v3340
  %v3469 = vpack.i.b16 %v3341, %v3341
  %v3470 = vpack.i.b16 %v3342, %v3342
  %v3471 = vpack.i.b16 %v3343, %v3343
  %v3472 = vpack.i.b16 %v3344, %v3344
  %v3473 = vpack.i.b16 %v3345, %v3345
  %v3474 = vpack.i.b16 %v3346, %v3346
  %v3475 = vpack.i.b16 %v3347, %v3347
  %v3476 = vpack.i.b16 %v3348, %v3348
  %v3477 = vpack.i.b16 %v3349, %v3349
  %v3478 = vpack.i.b16 %v3350, %v3350
  %v3479 = vpack.i.b16 %v3351, %v3351
  %v3480 = vpack.i.b16 %v3352, %v3352
  %v3481 = vpack.i.b16 %v3353, %v3353
  %v3482 = vpack.i.b16 %v3354, %v3354
  %v3483 = vpack.i.b16 %v3355, %v3355
  %v3484 = vperm.slane %v3356, 0
  %v3485 = vperm.slane %v3357, 0
  %v3486 = vperm.slane %v3358, 0
  %v3487 = vperm.slane %v3359, 0
  %v3488 = vperm.slane %v3360, 0
  %v3489 = vperm.slane %v3361, 0
  %v3490 = vperm.slane %v3362, 0
  %v3491 = vperm.slane %v3363, 0
  %v3492 = vperm.slane %v3364, 0
  %v3493 = vperm.slane %v3365, 0
  %v3494 = vperm.slane %v3366, 0
  %v3495 = vperm.slane %v3367, 0
  %v3496 = vperm.slane %v3368, 0
  %v3497 = vperm.slane %v3369, 0
  %v3498 = vperm.slane %v3370, 0
  %v3499 = vperm.slane %v3371, 0
  %v3500 = vperm.slane %v3372, 0
  %v3501 = vperm.slane %v3373, 0
  %v3502 = vperm.slane %v3374, 0
  %v3503 = vperm.slane %v3375, 0
  %v3504 = vperm.slane %v3376, 0
  %v3505 = vperm.slane %v3377, 0
  %v3506 = vperm.slane %v3378, 0
  %v3507 = vperm.slane %v3379, 0
  %v3508 = vperm.slane %v3380, 0
  %v3509 = vperm.slane %v3381, 0
  %v3510 = vperm.slane %v3382, 0
  %v3511 = vperm.slane %v3383, 0
  %v3512 = vperm.slane %v3384, 0
  %v3513 = vperm.slane %v3385, 0
  %v3514 = vperm.slane %v3386, 0
  %v3515 = vperm.slane %v3387, 0
  %v3516 = vperm.slane %v3388, 0
  %v3517 = vperm.slane %v3389, 0
  %v3518 = vperm.slane %v3390, 0
  %v3519 = vperm.slane %v3391, 0
  %v3520 = vperm.slane %v3392, 0
  %v3521 = vperm.slane %v3393, 0
  %v3522 = vperm.slane %v3394, 0
  %v3523 = vperm.slane %v3395, 0
  %v3524 = vperm.slane %v3396, 0
  %v3525 = vperm.slane %v3397, 0
  %v3526 = vperm.slane %v3398, 0
  %v3527 = vperm.slane %v3399, 0
  %v3528 = vperm.slane %v3400, 0
  %v3529 = vperm.slane %v3401, 0
  %v3530 = vperm.slane %v3402, 0
  %v3531 = vperm.slane %v3403, 0
  %v3532 = vperm.slane %v3404, 0
  %v3533 = vperm.slane %v3405, 0
  %v3534 = vperm.slane %v3406, 0
  %v3535 = vperm.slane %v3407, 0
  %v3536 = vperm.slane %v3408, 0
  %v3537 = vperm.slane %v3409, 0
  %v3538 = vperm.slane %v3410, 0
  %v3539 = vperm.slane %v3411, 0
  %v3540 = vperm.slane %v3412, 0
  %v3541 = vperm.slane %v3413, 0
  %v3542 = vperm.slane %v3414, 0
  %v3543 = vperm.slane %v3415, 0
  %v3544 = vperm.slane %v3416, 0
  %v3545 = vperm.slane %v3417, 0
  %v3546 = vperm.slane %v3418, 0
  %v3547 = vperm.slane %v3419, 0
  %v3548 = vperm.slane %v3420, 0
  %v3549 = vperm.slane %v3421, 0
  %v3550 = vperm.slane %v3422, 0
  %v3551 = vperm.slane %v3423, 0
  %v3552 = vperm.slane %v3424, 0
  %v3553 = vperm.slane %v3425, 0
  %v3554 = vperm.slane %v3426, 0
  %v3555 = vperm.slane %v3427, 0
  %v3556 = vperm.slane %v3428, 0
  %v3557 = vperm.slane %v3429, 0
  %v3558 = vperm.slane %v3430, 0
  %v3559 = vperm.slane %v3431, 0
  %v3560 = vperm.slane %v3432, 0
  %v3561 = vperm.slane %v3433, 0
  %v3562 = vperm.slane %v3434, 0
  %v3563 = vperm.slane %v3435, 0
  %v3564 = vperm.slane %v3436, 0
  %v3565 = vperm.slane %v3437, 0
  %v3566 = vperm.slane %v3438, 0
  %v3567 = vperm.slane %v3439, 0
  %v3568 = vperm.slane %v3440, 0
  %v3569 = vperm.slane %v3441, 0
  %v3570 = vperm.slane %v3442, 0
  %v3571 = vperm.slane %v3443, 0
  %v3572 = vperm.slane %v3444, 0
  %v3573 = vperm.slane %v3445, 0
  %v3574 = vperm.slane %v3446, 0
  %v3575 = vperm.slane %v3447, 0
  %v3576 = vperm.slane %v3448, 0
  %v3577 = vperm.slane %v3449, 0
  %v3578 = vperm.slane %v3450, 0
  %v3579 = vperm.slane %v3451, 0
  %v3580 = vperm.slane %v3452, 0
  %v3581 = vperm.slane %v3453, 0
  %v3582 = vperm.slane %v3454, 0
  %v3583 = vperm.slane %v3455, 0
  %v3584 = vperm.slane %v3456, 0
  %v3585 = vperm.slane %v3457, 0
  %v3586 = vperm.slane %v3458, 0
  %v3587 = vperm.slane %v3459, 0
  %v3588 = vperm.slane %v3460, 0
  %v3589 = vperm.slane %v3461, 0
  %v3590 = vperm.slane %v3462, 0
  %v3591 = vperm.slane %v3463, 0
  %v3592 = vperm.slane %v3464, 0
  %v3593 = vperm.slane %v3465, 0
  %v3594 = vperm.slane %v3466, 0
  %v3595 = vperm.slane %v3467, 0
  %v3596 = vperm.slane %v3468, 0
  %v3597 = vperm.slane %v3469, 0
  %v3598 = vperm.slane %v3470, 0
  %v3599 = vperm.slane %v3471, 0
  %v3600 = vperm.slane %v3472, 0
  %v3601 = vperm.slane %v3473, 0
  %v3602 = vperm.slane %v3474, 0
  %v3603 = vperm.slane %v3475, 0
  %v3604 = vperm.slane %v3476, 0
  %v3605 = vperm.slane %v3477, 0
  %v3606 = vperm.slane %v3478, 0
  %v3607 = vperm.slane %v3479, 0
  %v3608 = vperm.slane %v3480, 0
  %v3609 = vperm.slane %v3481, 0
  %v3610 = vperm.slane %v3482, 0
  %v3611 = vperm.slane %v3483, 0
  %3740 = vrot.lane.b32.xlu0 %v3484, 96
  %v3741 = vpop.permute.xlu0 %3740
  %3742 = vrot.lane.b32.xlu0 %v3485, 96
  %v3743 = vpop.permute.xlu0 %3742
  %3744 = vrot.lane.b32.xlu0 %v3486, 96
  %v3745 = vpop.permute.xlu0 %3744
  %3746 = vrot.lane.b32.xlu0 %v3487, 96
  %v3747 = vpop.permute.xlu0 %3746
  %3748 = vrot.lane.b32.xlu0 %v3488, 96
  %v3749 = vpop.permute.xlu0 %3748
  %3750 = vrot.lane.b32.xlu0 %v3489, 96
  %v3751 = vpop.permute.xlu0 %3750
  %3752 = vrot.lane.b32.xlu0 %v3490, 96
  %v3753 = vpop.permute.xlu0 %3752
  %3754 = vrot.lane.b32.xlu0 %v3491, 96
  %v3755 = vpop.permute.xlu0 %3754
  %3756 = vrot.lane.b32.xlu0 %v3492, 96
  %v3757 = vpop.permute.xlu0 %3756
  %3758 = vrot.lane.b32.xlu0 %v3493, 96
  %v3759 = vpop.permute.xlu0 %3758
  %3760 = vrot.lane.b32.xlu0 %v3494, 96
  %v3761 = vpop.permute.xlu0 %3760
  %3762 = vrot.lane.b32.xlu0 %v3495, 96
  %v3763 = vpop.permute.xlu0 %3762
  %3764 = vrot.lane.b32.xlu0 %v3496, 96
  %v3765 = vpop.permute.xlu0 %3764
  %3766 = vrot.lane.b32.xlu0 %v3497, 96
  %v3767 = vpop.permute.xlu0 %3766
  %3768 = vrot.lane.b32.xlu0 %v3498, 96
  %v3769 = vpop.permute.xlu0 %3768
  %3770 = vrot.lane.b32.xlu0 %v3499, 96
  %v3771 = vpop.permute.xlu0 %3770
  %3772 = vrot.lane.b32.xlu0 %v3500, 96
  %v3773 = vpop.permute.xlu0 %3772
  %3774 = vrot.lane.b32.xlu0 %v3501, 96
  %v3775 = vpop.permute.xlu0 %3774
  %3776 = vrot.lane.b32.xlu0 %v3502, 96
  %v3777 = vpop.permute.xlu0 %3776
  %3778 = vrot.lane.b32.xlu0 %v3503, 96
  %v3779 = vpop.permute.xlu0 %3778
  %3780 = vrot.lane.b32.xlu0 %v3504, 96
  %v3781 = vpop.permute.xlu0 %3780
  %3782 = vrot.lane.b32.xlu0 %v3505, 96
  %v3783 = vpop.permute.xlu0 %3782
  %3784 = vrot.lane.b32.xlu0 %v3506, 96
  %v3785 = vpop.permute.xlu0 %3784
  %3786 = vrot.lane.b32.xlu0 %v3507, 96
  %v3787 = vpop.permute.xlu0 %3786
  %3788 = vrot.lane.b32.xlu0 %v3508, 96
  %v3789 = vpop.permute.xlu0 %3788
  %3790 = vrot.lane.b32.xlu0 %v3509, 96
  %v3791 = vpop.permute.xlu0 %3790
  %3792 = vrot.lane.b32.xlu0 %v3510, 96
  %v3793 = vpop.permute.xlu0 %3792
  %3794 = vrot.lane.b32.xlu0 %v3511, 96
  %v3795 = vpop.permute.xlu0 %3794
  %3796 = vrot.lane.b32.xlu0 %v3512, 96
  %v3797 = vpop.permute.xlu0 %3796
  %3798 = vrot.lane.b32.xlu0 %v3513, 96
  %v3799 = vpop.permute.xlu0 %3798
  %3800 = vrot.lane.b32.xlu0 %v3514, 96
  %v3801 = vpop.permute.xlu0 %3800
  %3802 = vrot.lane.b32.xlu0 %v3515, 96
  %v3803 = vpop.permute.xlu0 %3802
  %3804 = vrot.lane.b32.xlu0 %v3516, 96
  %v3805 = vpop.permute.xlu0 %3804
  %3806 = vrot.lane.b32.xlu0 %v3517, 96
  %v3807 = vpop.permute.xlu0 %3806
  %3808 = vrot.lane.b32.xlu0 %v3518, 96
  %v3809 = vpop.permute.xlu0 %3808
  %3810 = vrot.lane.b32.xlu0 %v3519, 96
  %v3811 = vpop.permute.xlu0 %3810
  %3812 = vrot.lane.b32.xlu0 %v3520, 96
  %v3813 = vpop.permute.xlu0 %3812
  %3814 = vrot.lane.b32.xlu0 %v3521, 96
  %v3815 = vpop.permute.xlu0 %3814
  %3816 = vrot.lane.b32.xlu0 %v3522, 96
  %v3817 = vpop.permute.xlu0 %3816
  %3818 = vrot.lane.b32.xlu0 %v3523, 96
  %v3819 = vpop.permute.xlu0 %3818
  %3820 = vrot.lane.b32.xlu0 %v3524, 96
  %v3821 = vpop.permute.xlu0 %3820
  %3822 = vrot.lane.b32.xlu0 %v3525, 96
  %v3823 = vpop.permute.xlu0 %3822
  %3824 = vrot.lane.b32.xlu0 %v3526, 96
  %v3825 = vpop.permute.xlu0 %3824
  %3826 = vrot.lane.b32.xlu0 %v3527, 96
  %v3827 = vpop.permute.xlu0 %3826
  %3828 = vrot.lane.b32.xlu0 %v3528, 96
  %v3829 = vpop.permute.xlu0 %3828
  %3830 = vrot.lane.b32.xlu0 %v3529, 96
  %v3831 = vpop.permute.xlu0 %3830
  %3832 = vrot.lane.b32.xlu0 %v3530, 96
  %v3833 = vpop.permute.xlu0 %3832
  %3834 = vrot.lane.b32.xlu0 %v3531, 96
  %v3835 = vpop.permute.xlu0 %3834
  %3836 = vrot.lane.b32.xlu0 %v3532, 96
  %v3837 = vpop.permute.xlu0 %3836
  %3838 = vrot.lane.b32.xlu0 %v3533, 96
  %v3839 = vpop.permute.xlu0 %3838
  %3840 = vrot.lane.b32.xlu0 %v3534, 96
  %v3841 = vpop.permute.xlu0 %3840
  %3842 = vrot.lane.b32.xlu0 %v3535, 96
  %v3843 = vpop.permute.xlu0 %3842
  %3844 = vrot.lane.b32.xlu0 %v3536, 96
  %v3845 = vpop.permute.xlu0 %3844
  %3846 = vrot.lane.b32.xlu0 %v3537, 96
  %v3847 = vpop.permute.xlu0 %3846
  %3848 = vrot.lane.b32.xlu0 %v3538, 96
  %v3849 = vpop.permute.xlu0 %3848
  %3850 = vrot.lane.b32.xlu0 %v3539, 96
  %v3851 = vpop.permute.xlu0 %3850
  %3852 = vrot.lane.b32.xlu0 %v3540, 96
  %v3853 = vpop.permute.xlu0 %3852
  %3854 = vrot.lane.b32.xlu0 %v3541, 96
  %v3855 = vpop.permute.xlu0 %3854
  %3856 = vrot.lane.b32.xlu0 %v3542, 96
  %v3857 = vpop.permute.xlu0 %3856
  %3858 = vrot.lane.b32.xlu0 %v3543, 96
  %v3859 = vpop.permute.xlu0 %3858
  %3860 = vrot.lane.b32.xlu0 %v3544, 96
  %v3861 = vpop.permute.xlu0 %3860
  %3862 = vrot.lane.b32.xlu0 %v3545, 96
  %v3863 = vpop.permute.xlu0 %3862
  %3864 = vrot.lane.b32.xlu0 %v3546, 96
  %v3865 = vpop.permute.xlu0 %3864
  %3866 = vrot.lane.b32.xlu0 %v3547, 96
  %v3867 = vpop.permute.xlu0 %3866
  %3868 = vrot.lane.b32.xlu0 %v3548, 96
  %v3869 = vpop.permute.xlu0 %3868
  %3870 = vrot.lane.b32.xlu0 %v3549, 96
  %v3871 = vpop.permute.xlu0 %3870
  %3872 = vrot.lane.b32.xlu0 %v3550, 96
  %v3873 = vpop.permute.xlu0 %3872
  %3874 = vrot.lane.b32.xlu0 %v3551, 96
  %v3875 = vpop.permute.xlu0 %3874
  %3876 = vrot.lane.b32.xlu0 %v3552, 96
  %v3877 = vpop.permute.xlu0 %3876
  %3878 = vrot.lane.b32.xlu0 %v3553, 96
  %v3879 = vpop.permute.xlu0 %3878
  %3880 = vrot.lane.b32.xlu0 %v3554, 96
  %v3881 = vpop.permute.xlu0 %3880
  %3882 = vrot.lane.b32.xlu0 %v3555, 96
  %v3883 = vpop.permute.xlu0 %3882
  %3884 = vrot.lane.b32.xlu0 %v3556, 96
  %v3885 = vpop.permute.xlu0 %3884
  %3886 = vrot.lane.b32.xlu0 %v3557, 96
  %v3887 = vpop.permute.xlu0 %3886
  %3888 = vrot.lane.b32.xlu0 %v3558, 96
  %v3889 = vpop.permute.xlu0 %3888
  %3890 = vrot.lane.b32.xlu0 %v3559, 96
  %v3891 = vpop.permute.xlu0 %3890
  %3892 = vrot.lane.b32.xlu0 %v3560, 96
  %v3893 = vpop.permute.xlu0 %3892
  %3894 = vrot.lane.b32.xlu0 %v3561, 96
  %v3895 = vpop.permute.xlu0 %3894
  %3896 = vrot.lane.b32.xlu0 %v3562, 96
  %v3897 = vpop.permute.xlu0 %3896
  %3898 = vrot.lane.b32.xlu0 %v3563, 96
  %v3899 = vpop.permute.xlu0 %3898
  %3900 = vrot.lane.b32.xlu0 %v3564, 96
  %v3901 = vpop.permute.xlu0 %3900
  %3902 = vrot.lane.b32.xlu0 %v3565, 96
  %v3903 = vpop.permute.xlu0 %3902
  %3904 = vrot.lane.b32.xlu0 %v3566, 96
  %v3905 = vpop.permute.xlu0 %3904
  %3906 = vrot.lane.b32.xlu0 %v3567, 96
  %v3907 = vpop.permute.xlu0 %3906
  %3908 = vrot.lane.b32.xlu0 %v3568, 96
  %v3909 = vpop.permute.xlu0 %3908
  %3910 = vrot.lane.b32.xlu0 %v3569, 96
  %v3911 = vpop.permute.xlu0 %3910
  %3912 = vrot.lane.b32.xlu0 %v3570, 96
  %v3913 = vpop.permute.xlu0 %3912
  %3914 = vrot.lane.b32.xlu0 %v3571, 96
  %v3915 = vpop.permute.xlu0 %3914
  %3916 = vrot.lane.b32.xlu0 %v3572, 96
  %v3917 = vpop.permute.xlu0 %3916
  %3918 = vrot.lane.b32.xlu0 %v3573, 96
  %v3919 = vpop.permute.xlu0 %3918
  %3920 = vrot.lane.b32.xlu0 %v3574, 96
  %v3921 = vpop.permute.xlu0 %3920
  %3922 = vrot.lane.b32.xlu0 %v3575, 96
  %v3923 = vpop.permute.xlu0 %3922
  %3924 = vrot.lane.b32.xlu0 %v3576, 96
  %v3925 = vpop.permute.xlu0 %3924
  %3926 = vrot.lane.b32.xlu0 %v3577, 96
  %v3927 = vpop.permute.xlu0 %3926
  %3928 = vrot.lane.b32.xlu0 %v3578, 96
  %v3929 = vpop.permute.xlu0 %3928
  %3930 = vrot.lane.b32.xlu0 %v3579, 96
  %v3931 = vpop.permute.xlu0 %3930
  %3932 = vrot.lane.b32.xlu0 %v3580, 96
  %v3933 = vpop.permute.xlu0 %3932
  %3934 = vrot.lane.b32.xlu0 %v3581, 96
  %v3935 = vpop.permute.xlu0 %3934
  %3936 = vrot.lane.b32.xlu0 %v3582, 96
  %v3937 = vpop.permute.xlu0 %3936
  %3938 = vrot.lane.b32.xlu0 %v3583, 96
  %v3939 = vpop.permute.xlu0 %3938
  %3940 = vrot.lane.b32.xlu0 %v3584, 96
  %v3941 = vpop.permute.xlu0 %3940
  %3942 = vrot.lane.b32.xlu0 %v3585, 96
  %v3943 = vpop.permute.xlu0 %3942
  %3944 = vrot.lane.b32.xlu0 %v3586, 96
  %v3945 = vpop.permute.xlu0 %3944
  %3946 = vrot.lane.b32.xlu0 %v3587, 96
  %v3947 = vpop.permute.xlu0 %3946
  %3948 = vrot.lane.b32.xlu0 %v3588, 96
  %v3949 = vpop.permute.xlu0 %3948
  %3950 = vrot.lane.b32.xlu0 %v3589, 96
  %v3951 = vpop.permute.xlu0 %3950
  %3952 = vrot.lane.b32.xlu0 %v3590, 96
  %v3953 = vpop.permute.xlu0 %3952
  %3954 = vrot.lane.b32.xlu0 %v3591, 96
  %v3955 = vpop.permute.xlu0 %3954
  %3956 = vrot.lane.b32.xlu0 %v3592, 96
  %v3957 = vpop.permute.xlu0 %3956
  %3958 = vrot.lane.b32.xlu0 %v3593, 96
  %v3959 = vpop.permute.xlu0 %3958
  %3960 = vrot.lane.b32.xlu0 %v3594, 96
  %v3961 = vpop.permute.xlu0 %3960
  %3962 = vrot.lane.b32.xlu0 %v3595, 96
  %v3963 = vpop.permute.xlu0 %3962
  %3964 = vrot.lane.b32.xlu0 %v3596, 96
  %v3965 = vpop.permute.xlu0 %3964
  %3966 = vrot.lane.b32.xlu0 %v3597, 96
  %v3967 = vpop.permute.xlu0 %3966
  %3968 = vrot.lane.b32.xlu0 %v3598, 96
  %v3969 = vpop.permute.xlu0 %3968
  %3970 = vrot.lane.b32.xlu0 %v3599, 96
  %v3971 = vpop.permute.xlu0 %3970
  %3972 = vrot.lane.b32.xlu0 %v3600, 96
  %v3973 = vpop.permute.xlu0 %3972
  %3974 = vrot.lane.b32.xlu0 %v3601, 96
  %v3975 = vpop.permute.xlu0 %3974
  %3976 = vrot.lane.b32.xlu0 %v3602, 96
  %v3977 = vpop.permute.xlu0 %3976
  %3978 = vrot.lane.b32.xlu0 %v3603, 96
  %v3979 = vpop.permute.xlu0 %3978
  %3980 = vrot.lane.b32.xlu0 %v3604, 96
  %v3981 = vpop.permute.xlu0 %3980
  %3982 = vrot.lane.b32.xlu0 %v3605, 96
  %v3983 = vpop.permute.xlu0 %3982
  %3984 = vrot.lane.b32.xlu0 %v3606, 96
  %v3985 = vpop.permute.xlu0 %3984
  %3986 = vrot.lane.b32.xlu0 %v3607, 96
  %v3987 = vpop.permute.xlu0 %3986
  %3988 = vrot.lane.b32.xlu0 %v3608, 96
  %v3989 = vpop.permute.xlu0 %3988
  %3990 = vrot.lane.b32.xlu0 %v3609, 96
  %v3991 = vpop.permute.xlu0 %3990
  %3992 = vrot.lane.b32.xlu0 %v3610, 96
  %v3993 = vpop.permute.xlu0 %3992
  %3994 = vrot.lane.b32.xlu0 %v3611, 96
  %v3995 = vpop.permute.xlu0 %3994
  %4124 = vrot.lane.b32.xlu0 %v3484, 64
  %v4125 = vpop.permute.xlu0 %4124
  %4126 = vrot.lane.b32.xlu0 %v3485, 64
  %v4127 = vpop.permute.xlu0 %4126
  %4128 = vrot.lane.b32.xlu0 %v3486, 64
  %v4129 = vpop.permute.xlu0 %4128
  %4130 = vrot.lane.b32.xlu0 %v3487, 64
  %v4131 = vpop.permute.xlu0 %4130
  %4132 = vrot.lane.b32.xlu0 %v3488, 64
  %v4133 = vpop.permute.xlu0 %4132
  %4134 = vrot.lane.b32.xlu0 %v3489, 64
  %v4135 = vpop.permute.xlu0 %4134
  %4136 = vrot.lane.b32.xlu0 %v3490, 64
  %v4137 = vpop.permute.xlu0 %4136
  %4138 = vrot.lane.b32.xlu0 %v3491, 64
  %v4139 = vpop.permute.xlu0 %4138
  %4140 = vrot.lane.b32.xlu0 %v3492, 64
  %v4141 = vpop.permute.xlu0 %4140
  %4142 = vrot.lane.b32.xlu0 %v3493, 64
  %v4143 = vpop.permute.xlu0 %4142
  %4144 = vrot.lane.b32.xlu0 %v3494, 64
  %v4145 = vpop.permute.xlu0 %4144
  %4146 = vrot.lane.b32.xlu0 %v3495, 64
  %v4147 = vpop.permute.xlu0 %4146
  %4148 = vrot.lane.b32.xlu0 %v3496, 64
  %v4149 = vpop.permute.xlu0 %4148
  %4150 = vrot.lane.b32.xlu0 %v3497, 64
  %v4151 = vpop.permute.xlu0 %4150
  %4152 = vrot.lane.b32.xlu0 %v3498, 64
  %v4153 = vpop.permute.xlu0 %4152
  %4154 = vrot.lane.b32.xlu0 %v3499, 64
  %v4155 = vpop.permute.xlu0 %4154
  %4156 = vrot.lane.b32.xlu0 %v3500, 64
  %v4157 = vpop.permute.xlu0 %4156
  %4158 = vrot.lane.b32.xlu0 %v3501, 64
  %v4159 = vpop.permute.xlu0 %4158
  %4160 = vrot.lane.b32.xlu0 %v3502, 64
  %v4161 = vpop.permute.xlu0 %4160
  %4162 = vrot.lane.b32.xlu0 %v3503, 64
  %v4163 = vpop.permute.xlu0 %4162
  %4164 = vrot.lane.b32.xlu0 %v3504, 64
  %v4165 = vpop.permute.xlu0 %4164
  %4166 = vrot.lane.b32.xlu0 %v3505, 64
  %v4167 = vpop.permute.xlu0 %4166
  %4168 = vrot.lane.b32.xlu0 %v3506, 64
  %v4169 = vpop.permute.xlu0 %4168
  %4170 = vrot.lane.b32.xlu0 %v3507, 64
  %v4171 = vpop.permute.xlu0 %4170
  %4172 = vrot.lane.b32.xlu0 %v3508, 64
  %v4173 = vpop.permute.xlu0 %4172
  %4174 = vrot.lane.b32.xlu0 %v3509, 64
  %v4175 = vpop.permute.xlu0 %4174
  %4176 = vrot.lane.b32.xlu0 %v3510, 64
  %v4177 = vpop.permute.xlu0 %4176
  %4178 = vrot.lane.b32.xlu0 %v3511, 64
  %v4179 = vpop.permute.xlu0 %4178
  %4180 = vrot.lane.b32.xlu0 %v3512, 64
  %v4181 = vpop.permute.xlu0 %4180
  %4182 = vrot.lane.b32.xlu0 %v3513, 64
  %v4183 = vpop.permute.xlu0 %4182
  %4184 = vrot.lane.b32.xlu0 %v3514, 64
  %v4185 = vpop.permute.xlu0 %4184
  %4186 = vrot.lane.b32.xlu0 %v3515, 64
  %v4187 = vpop.permute.xlu0 %4186
  %4188 = vrot.lane.b32.xlu0 %v3516, 64
  %v4189 = vpop.permute.xlu0 %4188
  %4190 = vrot.lane.b32.xlu0 %v3517, 64
  %v4191 = vpop.permute.xlu0 %4190
  %4192 = vrot.lane.b32.xlu0 %v3518, 64
  %v4193 = vpop.permute.xlu0 %4192
  %4194 = vrot.lane.b32.xlu0 %v3519, 64
  %v4195 = vpop.permute.xlu0 %4194
  %4196 = vrot.lane.b32.xlu0 %v3520, 64
  %v4197 = vpop.permute.xlu0 %4196
  %4198 = vrot.lane.b32.xlu0 %v3521, 64
  %v4199 = vpop.permute.xlu0 %4198
  %4200 = vrot.lane.b32.xlu0 %v3522, 64
  %v4201 = vpop.permute.xlu0 %4200
  %4202 = vrot.lane.b32.xlu0 %v3523, 64
  %v4203 = vpop.permute.xlu0 %4202
  %4204 = vrot.lane.b32.xlu0 %v3524, 64
  %v4205 = vpop.permute.xlu0 %4204
  %4206 = vrot.lane.b32.xlu0 %v3525, 64
  %v4207 = vpop.permute.xlu0 %4206
  %4208 = vrot.lane.b32.xlu0 %v3526, 64
  %v4209 = vpop.permute.xlu0 %4208
  %4210 = vrot.lane.b32.xlu0 %v3527, 64
  %v4211 = vpop.permute.xlu0 %4210
  %4212 = vrot.lane.b32.xlu0 %v3528, 64
  %v4213 = vpop.permute.xlu0 %4212
  %4214 = vrot.lane.b32.xlu0 %v3529, 64
  %v4215 = vpop.permute.xlu0 %4214
  %4216 = vrot.lane.b32.xlu0 %v3530, 64
  %v4217 = vpop.permute.xlu0 %4216
  %4218 = vrot.lane.b32.xlu0 %v3531, 64
  %v4219 = vpop.permute.xlu0 %4218
  %4220 = vrot.lane.b32.xlu0 %v3532, 64
  %v4221 = vpop.permute.xlu0 %4220
  %4222 = vrot.lane.b32.xlu0 %v3533, 64
  %v4223 = vpop.permute.xlu0 %4222
  %4224 = vrot.lane.b32.xlu0 %v3534, 64
  %v4225 = vpop.permute.xlu0 %4224
  %4226 = vrot.lane.b32.xlu0 %v3535, 64
  %v4227 = vpop.permute.xlu0 %4226
  %4228 = vrot.lane.b32.xlu0 %v3536, 64
  %v4229 = vpop.permute.xlu0 %4228
  %4230 = vrot.lane.b32.xlu0 %v3537, 64
  %v4231 = vpop.permute.xlu0 %4230
  %4232 = vrot.lane.b32.xlu0 %v3538, 64
  %v4233 = vpop.permute.xlu0 %4232
  %4234 = vrot.lane.b32.xlu0 %v3539, 64
  %v4235 = vpop.permute.xlu0 %4234
  %4236 = vrot.lane.b32.xlu0 %v3540, 64
  %v4237 = vpop.permute.xlu0 %4236
  %4238 = vrot.lane.b32.xlu0 %v3541, 64
  %v4239 = vpop.permute.xlu0 %4238
  %4240 = vrot.lane.b32.xlu0 %v3542, 64
  %v4241 = vpop.permute.xlu0 %4240
  %4242 = vrot.lane.b32.xlu0 %v3543, 64
  %v4243 = vpop.permute.xlu0 %4242
  %4244 = vrot.lane.b32.xlu0 %v3544, 64
  %v4245 = vpop.permute.xlu0 %4244
  %4246 = vrot.lane.b32.xlu0 %v3545, 64
  %v4247 = vpop.permute.xlu0 %4246
  %4248 = vrot.lane.b32.xlu0 %v3546, 64
  %v4249 = vpop.permute.xlu0 %4248
  %4250 = vrot.lane.b32.xlu0 %v3547, 64
  %v4251 = vpop.permute.xlu0 %4250
  %4252 = vrot.lane.b32.xlu0 %v3548, 64
  %v4253 = vpop.permute.xlu0 %4252
  %4254 = vrot.lane.b32.xlu0 %v3549, 64
  %v4255 = vpop.permute.xlu0 %4254
  %4256 = vrot.lane.b32.xlu0 %v3550, 64
  %v4257 = vpop.permute.xlu0 %4256
  %4258 = vrot.lane.b32.xlu0 %v3551, 64
  %v4259 = vpop.permute.xlu0 %4258
  %4260 = vrot.lane.b32.xlu0 %v3552, 64
  %v4261 = vpop.permute.xlu0 %4260
  %4262 = vrot.lane.b32.xlu0 %v3553, 64
  %v4263 = vpop.permute.xlu0 %4262
  %4264 = vrot.lane.b32.xlu0 %v3554, 64
  %v4265 = vpop.permute.xlu0 %4264
  %4266 = vrot.lane.b32.xlu0 %v3555, 64
  %v4267 = vpop.permute.xlu0 %4266
  %4268 = vrot.lane.b32.xlu0 %v3556, 64
  %v4269 = vpop.permute.xlu0 %4268
  %4270 = vrot.lane.b32.xlu0 %v3557, 64
  %v4271 = vpop.permute.xlu0 %4270
  %4272 = vrot.lane.b32.xlu0 %v3558, 64
  %v4273 = vpop.permute.xlu0 %4272
  %4274 = vrot.lane.b32.xlu0 %v3559, 64
  %v4275 = vpop.permute.xlu0 %4274
  %4276 = vrot.lane.b32.xlu0 %v3560, 64
  %v4277 = vpop.permute.xlu0 %4276
  %4278 = vrot.lane.b32.xlu0 %v3561, 64
  %v4279 = vpop.permute.xlu0 %4278
  %4280 = vrot.lane.b32.xlu0 %v3562, 64
  %v4281 = vpop.permute.xlu0 %4280
  %4282 = vrot.lane.b32.xlu0 %v3563, 64
  %v4283 = vpop.permute.xlu0 %4282
  %4284 = vrot.lane.b32.xlu0 %v3564, 64
  %v4285 = vpop.permute.xlu0 %4284
  %4286 = vrot.lane.b32.xlu0 %v3565, 64
  %v4287 = vpop.permute.xlu0 %4286
  %4288 = vrot.lane.b32.xlu0 %v3566, 64
  %v4289 = vpop.permute.xlu0 %4288
  %4290 = vrot.lane.b32.xlu0 %v3567, 64
  %v4291 = vpop.permute.xlu0 %4290
  %4292 = vrot.lane.b32.xlu0 %v3568, 64
  %v4293 = vpop.permute.xlu0 %4292
  %4294 = vrot.lane.b32.xlu0 %v3569, 64
  %v4295 = vpop.permute.xlu0 %4294
  %4296 = vrot.lane.b32.xlu0 %v3570, 64
  %v4297 = vpop.permute.xlu0 %4296
  %4298 = vrot.lane.b32.xlu0 %v3571, 64
  %v4299 = vpop.permute.xlu0 %4298
  %4300 = vrot.lane.b32.xlu0 %v3572, 64
  %v4301 = vpop.permute.xlu0 %4300
  %4302 = vrot.lane.b32.xlu0 %v3573, 64
  %v4303 = vpop.permute.xlu0 %4302
  %4304 = vrot.lane.b32.xlu0 %v3574, 64
  %v4305 = vpop.permute.xlu0 %4304
  %4306 = vrot.lane.b32.xlu0 %v3575, 64
  %v4307 = vpop.permute.xlu0 %4306
  %4308 = vrot.lane.b32.xlu0 %v3576, 64
  %v4309 = vpop.permute.xlu0 %4308
  %4310 = vrot.lane.b32.xlu0 %v3577, 64
  %v4311 = vpop.permute.xlu0 %4310
  %4312 = vrot.lane.b32.xlu0 %v3578, 64
  %v4313 = vpop.permute.xlu0 %4312
  %4314 = vrot.lane.b32.xlu0 %v3579, 64
  %v4315 = vpop.permute.xlu0 %4314
  %4316 = vrot.lane.b32.xlu0 %v3580, 64
  %v4317 = vpop.permute.xlu0 %4316
  %4318 = vrot.lane.b32.xlu0 %v3581, 64
  %v4319 = vpop.permute.xlu0 %4318
  %4320 = vrot.lane.b32.xlu0 %v3582, 64
  %v4321 = vpop.permute.xlu0 %4320
  %4322 = vrot.lane.b32.xlu0 %v3583, 64
  %v4323 = vpop.permute.xlu0 %4322
  %4324 = vrot.lane.b32.xlu0 %v3584, 64
  %v4325 = vpop.permute.xlu0 %4324
  %4326 = vrot.lane.b32.xlu0 %v3585, 64
  %v4327 = vpop.permute.xlu0 %4326
  %4328 = vrot.lane.b32.xlu0 %v3586, 64
  %v4329 = vpop.permute.xlu0 %4328
  %4330 = vrot.lane.b32.xlu0 %v3587, 64
  %v4331 = vpop.permute.xlu0 %4330
  %4332 = vrot.lane.b32.xlu0 %v3588, 64
  %v4333 = vpop.permute.xlu0 %4332
  %4334 = vrot.lane.b32.xlu0 %v3589, 64
  %v4335 = vpop.permute.xlu0 %4334
  %4336 = vrot.lane.b32.xlu0 %v3590, 64
  %v4337 = vpop.permute.xlu0 %4336
  %4338 = vrot.lane.b32.xlu0 %v3591, 64
  %v4339 = vpop.permute.xlu0 %4338
  %4340 = vrot.lane.b32.xlu0 %v3592, 64
  %v4341 = vpop.permute.xlu0 %4340
  %4342 = vrot.lane.b32.xlu0 %v3593, 64
  %v4343 = vpop.permute.xlu0 %4342
  %4344 = vrot.lane.b32.xlu0 %v3594, 64
  %v4345 = vpop.permute.xlu0 %4344
  %4346 = vrot.lane.b32.xlu0 %v3595, 64
  %v4347 = vpop.permute.xlu0 %4346
  %4348 = vrot.lane.b32.xlu0 %v3596, 64
  %v4349 = vpop.permute.xlu0 %4348
  %4350 = vrot.lane.b32.xlu0 %v3597, 64
  %v4351 = vpop.permute.xlu0 %4350
  %4352 = vrot.lane.b32.xlu0 %v3598, 64
  %v4353 = vpop.permute.xlu0 %4352
  %4354 = vrot.lane.b32.xlu0 %v3599, 64
  %v4355 = vpop.permute.xlu0 %4354
  %4356 = vrot.lane.b32.xlu0 %v3600, 64
  %v4357 = vpop.permute.xlu0 %4356
  %4358 = vrot.lane.b32.xlu0 %v3601, 64
  %v4359 = vpop.permute.xlu0 %4358
  %4360 = vrot.lane.b32.xlu0 %v3602, 64
  %v4361 = vpop.permute.xlu0 %4360
  %4362 = vrot.lane.b32.xlu0 %v3603, 64
  %v4363 = vpop.permute.xlu0 %4362
  %4364 = vrot.lane.b32.xlu0 %v3604, 64
  %v4365 = vpop.permute.xlu0 %4364
  %4366 = vrot.lane.b32.xlu0 %v3605, 64
  %v4367 = vpop.permute.xlu0 %4366
  %4368 = vrot.lane.b32.xlu0 %v3606, 64
  %v4369 = vpop.permute.xlu0 %4368
  %4370 = vrot.lane.b32.xlu0 %v3607, 64
  %v4371 = vpop.permute.xlu0 %4370
  %4372 = vrot.lane.b32.xlu0 %v3608, 64
  %v4373 = vpop.permute.xlu0 %4372
  %4374 = vrot.lane.b32.xlu0 %v3609, 64
  %v4375 = vpop.permute.xlu0 %4374
  %4376 = vrot.lane.b32.xlu0 %v3610, 64
  %v4377 = vpop.permute.xlu0 %4376
  %4378 = vrot.lane.b32.xlu0 %v3611, 64
  %v4379 = vpop.permute.xlu0 %4378
  %v4380 = vsel %vm1729, %v3484, %v3741
  %v4381 = vsel %vm1729, %v3485, %v3743
  %v4382 = vsel %vm1729, %v3486, %v3745
  %v4383 = vsel %vm1729, %v3487, %v3747
  %v4384 = vsel %vm1729, %v3488, %v3749
  %v4385 = vsel %vm1729, %v3489, %v3751
  %v4386 = vsel %vm1729, %v3490, %v3753
  %v4387 = vsel %vm1729, %v3491, %v3755
  %v4388 = vsel %vm1729, %v3492, %v3757
  %v4389 = vsel %vm1729, %v3493, %v3759
  %v4390 = vsel %vm1729, %v3494, %v3761
  %v4391 = vsel %vm1729, %v3495, %v3763
  %v4392 = vsel %vm1729, %v3496, %v3765
  %v4393 = vsel %vm1729, %v3497, %v3767
  %v4394 = vsel %vm1729, %v3498, %v3769
  %v4395 = vsel %vm1729, %v3499, %v3771
  %v4396 = vsel %vm1729, %v3500, %v3773
  %v4397 = vsel %vm1729, %v3501, %v3775
  %v4398 = vsel %vm1729, %v3502, %v3777
  %v4399 = vsel %vm1729, %v3503, %v3779
  %v4400 = vsel %vm1729, %v3504, %v3781
  %v4401 = vsel %vm1729, %v3505, %v3783
  %v4402 = vsel %vm1729, %v3506, %v3785
  %v4403 = vsel %vm1729, %v3507, %v3787
  %v4404 = vsel %vm1729, %v3508, %v3789
  %v4405 = vsel %vm1729, %v3509, %v3791
  %v4406 = vsel %vm1729, %v3510, %v3793
  %v4407 = vsel %vm1729, %v3511, %v3795
  %v4408 = vsel %vm1729, %v3512, %v3797
  %v4409 = vsel %vm1729, %v3513, %v3799
  %v4410 = vsel %vm1729, %v3514, %v3801
  %v4411 = vsel %vm1729, %v3515, %v3803
  %v4412 = vsel %vm1729, %v3516, %v3805
  %v4413 = vsel %vm1729, %v3517, %v3807
  %v4414 = vsel %vm1729, %v3518, %v3809
  %v4415 = vsel %vm1729, %v3519, %v3811
  %v4416 = vsel %vm1729, %v3520, %v3813
  %v4417 = vsel %vm1729, %v3521, %v3815
  %v4418 = vsel %vm1729, %v3522, %v3817
  %v4419 = vsel %vm1729, %v3523, %v3819
  %v4420 = vsel %vm1729, %v3524, %v3821
  %v4421 = vsel %vm1729, %v3525, %v3823
  %v4422 = vsel %vm1729, %v3526, %v3825
  %v4423 = vsel %vm1729, %v3527, %v3827
  %v4424 = vsel %vm1729, %v3528, %v3829
  %v4425 = vsel %vm1729, %v3529, %v3831
  %v4426 = vsel %vm1729, %v3530, %v3833
  %v4427 = vsel %vm1729, %v3531, %v3835
  %v4428 = vsel %vm1729, %v3532, %v3837
  %v4429 = vsel %vm1729, %v3533, %v3839
  %v4430 = vsel %vm1729, %v3534, %v3841
  %v4431 = vsel %vm1729, %v3535, %v3843
  %v4432 = vsel %vm1729, %v3536, %v3845
  %v4433 = vsel %vm1729, %v3537, %v3847
  %v4434 = vsel %vm1729, %v3538, %v3849
  %v4435 = vsel %vm1729, %v3539, %v3851
  %v4436 = vsel %vm1729, %v3540, %v3853
  %v4437 = vsel %vm1729, %v3541, %v3855
  %v4438 = vsel %vm1729, %v3542, %v3857
  %v4439 = vsel %vm1729, %v3543, %v3859
  %v4440 = vsel %vm1729, %v3544, %v3861
  %v4441 = vsel %vm1729, %v3545, %v3863
  %v4442 = vsel %vm1729, %v3546, %v3865
  %v4443 = vsel %vm1729, %v3547, %v3867
  %v4444 = vsel %vm1729, %v3548, %v3869
  %v4445 = vsel %vm1729, %v3549, %v3871
  %v4446 = vsel %vm1729, %v3550, %v3873
  %v4447 = vsel %vm1729, %v3551, %v3875
  %v4448 = vsel %vm1729, %v3552, %v3877
  %v4449 = vsel %vm1729, %v3553, %v3879
  %v4450 = vsel %vm1729, %v3554, %v3881
  %v4451 = vsel %vm1729, %v3555, %v3883
  %v4452 = vsel %vm1729, %v3556, %v3885
  %v4453 = vsel %vm1729, %v3557, %v3887
  %v4454 = vsel %vm1729, %v3558, %v3889
  %v4455 = vsel %vm1729, %v3559, %v3891
  %v4456 = vsel %vm1729, %v3560, %v3893
  %v4457 = vsel %vm1729, %v3561, %v3895
  %v4458 = vsel %vm1729, %v3562, %v3897
  %v4459 = vsel %vm1729, %v3563, %v3899
  %v4460 = vsel %vm1729, %v3564, %v3901
  %v4461 = vsel %vm1729, %v3565, %v3903
  %v4462 = vsel %vm1729, %v3566, %v3905
  %v4463 = vsel %vm1729, %v3567, %v3907
  %v4464 = vsel %vm1729, %v3568, %v3909
  %v4465 = vsel %vm1729, %v3569, %v3911
  %v4466 = vsel %vm1729, %v3570, %v3913
  %v4467 = vsel %vm1729, %v3571, %v3915
  %v4468 = vsel %vm1729, %v3572, %v3917
  %v4469 = vsel %vm1729, %v3573, %v3919
  %v4470 = vsel %vm1729, %v3574, %v3921
  %v4471 = vsel %vm1729, %v3575, %v3923
  %v4472 = vsel %vm1729, %v3576, %v3925
  %v4473 = vsel %vm1729, %v3577, %v3927
  %v4474 = vsel %vm1729, %v3578, %v3929
  %v4475 = vsel %vm1729, %v3579, %v3931
  %v4476 = vsel %vm1729, %v3580, %v3933
  %v4477 = vsel %vm1729, %v3581, %v3935
  %v4478 = vsel %vm1729, %v3582, %v3937
  %v4479 = vsel %vm1729, %v3583, %v3939
  %v4480 = vsel %vm1729, %v3584, %v3941
  %v4481 = vsel %vm1729, %v3585, %v3943
  %v4482 = vsel %vm1729, %v3586, %v3945
  %v4483 = vsel %vm1729, %v3587, %v3947
  %v4484 = vsel %vm1729, %v3588, %v3949
  %v4485 = vsel %vm1729, %v3589, %v3951
  %v4486 = vsel %vm1729, %v3590, %v3953
  %v4487 = vsel %vm1729, %v3591, %v3955
  %v4488 = vsel %vm1729, %v3592, %v3957
  %v4489 = vsel %vm1729, %v3593, %v3959
  %v4490 = vsel %vm1729, %v3594, %v3961
  %v4491 = vsel %vm1729, %v3595, %v3963
  %v4492 = vsel %vm1729, %v3596, %v3965
  %v4493 = vsel %vm1729, %v3597, %v3967
  %v4494 = vsel %vm1729, %v3598, %v3969
  %v4495 = vsel %vm1729, %v3599, %v3971
  %v4496 = vsel %vm1729, %v3600, %v3973
  %v4497 = vsel %vm1729, %v3601, %v3975
  %v4498 = vsel %vm1729, %v3602, %v3977
  %v4499 = vsel %vm1729, %v3603, %v3979
  %v4500 = vsel %vm1729, %v3604, %v3981
  %v4501 = vsel %vm1729, %v3605, %v3983
  %v4502 = vsel %vm1729, %v3606, %v3985
  %v4503 = vsel %vm1729, %v3607, %v3987
  %v4504 = vsel %vm1729, %v3608, %v3989
  %v4505 = vsel %vm1729, %v3609, %v3991
  %v4506 = vsel %vm1729, %v3610, %v3993
  %v4507 = vsel %vm1729, %v3611, %v3995
  %v4510 = vsel %vm630, %v4380, %v4125
  %v4513 = vsel %vm630, %v4381, %v4127
  %v4516 = vsel %vm630, %v4382, %v4129
  %v4519 = vsel %vm630, %v4383, %v4131
  %v4522 = vsel %vm630, %v4384, %v4133
  %v4525 = vsel %vm630, %v4385, %v4135
  %v4528 = vsel %vm630, %v4386, %v4137
  %v4531 = vsel %vm630, %v4387, %v4139
  %v4534 = vsel %vm630, %v4388, %v4141
  %v4537 = vsel %vm630, %v4389, %v4143
  %v4540 = vsel %vm630, %v4390, %v4145
  %v4543 = vsel %vm630, %v4391, %v4147
  %v4546 = vsel %vm630, %v4392, %v4149
  %v4549 = vsel %vm630, %v4393, %v4151
  %v4552 = vsel %vm630, %v4394, %v4153
  %v4555 = vsel %vm630, %v4395, %v4155
  %v4558 = vsel %vm630, %v4396, %v4157
  %v4561 = vsel %vm630, %v4397, %v4159
  %v4564 = vsel %vm630, %v4398, %v4161
  %v4567 = vsel %vm630, %v4399, %v4163
  %v4570 = vsel %vm630, %v4400, %v4165
  %v4573 = vsel %vm630, %v4401, %v4167
  %v4576 = vsel %vm630, %v4402, %v4169
  %v4579 = vsel %vm630, %v4403, %v4171
  %v4582 = vsel %vm630, %v4404, %v4173
  %v4585 = vsel %vm630, %v4405, %v4175
  %v4588 = vsel %vm630, %v4406, %v4177
  %v4591 = vsel %vm630, %v4407, %v4179
  %v4594 = vsel %vm630, %v4408, %v4181
  %v4597 = vsel %vm630, %v4409, %v4183
  %v4600 = vsel %vm630, %v4410, %v4185
  %v4603 = vsel %vm630, %v4411, %v4187
  %v4606 = vsel %vm630, %v4412, %v4189
  %v4609 = vsel %vm630, %v4413, %v4191
  %v4612 = vsel %vm630, %v4414, %v4193
  %v4615 = vsel %vm630, %v4415, %v4195
  %v4618 = vsel %vm630, %v4416, %v4197
  %v4621 = vsel %vm630, %v4417, %v4199
  %v4624 = vsel %vm630, %v4418, %v4201
  %v4627 = vsel %vm630, %v4419, %v4203
  %v4630 = vsel %vm630, %v4420, %v4205
  %v4633 = vsel %vm630, %v4421, %v4207
  %v4636 = vsel %vm630, %v4422, %v4209
  %v4639 = vsel %vm630, %v4423, %v4211
  %v4642 = vsel %vm630, %v4424, %v4213
  %v4645 = vsel %vm630, %v4425, %v4215
  %v4648 = vsel %vm630, %v4426, %v4217
  %v4651 = vsel %vm630, %v4427, %v4219
  %v4654 = vsel %vm630, %v4428, %v4221
  %v4657 = vsel %vm630, %v4429, %v4223
  %v4660 = vsel %vm630, %v4430, %v4225
  %v4663 = vsel %vm630, %v4431, %v4227
  %v4666 = vsel %vm630, %v4432, %v4229
  %v4669 = vsel %vm630, %v4433, %v4231
  %v4672 = vsel %vm630, %v4434, %v4233
  %v4675 = vsel %vm630, %v4435, %v4235
  %v4678 = vsel %vm630, %v4436, %v4237
  %v4681 = vsel %vm630, %v4437, %v4239
  %v4684 = vsel %vm630, %v4438, %v4241
  %v4687 = vsel %vm630, %v4439, %v4243
  %v4690 = vsel %vm630, %v4440, %v4245
  %v4693 = vsel %vm630, %v4441, %v4247
  %v4696 = vsel %vm630, %v4442, %v4249
  %v4699 = vsel %vm630, %v4443, %v4251
  %v4702 = vsel %vm630, %v4444, %v4253
  %v4705 = vsel %vm630, %v4445, %v4255
  %v4708 = vsel %vm630, %v4446, %v4257
  %v4711 = vsel %vm630, %v4447, %v4259
  %v4714 = vsel %vm630, %v4448, %v4261
  %v4717 = vsel %vm630, %v4449, %v4263
  %v4720 = vsel %vm630, %v4450, %v4265
  %v4723 = vsel %vm630, %v4451, %v4267
  %v4726 = vsel %vm630, %v4452, %v4269
  %v4729 = vsel %vm630, %v4453, %v4271
  %v4732 = vsel %vm630, %v4454, %v4273
  %v4735 = vsel %vm630, %v4455, %v4275
  %v4738 = vsel %vm630, %v4456, %v4277
  %v4741 = vsel %vm630, %v4457, %v4279
  %v4744 = vsel %vm630, %v4458, %v4281
  %v4747 = vsel %vm630, %v4459, %v4283
  %v4750 = vsel %vm630, %v4460, %v4285
  %v4753 = vsel %vm630, %v4461, %v4287
  %v4756 = vsel %vm630, %v4462, %v4289
  %v4759 = vsel %vm630, %v4463, %v4291
  %v4762 = vsel %vm630, %v4464, %v4293
  %v4765 = vsel %vm630, %v4465, %v4295
  %v4768 = vsel %vm630, %v4466, %v4297
  %v4771 = vsel %vm630, %v4467, %v4299
  %v4774 = vsel %vm630, %v4468, %v4301
  %v4777 = vsel %vm630, %v4469, %v4303
  %v4780 = vsel %vm630, %v4470, %v4305
  %v4783 = vsel %vm630, %v4471, %v4307
  %v4786 = vsel %vm630, %v4472, %v4309
  %v4789 = vsel %vm630, %v4473, %v4311
  %v4792 = vsel %vm630, %v4474, %v4313
  %v4795 = vsel %vm630, %v4475, %v4315
  %v4798 = vsel %vm630, %v4476, %v4317
  %v4801 = vsel %vm630, %v4477, %v4319
  %v4804 = vsel %vm630, %v4478, %v4321
  %v4807 = vsel %vm630, %v4479, %v4323
  %v4810 = vsel %vm630, %v4480, %v4325
  %v4813 = vsel %vm630, %v4481, %v4327
  %v4816 = vsel %vm630, %v4482, %v4329
  %v4819 = vsel %vm630, %v4483, %v4331
  %v4822 = vsel %vm630, %v4484, %v4333
  %v4825 = vsel %vm630, %v4485, %v4335
  %v4828 = vsel %vm630, %v4486, %v4337
  %v4831 = vsel %vm630, %v4487, %v4339
  %v4834 = vsel %vm630, %v4488, %v4341
  %v4837 = vsel %vm630, %v4489, %v4343
  %v4840 = vsel %vm630, %v4490, %v4345
  %v4843 = vsel %vm630, %v4491, %v4347
  %v4846 = vsel %vm630, %v4492, %v4349
  %v4849 = vsel %vm630, %v4493, %v4351
  %v4852 = vsel %vm630, %v4494, %v4353
  %v4855 = vsel %vm630, %v4495, %v4355
  %v4858 = vsel %vm630, %v4496, %v4357
  %v4861 = vsel %vm630, %v4497, %v4359
  %v4864 = vsel %vm630, %v4498, %v4361
  %v4867 = vsel %vm630, %v4499, %v4363
  %v4870 = vsel %vm630, %v4500, %v4365
  %v4873 = vsel %vm630, %v4501, %v4367
  %v4876 = vsel %vm630, %v4502, %v4369
  %v4879 = vsel %vm630, %v4503, %v4371
  %v4882 = vsel %vm630, %v4504, %v4373
  %v4885 = vsel %vm630, %v4505, %v4375
  %v4888 = vsel %vm630, %v4506, %v4377
  %v4891 = vsel %vm630, %v4507, %v4379
  %v4917 = vrot.slane 0, 1
  %v4918 = vrot.slane %v4510, 1
  %v4919 = vrot.slane %v4513, 1
  %v4920 = vrot.slane %v4516, 1
  %v4921 = vrot.slane %v4519, 1
  %v4922 = vrot.slane %v4522, 1
  %v4923 = vrot.slane %v4525, 1
  %v4924 = vrot.slane %v4528, 1
  %v4925 = vrot.slane %v4531, 1
  %v4926 = vrot.slane %v4534, 1
  %v4927 = vrot.slane %v4537, 1
  %v4928 = vrot.slane %v4540, 1
  %v4929 = vrot.slane %v4543, 1
  %v4930 = vrot.slane %v4546, 1
  %v4931 = vrot.slane %v4549, 1
  %v4932 = vrot.slane %v4552, 1
  %v4933 = vrot.slane %v4555, 1
  %v4934 = vrot.slane %v4558, 1
  %v4935 = vrot.slane %v4561, 1
  %v4936 = vrot.slane %v4564, 1
  %v4937 = vrot.slane %v4567, 1
  %v4938 = vrot.slane %v4570, 1
  %v4939 = vrot.slane %v4573, 1
  %v4940 = vrot.slane %v4576, 1
  %v4941 = vrot.slane %v4579, 1
  %v4942 = vunpack.i.l.s16 0
  %v4943 = vunpack.i.h.s16 0
  %v4944 = vunpack.i.l.s16 %v4917
  %v4945 = vunpack.i.l.s16 %v4510
  %v4946 = vunpack.i.h.s16 %v4510
  %v4947 = vunpack.i.l.s16 %v4918
  %v4948 = vunpack.i.l.s16 %v4513
  %v4949 = vunpack.i.h.s16 %v4513
  %v4950 = vunpack.i.l.s16 %v4919
  %v4951 = vunpack.i.l.s16 %v4516
  %v4952 = vunpack.i.h.s16 %v4516
  %v4953 = vunpack.i.l.s16 %v4920
  %v4954 = vunpack.i.l.s16 %v4519
  %v4955 = vunpack.i.h.s16 %v4519
  %v4956 = vunpack.i.l.s16 %v4921
  %v4957 = vunpack.i.l.s16 %v4522
  %v4958 = vunpack.i.h.s16 %v4522
  %v4959 = vunpack.i.l.s16 %v4922
  %v4960 = vunpack.i.l.s16 %v4525
  %v4961 = vunpack.i.h.s16 %v4525
  %v4962 = vunpack.i.l.s16 %v4923
  %v4963 = vunpack.i.l.s16 %v4528
  %v4964 = vunpack.i.h.s16 %v4528
  %v4965 = vunpack.i.l.s16 %v4924
  %v4966 = vunpack.i.l.s16 %v4531
  %v4967 = vunpack.i.h.s16 %v4531
  %v4968 = vunpack.i.l.s16 %v4925
  %v4969 = vunpack.i.l.s16 %v4534
  %v4970 = vunpack.i.h.s16 %v4534
  %v4971 = vunpack.i.l.s16 %v4926
  %v4972 = vunpack.i.l.s16 %v4537
  %v4973 = vunpack.i.h.s16 %v4537
  %v4974 = vunpack.i.l.s16 %v4927
  %v4975 = vunpack.i.l.s16 %v4540
  %v4976 = vunpack.i.h.s16 %v4540
  %v4977 = vunpack.i.l.s16 %v4928
  %v4978 = vunpack.i.l.s16 %v4543
  %v4979 = vunpack.i.h.s16 %v4543
  %v4980 = vunpack.i.l.s16 %v4929
  %v4981 = vunpack.i.l.s16 %v4546
  %v4982 = vunpack.i.h.s16 %v4546
  %v4983 = vunpack.i.l.s16 %v4930
  %v4984 = vunpack.i.l.s16 %v4549
  %v4985 = vunpack.i.h.s16 %v4549
  %v4986 = vunpack.i.l.s16 %v4931
  %v4987 = vunpack.i.l.s16 %v4552
  %v4988 = vunpack.i.h.s16 %v4552
  %v4989 = vunpack.i.l.s16 %v4932
  %v4990 = vunpack.i.l.s16 %v4555
  %v4991 = vunpack.i.h.s16 %v4555
  %v4992 = vunpack.i.l.s16 %v4933
  %v4993 = vunpack.i.l.s16 %v4558
  %v4994 = vunpack.i.h.s16 %v4558
  %v4995 = vunpack.i.l.s16 %v4934
  %v4996 = vunpack.i.l.s16 %v4561
  %v4997 = vunpack.i.h.s16 %v4561
  %v4998 = vunpack.i.l.s16 %v4935
  %v4999 = vunpack.i.l.s16 %v4564
  %v5000 = vunpack.i.h.s16 %v4564
  %v5001 = vunpack.i.l.s16 %v4936
  %v5002 = vunpack.i.l.s16 %v4567
  %v5003 = vunpack.i.h.s16 %v4567
  %v5004 = vunpack.i.l.s16 %v4937
  %v5005 = vunpack.i.l.s16 %v4570
  %v5006 = vunpack.i.h.s16 %v4570
  %v5007 = vunpack.i.l.s16 %v4938
  %v5008 = vunpack.i.l.s16 %v4573
  %v5009 = vunpack.i.h.s16 %v4573
  %v5010 = vunpack.i.l.s16 %v4939
  %v5011 = vunpack.i.l.s16 %v4576
  %v5012 = vunpack.i.h.s16 %v4576
  %v5013 = vunpack.i.l.s16 %v4940
  %v5014 = vunpack.i.l.s16 %v4579
  %v5015 = vunpack.i.h.s16 %v4579
  %v5016 = vunpack.i.l.s16 %v4941
  %v5019 = vunpack.c.l.b16 %v2864
  %v5020 = vunpack.c.l.b16 %v2865
  %v5021 = vpack.c.b16 %v5020, %v5019
  %v5022 = vpack.i.b16 %v4943, %v4942
  %v5023 = vpack.i.b16 %v4942, %v4944
  %v5024 = vpack.i.b16 %v4944, %v4943
  %v5025 = vpack.i.b16 %v4946, %v4945
  %v5026 = vpack.i.b16 %v4948, %v4947
  %v5027 = vpack.i.b16 %v4950, %v4949
  %v5028 = vpack.i.b16 %v4952, %v4951
  %v5029 = vpack.i.b16 %v4954, %v4953
  %v5030 = vpack.i.b16 %v4956, %v4955
  %v5031 = vpack.i.b16 %v4958, %v4957
  %v5032 = vpack.i.b16 %v4960, %v4959
  %v5033 = vpack.i.b16 %v4962, %v4961
  %v5034 = vpack.i.b16 %v4964, %v4963
  %v5035 = vpack.i.b16 %v4966, %v4965
  %v5036 = vpack.i.b16 %v4968, %v4967
  %v5037 = vpack.i.b16 %v4970, %v4969
  %v5038 = vpack.i.b16 %v4972, %v4971
  %v5039 = vpack.i.b16 %v4974, %v4973
  %v5040 = vpack.i.b16 %v4976, %v4975
  %v5041 = vpack.i.b16 %v4978, %v4977
  %v5042 = vpack.i.b16 %v4980, %v4979
  %v5043 = vpack.i.b16 %v4982, %v4981
  %v5044 = vpack.i.b16 %v4984, %v4983
  %v5045 = vpack.i.b16 %v4986, %v4985
  %v5046 = vpack.i.b16 %v4988, %v4987
  %v5047 = vpack.i.b16 %v4990, %v4989
  %v5048 = vpack.i.b16 %v4992, %v4991
  %v5049 = vpack.i.b16 %v4994, %v4993
  %v5050 = vpack.i.b16 %v4996, %v4995
  %v5051 = vpack.i.b16 %v4998, %v4997
  %v5052 = vpack.i.b16 %v5000, %v4999
  %v5053 = vpack.i.b16 %v5002, %v5001
  %v5054 = vpack.i.b16 %v5004, %v5003
  %v5055 = vpack.i.b16 %v5006, %v5005
  %v5056 = vpack.i.b16 %v5008, %v5007
  %v5057 = vpack.i.b16 %v5010, %v5009
  %v5058 = vpack.i.b16 %v5012, %v5011
  %v5059 = vpack.i.b16 %v5014, %v5013
  %v5060 = vpack.i.b16 %v5016, %v5015
  %5062 = vst [vmem:[#allocation1] ss:$9 sm:$0xff] %v5022
  %s5064 = scalar_lea.vmem [#allocation1], 1
  %5065 = vst [vmem:[%s5064] ss:$9 sm:$0xff] %v5023
  %s5067 = scalar_lea.vmem [#allocation1], 2
  %5068 = vst [vmem:[%s5067] ss:$9 sm:$0xff] %v5024
  %s5069 = scalar_lea.vmem [#allocation1], 3
  %5070 = vst [vmem:[%s5069] ss:$9 sm:$0xff] %v5022
  %s5071 = scalar_lea.vmem [#allocation1], 4
  %5072 = vst [vmem:[%s5071] ss:$9 sm:$0xff] %v5023
  %s5073 = scalar_lea.vmem [#allocation1], 5
  %5074 = vst [vmem:[%s5073] ss:$9 sm:$0xff] %v5024
  %s5075 = scalar_lea.vmem [#allocation1], 6
  %5076 = vst [vmem:[%s5075] ss:$9 sm:$0xff] %v5022
  %s5077 = scalar_lea.vmem [#allocation1], 7
  %5078 = vst [vmem:[%s5077] ss:$9 sm:$0xff] %v5023
  %v5079 = vld [vmem:[#allocation1] sm:$0xff]
  %5080 = vst [vmem:[#allocation1] ss:$9 sm:$0xff] %v5024
  %5081 = vst [vmem:[%s5064] ss:$9 sm:$0xff] %v5022
  %5082 = vst [vmem:[%s5067] ss:$9 sm:$0xff] %v5023
  %5083 = vst [vmem:[%s5069] ss:$9 sm:$0xff] %v5024
  %5085 = vst [vmem:[%s5071] ss:$9 sm:$0xff] %v5025
  %5087 = vst [vmem:[%s5073] ss:$9 sm:$0xff] %v5026
  %5089 = vst [vmem:[%s5075] ss:$9 sm:$0xff] %v5027
  %5091 = vst [vmem:[%s5077] ss:$9 sm:$0xff] %v5028
  %v5092 = vld [vmem:[#allocation1] sm:$0xff]
  %5094 = vst [vmem:[#allocation1] ss:$9 sm:$0xff] %v5029
  %5096 = vst [vmem:[%s5064] ss:$9 sm:$0xff] %v5030
  %5098 = vst [vmem:[%s5067] ss:$9 sm:$0xff] %v5031
  %5100 = vst [vmem:[%s5069] ss:$9 sm:$0xff] %v5032
  %5102 = vst [vmem:[%s5071] ss:$9 sm:$0xff] %v5033
  %5104 = vst [vmem:[%s5073] ss:$9 sm:$0xff] %v5034
  %5106 = vst [vmem:[%s5075] ss:$9 sm:$0xff] %v5035
  %5108 = vst [vmem:[%s5077] ss:$9 sm:$0xff] %v5036
  %v5109 = vld [vmem:[#allocation1] sm:$0xff]
  %5111 = vst [vmem:[#allocation1] ss:$9 sm:$0xff] %v5037
  %5113 = vst [vmem:[%s5064] ss:$9 sm:$0xff] %v5038
  %5115 = vst [vmem:[%s5067] ss:$9 sm:$0xff] %v5039
  %5117 = vst [vmem:[%s5069] ss:$9 sm:$0xff] %v5040
  %5119 = vst [vmem:[%s5071] ss:$9 sm:$0xff] %v5041
  %5121 = vst [vmem:[%s5073] ss:$9 sm:$0xff] %v5042
  %5123 = vst [vmem:[%s5075] ss:$9 sm:$0xff] %v5043
  %5125 = vst [vmem:[%s5077] ss:$9 sm:$0xff] %v5044
  %v5126 = vld [vmem:[#allocation1] sm:$0xff]
  %5128 = vst [vmem:[#allocation1] ss:$9 sm:$0xff] %v5045
  %5130 = vst [vmem:[%s5064] ss:$9 sm:$0xff] %v5046
  %5132 = vst [vmem:[%s5067] ss:$9 sm:$0xff] %v5047
  %5134 = vst [vmem:[%s5069] ss:$9 sm:$0xff] %v5048
  %5136 = vst [vmem:[%s5071] ss:$9 sm:$0xff] %v5049
  %5138 = vst [vmem:[%s5073] ss:$9 sm:$0xff] %v5050
  %5140 = vst [vmem:[%s5075] ss:$9 sm:$0xff] %v5051
  %5142 = vst [vmem:[%s5077] ss:$9 sm:$0xff] %v5052
  %v5143 = vld [vmem:[#allocation1] sm:$0xff]
  %5145 = vst [vmem:[#allocation1] ss:$9 sm:$0xff] %v5053
  %5147 = vst [vmem:[%s5064] ss:$9 sm:$0xff] %v5054
  %5149 = vst [vmem:[%s5067] ss:$9 sm:$0xff] %v5055
  %5151 = vst [vmem:[%s5069] ss:$9 sm:$0xff] %v5056
  %5153 = vst [vmem:[%s5071] ss:$9 sm:$0xff] %v5057
  %5155 = vst [vmem:[%s5073] ss:$9 sm:$0xff] %v5058
  %5157 = vst [vmem:[%s5075] ss:$9 sm:$0xff] %v5059
  %5159 = vst [vmem:[%s5077] ss:$9 sm:$0xff] %v5060
  %v5160 = vld [vmem:[#allocation1] sm:$0xff]
  %vm5167 = vcmask 785408
  %v5169 = vsel %vm5167, %v5021, 0
  %5171 = vmatpush.bf16.msra.mxu0 0
  %5172 = vmatpush.bf16.msra.mxu0 0
  %5173 = vmatpush.bf16.msra.mxu0 %v5160
  %5174 = vmatpush.bf16.msra.mxu0 %v5143
  %5175 = vmatpush.bf16.msra.mxu0 %v5126
  %5176 = vmatpush.bf16.msra.mxu0 %v5109
  %5177 = vmatpush.bf16.msra.mxu0 %v5092
  %5178 = vmatpush.bf16.msra.mxu0 %v5079
  %5179 = vmatmul.bf16.gmra.mxu0 %v5169
  %v5180 = vpop.f32.mrf.mxu0
  %v5181 = vadd.f32 0.0, %v5180
  %v5182 = vpop.f32.mrf.mxu0
  %v5183 = vadd.f32 0.0, %v5182
  %5184 = vdwg.mxu0
  %5187 = vrot.lane.b32.xlu0 %v5181, 112
  %v5188 = vpop.permute.xlu0 %5187
  %5189 = vrot.lane.b32.xlu0 %v5183, 112
  %v5190 = vpop.permute.xlu0 %5189
  %v5193 = vmax.f32 %v5181, %v5188
  %v5194 = vmax.f32 %v5183, %v5190
  %v5211 = vrot.slane %v4582, 1
  %v5212 = vrot.slane %v4585, 1
  %v5213 = vrot.slane %v4588, 1
  %v5214 = vrot.slane %v4591, 1
  %v5215 = vrot.slane %v4594, 1
  %v5216 = vrot.slane %v4597, 1
  %v5217 = vrot.slane %v4600, 1
  %v5218 = vrot.slane %v4603, 1
  %v5219 = vrot.slane %v4606, 1
  %v5220 = vrot.slane %v4609, 1
  %v5221 = vrot.slane %v4612, 1
  %v5222 = vrot.slane %v4615, 1
  %v5223 = vrot.slane %v4618, 1
  %v5224 = vrot.slane %v4621, 1
  %v5225 = vrot.slane %v4624, 1
  %v5226 = vrot.slane %v4627, 1
  %v5227 = vunpack.i.l.s16 %v4582
  %v5228 = vunpack.i.h.s16 %v4582
  %v5229 = vunpack.i.l.s16 %v5211
  %v5230 = vunpack.i.l.s16 %v4585
  %v5231 = vunpack.i.h.s16 %v4585
  %v5232 = vunpack.i.l.s16 %v5212
  %v5233 = vunpack.i.l.s16 %v4588
  %v5234 = vunpack.i.h.s16 %v4588
  %v5235 = vunpack.i.l.s16 %v5213
  %v5236 = vunpack.i.l.s16 %v4591
  %v5237 = vunpack.i.h.s16 %v4591
  %v5238 = vunpack.i.l.s16 %v5214
  %v5239 = vunpack.i.l.s16 %v4594
  %v5240 = vunpack.i.h.s16 %v4594
  %v5241 = vunpack.i.l.s16 %v5215
  %v5242 = vunpack.i.l.s16 %v4597
  %v5243 = vunpack.i.h.s16 %v4597
  %v5244 = vunpack.i.l.s16 %v5216
  %v5245 = vunpack.i.l.s16 %v4600
  %v5246 = vunpack.i.h.s16 %v4600
  %v5247 = vunpack.i.l.s16 %v5217
  %v5248 = vunpack.i.l.s16 %v4603
  %v5249 = vunpack.i.h.s16 %v4603
  %v5250 = vunpack.i.l.s16 %v5218
  %v5251 = vunpack.i.l.s16 %v4606
  %v5252 = vunpack.i.h.s16 %v4606
  %v5253 = vunpack.i.l.s16 %v5219
  %v5254 = vunpack.i.l.s16 %v4609
  %v5255 = vunpack.i.h.s16 %v4609
  %v5256 = vunpack.i.l.s16 %v5220
  %v5257 = vunpack.i.l.s16 %v4612
  %v5258 = vunpack.i.h.s16 %v4612
  %v5259 = vunpack.i.l.s16 %v5221
  %v5260 = vunpack.i.l.s16 %v4615
  %v5261 = vunpack.i.h.s16 %v4615
  %v5262 = vunpack.i.l.s16 %v5222
  %v5263 = vunpack.i.l.s16 %v4618
  %v5264 = vunpack.i.h.s16 %v4618
  %v5265 = vunpack.i.l.s16 %v5223
  %v5266 = vunpack.i.l.s16 %v4621
  %v5267 = vunpack.i.h.s16 %v4621
  %v5268 = vunpack.i.l.s16 %v5224
  %v5269 = vunpack.i.l.s16 %v4624
  %v5270 = vunpack.i.h.s16 %v4624
  %v5271 = vunpack.i.l.s16 %v5225
  %v5272 = vunpack.i.l.s16 %v4627
  %v5273 = vunpack.i.h.s16 %v4627
  %v5274 = vunpack.i.l.s16 %v5226
  %v5275 = vpack.i.b16 %v5228, %v5227
  %v5276 = vpack.i.b16 %v5230, %v5229
  %v5277 = vpack.i.b16 %v5232, %v5231
  %v5278 = vpack.i.b16 %v5234, %v5233
  %v5279 = vpack.i.b16 %v5236, %v5235
  %v5280 = vpack.i.b16 %v5238, %v5237
  %v5281 = vpack.i.b16 %v5240, %v5239
  %v5282 = vpack.i.b16 %v5242, %v5241
  %v5283 = vpack.i.b16 %v5244, %v5243
  %v5284 = vpack.i.b16 %v5246, %v5245
  %v5285 = vpack.i.b16 %v5248, %v5247
  %v5286 = vpack.i.b16 %v5250, %v5249
  %v5287 = vpack.i.b16 %v5252, %v5251
  %v5288 = vpack.i.b16 %v5254, %v5253
  %v5289 = vpack.i.b16 %v5256, %v5255
  %v5290 = vpack.i.b16 %v5258, %v5257
  %v5291 = vpack.i.b16 %v5260, %v5259
  %v5292 = vpack.i.b16 %v5262, %v5261
  %v5293 = vpack.i.b16 %v5264, %v5263
  %v5294 = vpack.i.b16 %v5266, %v5265
  %v5295 = vpack.i.b16 %v5268, %v5267
  %v5296 = vpack.i.b16 %v5270, %v5269
  %v5297 = vpack.i.b16 %v5272, %v5271
  %v5298 = vpack.i.b16 %v5274, %v5273
  %5299 = vst [vmem:[#allocation1] ss:$9 sm:$0xff] %v5037
  %s5300 = scalar_lea.vmem [#allocation1], 1
  %5301 = vst [vmem:[%s5300] ss:$9 sm:$0xff] %v5038
  %s5302 = scalar_lea.vmem [#allocation1], 2
  %5303 = vst [vmem:[%s5302] ss:$9 sm:$0xff] %v5039
  %s5304 = scalar_lea.vmem [#allocation1], 3
  %5305 = vst [vmem:[%s5304] ss:$9 sm:$0xff] %v5040
  %s5306 = scalar_lea.vmem [#allocation1], 4
  %5307 = vst [vmem:[%s5306] ss:$9 sm:$0xff] %v5041
  %s5308 = scalar_lea.vmem [#allocation1], 5
  %5309 = vst [vmem:[%s5308] ss:$9 sm:$0xff] %v5042
  %s5310 = scalar_lea.vmem [#allocation1], 6
  %5311 = vst [vmem:[%s5310] ss:$9 sm:$0xff] %v5043
  %s5312 = scalar_lea.vmem [#allocation1], 7
  %5313 = vst [vmem:[%s5312] ss:$9 sm:$0xff] %v5044
  %v5314 = vld [vmem:[#allocation1] sm:$0xff]
  %5315 = vst [vmem:[#allocation1] ss:$9 sm:$0xff] %v5045
  %5316 = vst [vmem:[%s5300] ss:$9 sm:$0xff] %v5046
  %5317 = vst [vmem:[%s5302] ss:$9 sm:$0xff] %v5047
  %5318 = vst [vmem:[%s5304] ss:$9 sm:$0xff] %v5048
  %5319 = vst [vmem:[%s5306] ss:$9 sm:$0xff] %v5049
  %5320 = vst [vmem:[%s5308] ss:$9 sm:$0xff] %v5050
  %5321 = vst [vmem:[%s5310] ss:$9 sm:$0xff] %v5051
  %5322 = vst [vmem:[%s5312] ss:$9 sm:$0xff] %v5052
  %v5323 = vld [vmem:[#allocation1] sm:$0xff]
  %5324 = vst [vmem:[#allocation1] ss:$9 sm:$0xff] %v5053
  %5325 = vst [vmem:[%s5300] ss:$9 sm:$0xff] %v5054
  %5326 = vst [vmem:[%s5302] ss:$9 sm:$0xff] %v5055
  %5327 = vst [vmem:[%s5304] ss:$9 sm:$0xff] %v5056
  %5328 = vst [vmem:[%s5306] ss:$9 sm:$0xff] %v5057
  %5329 = vst [vmem:[%s5308] ss:$9 sm:$0xff] %v5058
  %5330 = vst [vmem:[%s5310] ss:$9 sm:$0xff] %v5059
  %5331 = vst [vmem:[%s5312] ss:$9 sm:$0xff] %v5060
  %v5332 = vld [vmem:[#allocation1] sm:$0xff]
  %5334 = vst [vmem:[#allocation1] ss:$9 sm:$0xff] %v5275
  %5336 = vst [vmem:[%s5300] ss:$9 sm:$0xff] %v5276
  %5338 = vst [vmem:[%s5302] ss:$9 sm:$0xff] %v5277
  %5340 = vst [vmem:[%s5304] ss:$9 sm:$0xff] %v5278
  %5342 = vst [vmem:[%s5306] ss:$9 sm:$0xff] %v5279
  %5344 = vst [vmem:[%s5308] ss:$9 sm:$0xff] %v5280
  %5346 = vst [vmem:[%s5310] ss:$9 sm:$0xff] %v5281
  %5348 = vst [vmem:[%s5312] ss:$9 sm:$0xff] %v5282
  %v5349 = vld [vmem:[#allocation1] sm:$0xff]
  %5351 = vst [vmem:[#allocation1] ss:$9 sm:$0xff] %v5283
  %5353 = vst [vmem:[%s5300] ss:$9 sm:$0xff] %v5284
  %5355 = vst [vmem:[%s5302] ss:$9 sm:$0xff] %v5285
  %5357 = vst [vmem:[%s5304] ss:$9 sm:$0xff] %v5286
  %5359 = vst [vmem:[%s5306] ss:$9 sm:$0xff] %v5287
  %5361 = vst [vmem:[%s5308] ss:$9 sm:$0xff] %v5288
  %5363 = vst [vmem:[%s5310] ss:$9 sm:$0xff] %v5289
  %5365 = vst [vmem:[%s5312] ss:$9 sm:$0xff] %v5290
  %v5366 = vld [vmem:[#allocation1] sm:$0xff]
  %5368 = vst [vmem:[#allocation1] ss:$9 sm:$0xff] %v5291
  %5370 = vst [vmem:[%s5300] ss:$9 sm:$0xff] %v5292
  %5372 = vst [vmem:[%s5302] ss:$9 sm:$0xff] %v5293
  %5374 = vst [vmem:[%s5304] ss:$9 sm:$0xff] %v5294
  %5376 = vst [vmem:[%s5306] ss:$9 sm:$0xff] %v5295
  %5378 = vst [vmem:[%s5308] ss:$9 sm:$0xff] %v5296
  %5380 = vst [vmem:[%s5310] ss:$9 sm:$0xff] %v5297
  %5382 = vst [vmem:[%s5312] ss:$9 sm:$0xff] %v5298
  %v5383 = vld [vmem:[#allocation1] sm:$0xff]
  %5390 = vmatpush.bf16.msra.mxu0 0
  %5391 = vmatpush.bf16.msra.mxu0 0
  %5392 = vmatpush.bf16.msra.mxu0 %v5383
  %5393 = vmatpush.bf16.msra.mxu0 %v5366
  %5394 = vmatpush.bf16.msra.mxu0 %v5349
  %5395 = vmatpush.bf16.msra.mxu0 %v5332
  %5396 = vmatpush.bf16.msra.mxu0 %v5323
  %5397 = vmatpush.bf16.msra.mxu0 %v5314
  %5398 = vmatmul.bf16.gmra.mxu0 %v5169
  %v5399 = vpop.f32.mrf.mxu0
  %v5400 = vadd.f32 0.0, %v5399
  %v5401 = vpop.f32.mrf.mxu0
  %v5402 = vadd.f32 0.0, %v5401
  %5403 = vdwg.mxu0
  %5406 = vrot.lane.b32.xlu0 %v5400, 112
  %v5407 = vpop.permute.xlu0 %5406
  %5408 = vrot.lane.b32.xlu0 %v5402, 112
  %v5409 = vpop.permute.xlu0 %5408
  %v5412 = vmax.f32 %v5400, %v5407
  %v5413 = vmax.f32 %v5402, %v5409
  %v5414 = vmax.f32 %v5193, %v5412
  %v5415 = vmax.f32 %v5194, %v5413
  %5417 = vset.pattern.permute.xlu0 0
  %5418 = vperm.xlu0 %5417, %v2866
  %v5419 = vpop.permute.xlu0 %5418
  %5422 = vset.pattern.permute.xlu0 0
  %5423 = vperm.xlu0 %5422, %v2867
  %v5424 = vpop.permute.xlu0 %5423
  %v5426 = vadd.f32 %v5414, %v5419
  %v5427 = vadd.f32 %v5415, %v5424
  %v5428 = vmax.f32 %v5426, 0.0
  %v5429 = vmax.f32 %v5427, 0.0
  %v5446 = vrot.slane %v4630, 1
  %v5447 = vrot.slane %v4633, 1
  %v5448 = vrot.slane %v4636, 1
  %v5449 = vrot.slane %v4639, 1
  %v5450 = vrot.slane %v4642, 1
  %v5451 = vrot.slane %v4645, 1
  %v5452 = vrot.slane %v4648, 1
  %v5453 = vrot.slane %v4651, 1
  %v5454 = vrot.slane %v4654, 1
  %v5455 = vrot.slane %v4657, 1
  %v5456 = vrot.slane %v4660, 1
  %v5457 = vrot.slane %v4663, 1
  %v5458 = vrot.slane %v4666, 1
  %v5459 = vrot.slane %v4669, 1
  %v5460 = vrot.slane %v4672, 1
  %v5461 = vrot.slane %v4675, 1
  %v5462 = vunpack.i.l.s16 %v4630
  %v5463 = vunpack.i.h.s16 %v4630
  %v5464 = vunpack.i.l.s16 %v5446
  %v5465 = vunpack.i.l.s16 %v4633
  %v5466 = vunpack.i.h.s16 %v4633
  %v5467 = vunpack.i.l.s16 %v5447
  %v5468 = vunpack.i.l.s16 %v4636
  %v5469 = vunpack.i.h.s16 %v4636
  %v5470 = vunpack.i.l.s16 %v5448
  %v5471 = vunpack.i.l.s16 %v4639
  %v5472 = vunpack.i.h.s16 %v4639
  %v5473 = vunpack.i.l.s16 %v5449
  %v5474 = vunpack.i.l.s16 %v4642
  %v5475 = vunpack.i.h.s16 %v4642
  %v5476 = vunpack.i.l.s16 %v5450
  %v5477 = vunpack.i.l.s16 %v4645
  %v5478 = vunpack.i.h.s16 %v4645
  %v5479 = vunpack.i.l.s16 %v5451
  %v5480 = vunpack.i.l.s16 %v4648
  %v5481 = vunpack.i.h.s16 %v4648
  %v5482 = vunpack.i.l.s16 %v5452
  %v5483 = vunpack.i.l.s16 %v4651
  %v5484 = vunpack.i.h.s16 %v4651
  %v5485 = vunpack.i.l.s16 %v5453
  %v5486 = vunpack.i.l.s16 %v4654
  %v5487 = vunpack.i.h.s16 %v4654
  %v5488 = vunpack.i.l.s16 %v5454
  %v5489 = vunpack.i.l.s16 %v4657
  %v5490 = vunpack.i.h.s16 %v4657
  %v5491 = vunpack.i.l.s16 %v5455
  %v5492 = vunpack.i.l.s16 %v4660
  %v5493 = vunpack.i.h.s16 %v4660
  %v5494 = vunpack.i.l.s16 %v5456
  %v5495 = vunpack.i.l.s16 %v4663
  %v5496 = vunpack.i.h.s16 %v4663
  %v5497 = vunpack.i.l.s16 %v5457
  %v5498 = vunpack.i.l.s16 %v4666
  %v5499 = vunpack.i.h.s16 %v4666
  %v5500 = vunpack.i.l.s16 %v5458
  %v5501 = vunpack.i.l.s16 %v4669
  %v5502 = vunpack.i.h.s16 %v4669
  %v5503 = vunpack.i.l.s16 %v5459
  %v5504 = vunpack.i.l.s16 %v4672
  %v5505 = vunpack.i.h.s16 %v4672
  %v5506 = vunpack.i.l.s16 %v5460
  %v5507 = vunpack.i.l.s16 %v4675
  %v5508 = vunpack.i.h.s16 %v4675
  %v5509 = vunpack.i.l.s16 %v5461
  %v5510 = vpack.i.b16 %v5463, %v5462
  %v5511 = vpack.i.b16 %v5465, %v5464
  %v5512 = vpack.i.b16 %v5467, %v5466
  %v5513 = vpack.i.b16 %v5469, %v5468
  %v5514 = vpack.i.b16 %v5471, %v5470
  %v5515 = vpack.i.b16 %v5473, %v5472
  %v5516 = vpack.i.b16 %v5475, %v5474
  %v5517 = vpack.i.b16 %v5477, %v5476
  %v5518 = vpack.i.b16 %v5479, %v5478
  %v5519 = vpack.i.b16 %v5481, %v5480
  %v5520 = vpack.i.b16 %v5483, %v5482
  %v5521 = vpack.i.b16 %v5485, %v5484
  %v5522 = vpack.i.b16 %v5487, %v5486
  %v5523 = vpack.i.b16 %v5489, %v5488
  %v5524 = vpack.i.b16 %v5491, %v5490
  %v5525 = vpack.i.b16 %v5493, %v5492
  %v5526 = vpack.i.b16 %v5495, %v5494
  %v5527 = vpack.i.b16 %v5497, %v5496
  %v5528 = vpack.i.b16 %v5499, %v5498
  %v5529 = vpack.i.b16 %v5501, %v5500
  %v5530 = vpack.i.b16 %v5503, %v5502
  %v5531 = vpack.i.b16 %v5505, %v5504
  %v5532 = vpack.i.b16 %v5507, %v5506
  %v5533 = vpack.i.b16 %v5509, %v5508
  %5534 = vst [vmem:[#allocation1] ss:$9 sm:$0xff] %v5275
  %s5535 = scalar_lea.vmem [#allocation1], 1
  %5536 = vst [vmem:[%s5535] ss:$9 sm:$0xff] %v5276
  %s5537 = scalar_lea.vmem [#allocation1], 2
  %5538 = vst [vmem:[%s5537] ss:$9 sm:$0xff] %v5277
  %s5539 = scalar_lea.vmem [#allocation1], 3
  %5540 = vst [vmem:[%s5539] ss:$9 sm:$0xff] %v5278
  %s5541 = scalar_lea.vmem [#allocation1], 4
  %5542 = vst [vmem:[%s5541] ss:$9 sm:$0xff] %v5279
  %s5543 = scalar_lea.vmem [#allocation1], 5
  %5544 = vst [vmem:[%s5543] ss:$9 sm:$0xff] %v5280
  %s5545 = scalar_lea.vmem [#allocation1], 6
  %5546 = vst [vmem:[%s5545] ss:$9 sm:$0xff] %v5281
  %s5547 = scalar_lea.vmem [#allocation1], 7
  %5548 = vst [vmem:[%s5547] ss:$9 sm:$0xff] %v5282
  %v5549 = vld [vmem:[#allocation1] sm:$0xff]
  %5550 = vst [vmem:[#allocation1] ss:$9 sm:$0xff] %v5283
  %5551 = vst [vmem:[%s5535] ss:$9 sm:$0xff] %v5284
  %5552 = vst [vmem:[%s5537] ss:$9 sm:$0xff] %v5285
  %5553 = vst [vmem:[%s5539] ss:$9 sm:$0xff] %v5286
  %5554 = vst [vmem:[%s5541] ss:$9 sm:$0xff] %v5287
  %5555 = vst [vmem:[%s5543] ss:$9 sm:$0xff] %v5288
  %5556 = vst [vmem:[%s5545] ss:$9 sm:$0xff] %v5289
  %5557 = vst [vmem:[%s5547] ss:$9 sm:$0xff] %v5290
  %v5558 = vld [vmem:[#allocation1] sm:$0xff]
  %5559 = vst [vmem:[#allocation1] ss:$9 sm:$0xff] %v5291
  %5560 = vst [vmem:[%s5535] ss:$9 sm:$0xff] %v5292
  %5561 = vst [vmem:[%s5537] ss:$9 sm:$0xff] %v5293
  %5562 = vst [vmem:[%s5539] ss:$9 sm:$0xff] %v5294
  %5563 = vst [vmem:[%s5541] ss:$9 sm:$0xff] %v5295
  %5564 = vst [vmem:[%s5543] ss:$9 sm:$0xff] %v5296
  %5565 = vst [vmem:[%s5545] ss:$9 sm:$0xff] %v5297
  %5566 = vst [vmem:[%s5547] ss:$9 sm:$0xff] %v5298
  %v5567 = vld [vmem:[#allocation1] sm:$0xff]
  %5569 = vst [vmem:[#allocation1] ss:$9 sm:$0xff] %v5510
  %5571 = vst [vmem:[%s5535] ss:$9 sm:$0xff] %v5511
  %5573 = vst [vmem:[%s5537] ss:$9 sm:$0xff] %v5512
  %5575 = vst [vmem:[%s5539] ss:$9 sm:$0xff] %v5513
  %5577 = vst [vmem:[%s5541] ss:$9 sm:$0xff] %v5514
  %5579 = vst [vmem:[%s5543] ss:$9 sm:$0xff] %v5515
  %5581 = vst [vmem:[%s5545] ss:$9 sm:$0xff] %v5516
  %5583 = vst [vmem:[%s5547] ss:$9 sm:$0xff] %v5517
  %v5584 = vld [vmem:[#allocation1] sm:$0xff]
  %5586 = vst [vmem:[#allocation1] ss:$9 sm:$0xff] %v5518
  %5588 = vst [vmem:[%s5535] ss:$9 sm:$0xff] %v5519
  %5590 = vst [vmem:[%s5537] ss:$9 sm:$0xff] %v5520
  %5592 = vst [vmem:[%s5539] ss:$9 sm:$0xff] %v5521
  %5594 = vst [vmem:[%s5541] ss:$9 sm:$0xff] %v5522
  %5596 = vst [vmem:[%s5543] ss:$9 sm:$0xff] %v5523
  %5598 = vst [vmem:[%s5545] ss:$9 sm:$0xff] %v5524
  %5600 = vst [vmem:[%s5547] ss:$9 sm:$0xff] %v5525
  %v5601 = vld [vmem:[#allocation1] sm:$0xff]
  %5603 = vst [vmem:[#allocation1] ss:$9 sm:$0xff] %v5526
  %5605 = vst [vmem:[%s5535] ss:$9 sm:$0xff] %v5527
  %5607 = vst [vmem:[%s5537] ss:$9 sm:$0xff] %v5528
  %5609 = vst [vmem:[%s5539] ss:$9 sm:$0xff] %v5529
  %5611 = vst [vmem:[%s5541] ss:$9 sm:$0xff] %v5530
  %5613 = vst [vmem:[%s5543] ss:$9 sm:$0xff] %v5531
  %5615 = vst [vmem:[%s5545] ss:$9 sm:$0xff] %v5532
  %5617 = vst [vmem:[%s5547] ss:$9 sm:$0xff] %v5533
  %v5618 = vld [vmem:[#allocation1] sm:$0xff]
  %5625 = vmatpush.bf16.msra.mxu0 0
  %5626 = vmatpush.bf16.msra.mxu0 0
  %5627 = vmatpush.bf16.msra.mxu0 %v5618
  %5628 = vmatpush.bf16.msra.mxu0 %v5601
  %5629 = vmatpush.bf16.msra.mxu0 %v5584
  %5630 = vmatpush.bf16.msra.mxu0 %v5567
  %5631 = vmatpush.bf16.msra.mxu0 %v5558
  %5632 = vmatpush.bf16.msra.mxu0 %v5549
  %5633 = vmatmul.bf16.gmra.mxu0 %v5169
  %v5634 = vpop.f32.mrf.mxu0
  %v5635 = vadd.f32 0.0, %v5634
  %v5636 = vpop.f32.mrf.mxu0
  %v5637 = vadd.f32 0.0, %v5636
  %5638 = vdwg.mxu0
  %5641 = vrot.lane.b32.xlu0 %v5635, 112
  %v5642 = vpop.permute.xlu0 %5641
  %5643 = vrot.lane.b32.xlu0 %v5637, 112
  %v5644 = vpop.permute.xlu0 %5643
  %v5647 = vmax.f32 %v5635, %v5642
  %v5648 = vmax.f32 %v5637, %v5644
  %v5665 = vrot.slane %v4678, 1
  %v5666 = vrot.slane %v4681, 1
  %v5667 = vrot.slane %v4684, 1
  %v5668 = vrot.slane %v4687, 1
  %v5669 = vrot.slane %v4690, 1
  %v5670 = vrot.slane %v4693, 1
  %v5671 = vrot.slane %v4696, 1
  %v5672 = vrot.slane %v4699, 1
  %v5673 = vrot.slane %v4702, 1
  %v5674 = vrot.slane %v4705, 1
  %v5675 = vrot.slane %v4708, 1
  %v5676 = vrot.slane %v4711, 1
  %v5677 = vrot.slane %v4714, 1
  %v5678 = vrot.slane %v4717, 1
  %v5679 = vrot.slane %v4720, 1
  %v5680 = vrot.slane %v4723, 1
  %v5681 = vunpack.i.l.s16 %v4678
  %v5682 = vunpack.i.h.s16 %v4678
  %v5683 = vunpack.i.l.s16 %v5665
  %v5684 = vunpack.i.l.s16 %v4681
  %v5685 = vunpack.i.h.s16 %v4681
  %v5686 = vunpack.i.l.s16 %v5666
  %v5687 = vunpack.i.l.s16 %v4684
  %v5688 = vunpack.i.h.s16 %v4684
  %v5689 = vunpack.i.l.s16 %v5667
  %v5690 = vunpack.i.l.s16 %v4687
  %v5691 = vunpack.i.h.s16 %v4687
  %v5692 = vunpack.i.l.s16 %v5668
  %v5693 = vunpack.i.l.s16 %v4690
  %v5694 = vunpack.i.h.s16 %v4690
  %v5695 = vunpack.i.l.s16 %v5669
  %v5696 = vunpack.i.l.s16 %v4693
  %v5697 = vunpack.i.h.s16 %v4693
  %v5698 = vunpack.i.l.s16 %v5670
  %v5699 = vunpack.i.l.s16 %v4696
  %v5700 = vunpack.i.h.s16 %v4696
  %v5701 = vunpack.i.l.s16 %v5671
  %v5702 = vunpack.i.l.s16 %v4699
  %v5703 = vunpack.i.h.s16 %v4699
  %v5704 = vunpack.i.l.s16 %v5672
  %v5705 = vunpack.i.l.s16 %v4702
  %v5706 = vunpack.i.h.s16 %v4702
  %v5707 = vunpack.i.l.s16 %v5673
  %v5708 = vunpack.i.l.s16 %v4705
  %v5709 = vunpack.i.h.s16 %v4705
  %v5710 = vunpack.i.l.s16 %v5674
  %v5711 = vunpack.i.l.s16 %v4708
  %v5712 = vunpack.i.h.s16 %v4708
  %v5713 = vunpack.i.l.s16 %v5675
  %v5714 = vunpack.i.l.s16 %v4711
  %v5715 = vunpack.i.h.s16 %v4711
  %v5716 = vunpack.i.l.s16 %v5676
  %v5717 = vunpack.i.l.s16 %v4714
  %v5718 = vunpack.i.h.s16 %v4714
  %v5719 = vunpack.i.l.s16 %v5677
  %v5720 = vunpack.i.l.s16 %v4717
  %v5721 = vunpack.i.h.s16 %v4717
  %v5722 = vunpack.i.l.s16 %v5678
  %v5723 = vunpack.i.l.s16 %v4720
  %v5724 = vunpack.i.h.s16 %v4720
  %v5725 = vunpack.i.l.s16 %v5679
  %v5726 = vunpack.i.l.s16 %v4723
  %v5727 = vunpack.i.h.s16 %v4723
  %v5728 = vunpack.i.l.s16 %v5680
  %v5729 = vpack.i.b16 %v5682, %v5681
  %v5730 = vpack.i.b16 %v5684, %v5683
  %v5731 = vpack.i.b16 %v5686, %v5685
  %v5732 = vpack.i.b16 %v5688, %v5687
  %v5733 = vpack.i.b16 %v5690, %v5689
  %v5734 = vpack.i.b16 %v5692, %v5691
  %v5735 = vpack.i.b16 %v5694, %v5693
  %v5736 = vpack.i.b16 %v5696, %v5695
  %v5737 = vpack.i.b16 %v5698, %v5697
  %v5738 = vpack.i.b16 %v5700, %v5699
  %v5739 = vpack.i.b16 %v5702, %v5701
  %v5740 = vpack.i.b16 %v5704, %v5703
  %v5741 = vpack.i.b16 %v5706, %v5705
  %v5742 = vpack.i.b16 %v5708, %v5707
  %v5743 = vpack.i.b16 %v5710, %v5709
  %v5744 = vpack.i.b16 %v5712, %v5711
  %v5745 = vpack.i.b16 %v5714, %v5713
  %v5746 = vpack.i.b16 %v5716, %v5715
  %v5747 = vpack.i.b16 %v5718, %v5717
  %v5748 = vpack.i.b16 %v5720, %v5719
  %v5749 = vpack.i.b16 %v5722, %v5721
  %v5750 = vpack.i.b16 %v5724, %v5723
  %v5751 = vpack.i.b16 %v5726, %v5725
  %v5752 = vpack.i.b16 %v5728, %v5727
  %5753 = vst [vmem:[#allocation1] ss:$9 sm:$0xff] %v5510
  %s5754 = scalar_lea.vmem [#allocation1], 1
  %5755 = vst [vmem:[%s5754] ss:$9 sm:$0xff] %v5511
  %s5756 = scalar_lea.vmem [#allocation1], 2
  %5757 = vst [vmem:[%s5756] ss:$9 sm:$0xff] %v5512
  %s5758 = scalar_lea.vmem [#allocation1], 3
  %5759 = vst [vmem:[%s5758] ss:$9 sm:$0xff] %v5513
  %s5760 = scalar_lea.vmem [#allocation1], 4
  %5761 = vst [vmem:[%s5760] ss:$9 sm:$0xff] %v5514
  %s5762 = scalar_lea.vmem [#allocation1], 5
  %5763 = vst [vmem:[%s5762] ss:$9 sm:$0xff] %v5515
  %s5764 = scalar_lea.vmem [#allocation1], 6
  %5765 = vst [vmem:[%s5764] ss:$9 sm:$0xff] %v5516
  %s5766 = scalar_lea.vmem [#allocation1], 7
  %5767 = vst [vmem:[%s5766] ss:$9 sm:$0xff] %v5517
  %v5768 = vld [vmem:[#allocation1] sm:$0xff]
  %5769 = vst [vmem:[#allocation1] ss:$9 sm:$0xff] %v5518
  %5770 = vst [vmem:[%s5754] ss:$9 sm:$0xff] %v5519
  %5771 = vst [vmem:[%s5756] ss:$9 sm:$0xff] %v5520
  %5772 = vst [vmem:[%s5758] ss:$9 sm:$0xff] %v5521
  %5773 = vst [vmem:[%s5760] ss:$9 sm:$0xff] %v5522
  %5774 = vst [vmem:[%s5762] ss:$9 sm:$0xff] %v5523
  %5775 = vst [vmem:[%s5764] ss:$9 sm:$0xff] %v5524
  %5776 = vst [vmem:[%s5766] ss:$9 sm:$0xff] %v5525
  %v5777 = vld [vmem:[#allocation1] sm:$0xff]
  %5778 = vst [vmem:[#allocation1] ss:$9 sm:$0xff] %v5526
  %5779 = vst [vmem:[%s5754] ss:$9 sm:$0xff] %v5527
  %5780 = vst [vmem:[%s5756] ss:$9 sm:$0xff] %v5528
  %5781 = vst [vmem:[%s5758] ss:$9 sm:$0xff] %v5529
  %5782 = vst [vmem:[%s5760] ss:$9 sm:$0xff] %v5530
  %5783 = vst [vmem:[%s5762] ss:$9 sm:$0xff] %v5531
  %5784 = vst [vmem:[%s5764] ss:$9 sm:$0xff] %v5532
  %5785 = vst [vmem:[%s5766] ss:$9 sm:$0xff] %v5533
  %v5786 = vld [vmem:[#allocation1] sm:$0xff]
  %5788 = vst [vmem:[#allocation1] ss:$9 sm:$0xff] %v5729
  %5790 = vst [vmem:[%s5754] ss:$9 sm:$0xff] %v5730
  %5792 = vst [vmem:[%s5756] ss:$9 sm:$0xff] %v5731
  %5794 = vst [vmem:[%s5758] ss:$9 sm:$0xff] %v5732
  %5796 = vst [vmem:[%s5760] ss:$9 sm:$0xff] %v5733
  %5798 = vst [vmem:[%s5762] ss:$9 sm:$0xff] %v5734
  %5800 = vst [vmem:[%s5764] ss:$9 sm:$0xff] %v5735
  %5802 = vst [vmem:[%s5766] ss:$9 sm:$0xff] %v5736
  %v5803 = vld [vmem:[#allocation1] sm:$0xff]
  %5805 = vst [vmem:[#allocation1] ss:$9 sm:$0xff] %v5737
  %5807 = vst [vmem:[%s5754] ss:$9 sm:$0xff] %v5738
  %5809 = vst [vmem:[%s5756] ss:$9 sm:$0xff] %v5739
  %5811 = vst [vmem:[%s5758] ss:$9 sm:$0xff] %v5740
  %5813 = vst [vmem:[%s5760] ss:$9 sm:$0xff] %v5741
  %5815 = vst [vmem:[%s5762] ss:$9 sm:$0xff] %v5742
  %5817 = vst [vmem:[%s5764] ss:$9 sm:$0xff] %v5743
  %5819 = vst [vmem:[%s5766] ss:$9 sm:$0xff] %v5744
  %v5820 = vld [vmem:[#allocation1] sm:$0xff]
  %5822 = vst [vmem:[#allocation1] ss:$9 sm:$0xff] %v5745
  %5824 = vst [vmem:[%s5754] ss:$9 sm:$0xff] %v5746
  %5826 = vst [vmem:[%s5756] ss:$9 sm:$0xff] %v5747
  %5828 = vst [vmem:[%s5758] ss:$9 sm:$0xff] %v5748
  %5830 = vst [vmem:[%s5760] ss:$9 sm:$0xff] %v5749
  %5832 = vst [vmem:[%s5762] ss:$9 sm:$0xff] %v5750
  %5834 = vst [vmem:[%s5764] ss:$9 sm:$0xff] %v5751
  %5836 = vst [vmem:[%s5766] ss:$9 sm:$0xff] %v5752
  %v5837 = vld [vmem:[#allocation1] sm:$0xff]
  %5844 = vmatpush.bf16.msra.mxu0 0
  %5845 = vmatpush.bf16.msra.mxu0 0
  %5846 = vmatpush.bf16.msra.mxu0 %v5837
  %5847 = vmatpush.bf16.msra.mxu0 %v5820
  %5848 = vmatpush.bf16.msra.mxu0 %v5803
  %5849 = vmatpush.bf16.msra.mxu0 %v5786
  %5850 = vmatpush.bf16.msra.mxu0 %v5777
  %5851 = vmatpush.bf16.msra.mxu0 %v5768
  %5852 = vmatmul.bf16.gmra.mxu0 %v5169
  %v5853 = vpop.f32.mrf.mxu0
  %v5854 = vadd.f32 0.0, %v5853
  %v5855 = vpop.f32.mrf.mxu0
  %v5856 = vadd.f32 0.0, %v5855
  %5857 = vdwg.mxu0
  %5860 = vrot.lane.b32.xlu0 %v5854, 112
  %v5861 = vpop.permute.xlu0 %5860
  %5862 = vrot.lane.b32.xlu0 %v5856, 112
  %v5863 = vpop.permute.xlu0 %5862
  %v5866 = vmax.f32 %v5854, %v5861
  %v5867 = vmax.f32 %v5856, %v5863
  %v5868 = vmax.f32 %v5647, %v5866
  %v5869 = vmax.f32 %v5648, %v5867
  %v5870 = vadd.f32 %v5868, %v5419
  %v5871 = vadd.f32 %v5869, %v5424
  %v5872 = vmax.f32 %v5870, 0.0
  %v5873 = vmax.f32 %v5871, 0.0
  %v5890 = vrot.slane %v4726, 1
  %v5891 = vrot.slane %v4729, 1
  %v5892 = vrot.slane %v4732, 1
  %v5893 = vrot.slane %v4735, 1
  %v5894 = vrot.slane %v4738, 1
  %v5895 = vrot.slane %v4741, 1
  %v5896 = vrot.slane %v4744, 1
  %v5897 = vrot.slane %v4747, 1
  %v5898 = vrot.slane %v4750, 1
  %v5899 = vrot.slane %v4753, 1
  %v5900 = vrot.slane %v4756, 1
  %v5901 = vrot.slane %v4759, 1
  %v5902 = vrot.slane %v4762, 1
  %v5903 = vrot.slane %v4765, 1
  %v5904 = vrot.slane %v4768, 1
  %v5905 = vrot.slane %v4771, 1
  %v5906 = vunpack.i.l.s16 %v4726
  %v5907 = vunpack.i.h.s16 %v4726
  %v5908 = vunpack.i.l.s16 %v5890
  %v5909 = vunpack.i.l.s16 %v4729
  %v5910 = vunpack.i.h.s16 %v4729
  %v5911 = vunpack.i.l.s16 %v5891
  %v5912 = vunpack.i.l.s16 %v4732
  %v5913 = vunpack.i.h.s16 %v4732
  %v5914 = vunpack.i.l.s16 %v5892
  %v5915 = vunpack.i.l.s16 %v4735
  %v5916 = vunpack.i.h.s16 %v4735
  %v5917 = vunpack.i.l.s16 %v5893
  %v5918 = vunpack.i.l.s16 %v4738
  %v5919 = vunpack.i.h.s16 %v4738
  %v5920 = vunpack.i.l.s16 %v5894
  %v5921 = vunpack.i.l.s16 %v4741
  %v5922 = vunpack.i.h.s16 %v4741
  %v5923 = vunpack.i.l.s16 %v5895
  %v5924 = vunpack.i.l.s16 %v4744
  %v5925 = vunpack.i.h.s16 %v4744
  %v5926 = vunpack.i.l.s16 %v5896
  %v5927 = vunpack.i.l.s16 %v4747
  %v5928 = vunpack.i.h.s16 %v4747
  %v5929 = vunpack.i.l.s16 %v5897
  %v5930 = vunpack.i.l.s16 %v4750
  %v5931 = vunpack.i.h.s16 %v4750
  %v5932 = vunpack.i.l.s16 %v5898
  %v5933 = vunpack.i.l.s16 %v4753
  %v5934 = vunpack.i.h.s16 %v4753
  %v5935 = vunpack.i.l.s16 %v5899
  %v5936 = vunpack.i.l.s16 %v4756
  %v5937 = vunpack.i.h.s16 %v4756
  %v5938 = vunpack.i.l.s16 %v5900
  %v5939 = vunpack.i.l.s16 %v4759
  %v5940 = vunpack.i.h.s16 %v4759
  %v5941 = vunpack.i.l.s16 %v5901
  %v5942 = vunpack.i.l.s16 %v4762
  %v5943 = vunpack.i.h.s16 %v4762
  %v5944 = vunpack.i.l.s16 %v5902
  %v5945 = vunpack.i.l.s16 %v4765
  %v5946 = vunpack.i.h.s16 %v4765
  %v5947 = vunpack.i.l.s16 %v5903
  %v5948 = vunpack.i.l.s16 %v4768
  %v5949 = vunpack.i.h.s16 %v4768
  %v5950 = vunpack.i.l.s16 %v5904
  %v5951 = vunpack.i.l.s16 %v4771
  %v5952 = vunpack.i.h.s16 %v4771
  %v5953 = vunpack.i.l.s16 %v5905
  %v5954 = vpack.i.b16 %v5907, %v5906
  %v5955 = vpack.i.b16 %v5909, %v5908
  %v5956 = vpack.i.b16 %v5911, %v5910
  %v5957 = vpack.i.b16 %v5913, %v5912
  %v5958 = vpack.i.b16 %v5915, %v5914
  %v5959 = vpack.i.b16 %v5917, %v5916
  %v5960 = vpack.i.b16 %v5919, %v5918
  %v5961 = vpack.i.b16 %v5921, %v5920
  %v5962 = vpack.i.b16 %v5923, %v5922
  %v5963 = vpack.i.b16 %v5925, %v5924
  %v5964 = vpack.i.b16 %v5927, %v5926
  %v5965 = vpack.i.b16 %v5929, %v5928
  %v5966 = vpack.i.b16 %v5931, %v5930
  %v5967 = vpack.i.b16 %v5933, %v5932
  %v5968 = vpack.i.b16 %v5935, %v5934
  %v5969 = vpack.i.b16 %v5937, %v5936
  %v5970 = vpack.i.b16 %v5939, %v5938
  %v5971 = vpack.i.b16 %v5941, %v5940
  %v5972 = vpack.i.b16 %v5943, %v5942
  %v5973 = vpack.i.b16 %v5945, %v5944
  %v5974 = vpack.i.b16 %v5947, %v5946
  %v5975 = vpack.i.b16 %v5949, %v5948
  %v5976 = vpack.i.b16 %v5951, %v5950
  %v5977 = vpack.i.b16 %v5953, %v5952
  %5978 = vst [vmem:[#allocation1] ss:$9 sm:$0xff] %v5729
  %s5979 = scalar_lea.vmem [#allocation1], 1
  %5980 = vst [vmem:[%s5979] ss:$9 sm:$0xff] %v5730
  %s5981 = scalar_lea.vmem [#allocation1], 2
  %5982 = vst [vmem:[%s5981] ss:$9 sm:$0xff] %v5731
  %s5983 = scalar_lea.vmem [#allocation1], 3
  %5984 = vst [vmem:[%s5983] ss:$9 sm:$0xff] %v5732
  %s5985 = scalar_lea.vmem [#allocation1], 4
  %5986 = vst [vmem:[%s5985] ss:$9 sm:$0xff] %v5733
  %s5987 = scalar_lea.vmem [#allocation1], 5
  %5988 = vst [vmem:[%s5987] ss:$9 sm:$0xff] %v5734
  %s5989 = scalar_lea.vmem [#allocation1], 6
  %5990 = vst [vmem:[%s5989] ss:$9 sm:$0xff] %v5735
  %s5991 = scalar_lea.vmem [#allocation1], 7
  %5992 = vst [vmem:[%s5991] ss:$9 sm:$0xff] %v5736
  %v5993 = vld [vmem:[#allocation1] sm:$0xff]
  %5994 = vst [vmem:[#allocation1] ss:$9 sm:$0xff] %v5737
  %5995 = vst [vmem:[%s5979] ss:$9 sm:$0xff] %v5738
  %5996 = vst [vmem:[%s5981] ss:$9 sm:$0xff] %v5739
  %5997 = vst [vmem:[%s5983] ss:$9 sm:$0xff] %v5740
  %5998 = vst [vmem:[%s5985] ss:$9 sm:$0xff] %v5741
  %5999 = vst [vmem:[%s5987] ss:$9 sm:$0xff] %v5742
  %6000 = vst [vmem:[%s5989] ss:$9 sm:$0xff] %v5743
  %6001 = vst [vmem:[%s5991] ss:$9 sm:$0xff] %v5744
  %v6002 = vld [vmem:[#allocation1] sm:$0xff]
  %6003 = vst [vmem:[#allocation1] ss:$9 sm:$0xff] %v5745
  %6004 = vst [vmem:[%s5979] ss:$9 sm:$0xff] %v5746
  %6005 = vst [vmem:[%s5981] ss:$9 sm:$0xff] %v5747
  %6006 = vst [vmem:[%s5983] ss:$9 sm:$0xff] %v5748
  %6007 = vst [vmem:[%s5985] ss:$9 sm:$0xff] %v5749
  %6008 = vst [vmem:[%s5987] ss:$9 sm:$0xff] %v5750
  %6009 = vst [vmem:[%s5989] ss:$9 sm:$0xff] %v5751
  %6010 = vst [vmem:[%s5991] ss:$9 sm:$0xff] %v5752
  %v6011 = vld [vmem:[#allocation1] sm:$0xff]
  %6013 = vst [vmem:[#allocation1] ss:$9 sm:$0xff] %v5954
  %6015 = vst [vmem:[%s5979] ss:$9 sm:$0xff] %v5955
  %6017 = vst [vmem:[%s5981] ss:$9 sm:$0xff] %v5956
  %6019 = vst [vmem:[%s5983] ss:$9 sm:$0xff] %v5957
  %6021 = vst [vmem:[%s5985] ss:$9 sm:$0xff] %v5958
  %6023 = vst [vmem:[%s5987] ss:$9 sm:$0xff] %v5959
  %6025 = vst [vmem:[%s5989] ss:$9 sm:$0xff] %v5960
  %6027 = vst [vmem:[%s5991] ss:$9 sm:$0xff] %v5961
  %v6028 = vld [vmem:[#allocation1] sm:$0xff]
  %6030 = vst [vmem:[#allocation1] ss:$9 sm:$0xff] %v5962
  %6032 = vst [vmem:[%s5979] ss:$9 sm:$0xff] %v5963
  %6034 = vst [vmem:[%s5981] ss:$9 sm:$0xff] %v5964
  %6036 = vst [vmem:[%s5983] ss:$9 sm:$0xff] %v5965
  %6038 = vst [vmem:[%s5985] ss:$9 sm:$0xff] %v5966
  %6040 = vst [vmem:[%s5987] ss:$9 sm:$0xff] %v5967
  %6042 = vst [vmem:[%s5989] ss:$9 sm:$0xff] %v5968
  %6044 = vst [vmem:[%s5991] ss:$9 sm:$0xff] %v5969
  %v6045 = vld [vmem:[#allocation1] sm:$0xff]
  %6047 = vst [vmem:[#allocation1] ss:$9 sm:$0xff] %v5970
  %6049 = vst [vmem:[%s5979] ss:$9 sm:$0xff] %v5971
  %6051 = vst [vmem:[%s5981] ss:$9 sm:$0xff] %v5972
  %6053 = vst [vmem:[%s5983] ss:$9 sm:$0xff] %v5973
  %6055 = vst [vmem:[%s5985] ss:$9 sm:$0xff] %v5974
  %6057 = vst [vmem:[%s5987] ss:$9 sm:$0xff] %v5975
  %6059 = vst [vmem:[%s5989] ss:$9 sm:$0xff] %v5976
  %6061 = vst [vmem:[%s5991] ss:$9 sm:$0xff] %v5977
  %v6062 = vld [vmem:[#allocation1] sm:$0xff]
  %6069 = vmatpush.bf16.msra.mxu0 0
  %6070 = vmatpush.bf16.msra.mxu0 0
  %6071 = vmatpush.bf16.msra.mxu0 %v6062
  %6072 = vmatpush.bf16.msra.mxu0 %v6045
  %6073 = vmatpush.bf16.msra.mxu0 %v6028
  %6074 = vmatpush.bf16.msra.mxu0 %v6011
  %6075 = vmatpush.bf16.msra.mxu0 %v6002
  %6076 = vmatpush.bf16.msra.mxu0 %v5993
  %6077 = vmatmul.bf16.gmra.mxu0 %v5169
  %v6078 = vpop.f32.mrf.mxu0
  %v6079 = vadd.f32 0.0, %v6078
  %v6080 = vpop.f32.mrf.mxu0
  %v6081 = vadd.f32 0.0, %v6080
  %6082 = vdwg.mxu0
  %6085 = vrot.lane.b32.xlu0 %v6079, 112
  %v6086 = vpop.permute.xlu0 %6085
  %6087 = vrot.lane.b32.xlu0 %v6081, 112
  %v6088 = vpop.permute.xlu0 %6087
  %v6091 = vmax.f32 %v6079, %v6086
  %v6092 = vmax.f32 %v6081, %v6088
  %v6109 = vrot.slane %v4774, 1
  %v6110 = vrot.slane %v4777, 1
  %v6111 = vrot.slane %v4780, 1
  %v6112 = vrot.slane %v4783, 1
  %v6113 = vrot.slane %v4786, 1
  %v6114 = vrot.slane %v4789, 1
  %v6115 = vrot.slane %v4792, 1
  %v6116 = vrot.slane %v4795, 1
  %v6117 = vrot.slane %v4798, 1
  %v6118 = vrot.slane %v4801, 1
  %v6119 = vrot.slane %v4804, 1
  %v6120 = vrot.slane %v4807, 1
  %v6121 = vrot.slane %v4810, 1
  %v6122 = vrot.slane %v4813, 1
  %v6123 = vrot.slane %v4816, 1
  %v6124 = vrot.slane %v4819, 1
  %v6125 = vunpack.i.l.s16 %v4774
  %v6126 = vunpack.i.h.s16 %v4774
  %v6127 = vunpack.i.l.s16 %v6109
  %v6128 = vunpack.i.l.s16 %v4777
  %v6129 = vunpack.i.h.s16 %v4777
  %v6130 = vunpack.i.l.s16 %v6110
  %v6131 = vunpack.i.l.s16 %v4780
  %v6132 = vunpack.i.h.s16 %v4780
  %v6133 = vunpack.i.l.s16 %v6111
  %v6134 = vunpack.i.l.s16 %v4783
  %v6135 = vunpack.i.h.s16 %v4783
  %v6136 = vunpack.i.l.s16 %v6112
  %v6137 = vunpack.i.l.s16 %v4786
  %v6138 = vunpack.i.h.s16 %v4786
  %v6139 = vunpack.i.l.s16 %v6113
  %v6140 = vunpack.i.l.s16 %v4789
  %v6141 = vunpack.i.h.s16 %v4789
  %v6142 = vunpack.i.l.s16 %v6114
  %v6143 = vunpack.i.l.s16 %v4792
  %v6144 = vunpack.i.h.s16 %v4792
  %v6145 = vunpack.i.l.s16 %v6115
  %v6146 = vunpack.i.l.s16 %v4795
  %v6147 = vunpack.i.h.s16 %v4795
  %v6148 = vunpack.i.l.s16 %v6116
  %v6149 = vunpack.i.l.s16 %v4798
  %v6150 = vunpack.i.h.s16 %v4798
  %v6151 = vunpack.i.l.s16 %v6117
  %v6152 = vunpack.i.l.s16 %v4801
  %v6153 = vunpack.i.h.s16 %v4801
  %v6154 = vunpack.i.l.s16 %v6118
  %v6155 = vunpack.i.l.s16 %v4804
  %v6156 = vunpack.i.h.s16 %v4804
  %v6157 = vunpack.i.l.s16 %v6119
  %v6158 = vunpack.i.l.s16 %v4807
  %v6159 = vunpack.i.h.s16 %v4807
  %v6160 = vunpack.i.l.s16 %v6120
  %v6161 = vunpack.i.l.s16 %v4810
  %v6162 = vunpack.i.h.s16 %v4810
  %v6163 = vunpack.i.l.s16 %v6121
  %v6164 = vunpack.i.l.s16 %v4813
  %v6165 = vunpack.i.h.s16 %v4813
  %v6166 = vunpack.i.l.s16 %v6122
  %v6167 = vunpack.i.l.s16 %v4816
  %v6168 = vunpack.i.h.s16 %v4816
  %v6169 = vunpack.i.l.s16 %v6123
  %v6170 = vunpack.i.l.s16 %v4819
  %v6171 = vunpack.i.h.s16 %v4819
  %v6172 = vunpack.i.l.s16 %v6124
  %v6173 = vpack.i.b16 %v6126, %v6125
  %v6174 = vpack.i.b16 %v6128, %v6127
  %v6175 = vpack.i.b16 %v6130, %v6129
  %v6176 = vpack.i.b16 %v6132, %v6131
  %v6177 = vpack.i.b16 %v6134, %v6133
  %v6178 = vpack.i.b16 %v6136, %v6135
  %v6179 = vpack.i.b16 %v6138, %v6137
  %v6180 = vpack.i.b16 %v6140, %v6139
  %v6181 = vpack.i.b16 %v6142, %v6141
  %v6182 = vpack.i.b16 %v6144, %v6143
  %v6183 = vpack.i.b16 %v6146, %v6145
  %v6184 = vpack.i.b16 %v6148, %v6147
  %v6185 = vpack.i.b16 %v6150, %v6149
  %v6186 = vpack.i.b16 %v6152, %v6151
  %v6187 = vpack.i.b16 %v6154, %v6153
  %v6188 = vpack.i.b16 %v6156, %v6155
  %v6189 = vpack.i.b16 %v6158, %v6157
  %v6190 = vpack.i.b16 %v6160, %v6159
  %v6191 = vpack.i.b16 %v6162, %v6161
  %v6192 = vpack.i.b16 %v6164, %v6163
  %v6193 = vpack.i.b16 %v6166, %v6165
  %v6194 = vpack.i.b16 %v6168, %v6167
  %v6195 = vpack.i.b16 %v6170, %v6169
  %v6196 = vpack.i.b16 %v6172, %v6171
  %6197 = vst [vmem:[#allocation1] ss:$9 sm:$0xff] %v5954
  %s6198 = scalar_lea.vmem [#allocation1], 1
  %6199 = vst [vmem:[%s6198] ss:$9 sm:$0xff] %v5955
  %s6200 = scalar_lea.vmem [#allocation1], 2
  %6201 = vst [vmem:[%s6200] ss:$9 sm:$0xff] %v5956
  %s6202 = scalar_lea.vmem [#allocation1], 3
  %6203 = vst [vmem:[%s6202] ss:$9 sm:$0xff] %v5957
  %s6204 = scalar_lea.vmem [#allocation1], 4
  %6205 = vst [vmem:[%s6204] ss:$9 sm:$0xff] %v5958
  %s6206 = scalar_lea.vmem [#allocation1], 5
  %6207 = vst [vmem:[%s6206] ss:$9 sm:$0xff] %v5959
  %s6208 = scalar_lea.vmem [#allocation1], 6
  %6209 = vst [vmem:[%s6208] ss:$9 sm:$0xff] %v5960
  %s6210 = scalar_lea.vmem [#allocation1], 7
  %6211 = vst [vmem:[%s6210] ss:$9 sm:$0xff] %v5961
  %v6212 = vld [vmem:[#allocation1] sm:$0xff]
  %6213 = vst [vmem:[#allocation1] ss:$9 sm:$0xff] %v5962
  %6214 = vst [vmem:[%s6198] ss:$9 sm:$0xff] %v5963
  %6215 = vst [vmem:[%s6200] ss:$9 sm:$0xff] %v5964
  %6216 = vst [vmem:[%s6202] ss:$9 sm:$0xff] %v5965
  %6217 = vst [vmem:[%s6204] ss:$9 sm:$0xff] %v5966
  %6218 = vst [vmem:[%s6206] ss:$9 sm:$0xff] %v5967
  %6219 = vst [vmem:[%s6208] ss:$9 sm:$0xff] %v5968
  %6220 = vst [vmem:[%s6210] ss:$9 sm:$0xff] %v5969
  %v6221 = vld [vmem:[#allocation1] sm:$0xff]
  %6222 = vst [vmem:[#allocation1] ss:$9 sm:$0xff] %v5970
  %6223 = vst [vmem:[%s6198] ss:$9 sm:$0xff] %v5971
  %6224 = vst [vmem:[%s6200] ss:$9 sm:$0xff] %v5972
  %6225 = vst [vmem:[%s6202] ss:$9 sm:$0xff] %v5973
  %6226 = vst [vmem:[%s6204] ss:$9 sm:$0xff] %v5974
  %6227 = vst [vmem:[%s6206] ss:$9 sm:$0xff] %v5975
  %6228 = vst [vmem:[%s6208] ss:$9 sm:$0xff] %v5976
  %6229 = vst [vmem:[%s6210] ss:$9 sm:$0xff] %v5977
  %v6230 = vld [vmem:[#allocation1] sm:$0xff]
  %6232 = vst [vmem:[#allocation1] ss:$9 sm:$0xff] %v6173
  %6234 = vst [vmem:[%s6198] ss:$9 sm:$0xff] %v6174
  %6236 = vst [vmem:[%s6200] ss:$9 sm:$0xff] %v6175
  %6238 = vst [vmem:[%s6202] ss:$9 sm:$0xff] %v6176
  %6240 = vst [vmem:[%s6204] ss:$9 sm:$0xff] %v6177
  %6242 = vst [vmem:[%s6206] ss:$9 sm:$0xff] %v6178
  %6244 = vst [vmem:[%s6208] ss:$9 sm:$0xff] %v6179
  %6246 = vst [vmem:[%s6210] ss:$9 sm:$0xff] %v6180
  %v6247 = vld [vmem:[#allocation1] sm:$0xff]
  %6249 = vst [vmem:[#allocation1] ss:$9 sm:$0xff] %v6181
  %6251 = vst [vmem:[%s6198] ss:$9 sm:$0xff] %v6182
  %6253 = vst [vmem:[%s6200] ss:$9 sm:$0xff] %v6183
  %6255 = vst [vmem:[%s6202] ss:$9 sm:$0xff] %v6184
  %6257 = vst [vmem:[%s6204] ss:$9 sm:$0xff] %v6185
  %6259 = vst [vmem:[%s6206] ss:$9 sm:$0xff] %v6186
  %6261 = vst [vmem:[%s6208] ss:$9 sm:$0xff] %v6187
  %6263 = vst [vmem:[%s6210] ss:$9 sm:$0xff] %v6188
  %v6264 = vld [vmem:[#allocation1] sm:$0xff]
  %6266 = vst [vmem:[#allocation1] ss:$9 sm:$0xff] %v6189
  %6268 = vst [vmem:[%s6198] ss:$9 sm:$0xff] %v6190
  %6270 = vst [vmem:[%s6200] ss:$9 sm:$0xff] %v6191
  %6272 = vst [vmem:[%s6202] ss:$9 sm:$0xff] %v6192
  %6274 = vst [vmem:[%s6204] ss:$9 sm:$0xff] %v6193
  %6276 = vst [vmem:[%s6206] ss:$9 sm:$0xff] %v6194
  %6278 = vst [vmem:[%s6208] ss:$9 sm:$0xff] %v6195
  %6280 = vst [vmem:[%s6210] ss:$9 sm:$0xff] %v6196
  %v6281 = vld [vmem:[#allocation1] sm:$0xff]
  %6288 = vmatpush.bf16.msra.mxu0 0
  %6289 = vmatpush.bf16.msra.mxu0 0
  %6290 = vmatpush.bf16.msra.mxu0 %v6281
  %6291 = vmatpush.bf16.msra.mxu0 %v6264
  %6292 = vmatpush.bf16.msra.mxu0 %v6247
  %6293 = vmatpush.bf16.msra.mxu0 %v6230
  %6294 = vmatpush.bf16.msra.mxu0 %v6221
  %6295 = vmatpush.bf16.msra.mxu0 %v6212
  %6296 = vmatmul.bf16.gmra.mxu0 %v5169
  %v6297 = vpop.f32.mrf.mxu0
  %v6298 = vadd.f32 0.0, %v6297
  %v6299 = vpop.f32.mrf.mxu0
  %v6300 = vadd.f32 0.0, %v6299
  %6301 = vdwg.mxu0
  %6304 = vrot.lane.b32.xlu0 %v6298, 112
  %v6305 = vpop.permute.xlu0 %6304
  %6306 = vrot.lane.b32.xlu0 %v6300, 112
  %v6307 = vpop.permute.xlu0 %6306
  %v6310 = vmax.f32 %v6298, %v6305
  %v6311 = vmax.f32 %v6300, %v6307
  %v6312 = vmax.f32 %v6091, %v6310
  %v6313 = vmax.f32 %v6092, %v6311
  %v6314 = vadd.f32 %v6312, %v5419
  %v6315 = vadd.f32 %v6313, %v5424
  %v6316 = vmax.f32 %v6314, 0.0
  %v6317 = vmax.f32 %v6315, 0.0
  %v6334 = vrot.slane %v4822, 1
  %v6335 = vrot.slane %v4825, 1
  %v6336 = vrot.slane %v4828, 1
  %v6337 = vrot.slane %v4831, 1
  %v6338 = vrot.slane %v4834, 1
  %v6339 = vrot.slane %v4837, 1
  %v6340 = vrot.slane %v4840, 1
  %v6341 = vrot.slane %v4843, 1
  %v6342 = vrot.slane %v4846, 1
  %v6343 = vrot.slane %v4849, 1
  %v6344 = vrot.slane %v4852, 1
  %v6345 = vrot.slane %v4855, 1
  %v6346 = vrot.slane %v4858, 1
  %v6347 = vrot.slane %v4861, 1
  %v6348 = vrot.slane %v4864, 1
  %v6349 = vrot.slane %v4867, 1
  %v6350 = vunpack.i.l.s16 %v4822
  %v6351 = vunpack.i.h.s16 %v4822
  %v6352 = vunpack.i.l.s16 %v6334
  %v6353 = vunpack.i.l.s16 %v4825
  %v6354 = vunpack.i.h.s16 %v4825
  %v6355 = vunpack.i.l.s16 %v6335
  %v6356 = vunpack.i.l.s16 %v4828
  %v6357 = vunpack.i.h.s16 %v4828
  %v6358 = vunpack.i.l.s16 %v6336
  %v6359 = vunpack.i.l.s16 %v4831
  %v6360 = vunpack.i.h.s16 %v4831
  %v6361 = vunpack.i.l.s16 %v6337
  %v6362 = vunpack.i.l.s16 %v4834
  %v6363 = vunpack.i.h.s16 %v4834
  %v6364 = vunpack.i.l.s16 %v6338
  %v6365 = vunpack.i.l.s16 %v4837
  %v6366 = vunpack.i.h.s16 %v4837
  %v6367 = vunpack.i.l.s16 %v6339
  %v6368 = vunpack.i.l.s16 %v4840
  %v6369 = vunpack.i.h.s16 %v4840
  %v6370 = vunpack.i.l.s16 %v6340
  %v6371 = vunpack.i.l.s16 %v4843
  %v6372 = vunpack.i.h.s16 %v4843
  %v6373 = vunpack.i.l.s16 %v6341
  %v6374 = vunpack.i.l.s16 %v4846
  %v6375 = vunpack.i.h.s16 %v4846
  %v6376 = vunpack.i.l.s16 %v6342
  %v6377 = vunpack.i.l.s16 %v4849
  %v6378 = vunpack.i.h.s16 %v4849
  %v6379 = vunpack.i.l.s16 %v6343
  %v6380 = vunpack.i.l.s16 %v4852
  %v6381 = vunpack.i.h.s16 %v4852
  %v6382 = vunpack.i.l.s16 %v6344
  %v6383 = vunpack.i.l.s16 %v4855
  %v6384 = vunpack.i.h.s16 %v4855
  %v6385 = vunpack.i.l.s16 %v6345
  %v6386 = vunpack.i.l.s16 %v4858
  %v6387 = vunpack.i.h.s16 %v4858
  %v6388 = vunpack.i.l.s16 %v6346
  %v6389 = vunpack.i.l.s16 %v4861
  %v6390 = vunpack.i.h.s16 %v4861
  %v6391 = vunpack.i.l.s16 %v6347
  %v6392 = vunpack.i.l.s16 %v4864
  %v6393 = vunpack.i.h.s16 %v4864
  %v6394 = vunpack.i.l.s16 %v6348
  %v6395 = vunpack.i.l.s16 %v4867
  %v6396 = vunpack.i.h.s16 %v4867
  %v6397 = vunpack.i.l.s16 %v6349
  %v6398 = vpack.i.b16 %v6351, %v6350
  %v6399 = vpack.i.b16 %v6353, %v6352
  %v6400 = vpack.i.b16 %v6355, %v6354
  %v6401 = vpack.i.b16 %v6357, %v6356
  %v6402 = vpack.i.b16 %v6359, %v6358
  %v6403 = vpack.i.b16 %v6361, %v6360
  %v6404 = vpack.i.b16 %v6363, %v6362
  %v6405 = vpack.i.b16 %v6365, %v6364
  %v6406 = vpack.i.b16 %v6367, %v6366
  %v6407 = vpack.i.b16 %v6369, %v6368
  %v6408 = vpack.i.b16 %v6371, %v6370
  %v6409 = vpack.i.b16 %v6373, %v6372
  %v6410 = vpack.i.b16 %v6375, %v6374
  %v6411 = vpack.i.b16 %v6377, %v6376
  %v6412 = vpack.i.b16 %v6379, %v6378
  %v6413 = vpack.i.b16 %v6381, %v6380
  %v6414 = vpack.i.b16 %v6383, %v6382
  %v6415 = vpack.i.b16 %v6385, %v6384
  %v6416 = vpack.i.b16 %v6387, %v6386
  %v6417 = vpack.i.b16 %v6389, %v6388
  %v6418 = vpack.i.b16 %v6391, %v6390
  %v6419 = vpack.i.b16 %v6393, %v6392
  %v6420 = vpack.i.b16 %v6395, %v6394
  %v6421 = vpack.i.b16 %v6397, %v6396
  %6422 = vst [vmem:[#allocation1] ss:$9 sm:$0xff] %v6173
  %s6423 = scalar_lea.vmem [#allocation1], 1
  %6424 = vst [vmem:[%s6423] ss:$9 sm:$0xff] %v6174
  %s6425 = scalar_lea.vmem [#allocation1], 2
  %6426 = vst [vmem:[%s6425] ss:$9 sm:$0xff] %v6175
  %s6427 = scalar_lea.vmem [#allocation1], 3
  %6428 = vst [vmem:[%s6427] ss:$9 sm:$0xff] %v6176
  %s6429 = scalar_lea.vmem [#allocation1], 4
  %6430 = vst [vmem:[%s6429] ss:$9 sm:$0xff] %v6177
  %s6431 = scalar_lea.vmem [#allocation1], 5
  %6432 = vst [vmem:[%s6431] ss:$9 sm:$0xff] %v6178
  %s6433 = scalar_lea.vmem [#allocation1], 6
  %6434 = vst [vmem:[%s6433] ss:$9 sm:$0xff] %v6179
  %s6435 = scalar_lea.vmem [#allocation1], 7
  %6436 = vst [vmem:[%s6435] ss:$9 sm:$0xff] %v6180
  %v6437 = vld [vmem:[#allocation1] sm:$0xff]
  %6438 = vst [vmem:[#allocation1] ss:$9 sm:$0xff] %v6181
  %6439 = vst [vmem:[%s6423] ss:$9 sm:$0xff] %v6182
  %6440 = vst [vmem:[%s6425] ss:$9 sm:$0xff] %v6183
  %6441 = vst [vmem:[%s6427] ss:$9 sm:$0xff] %v6184
  %6442 = vst [vmem:[%s6429] ss:$9 sm:$0xff] %v6185
  %6443 = vst [vmem:[%s6431] ss:$9 sm:$0xff] %v6186
  %6444 = vst [vmem:[%s6433] ss:$9 sm:$0xff] %v6187
  %6445 = vst [vmem:[%s6435] ss:$9 sm:$0xff] %v6188
  %v6446 = vld [vmem:[#allocation1] sm:$0xff]
  %6447 = vst [vmem:[#allocation1] ss:$9 sm:$0xff] %v6189
  %6448 = vst [vmem:[%s6423] ss:$9 sm:$0xff] %v6190
  %6449 = vst [vmem:[%s6425] ss:$9 sm:$0xff] %v6191
  %6450 = vst [vmem:[%s6427] ss:$9 sm:$0xff] %v6192
  %6451 = vst [vmem:[%s6429] ss:$9 sm:$0xff] %v6193
  %6452 = vst [vmem:[%s6431] ss:$9 sm:$0xff] %v6194
  %6453 = vst [vmem:[%s6433] ss:$9 sm:$0xff] %v6195
  %6454 = vst [vmem:[%s6435] ss:$9 sm:$0xff] %v6196
  %v6455 = vld [vmem:[#allocation1] sm:$0xff]
  %6457 = vst [vmem:[#allocation1] ss:$9 sm:$0xff] %v6398
  %6459 = vst [vmem:[%s6423] ss:$9 sm:$0xff] %v6399
  %6461 = vst [vmem:[%s6425] ss:$9 sm:$0xff] %v6400
  %6463 = vst [vmem:[%s6427] ss:$9 sm:$0xff] %v6401
  %6465 = vst [vmem:[%s6429] ss:$9 sm:$0xff] %v6402
  %6467 = vst [vmem:[%s6431] ss:$9 sm:$0xff] %v6403
  %6469 = vst [vmem:[%s6433] ss:$9 sm:$0xff] %v6404
  %6471 = vst [vmem:[%s6435] ss:$9 sm:$0xff] %v6405
  %v6472 = vld [vmem:[#allocation1] sm:$0xff]
  %6474 = vst [vmem:[#allocation1] ss:$9 sm:$0xff] %v6406
  %6476 = vst [vmem:[%s6423] ss:$9 sm:$0xff] %v6407
  %6478 = vst [vmem:[%s6425] ss:$9 sm:$0xff] %v6408
  %6480 = vst [vmem:[%s6427] ss:$9 sm:$0xff] %v6409
  %6482 = vst [vmem:[%s6429] ss:$9 sm:$0xff] %v6410
  %6484 = vst [vmem:[%s6431] ss:$9 sm:$0xff] %v6411
  %6486 = vst [vmem:[%s6433] ss:$9 sm:$0xff] %v6412
  %6488 = vst [vmem:[%s6435] ss:$9 sm:$0xff] %v6413
  %v6489 = vld [vmem:[#allocation1] sm:$0xff]
  %6491 = vst [vmem:[#allocation1] ss:$9 sm:$0xff] %v6414
  %6493 = vst [vmem:[%s6423] ss:$9 sm:$0xff] %v6415
  %6495 = vst [vmem:[%s6425] ss:$9 sm:$0xff] %v6416
  %6497 = vst [vmem:[%s6427] ss:$9 sm:$0xff] %v6417
  %6499 = vst [vmem:[%s6429] ss:$9 sm:$0xff] %v6418
  %6501 = vst [vmem:[%s6431] ss:$9 sm:$0xff] %v6419
  %6503 = vst [vmem:[%s6433] ss:$9 sm:$0xff] %v6420
  %6505 = vst [vmem:[%s6435] ss:$9 sm:$0xff] %v6421
  %v6506 = vld [vmem:[#allocation1] sm:$0xff]
  %6513 = vmatpush.bf16.msra.mxu0 0
  %6514 = vmatpush.bf16.msra.mxu0 0
  %6515 = vmatpush.bf16.msra.mxu0 %v6506
  %6516 = vmatpush.bf16.msra.mxu0 %v6489
  %6517 = vmatpush.bf16.msra.mxu0 %v6472
  %6518 = vmatpush.bf16.msra.mxu0 %v6455
  %6519 = vmatpush.bf16.msra.mxu0 %v6446
  %6520 = vmatpush.bf16.msra.mxu0 %v6437
  %6521 = vmatmul.bf16.gmra.mxu0 %v5169
  %v6522 = vpop.f32.mrf.mxu0
  %v6523 = vadd.f32 0.0, %v6522
  %v6524 = vpop.f32.mrf.mxu0
  %v6525 = vadd.f32 0.0, %v6524
  %6526 = vdwg.mxu0
  %6529 = vrot.lane.b32.xlu0 %v6523, 112
  %v6530 = vpop.permute.xlu0 %6529
  %6531 = vrot.lane.b32.xlu0 %v6525, 112
  %v6532 = vpop.permute.xlu0 %6531
  %v6535 = vmax.f32 %v6523, %v6530
  %v6536 = vmax.f32 %v6525, %v6532
  %v6545 = vrot.slane %v4870, 1
  %v6546 = vrot.slane %v4873, 1
  %v6547 = vrot.slane %v4876, 1
  %v6548 = vrot.slane %v4879, 1
  %v6549 = vrot.slane %v4882, 1
  %v6550 = vrot.slane %v4885, 1
  %v6551 = vrot.slane %v4888, 1
  %v6552 = vrot.slane %v4891, 1
  %v6553 = vunpack.i.l.s16 %v4870
  %v6554 = vunpack.i.h.s16 %v4870
  %v6555 = vunpack.i.l.s16 %v6545
  %v6556 = vunpack.i.l.s16 %v4873
  %v6557 = vunpack.i.h.s16 %v4873
  %v6558 = vunpack.i.l.s16 %v6546
  %v6559 = vunpack.i.l.s16 %v4876
  %v6560 = vunpack.i.h.s16 %v4876
  %v6561 = vunpack.i.l.s16 %v6547
  %v6562 = vunpack.i.l.s16 %v4879
  %v6563 = vunpack.i.h.s16 %v4879
  %v6564 = vunpack.i.l.s16 %v6548
  %v6565 = vunpack.i.l.s16 %v4882
  %v6566 = vunpack.i.h.s16 %v4882
  %v6567 = vunpack.i.l.s16 %v6549
  %v6568 = vunpack.i.l.s16 %v4885
  %v6569 = vunpack.i.h.s16 %v4885
  %v6570 = vunpack.i.l.s16 %v6550
  %v6571 = vunpack.i.l.s16 %v4888
  %v6572 = vunpack.i.h.s16 %v4888
  %v6573 = vunpack.i.l.s16 %v6551
  %v6574 = vunpack.i.l.s16 %v4891
  %v6575 = vunpack.i.h.s16 %v4891
  %v6576 = vunpack.i.l.s16 %v6552
  %v6577 = vpack.i.b16 %v6554, %v6553
  %v6578 = vpack.i.b16 %v6556, %v6555
  %v6579 = vpack.i.b16 %v6558, %v6557
  %v6580 = vpack.i.b16 %v6560, %v6559
  %v6581 = vpack.i.b16 %v6562, %v6561
  %v6582 = vpack.i.b16 %v6564, %v6563
  %v6583 = vpack.i.b16 %v6566, %v6565
  %v6584 = vpack.i.b16 %v6568, %v6567
  %v6585 = vpack.i.b16 %v6570, %v6569
  %v6586 = vpack.i.b16 %v6572, %v6571
  %v6587 = vpack.i.b16 %v6574, %v6573
  %v6588 = vpack.i.b16 %v6576, %v6575
  %6589 = vst [vmem:[#allocation1] ss:$9 sm:$0xff] %v6398
  %s6590 = scalar_lea.vmem [#allocation1], 1
  %6591 = vst [vmem:[%s6590] ss:$9 sm:$0xff] %v6399
  %s6592 = scalar_lea.vmem [#allocation1], 2
  %6593 = vst [vmem:[%s6592] ss:$9 sm:$0xff] %v6400
  %s6594 = scalar_lea.vmem [#allocation1], 3
  %6595 = vst [vmem:[%s6594] ss:$9 sm:$0xff] %v6401
  %s6596 = scalar_lea.vmem [#allocation1], 4
  %6597 = vst [vmem:[%s6596] ss:$9 sm:$0xff] %v6402
  %s6598 = scalar_lea.vmem [#allocation1], 5
  %6599 = vst [vmem:[%s6598] ss:$9 sm:$0xff] %v6403
  %s6600 = scalar_lea.vmem [#allocation1], 6
  %6601 = vst [vmem:[%s6600] ss:$9 sm:$0xff] %v6404
  %s6602 = scalar_lea.vmem [#allocation1], 7
  %6603 = vst [vmem:[%s6602] ss:$9 sm:$0xff] %v6405
  %v6604 = vld [vmem:[#allocation1] sm:$0xff]
  %6605 = vst [vmem:[#allocation1] ss:$9 sm:$0xff] %v6406
  %6606 = vst [vmem:[%s6590] ss:$9 sm:$0xff] %v6407
  %6607 = vst [vmem:[%s6592] ss:$9 sm:$0xff] %v6408
  %6608 = vst [vmem:[%s6594] ss:$9 sm:$0xff] %v6409
  %6609 = vst [vmem:[%s6596] ss:$9 sm:$0xff] %v6410
  %6610 = vst [vmem:[%s6598] ss:$9 sm:$0xff] %v6411
  %6611 = vst [vmem:[%s6600] ss:$9 sm:$0xff] %v6412
  %6612 = vst [vmem:[%s6602] ss:$9 sm:$0xff] %v6413
  %v6613 = vld [vmem:[#allocation1] sm:$0xff]
  %6614 = vst [vmem:[#allocation1] ss:$9 sm:$0xff] %v6414
  %6615 = vst [vmem:[%s6590] ss:$9 sm:$0xff] %v6415
  %6616 = vst [vmem:[%s6592] ss:$9 sm:$0xff] %v6416
  %6617 = vst [vmem:[%s6594] ss:$9 sm:$0xff] %v6417
  %6618 = vst [vmem:[%s6596] ss:$9 sm:$0xff] %v6418
  %6619 = vst [vmem:[%s6598] ss:$9 sm:$0xff] %v6419
  %6620 = vst [vmem:[%s6600] ss:$9 sm:$0xff] %v6420
  %6621 = vst [vmem:[%s6602] ss:$9 sm:$0xff] %v6421
  %v6622 = vld [vmem:[#allocation1] sm:$0xff]
  %6624 = vst [vmem:[#allocation1] ss:$9 sm:$0xff] %v6577
  %6626 = vst [vmem:[%s6590] ss:$9 sm:$0xff] %v6578
  %6628 = vst [vmem:[%s6592] ss:$9 sm:$0xff] %v6579
  %6630 = vst [vmem:[%s6594] ss:$9 sm:$0xff] %v6580
  %6632 = vst [vmem:[%s6596] ss:$9 sm:$0xff] %v6581
  %6634 = vst [vmem:[%s6598] ss:$9 sm:$0xff] %v6582
  %6636 = vst [vmem:[%s6600] ss:$9 sm:$0xff] %v6583
  %6638 = vst [vmem:[%s6602] ss:$9 sm:$0xff] %v6584
  %v6639 = vld [vmem:[#allocation1] sm:$0xff]
  %6641 = vst [vmem:[#allocation1] ss:$9 sm:$0xff] %v6585
  %6643 = vst [vmem:[%s6590] ss:$9 sm:$0xff] %v6586
  %6645 = vst [vmem:[%s6592] ss:$9 sm:$0xff] %v6587
  %6647 = vst [vmem:[%s6594] ss:$9 sm:$0xff] %v6588
  %6648 = vst [vmem:[%s6596] ss:$9 sm:$0xff] %v5022
  %6649 = vst [vmem:[%s6598] ss:$9 sm:$0xff] %v5023
  %6650 = vst [vmem:[%s6600] ss:$9 sm:$0xff] %v5024
  %6651 = vst [vmem:[%s6602] ss:$9 sm:$0xff] %v5022
  %v6652 = vld [vmem:[#allocation1] sm:$0xff]
  %6653 = vst [vmem:[#allocation1] ss:$9 sm:$0xff] %v5023
  %6654 = vst [vmem:[%s6590] ss:$9 sm:$0xff] %v5024
  %6655 = vst [vmem:[%s6592] ss:$9 sm:$0xff] %v5022
  %6656 = vst [vmem:[%s6594] ss:$9 sm:$0xff] %v5023
  %6657 = vst [vmem:[%s6596] ss:$9 sm:$0xff] %v5024
  %6658 = vst [vmem:[%s6598] ss:$9 sm:$0xff] %v5022
  %6659 = vst [vmem:[%s6600] ss:$9 sm:$0xff] %v5023
  %6660 = vst [vmem:[%s6602] ss:$9 sm:$0xff] %v5024
  %v6661 = vld [vmem:[#allocation1] sm:$0xff]
  %6668 = vmatpush.bf16.msra.mxu0 0
  %6669 = vmatpush.bf16.msra.mxu0 0
  %6670 = vmatpush.bf16.msra.mxu0 %v6661
  %6671 = vmatpush.bf16.msra.mxu0 %v6652
  %6672 = vmatpush.bf16.msra.mxu0 %v6639
  %6673 = vmatpush.bf16.msra.mxu0 %v6622
  %6674 = vmatpush.bf16.msra.mxu0 %v6613
  %6675 = vmatpush.bf16.msra.mxu0 %v6604
  %6676 = vmatmul.bf16.gmra.mxu0 %v5169
  %v6677 = vpop.f32.mrf.mxu0
  %v6678 = vadd.f32 0.0, %v6677
  %v6679 = vpop.f32.mrf.mxu0
  %v6680 = vadd.f32 0.0, %v6679
  %6681 = vdwg.mxu0
  %6684 = vrot.lane.b32.xlu0 %v6678, 112
  %v6685 = vpop.permute.xlu0 %6684
  %6686 = vrot.lane.b32.xlu0 %v6680, 112
  %v6687 = vpop.permute.xlu0 %6686
  %v6690 = vmax.f32 %v6678, %v6685
  %v6691 = vmax.f32 %v6680, %v6687
  %v6692 = vmax.f32 %v6535, %v6690
  %v6693 = vmax.f32 %v6536, %v6691
  %v6694 = vadd.f32 %v6692, %v5419
  %v6695 = vadd.f32 %v6693, %v5424
  %v6696 = vmax.f32 %v6694, 0.0
  %v6697 = vmax.f32 %v6695, 0.0
  %v6698 = vpack.c.bf16 %v5429, %v5428
  %v6699 = vpack.c.bf16 %v5873, %v5872
  %v6700 = vpack.c.bf16 %v6317, %v6316
  %v6701 = vpack.c.bf16 %v6697, %v6696
  %v6702 = vld [vmem:[%s7] sm:$0xf]
  %v6703 = vld [vmem:[%s7 + $0x4] sm:$0xf]
  %v6704 = vld [vmem:[%s8] sm:$0xff]
  %v6705 = vld [vmem:[%s8 + $0x8] sm:$0xff]
  %v6706 = vld [vmem:[%s8 + $0x10] sm:$0xff]
  %v6707 = vld [vmem:[%s8 + $0x18] sm:$0xff]
  %v6708 = vld [vmem:[%s9] sm:$0xff]
  %v6709 = vld [vmem:[%s9 + $0x8] sm:$0xff]
  %v6710 = vld [vmem:[%s9 + $0x10] sm:$0xff]
  %v6711 = vld [vmem:[%s9 + $0x18] sm:$0xff]
  %v6714 = vunpack.c.l.b16 %v6702
  %v6715 = vunpack.c.l.b16 %v6703
  %v6716 = vpack.c.b16 %v6715, %v6714
  %vm6718 = vcmask 130048
  %v6720 = vsel %vm6718, %v6698, 0
  %v6723 = vsel %vm6718, %v6699, 0
  %v6726 = vsel %vm6718, %v6700, 0
  %v6729 = vsel %vm6718, %v6701, 0
  %6731 = vmatpush.bf16.msra.mxu0 0
  %6732 = vmatpush.bf16.msra.mxu0 0
  %6733 = vmatpush.bf16.msra.mxu0 0
  %6734 = vmatpush.bf16.msra.mxu0 0
  %6735 = vmatpush.bf16.msra.mxu0 0
  %6736 = vmatpush.bf16.msra.mxu0 0
  %6737 = vmatpush.bf16.msra.mxu0 0
  %6738 = vmatpush.bf16.msra.mxu0 %v6716
  %6739 = vmatmul.bf16.gmra.mxu0 %v6720
  %v6740 = vpop.f32.mrf.mxu0
  %v6741 = vadd.f32 0.0, %v6740
  %v6742 = vpop.f32.mrf.mxu0
  %v6743 = vadd.f32 0.0, %v6742
  %6744 = vmatmul.bf16.gmra.mxu0 %v6723
  %v6745 = vpop.f32.mrf.mxu0
  %v6746 = vadd.f32 0.0, %v6745
  %v6747 = vpop.f32.mrf.mxu0
  %v6748 = vadd.f32 0.0, %v6747
  %6749 = vmatmul.bf16.gmra.mxu0 %v6726
  %v6750 = vpop.f32.mrf.mxu0
  %v6751 = vadd.f32 0.0, %v6750
  %v6752 = vpop.f32.mrf.mxu0
  %v6753 = vadd.f32 0.0, %v6752
  %6754 = vmatmul.bf16.gmra.mxu0 %v6729
  %v6755 = vpop.f32.mrf.mxu0
  %v6756 = vadd.f32 0.0, %v6755
  %v6757 = vpop.f32.mrf.mxu0
  %v6758 = vadd.f32 0.0, %v6757
  %6759 = vdwg.mxu0
  %v6760 = vpack.c.bf16 %v6741, %v6741
  %v6761 = vpack.c.bf16 %v6743, %v6743
  %v6762 = vpack.c.bf16 %v6746, %v6746
  %v6763 = vpack.c.bf16 %v6748, %v6748
  %v6764 = vpack.c.bf16 %v6751, %v6751
  %v6765 = vpack.c.bf16 %v6753, %v6753
  %v6766 = vpack.c.bf16 %v6756, %v6756
  %v6767 = vpack.c.bf16 %v6758, %v6758
  %v6776 = vrot.slane %v6760, 3
  %v6777 = vrot.slane %v6761, 3
  %v6778 = vrot.slane %v6762, 3
  %v6779 = vrot.slane %v6763, 3
  %v6780 = vrot.slane %v6764, 3
  %v6781 = vrot.slane %v6765, 3
  %v6782 = vrot.slane %v6766, 3
  %v6783 = vrot.slane %v6767, 3
  %v6786 = vsel %vm630, %v6760, %v6776
  %v6788 = vsel %vm635, %v6760, %v6776
  %v6790 = vrot.slane %v6788, 1
  %v6791 = vsel %vm639, %v6760, %v6776
  %v6793 = vrot.slane %v6791, 2
  %v6794 = vsel %vm643, %v6760, %v6776
  %v6796 = vrot.slane %v6794, 3
  %v6799 = vsel %vm630, %v6761, %v6777
  %v6801 = vsel %vm635, %v6761, %v6777
  %v6803 = vrot.slane %v6801, 1
  %v6804 = vsel %vm639, %v6761, %v6777
  %v6806 = vrot.slane %v6804, 2
  %v6807 = vsel %vm643, %v6761, %v6777
  %v6809 = vrot.slane %v6807, 3
  %v6812 = vsel %vm630, %v6762, %v6778
  %v6814 = vsel %vm635, %v6762, %v6778
  %v6816 = vrot.slane %v6814, 1
  %v6817 = vsel %vm639, %v6762, %v6778
  %v6819 = vrot.slane %v6817, 2
  %v6820 = vsel %vm643, %v6762, %v6778
  %v6822 = vrot.slane %v6820, 3
  %v6825 = vsel %vm630, %v6763, %v6779
  %v6827 = vsel %vm635, %v6763, %v6779
  %v6829 = vrot.slane %v6827, 1
  %v6830 = vsel %vm639, %v6763, %v6779
  %v6832 = vrot.slane %v6830, 2
  %v6833 = vsel %vm643, %v6763, %v6779
  %v6835 = vrot.slane %v6833, 3
  %v6838 = vsel %vm630, %v6764, %v6780
  %v6840 = vsel %vm635, %v6764, %v6780
  %v6842 = vrot.slane %v6840, 1
  %v6843 = vsel %vm639, %v6764, %v6780
  %v6845 = vrot.slane %v6843, 2
  %v6846 = vsel %vm643, %v6764, %v6780
  %v6848 = vrot.slane %v6846, 3
  %v6851 = vsel %vm630, %v6765, %v6781
  %v6853 = vsel %vm635, %v6765, %v6781
  %v6855 = vrot.slane %v6853, 1
  %v6856 = vsel %vm639, %v6765, %v6781
  %v6858 = vrot.slane %v6856, 2
  %v6859 = vsel %vm643, %v6765, %v6781
  %v6861 = vrot.slane %v6859, 3
  %v6864 = vsel %vm630, %v6766, %v6782
  %v6866 = vsel %vm635, %v6766, %v6782
  %v6868 = vrot.slane %v6866, 1
  %v6869 = vsel %vm639, %v6766, %v6782
  %v6871 = vrot.slane %v6869, 2
  %v6872 = vsel %vm643, %v6766, %v6782
  %v6874 = vrot.slane %v6872, 3
  %v6877 = vsel %vm630, %v6767, %v6783
  %v6879 = vsel %vm635, %v6767, %v6783
  %v6881 = vrot.slane %v6879, 1
  %v6882 = vsel %vm639, %v6767, %v6783
  %v6884 = vrot.slane %v6882, 2
  %v6885 = vsel %vm643, %v6767, %v6783
  %v6887 = vrot.slane %v6885, 3
  %v6888 = vunpack.i.l.s16 %v6786
  %v6889 = vunpack.i.h.s16 %v6786
  %v6890 = vunpack.i.l.s16 %v6790
  %v6891 = vunpack.i.h.s16 %v6790
  %v6892 = vunpack.i.l.s16 %v6793
  %v6893 = vunpack.i.h.s16 %v6793
  %v6894 = vunpack.i.l.s16 %v6796
  %v6895 = vunpack.i.h.s16 %v6796
  %v6896 = vunpack.i.l.s16 %v6799
  %v6897 = vunpack.i.h.s16 %v6799
  %v6898 = vunpack.i.l.s16 %v6803
  %v6899 = vunpack.i.h.s16 %v6803
  %v6900 = vunpack.i.l.s16 %v6806
  %v6901 = vunpack.i.h.s16 %v6806
  %v6902 = vunpack.i.l.s16 %v6809
  %v6903 = vunpack.i.h.s16 %v6809
  %v6904 = vunpack.i.l.s16 %v6812
  %v6905 = vunpack.i.h.s16 %v6812
  %v6906 = vunpack.i.l.s16 %v6816
  %v6907 = vunpack.i.h.s16 %v6816
  %v6908 = vunpack.i.l.s16 %v6819
  %v6909 = vunpack.i.h.s16 %v6819
  %v6910 = vunpack.i.l.s16 %v6822
  %v6911 = vunpack.i.h.s16 %v6822
  %v6912 = vunpack.i.l.s16 %v6825
  %v6913 = vunpack.i.h.s16 %v6825
  %v6914 = vunpack.i.l.s16 %v6829
  %v6915 = vunpack.i.h.s16 %v6829
  %v6916 = vunpack.i.l.s16 %v6832
  %v6917 = vunpack.i.h.s16 %v6832
  %v6918 = vunpack.i.l.s16 %v6835
  %v6919 = vunpack.i.h.s16 %v6835
  %v6920 = vunpack.i.l.s16 %v6838
  %v6921 = vunpack.i.h.s16 %v6838
  %v6922 = vunpack.i.l.s16 %v6842
  %v6923 = vunpack.i.h.s16 %v6842
  %v6924 = vunpack.i.l.s16 %v6845
  %v6925 = vunpack.i.h.s16 %v6845
  %v6926 = vunpack.i.l.s16 %v6848
  %v6927 = vunpack.i.h.s16 %v6848
  %v6928 = vunpack.i.l.s16 %v6851
  %v6929 = vunpack.i.h.s16 %v6851
  %v6930 = vunpack.i.l.s16 %v6855
  %v6931 = vunpack.i.h.s16 %v6855
  %v6932 = vunpack.i.l.s16 %v6858
  %v6933 = vunpack.i.h.s16 %v6858
  %v6934 = vunpack.i.l.s16 %v6861
  %v6935 = vunpack.i.h.s16 %v6861
  %v6936 = vunpack.i.l.s16 %v6864
  %v6937 = vunpack.i.h.s16 %v6864
  %v6938 = vunpack.i.l.s16 %v6868
  %v6939 = vunpack.i.h.s16 %v6868
  %v6940 = vunpack.i.l.s16 %v6871
  %v6941 = vunpack.i.h.s16 %v6871
  %v6942 = vunpack.i.l.s16 %v6874
  %v6943 = vunpack.i.h.s16 %v6874
  %v6944 = vunpack.i.l.s16 %v6877
  %v6945 = vunpack.i.h.s16 %v6877
  %v6946 = vunpack.i.l.s16 %v6881
  %v6947 = vunpack.i.h.s16 %v6881
  %v6948 = vunpack.i.l.s16 %v6884
  %v6949 = vunpack.i.h.s16 %v6884
  %v6950 = vunpack.i.l.s16 %v6887
  %v6951 = vunpack.i.h.s16 %v6887
  %v6952 = vpack.i.b16 %v6888, %v6888
  %v6953 = vpack.i.b16 %v6889, %v6889
  %v6954 = vpack.i.b16 %v6890, %v6890
  %v6955 = vpack.i.b16 %v6891, %v6891
  %v6956 = vpack.i.b16 %v6892, %v6892
  %v6957 = vpack.i.b16 %v6893, %v6893
  %v6958 = vpack.i.b16 %v6894, %v6894
  %v6959 = vpack.i.b16 %v6895, %v6895
  %v6960 = vpack.i.b16 %v6896, %v6896
  %v6961 = vpack.i.b16 %v6897, %v6897
  %v6962 = vpack.i.b16 %v6898, %v6898
  %v6963 = vpack.i.b16 %v6899, %v6899
  %v6964 = vpack.i.b16 %v6900, %v6900
  %v6965 = vpack.i.b16 %v6901, %v6901
  %v6966 = vpack.i.b16 %v6902, %v6902
  %v6967 = vpack.i.b16 %v6903, %v6903
  %v6968 = vpack.i.b16 %v6904, %v6904
  %v6969 = vpack.i.b16 %v6905, %v6905
  %v6970 = vpack.i.b16 %v6906, %v6906
  %v6971 = vpack.i.b16 %v6907, %v6907
  %v6972 = vpack.i.b16 %v6908, %v6908
  %v6973 = vpack.i.b16 %v6909, %v6909
  %v6974 = vpack.i.b16 %v6910, %v6910
  %v6975 = vpack.i.b16 %v6911, %v6911
  %v6976 = vpack.i.b16 %v6912, %v6912
  %v6977 = vpack.i.b16 %v6913, %v6913
  %v6978 = vpack.i.b16 %v6914, %v6914
  %v6979 = vpack.i.b16 %v6915, %v6915
  %v6980 = vpack.i.b16 %v6916, %v6916
  %v6981 = vpack.i.b16 %v6917, %v6917
  %v6982 = vpack.i.b16 %v6918, %v6918
  %v6983 = vpack.i.b16 %v6919, %v6919
  %v6984 = vpack.i.b16 %v6920, %v6920
  %v6985 = vpack.i.b16 %v6921, %v6921
  %v6986 = vpack.i.b16 %v6922, %v6922
  %v6987 = vpack.i.b16 %v6923, %v6923
  %v6988 = vpack.i.b16 %v6924, %v6924
  %v6989 = vpack.i.b16 %v6925, %v6925
  %v6990 = vpack.i.b16 %v6926, %v6926
  %v6991 = vpack.i.b16 %v6927, %v6927
  %v6992 = vpack.i.b16 %v6928, %v6928
  %v6993 = vpack.i.b16 %v6929, %v6929
  %v6994 = vpack.i.b16 %v6930, %v6930
  %v6995 = vpack.i.b16 %v6931, %v6931
  %v6996 = vpack.i.b16 %v6932, %v6932
  %v6997 = vpack.i.b16 %v6933, %v6933
  %v6998 = vpack.i.b16 %v6934, %v6934
  %v6999 = vpack.i.b16 %v6935, %v6935
  %v7000 = vpack.i.b16 %v6936, %v6936
  %v7001 = vpack.i.b16 %v6937, %v6937
  %v7002 = vpack.i.b16 %v6938, %v6938
  %v7003 = vpack.i.b16 %v6939, %v6939
  %v7004 = vpack.i.b16 %v6940, %v6940
  %v7005 = vpack.i.b16 %v6941, %v6941
  %v7006 = vpack.i.b16 %v6942, %v6942
  %v7007 = vpack.i.b16 %v6943, %v6943
  %v7008 = vpack.i.b16 %v6944, %v6944
  %v7009 = vpack.i.b16 %v6945, %v6945
  %v7010 = vpack.i.b16 %v6946, %v6946
  %v7011 = vpack.i.b16 %v6947, %v6947
  %v7012 = vpack.i.b16 %v6948, %v6948
  %v7013 = vpack.i.b16 %v6949, %v6949
  %v7014 = vpack.i.b16 %v6950, %v6950
  %v7015 = vpack.i.b16 %v6951, %v6951
  %v7016 = vperm.slane %v6952, 0
  %v7017 = vperm.slane %v6953, 0
  %v7018 = vperm.slane %v6954, 0
  %v7019 = vperm.slane %v6955, 0
  %v7020 = vperm.slane %v6956, 0
  %v7021 = vperm.slane %v6957, 0
  %v7022 = vperm.slane %v6958, 0
  %v7023 = vperm.slane %v6959, 0
  %v7024 = vperm.slane %v6960, 0
  %v7025 = vperm.slane %v6961, 0
  %v7026 = vperm.slane %v6962, 0
  %v7027 = vperm.slane %v6963, 0
  %v7028 = vperm.slane %v6964, 0
  %v7029 = vperm.slane %v6965, 0
  %v7030 = vperm.slane %v6966, 0
  %v7031 = vperm.slane %v6967, 0
  %v7032 = vperm.slane %v6968, 0
  %v7033 = vperm.slane %v6969, 0
  %v7034 = vperm.slane %v6970, 0
  %v7035 = vperm.slane %v6971, 0
  %v7036 = vperm.slane %v6972, 0
  %v7037 = vperm.slane %v6973, 0
  %v7038 = vperm.slane %v6974, 0
  %v7039 = vperm.slane %v6975, 0
  %v7040 = vperm.slane %v6976, 0
  %v7041 = vperm.slane %v6977, 0
  %v7042 = vperm.slane %v6978, 0
  %v7043 = vperm.slane %v6979, 0
  %v7044 = vperm.slane %v6980, 0
  %v7045 = vperm.slane %v6981, 0
  %v7046 = vperm.slane %v6982, 0
  %v7047 = vperm.slane %v6983, 0
  %v7048 = vperm.slane %v6984, 0
  %v7049 = vperm.slane %v6985, 0
  %v7050 = vperm.slane %v6986, 0
  %v7051 = vperm.slane %v6987, 0
  %v7052 = vperm.slane %v6988, 0
  %v7053 = vperm.slane %v6989, 0
  %v7054 = vperm.slane %v6990, 0
  %v7055 = vperm.slane %v6991, 0
  %v7056 = vperm.slane %v6992, 0
  %v7057 = vperm.slane %v6993, 0
  %v7058 = vperm.slane %v6994, 0
  %v7059 = vperm.slane %v6995, 0
  %v7060 = vperm.slane %v6996, 0
  %v7061 = vperm.slane %v6997, 0
  %v7062 = vperm.slane %v6998, 0
  %v7063 = vperm.slane %v6999, 0
  %v7064 = vperm.slane %v7000, 0
  %v7065 = vperm.slane %v7001, 0
  %v7066 = vperm.slane %v7002, 0
  %v7067 = vperm.slane %v7003, 0
  %v7068 = vperm.slane %v7004, 0
  %v7069 = vperm.slane %v7005, 0
  %v7070 = vperm.slane %v7006, 0
  %v7071 = vperm.slane %v7007, 0
  %v7072 = vperm.slane %v7008, 0
  %v7073 = vperm.slane %v7009, 0
  %v7074 = vperm.slane %v7010, 0
  %v7075 = vperm.slane %v7011, 0
  %v7076 = vperm.slane %v7012, 0
  %v7077 = vperm.slane %v7013, 0
  %v7078 = vperm.slane %v7014, 0
  %v7079 = vperm.slane %v7015, 0
  %7144 = vrot.lane.b32.xlu0 %v7016, 120
  %v7145 = vpop.permute.xlu0 %7144
  %7146 = vrot.lane.b32.xlu0 %v7017, 120
  %v7147 = vpop.permute.xlu0 %7146
  %7148 = vrot.lane.b32.xlu0 %v7018, 120
  %v7149 = vpop.permute.xlu0 %7148
  %7150 = vrot.lane.b32.xlu0 %v7019, 120
  %v7151 = vpop.permute.xlu0 %7150
  %7152 = vrot.lane.b32.xlu0 %v7020, 120
  %v7153 = vpop.permute.xlu0 %7152
  %7154 = vrot.lane.b32.xlu0 %v7021, 120
  %v7155 = vpop.permute.xlu0 %7154
  %7156 = vrot.lane.b32.xlu0 %v7022, 120
  %v7157 = vpop.permute.xlu0 %7156
  %7158 = vrot.lane.b32.xlu0 %v7023, 120
  %v7159 = vpop.permute.xlu0 %7158
  %7160 = vrot.lane.b32.xlu0 %v7024, 120
  %v7161 = vpop.permute.xlu0 %7160
  %7162 = vrot.lane.b32.xlu0 %v7025, 120
  %v7163 = vpop.permute.xlu0 %7162
  %7164 = vrot.lane.b32.xlu0 %v7026, 120
  %v7165 = vpop.permute.xlu0 %7164
  %7166 = vrot.lane.b32.xlu0 %v7027, 120
  %v7167 = vpop.permute.xlu0 %7166
  %7168 = vrot.lane.b32.xlu0 %v7028, 120
  %v7169 = vpop.permute.xlu0 %7168
  %7170 = vrot.lane.b32.xlu0 %v7029, 120
  %v7171 = vpop.permute.xlu0 %7170
  %7172 = vrot.lane.b32.xlu0 %v7030, 120
  %v7173 = vpop.permute.xlu0 %7172
  %7174 = vrot.lane.b32.xlu0 %v7031, 120
  %v7175 = vpop.permute.xlu0 %7174
  %7176 = vrot.lane.b32.xlu0 %v7032, 120
  %v7177 = vpop.permute.xlu0 %7176
  %7178 = vrot.lane.b32.xlu0 %v7033, 120
  %v7179 = vpop.permute.xlu0 %7178
  %7180 = vrot.lane.b32.xlu0 %v7034, 120
  %v7181 = vpop.permute.xlu0 %7180
  %7182 = vrot.lane.b32.xlu0 %v7035, 120
  %v7183 = vpop.permute.xlu0 %7182
  %7184 = vrot.lane.b32.xlu0 %v7036, 120
  %v7185 = vpop.permute.xlu0 %7184
  %7186 = vrot.lane.b32.xlu0 %v7037, 120
  %v7187 = vpop.permute.xlu0 %7186
  %7188 = vrot.lane.b32.xlu0 %v7038, 120
  %v7189 = vpop.permute.xlu0 %7188
  %7190 = vrot.lane.b32.xlu0 %v7039, 120
  %v7191 = vpop.permute.xlu0 %7190
  %7192 = vrot.lane.b32.xlu0 %v7040, 120
  %v7193 = vpop.permute.xlu0 %7192
  %7194 = vrot.lane.b32.xlu0 %v7041, 120
  %v7195 = vpop.permute.xlu0 %7194
  %7196 = vrot.lane.b32.xlu0 %v7042, 120
  %v7197 = vpop.permute.xlu0 %7196
  %7198 = vrot.lane.b32.xlu0 %v7043, 120
  %v7199 = vpop.permute.xlu0 %7198
  %7200 = vrot.lane.b32.xlu0 %v7044, 120
  %v7201 = vpop.permute.xlu0 %7200
  %7202 = vrot.lane.b32.xlu0 %v7045, 120
  %v7203 = vpop.permute.xlu0 %7202
  %7204 = vrot.lane.b32.xlu0 %v7046, 120
  %v7205 = vpop.permute.xlu0 %7204
  %7206 = vrot.lane.b32.xlu0 %v7047, 120
  %v7207 = vpop.permute.xlu0 %7206
  %7208 = vrot.lane.b32.xlu0 %v7048, 120
  %v7209 = vpop.permute.xlu0 %7208
  %7210 = vrot.lane.b32.xlu0 %v7049, 120
  %v7211 = vpop.permute.xlu0 %7210
  %7212 = vrot.lane.b32.xlu0 %v7050, 120
  %v7213 = vpop.permute.xlu0 %7212
  %7214 = vrot.lane.b32.xlu0 %v7051, 120
  %v7215 = vpop.permute.xlu0 %7214
  %7216 = vrot.lane.b32.xlu0 %v7052, 120
  %v7217 = vpop.permute.xlu0 %7216
  %7218 = vrot.lane.b32.xlu0 %v7053, 120
  %v7219 = vpop.permute.xlu0 %7218
  %7220 = vrot.lane.b32.xlu0 %v7054, 120
  %v7221 = vpop.permute.xlu0 %7220
  %7222 = vrot.lane.b32.xlu0 %v7055, 120
  %v7223 = vpop.permute.xlu0 %7222
  %7224 = vrot.lane.b32.xlu0 %v7056, 120
  %v7225 = vpop.permute.xlu0 %7224
  %7226 = vrot.lane.b32.xlu0 %v7057, 120
  %v7227 = vpop.permute.xlu0 %7226
  %7228 = vrot.lane.b32.xlu0 %v7058, 120
  %v7229 = vpop.permute.xlu0 %7228
  %7230 = vrot.lane.b32.xlu0 %v7059, 120
  %v7231 = vpop.permute.xlu0 %7230
  %7232 = vrot.lane.b32.xlu0 %v7060, 120
  %v7233 = vpop.permute.xlu0 %7232
  %7234 = vrot.lane.b32.xlu0 %v7061, 120
  %v7235 = vpop.permute.xlu0 %7234
  %7236 = vrot.lane.b32.xlu0 %v7062, 120
  %v7237 = vpop.permute.xlu0 %7236
  %7238 = vrot.lane.b32.xlu0 %v7063, 120
  %v7239 = vpop.permute.xlu0 %7238
  %7240 = vrot.lane.b32.xlu0 %v7064, 120
  %v7241 = vpop.permute.xlu0 %7240
  %7242 = vrot.lane.b32.xlu0 %v7065, 120
  %v7243 = vpop.permute.xlu0 %7242
  %7244 = vrot.lane.b32.xlu0 %v7066, 120
  %v7245 = vpop.permute.xlu0 %7244
  %7246 = vrot.lane.b32.xlu0 %v7067, 120
  %v7247 = vpop.permute.xlu0 %7246
  %7248 = vrot.lane.b32.xlu0 %v7068, 120
  %v7249 = vpop.permute.xlu0 %7248
  %7250 = vrot.lane.b32.xlu0 %v7069, 120
  %v7251 = vpop.permute.xlu0 %7250
  %7252 = vrot.lane.b32.xlu0 %v7070, 120
  %v7253 = vpop.permute.xlu0 %7252
  %7254 = vrot.lane.b32.xlu0 %v7071, 120
  %v7255 = vpop.permute.xlu0 %7254
  %7256 = vrot.lane.b32.xlu0 %v7072, 120
  %v7257 = vpop.permute.xlu0 %7256
  %7258 = vrot.lane.b32.xlu0 %v7073, 120
  %v7259 = vpop.permute.xlu0 %7258
  %7260 = vrot.lane.b32.xlu0 %v7074, 120
  %v7261 = vpop.permute.xlu0 %7260
  %7262 = vrot.lane.b32.xlu0 %v7075, 120
  %v7263 = vpop.permute.xlu0 %7262
  %7264 = vrot.lane.b32.xlu0 %v7076, 120
  %v7265 = vpop.permute.xlu0 %7264
  %7266 = vrot.lane.b32.xlu0 %v7077, 120
  %v7267 = vpop.permute.xlu0 %7266
  %7268 = vrot.lane.b32.xlu0 %v7078, 120
  %v7269 = vpop.permute.xlu0 %7268
  %7270 = vrot.lane.b32.xlu0 %v7079, 120
  %v7271 = vpop.permute.xlu0 %7270
  %7336 = vrot.lane.b32.xlu0 %v7016, 112
  %v7337 = vpop.permute.xlu0 %7336
  %7338 = vrot.lane.b32.xlu0 %v7017, 112
  %v7339 = vpop.permute.xlu0 %7338
  %7340 = vrot.lane.b32.xlu0 %v7018, 112
  %v7341 = vpop.permute.xlu0 %7340
  %7342 = vrot.lane.b32.xlu0 %v7019, 112
  %v7343 = vpop.permute.xlu0 %7342
  %7344 = vrot.lane.b32.xlu0 %v7020, 112
  %v7345 = vpop.permute.xlu0 %7344
  %7346 = vrot.lane.b32.xlu0 %v7021, 112
  %v7347 = vpop.permute.xlu0 %7346
  %7348 = vrot.lane.b32.xlu0 %v7022, 112
  %v7349 = vpop.permute.xlu0 %7348
  %7350 = vrot.lane.b32.xlu0 %v7023, 112
  %v7351 = vpop.permute.xlu0 %7350
  %7352 = vrot.lane.b32.xlu0 %v7024, 112
  %v7353 = vpop.permute.xlu0 %7352
  %7354 = vrot.lane.b32.xlu0 %v7025, 112
  %v7355 = vpop.permute.xlu0 %7354
  %7356 = vrot.lane.b32.xlu0 %v7026, 112
  %v7357 = vpop.permute.xlu0 %7356
  %7358 = vrot.lane.b32.xlu0 %v7027, 112
  %v7359 = vpop.permute.xlu0 %7358
  %7360 = vrot.lane.b32.xlu0 %v7028, 112
  %v7361 = vpop.permute.xlu0 %7360
  %7362 = vrot.lane.b32.xlu0 %v7029, 112
  %v7363 = vpop.permute.xlu0 %7362
  %7364 = vrot.lane.b32.xlu0 %v7030, 112
  %v7365 = vpop.permute.xlu0 %7364
  %7366 = vrot.lane.b32.xlu0 %v7031, 112
  %v7367 = vpop.permute.xlu0 %7366
  %7368 = vrot.lane.b32.xlu0 %v7032, 112
  %v7369 = vpop.permute.xlu0 %7368
  %7370 = vrot.lane.b32.xlu0 %v7033, 112
  %v7371 = vpop.permute.xlu0 %7370
  %7372 = vrot.lane.b32.xlu0 %v7034, 112
  %v7373 = vpop.permute.xlu0 %7372
  %7374 = vrot.lane.b32.xlu0 %v7035, 112
  %v7375 = vpop.permute.xlu0 %7374
  %7376 = vrot.lane.b32.xlu0 %v7036, 112
  %v7377 = vpop.permute.xlu0 %7376
  %7378 = vrot.lane.b32.xlu0 %v7037, 112
  %v7379 = vpop.permute.xlu0 %7378
  %7380 = vrot.lane.b32.xlu0 %v7038, 112
  %v7381 = vpop.permute.xlu0 %7380
  %7382 = vrot.lane.b32.xlu0 %v7039, 112
  %v7383 = vpop.permute.xlu0 %7382
  %7384 = vrot.lane.b32.xlu0 %v7040, 112
  %v7385 = vpop.permute.xlu0 %7384
  %7386 = vrot.lane.b32.xlu0 %v7041, 112
  %v7387 = vpop.permute.xlu0 %7386
  %7388 = vrot.lane.b32.xlu0 %v7042, 112
  %v7389 = vpop.permute.xlu0 %7388
  %7390 = vrot.lane.b32.xlu0 %v7043, 112
  %v7391 = vpop.permute.xlu0 %7390
  %7392 = vrot.lane.b32.xlu0 %v7044, 112
  %v7393 = vpop.permute.xlu0 %7392
  %7394 = vrot.lane.b32.xlu0 %v7045, 112
  %v7395 = vpop.permute.xlu0 %7394
  %7396 = vrot.lane.b32.xlu0 %v7046, 112
  %v7397 = vpop.permute.xlu0 %7396
  %7398 = vrot.lane.b32.xlu0 %v7047, 112
  %v7399 = vpop.permute.xlu0 %7398
  %7400 = vrot.lane.b32.xlu0 %v7048, 112
  %v7401 = vpop.permute.xlu0 %7400
  %7402 = vrot.lane.b32.xlu0 %v7049, 112
  %v7403 = vpop.permute.xlu0 %7402
  %7404 = vrot.lane.b32.xlu0 %v7050, 112
  %v7405 = vpop.permute.xlu0 %7404
  %7406 = vrot.lane.b32.xlu0 %v7051, 112
  %v7407 = vpop.permute.xlu0 %7406
  %7408 = vrot.lane.b32.xlu0 %v7052, 112
  %v7409 = vpop.permute.xlu0 %7408
  %7410 = vrot.lane.b32.xlu0 %v7053, 112
  %v7411 = vpop.permute.xlu0 %7410
  %7412 = vrot.lane.b32.xlu0 %v7054, 112
  %v7413 = vpop.permute.xlu0 %7412
  %7414 = vrot.lane.b32.xlu0 %v7055, 112
  %v7415 = vpop.permute.xlu0 %7414
  %7416 = vrot.lane.b32.xlu0 %v7056, 112
  %v7417 = vpop.permute.xlu0 %7416
  %7418 = vrot.lane.b32.xlu0 %v7057, 112
  %v7419 = vpop.permute.xlu0 %7418
  %7420 = vrot.lane.b32.xlu0 %v7058, 112
  %v7421 = vpop.permute.xlu0 %7420
  %7422 = vrot.lane.b32.xlu0 %v7059, 112
  %v7423 = vpop.permute.xlu0 %7422
  %7424 = vrot.lane.b32.xlu0 %v7060, 112
  %v7425 = vpop.permute.xlu0 %7424
  %7426 = vrot.lane.b32.xlu0 %v7061, 112
  %v7427 = vpop.permute.xlu0 %7426
  %7428 = vrot.lane.b32.xlu0 %v7062, 112
  %v7429 = vpop.permute.xlu0 %7428
  %7430 = vrot.lane.b32.xlu0 %v7063, 112
  %v7431 = vpop.permute.xlu0 %7430
  %7432 = vrot.lane.b32.xlu0 %v7064, 112
  %v7433 = vpop.permute.xlu0 %7432
  %7434 = vrot.lane.b32.xlu0 %v7065, 112
  %v7435 = vpop.permute.xlu0 %7434
  %7436 = vrot.lane.b32.xlu0 %v7066, 112
  %v7437 = vpop.permute.xlu0 %7436
  %7438 = vrot.lane.b32.xlu0 %v7067, 112
  %v7439 = vpop.permute.xlu0 %7438
  %7440 = vrot.lane.b32.xlu0 %v7068, 112
  %v7441 = vpop.permute.xlu0 %7440
  %7442 = vrot.lane.b32.xlu0 %v7069, 112
  %v7443 = vpop.permute.xlu0 %7442
  %7444 = vrot.lane.b32.xlu0 %v7070, 112
  %v7445 = vpop.permute.xlu0 %7444
  %7446 = vrot.lane.b32.xlu0 %v7071, 112
  %v7447 = vpop.permute.xlu0 %7446
  %7448 = vrot.lane.b32.xlu0 %v7072, 112
  %v7449 = vpop.permute.xlu0 %7448
  %7450 = vrot.lane.b32.xlu0 %v7073, 112
  %v7451 = vpop.permute.xlu0 %7450
  %7452 = vrot.lane.b32.xlu0 %v7074, 112
  %v7453 = vpop.permute.xlu0 %7452
  %7454 = vrot.lane.b32.xlu0 %v7075, 112
  %v7455 = vpop.permute.xlu0 %7454
  %7456 = vrot.lane.b32.xlu0 %v7076, 112
  %v7457 = vpop.permute.xlu0 %7456
  %7458 = vrot.lane.b32.xlu0 %v7077, 112
  %v7459 = vpop.permute.xlu0 %7458
  %7460 = vrot.lane.b32.xlu0 %v7078, 112
  %v7461 = vpop.permute.xlu0 %7460
  %7462 = vrot.lane.b32.xlu0 %v7079, 112
  %v7463 = vpop.permute.xlu0 %7462
  %7464 = vrot.lane.b32.xlu0 %v7016, 104
  %v7465 = vpop.permute.xlu0 %7464
  %7466 = vrot.lane.b32.xlu0 %v7017, 104
  %v7467 = vpop.permute.xlu0 %7466
  %7468 = vrot.lane.b32.xlu0 %v7018, 104
  %v7469 = vpop.permute.xlu0 %7468
  %7470 = vrot.lane.b32.xlu0 %v7019, 104
  %v7471 = vpop.permute.xlu0 %7470
  %7472 = vrot.lane.b32.xlu0 %v7020, 104
  %v7473 = vpop.permute.xlu0 %7472
  %7474 = vrot.lane.b32.xlu0 %v7021, 104
  %v7475 = vpop.permute.xlu0 %7474
  %7476 = vrot.lane.b32.xlu0 %v7022, 104
  %v7477 = vpop.permute.xlu0 %7476
  %7478 = vrot.lane.b32.xlu0 %v7023, 104
  %v7479 = vpop.permute.xlu0 %7478
  %7480 = vrot.lane.b32.xlu0 %v7024, 104
  %v7481 = vpop.permute.xlu0 %7480
  %7482 = vrot.lane.b32.xlu0 %v7025, 104
  %v7483 = vpop.permute.xlu0 %7482
  %7484 = vrot.lane.b32.xlu0 %v7026, 104
  %v7485 = vpop.permute.xlu0 %7484
  %7486 = vrot.lane.b32.xlu0 %v7027, 104
  %v7487 = vpop.permute.xlu0 %7486
  %7488 = vrot.lane.b32.xlu0 %v7028, 104
  %v7489 = vpop.permute.xlu0 %7488
  %7490 = vrot.lane.b32.xlu0 %v7029, 104
  %v7491 = vpop.permute.xlu0 %7490
  %7492 = vrot.lane.b32.xlu0 %v7030, 104
  %v7493 = vpop.permute.xlu0 %7492
  %7494 = vrot.lane.b32.xlu0 %v7031, 104
  %v7495 = vpop.permute.xlu0 %7494
  %7496 = vrot.lane.b32.xlu0 %v7032, 104
  %v7497 = vpop.permute.xlu0 %7496
  %7498 = vrot.lane.b32.xlu0 %v7033, 104
  %v7499 = vpop.permute.xlu0 %7498
  %7500 = vrot.lane.b32.xlu0 %v7034, 104
  %v7501 = vpop.permute.xlu0 %7500
  %7502 = vrot.lane.b32.xlu0 %v7035, 104
  %v7503 = vpop.permute.xlu0 %7502
  %7504 = vrot.lane.b32.xlu0 %v7036, 104
  %v7505 = vpop.permute.xlu0 %7504
  %7506 = vrot.lane.b32.xlu0 %v7037, 104
  %v7507 = vpop.permute.xlu0 %7506
  %7508 = vrot.lane.b32.xlu0 %v7038, 104
  %v7509 = vpop.permute.xlu0 %7508
  %7510 = vrot.lane.b32.xlu0 %v7039, 104
  %v7511 = vpop.permute.xlu0 %7510
  %7512 = vrot.lane.b32.xlu0 %v7040, 104
  %v7513 = vpop.permute.xlu0 %7512
  %7514 = vrot.lane.b32.xlu0 %v7041, 104
  %v7515 = vpop.permute.xlu0 %7514
  %7516 = vrot.lane.b32.xlu0 %v7042, 104
  %v7517 = vpop.permute.xlu0 %7516
  %7518 = vrot.lane.b32.xlu0 %v7043, 104
  %v7519 = vpop.permute.xlu0 %7518
  %7520 = vrot.lane.b32.xlu0 %v7044, 104
  %v7521 = vpop.permute.xlu0 %7520
  %7522 = vrot.lane.b32.xlu0 %v7045, 104
  %v7523 = vpop.permute.xlu0 %7522
  %7524 = vrot.lane.b32.xlu0 %v7046, 104
  %v7525 = vpop.permute.xlu0 %7524
  %7526 = vrot.lane.b32.xlu0 %v7047, 104
  %v7527 = vpop.permute.xlu0 %7526
  %7528 = vrot.lane.b32.xlu0 %v7048, 104
  %v7529 = vpop.permute.xlu0 %7528
  %7530 = vrot.lane.b32.xlu0 %v7049, 104
  %v7531 = vpop.permute.xlu0 %7530
  %7532 = vrot.lane.b32.xlu0 %v7050, 104
  %v7533 = vpop.permute.xlu0 %7532
  %7534 = vrot.lane.b32.xlu0 %v7051, 104
  %v7535 = vpop.permute.xlu0 %7534
  %7536 = vrot.lane.b32.xlu0 %v7052, 104
  %v7537 = vpop.permute.xlu0 %7536
  %7538 = vrot.lane.b32.xlu0 %v7053, 104
  %v7539 = vpop.permute.xlu0 %7538
  %7540 = vrot.lane.b32.xlu0 %v7054, 104
  %v7541 = vpop.permute.xlu0 %7540
  %7542 = vrot.lane.b32.xlu0 %v7055, 104
  %v7543 = vpop.permute.xlu0 %7542
  %7544 = vrot.lane.b32.xlu0 %v7056, 104
  %v7545 = vpop.permute.xlu0 %7544
  %7546 = vrot.lane.b32.xlu0 %v7057, 104
  %v7547 = vpop.permute.xlu0 %7546
  %7548 = vrot.lane.b32.xlu0 %v7058, 104
  %v7549 = vpop.permute.xlu0 %7548
  %7550 = vrot.lane.b32.xlu0 %v7059, 104
  %v7551 = vpop.permute.xlu0 %7550
  %7552 = vrot.lane.b32.xlu0 %v7060, 104
  %v7553 = vpop.permute.xlu0 %7552
  %7554 = vrot.lane.b32.xlu0 %v7061, 104
  %v7555 = vpop.permute.xlu0 %7554
  %7556 = vrot.lane.b32.xlu0 %v7062, 104
  %v7557 = vpop.permute.xlu0 %7556
  %7558 = vrot.lane.b32.xlu0 %v7063, 104
  %v7559 = vpop.permute.xlu0 %7558
  %7560 = vrot.lane.b32.xlu0 %v7064, 104
  %v7561 = vpop.permute.xlu0 %7560
  %7562 = vrot.lane.b32.xlu0 %v7065, 104
  %v7563 = vpop.permute.xlu0 %7562
  %7564 = vrot.lane.b32.xlu0 %v7066, 104
  %v7565 = vpop.permute.xlu0 %7564
  %7566 = vrot.lane.b32.xlu0 %v7067, 104
  %v7567 = vpop.permute.xlu0 %7566
  %7568 = vrot.lane.b32.xlu0 %v7068, 104
  %v7569 = vpop.permute.xlu0 %7568
  %7570 = vrot.lane.b32.xlu0 %v7069, 104
  %v7571 = vpop.permute.xlu0 %7570
  %7572 = vrot.lane.b32.xlu0 %v7070, 104
  %v7573 = vpop.permute.xlu0 %7572
  %7574 = vrot.lane.b32.xlu0 %v7071, 104
  %v7575 = vpop.permute.xlu0 %7574
  %7576 = vrot.lane.b32.xlu0 %v7072, 104
  %v7577 = vpop.permute.xlu0 %7576
  %7578 = vrot.lane.b32.xlu0 %v7073, 104
  %v7579 = vpop.permute.xlu0 %7578
  %7580 = vrot.lane.b32.xlu0 %v7074, 104
  %v7581 = vpop.permute.xlu0 %7580
  %7582 = vrot.lane.b32.xlu0 %v7075, 104
  %v7583 = vpop.permute.xlu0 %7582
  %7584 = vrot.lane.b32.xlu0 %v7076, 104
  %v7585 = vpop.permute.xlu0 %7584
  %7586 = vrot.lane.b32.xlu0 %v7077, 104
  %v7587 = vpop.permute.xlu0 %7586
  %7588 = vrot.lane.b32.xlu0 %v7078, 104
  %v7589 = vpop.permute.xlu0 %7588
  %7590 = vrot.lane.b32.xlu0 %v7079, 104
  %v7591 = vpop.permute.xlu0 %7590
  %v7656 = vsel %vm1729, %v7016, %v7145
  %v7657 = vsel %vm1729, %v7017, %v7147
  %v7658 = vsel %vm1729, %v7018, %v7149
  %v7659 = vsel %vm1729, %v7019, %v7151
  %v7660 = vsel %vm1729, %v7020, %v7153
  %v7661 = vsel %vm1729, %v7021, %v7155
  %v7662 = vsel %vm1729, %v7022, %v7157
  %v7663 = vsel %vm1729, %v7023, %v7159
  %v7664 = vsel %vm1729, %v7024, %v7161
  %v7665 = vsel %vm1729, %v7025, %v7163
  %v7666 = vsel %vm1729, %v7026, %v7165
  %v7667 = vsel %vm1729, %v7027, %v7167
  %v7668 = vsel %vm1729, %v7028, %v7169
  %v7669 = vsel %vm1729, %v7029, %v7171
  %v7670 = vsel %vm1729, %v7030, %v7173
  %v7671 = vsel %vm1729, %v7031, %v7175
  %v7672 = vsel %vm1729, %v7032, %v7177
  %v7673 = vsel %vm1729, %v7033, %v7179
  %v7674 = vsel %vm1729, %v7034, %v7181
  %v7675 = vsel %vm1729, %v7035, %v7183
  %v7676 = vsel %vm1729, %v7036, %v7185
  %v7677 = vsel %vm1729, %v7037, %v7187
  %v7678 = vsel %vm1729, %v7038, %v7189
  %v7679 = vsel %vm1729, %v7039, %v7191
  %v7680 = vsel %vm1729, %v7040, %v7193
  %v7681 = vsel %vm1729, %v7041, %v7195
  %v7682 = vsel %vm1729, %v7042, %v7197
  %v7683 = vsel %vm1729, %v7043, %v7199
  %v7684 = vsel %vm1729, %v7044, %v7201
  %v7685 = vsel %vm1729, %v7045, %v7203
  %v7686 = vsel %vm1729, %v7046, %v7205
  %v7687 = vsel %vm1729, %v7047, %v7207
  %v7688 = vsel %vm1729, %v7048, %v7209
  %v7689 = vsel %vm1729, %v7049, %v7211
  %v7690 = vsel %vm1729, %v7050, %v7213
  %v7691 = vsel %vm1729, %v7051, %v7215
  %v7692 = vsel %vm1729, %v7052, %v7217
  %v7693 = vsel %vm1729, %v7053, %v7219
  %v7694 = vsel %vm1729, %v7054, %v7221
  %v7695 = vsel %vm1729, %v7055, %v7223
  %v7696 = vsel %vm1729, %v7056, %v7225
  %v7697 = vsel %vm1729, %v7057, %v7227
  %v7698 = vsel %vm1729, %v7058, %v7229
  %v7699 = vsel %vm1729, %v7059, %v7231
  %v7700 = vsel %vm1729, %v7060, %v7233
  %v7701 = vsel %vm1729, %v7061, %v7235
  %v7702 = vsel %vm1729, %v7062, %v7237
  %v7703 = vsel %vm1729, %v7063, %v7239
  %v7704 = vsel %vm1729, %v7064, %v7241
  %v7705 = vsel %vm1729, %v7065, %v7243
  %v7706 = vsel %vm1729, %v7066, %v7245
  %v7707 = vsel %vm1729, %v7067, %v7247
  %v7708 = vsel %vm1729, %v7068, %v7249
  %v7709 = vsel %vm1729, %v7069, %v7251
  %v7710 = vsel %vm1729, %v7070, %v7253
  %v7711 = vsel %vm1729, %v7071, %v7255
  %v7712 = vsel %vm1729, %v7072, %v7257
  %v7713 = vsel %vm1729, %v7073, %v7259
  %v7714 = vsel %vm1729, %v7074, %v7261
  %v7715 = vsel %vm1729, %v7075, %v7263
  %v7716 = vsel %vm1729, %v7076, %v7265
  %v7717 = vsel %vm1729, %v7077, %v7267
  %v7718 = vsel %vm1729, %v7078, %v7269
  %v7719 = vsel %vm1729, %v7079, %v7271
  %v7722 = vsel %vm630, %v7656, %v7337
  %v7726 = vsel %vm630, %v7657, %v7339
  %v7730 = vsel %vm630, %v7658, %v7341
  %v7734 = vsel %vm630, %v7659, %v7343
  %v7738 = vsel %vm630, %v7660, %v7345
  %v7742 = vsel %vm630, %v7661, %v7347
  %v7746 = vsel %vm630, %v7662, %v7349
  %v7750 = vsel %vm630, %v7663, %v7351
  %v7754 = vsel %vm630, %v7664, %v7353
  %v7758 = vsel %vm630, %v7665, %v7355
  %v7762 = vsel %vm630, %v7666, %v7357
  %v7766 = vsel %vm630, %v7667, %v7359
  %v7770 = vsel %vm630, %v7668, %v7361
  %v7774 = vsel %vm630, %v7669, %v7363
  %v7778 = vsel %vm630, %v7670, %v7365
  %v7782 = vsel %vm630, %v7671, %v7367
  %v7786 = vsel %vm630, %v7672, %v7369
  %v7790 = vsel %vm630, %v7673, %v7371
  %v7794 = vsel %vm630, %v7674, %v7373
  %v7798 = vsel %vm630, %v7675, %v7375
  %v7802 = vsel %vm630, %v7676, %v7377
  %v7806 = vsel %vm630, %v7677, %v7379
  %v7810 = vsel %vm630, %v7678, %v7381
  %v7814 = vsel %vm630, %v7679, %v7383
  %v7818 = vsel %vm630, %v7680, %v7385
  %v7822 = vsel %vm630, %v7681, %v7387
  %v7826 = vsel %vm630, %v7682, %v7389
  %v7830 = vsel %vm630, %v7683, %v7391
  %v7834 = vsel %vm630, %v7684, %v7393
  %v7838 = vsel %vm630, %v7685, %v7395
  %v7842 = vsel %vm630, %v7686, %v7397
  %v7846 = vsel %vm630, %v7687, %v7399
  %v7850 = vsel %vm630, %v7688, %v7401
  %v7854 = vsel %vm630, %v7689, %v7403
  %v7858 = vsel %vm630, %v7690, %v7405
  %v7862 = vsel %vm630, %v7691, %v7407
  %v7866 = vsel %vm630, %v7692, %v7409
  %v7870 = vsel %vm630, %v7693, %v7411
  %v7874 = vsel %vm630, %v7694, %v7413
  %v7878 = vsel %vm630, %v7695, %v7415
  %v7882 = vsel %vm630, %v7696, %v7417
  %v7886 = vsel %vm630, %v7697, %v7419
  %v7890 = vsel %vm630, %v7698, %v7421
  %v7894 = vsel %vm630, %v7699, %v7423
  %v7898 = vsel %vm630, %v7700, %v7425
  %v7902 = vsel %vm630, %v7701, %v7427
  %v7906 = vsel %vm630, %v7702, %v7429
  %v7910 = vsel %vm630, %v7703, %v7431
  %v7914 = vsel %vm630, %v7704, %v7433
  %v7918 = vsel %vm630, %v7705, %v7435
  %v7922 = vsel %vm630, %v7706, %v7437
  %v7926 = vsel %vm630, %v7707, %v7439
  %v7930 = vsel %vm630, %v7708, %v7441
  %v7934 = vsel %vm630, %v7709, %v7443
  %v7938 = vsel %vm630, %v7710, %v7445
  %v7942 = vsel %vm630, %v7711, %v7447
  %v7946 = vsel %vm630, %v7712, %v7449
  %v7950 = vsel %vm630, %v7713, %v7451
  %v7954 = vsel %vm630, %v7714, %v7453
  %v7958 = vsel %vm630, %v7715, %v7455
  %v7962 = vsel %vm630, %v7716, %v7457
  %v7966 = vsel %vm630, %v7717, %v7459
  %v7970 = vsel %vm630, %v7718, %v7461
  %v7974 = vsel %vm630, %v7719, %v7463
  %v7976 = vsel %vm1892, %v7722, %v7465
  %v7977 = vsel %vm1892, %v7726, %v7467
  %v7978 = vsel %vm1892, %v7730, %v7469
  %v7979 = vsel %vm1892, %v7734, %v7471
  %v7980 = vsel %vm1892, %v7738, %v7473
  %v7981 = vsel %vm1892, %v7742, %v7475
  %v7982 = vsel %vm1892, %v7746, %v7477
  %v7983 = vsel %vm1892, %v7750, %v7479
  %v7984 = vsel %vm1892, %v7754, %v7481
  %v7985 = vsel %vm1892, %v7758, %v7483
  %v7986 = vsel %vm1892, %v7762, %v7485
  %v7987 = vsel %vm1892, %v7766, %v7487
  %v7988 = vsel %vm1892, %v7770, %v7489
  %v7989 = vsel %vm1892, %v7774, %v7491
  %v7990 = vsel %vm1892, %v7778, %v7493
  %v7991 = vsel %vm1892, %v7782, %v7495
  %v7992 = vsel %vm1892, %v7786, %v7497
  %v7993 = vsel %vm1892, %v7790, %v7499
  %v7994 = vsel %vm1892, %v7794, %v7501
  %v7995 = vsel %vm1892, %v7798, %v7503
  %v7996 = vsel %vm1892, %v7802, %v7505
  %v7997 = vsel %vm1892, %v7806, %v7507
  %v7998 = vsel %vm1892, %v7810, %v7509
  %v7999 = vsel %vm1892, %v7814, %v7511
  %v8000 = vsel %vm1892, %v7818, %v7513
  %v8001 = vsel %vm1892, %v7822, %v7515
  %v8002 = vsel %vm1892, %v7826, %v7517
  %v8003 = vsel %vm1892, %v7830, %v7519
  %v8004 = vsel %vm1892, %v7834, %v7521
  %v8005 = vsel %vm1892, %v7838, %v7523
  %v8006 = vsel %vm1892, %v7842, %v7525
  %v8007 = vsel %vm1892, %v7846, %v7527
  %v8008 = vsel %vm1892, %v7850, %v7529
  %v8009 = vsel %vm1892, %v7854, %v7531
  %v8010 = vsel %vm1892, %v7858, %v7533
  %v8011 = vsel %vm1892, %v7862, %v7535
  %v8012 = vsel %vm1892, %v7866, %v7537
  %v8013 = vsel %vm1892, %v7870, %v7539
  %v8014 = vsel %vm1892, %v7874, %v7541
  %v8015 = vsel %vm1892, %v7878, %v7543
  %v8016 = vsel %vm1892, %v7882, %v7545
  %v8017 = vsel %vm1892, %v7886, %v7547
  %v8018 = vsel %vm1892, %v7890, %v7549
  %v8019 = vsel %vm1892, %v7894, %v7551
  %v8020 = vsel %vm1892, %v7898, %v7553
  %v8021 = vsel %vm1892, %v7902, %v7555
  %v8022 = vsel %vm1892, %v7906, %v7557
  %v8023 = vsel %vm1892, %v7910, %v7559
  %v8024 = vsel %vm1892, %v7914, %v7561
  %v8025 = vsel %vm1892, %v7918, %v7563
  %v8026 = vsel %vm1892, %v7922, %v7565
  %v8027 = vsel %vm1892, %v7926, %v7567
  %v8028 = vsel %vm1892, %v7930, %v7569
  %v8029 = vsel %vm1892, %v7934, %v7571
  %v8030 = vsel %vm1892, %v7938, %v7573
  %v8031 = vsel %vm1892, %v7942, %v7575
  %v8032 = vsel %vm1892, %v7946, %v7577
  %v8033 = vsel %vm1892, %v7950, %v7579
  %v8034 = vsel %vm1892, %v7954, %v7581
  %v8035 = vsel %vm1892, %v7958, %v7583
  %v8036 = vsel %vm1892, %v7962, %v7585
  %v8037 = vsel %vm1892, %v7966, %v7587
  %v8038 = vsel %vm1892, %v7970, %v7589
  %v8039 = vsel %vm1892, %v7974, %v7591
  %v8044 = vunpack.c.l.b16 %v6704
  %v8045 = vunpack.c.h.b16 %v6704
  %v8046 = vunpack.c.l.b16 %v6705
  %v8047 = vunpack.c.h.b16 %v6705
  %v8048 = vunpack.c.l.b16 %v6706
  %v8049 = vunpack.c.h.b16 %v6706
  %v8050 = vunpack.c.l.b16 %v6707
  %v8051 = vunpack.c.h.b16 %v6707
  %v8052 = vpack.c.b16 %v8046, %v8044
  %v8053 = vpack.c.b16 %v8047, %v8045
  %v8054 = vpack.c.b16 %v8050, %v8048
  %v8055 = vpack.c.b16 %v8051, %v8049
  %8058 = vst [vmem:[#allocation1] ss:$4 sm:$0xff] 0
  %s8059 = scalar_lea.vmem [#allocation1], 1
  %8060 = vst [vmem:[%s8059] ss:$4 sm:$0xff] 0
  %s8061 = scalar_lea.vmem [#allocation1], 2
  %8062 = vst [vmem:[%s8061] ss:$4 sm:$0xff] 0
  %s8063 = scalar_lea.vmem [#allocation1], 3
  %8064 = vst [vmem:[%s8063] ss:$4 sm:$0xff] 0
  %s8065 = scalar_lea.vmem [#allocation1], 32
  %8066 = vst [vmem:[%s8065] ss:$4 sm:$0xff] 0
  %s8067 = scalar_lea.vmem [#allocation1], 33
  %8068 = vst [vmem:[%s8067] ss:$4 sm:$0xff] 0
  %s8069 = scalar_lea.vmem [#allocation1], 34
  %8070 = vst [vmem:[%s8069] ss:$4 sm:$0xff] 0
  %s8071 = scalar_lea.vmem [#allocation1], 35
  %8072 = vst [vmem:[%s8071] ss:$4 sm:$0xff] 0
  %v8073 = vld.sshfl [vmem:[#allocation1] sm:$0xff pattern:$0x73625140]
  %v8074 = vld.sshfl [vmem:[#allocation1 + $0x20] sm:$0xff pattern:$0x73625140]
  %8075 = vst [vmem:[#allocation1] ss:$4 sm:$0xff] 0
  %8076 = vst [vmem:[%s8059] ss:$4 sm:$0xff] 0
  %8077 = vst [vmem:[%s8061] ss:$4 sm:$0xff] 0
  %8078 = vst [vmem:[%s8063] ss:$4 sm:$0xff] 0
  %8079 = vst [vmem:[%s8065] ss:$4 sm:$0xff] 0
  %8080 = vst [vmem:[%s8067] ss:$4 sm:$0xff] 0
  %8081 = vst [vmem:[%s8069] ss:$4 sm:$0xff] 0
  %8082 = vst [vmem:[%s8071] ss:$4 sm:$0xff] 0
  %v8083 = vld.sshfl [vmem:[#allocation1] sm:$0xff pattern:$0x73625140]
  %v8084 = vld.sshfl [vmem:[#allocation1 + $0x20] sm:$0xff pattern:$0x73625140]
  %8086 = vst [vmem:[#allocation1] ss:$4 sm:$0xff] %v7976
  %8088 = vst [vmem:[%s8059] ss:$4 sm:$0xff] %v7977
  %8090 = vst [vmem:[%s8061] ss:$4 sm:$0xff] %v7978
  %8092 = vst [vmem:[%s8063] ss:$4 sm:$0xff] %v7979
  %8094 = vst [vmem:[%s8065] ss:$4 sm:$0xff] %v7980
  %8096 = vst [vmem:[%s8067] ss:$4 sm:$0xff] %v7981
  %8098 = vst [vmem:[%s8069] ss:$4 sm:$0xff] %v7982
  %8100 = vst [vmem:[%s8071] ss:$4 sm:$0xff] %v7983
  %v8101 = vld.sshfl [vmem:[#allocation1] sm:$0xff pattern:$0x73625140]
  %v8102 = vld.sshfl [vmem:[#allocation1 + $0x20] sm:$0xff pattern:$0x73625140]
  %8104 = vst [vmem:[#allocation1] ss:$4 sm:$0xff] %v7984
  %8106 = vst [vmem:[%s8059] ss:$4 sm:$0xff] %v7985
  %8108 = vst [vmem:[%s8061] ss:$4 sm:$0xff] %v7986
  %8110 = vst [vmem:[%s8063] ss:$4 sm:$0xff] %v7987
  %8112 = vst [vmem:[%s8065] ss:$4 sm:$0xff] %v7988
  %8114 = vst [vmem:[%s8067] ss:$4 sm:$0xff] %v7989
  %8116 = vst [vmem:[%s8069] ss:$4 sm:$0xff] %v7990
  %8118 = vst [vmem:[%s8071] ss:$4 sm:$0xff] %v7991
  %v8119 = vld.sshfl [vmem:[#allocation1] sm:$0xff pattern:$0x73625140]
  %v8120 = vld.sshfl [vmem:[#allocation1 + $0x20] sm:$0xff pattern:$0x73625140]
  %8122 = vst [vmem:[#allocation1] ss:$4 sm:$0xff] %v7992
  %8124 = vst [vmem:[%s8059] ss:$4 sm:$0xff] %v7993
  %8126 = vst [vmem:[%s8061] ss:$4 sm:$0xff] %v7994
  %8128 = vst [vmem:[%s8063] ss:$4 sm:$0xff] %v7995
  %8130 = vst [vmem:[%s8065] ss:$4 sm:$0xff] %v7996
  %8132 = vst [vmem:[%s8067] ss:$4 sm:$0xff] %v7997
  %8134 = vst [vmem:[%s8069] ss:$4 sm:$0xff] %v7998
  %8136 = vst [vmem:[%s8071] ss:$4 sm:$0xff] %v7999
  %v8137 = vld.sshfl [vmem:[#allocation1] sm:$0xff pattern:$0x73625140]
  %v8138 = vld.sshfl [vmem:[#allocation1 + $0x20] sm:$0xff pattern:$0x73625140]
  %8140 = vst [vmem:[#allocation1] ss:$4 sm:$0xff] %v8000
  %8142 = vst [vmem:[%s8059] ss:$4 sm:$0xff] %v8001
  %8144 = vst [vmem:[%s8061] ss:$4 sm:$0xff] %v8002
  %8146 = vst [vmem:[%s8063] ss:$4 sm:$0xff] %v8003
  %8148 = vst [vmem:[%s8065] ss:$4 sm:$0xff] %v8004
  %8150 = vst [vmem:[%s8067] ss:$4 sm:$0xff] %v8005
  %8152 = vst [vmem:[%s8069] ss:$4 sm:$0xff] %v8006
  %8154 = vst [vmem:[%s8071] ss:$4 sm:$0xff] %v8007
  %v8155 = vld.sshfl [vmem:[#allocation1] sm:$0xff pattern:$0x73625140]
  %v8156 = vld.sshfl [vmem:[#allocation1 + $0x20] sm:$0xff pattern:$0x73625140]
  %vm8169 = vcmask 523264
  %v8171 = vsel %vm8169, %v8053, 0
  %v8174 = vsel %vm8169, %v8055, 0
  %8176 = vmatpush.bf16.msra.mxu0 %v8120
  %8177 = vmatpush.bf16.msra.mxu0 %v8119
  %8178 = vmatpush.bf16.msra.mxu0 %v8102
  %8179 = vmatpush.bf16.msra.mxu0 %v8101
  %8180 = vmatpush.bf16.msra.mxu0 %v8084
  %8181 = vmatpush.bf16.msra.mxu0 %v8083
  %8182 = vmatpush.bf16.msra.mxu0 %v8074
  %8183 = vmatpush.bf16.msra.mxu0 %v8073
  %8184 = vmatmul.bf16.gmra.mxu0 %v8052
  %v8185 = vpop.f32.mrf.mxu0
  %v8186 = vadd.f32 0.0, %v8185
  %v8187 = vpop.f32.mrf.mxu0
  %v8188 = vadd.f32 0.0, %v8187
  %8189 = vmatmul.bf16.gmra.mxu0 %v8054
  %v8190 = vpop.f32.mrf.mxu0
  %v8191 = vadd.f32 0.0, %v8190
  %v8192 = vpop.f32.mrf.mxu0
  %v8193 = vadd.f32 0.0, %v8192
  %8194 = vdwg.mxu0
  %8195 = vmatpush.bf16.msra.mxu0 0
  %8196 = vmatpush.bf16.msra.mxu0 0
  %8197 = vmatpush.bf16.msra.mxu0 0
  %8198 = vmatpush.bf16.msra.mxu0 0
  %8199 = vmatpush.bf16.msra.mxu0 %v8156
  %8200 = vmatpush.bf16.msra.mxu0 %v8155
  %8201 = vmatpush.bf16.msra.mxu0 %v8138
  %8202 = vmatpush.bf16.msra.mxu0 %v8137
  %8203 = vmatmul.bf16.gmra.mxu0 %v8171
  %v8204 = vpop.f32.mrf.mxu0
  %v8205 = vadd.f32 %v8186, %v8204
  %v8206 = vpop.f32.mrf.mxu0
  %v8207 = vadd.f32 %v8188, %v8206
  %8208 = vmatmul.bf16.gmra.mxu0 %v8174
  %v8209 = vpop.f32.mrf.mxu0
  %v8210 = vadd.f32 %v8191, %v8209
  %v8211 = vpop.f32.mrf.mxu0
  %v8212 = vadd.f32 %v8193, %v8211
  %8213 = vdwg.mxu0
  %8218 = vrot.lane.b32.xlu0 %v8205, 124
  %v8219 = vpop.permute.xlu0 %8218
  %8220 = vrot.lane.b32.xlu0 %v8207, 124
  %v8221 = vpop.permute.xlu0 %8220
  %8222 = vrot.lane.b32.xlu0 %v8210, 124
  %v8223 = vpop.permute.xlu0 %8222
  %8224 = vrot.lane.b32.xlu0 %v8212, 124
  %v8225 = vpop.permute.xlu0 %8224
  %v8230 = vmax.f32 %v8205, %v8219
  %v8231 = vmax.f32 %v8207, %v8221
  %v8232 = vmax.f32 %v8210, %v8223
  %v8233 = vmax.f32 %v8212, %v8225
  %8234 = vst [vmem:[#allocation1] ss:$4 sm:$0xff] %v7976
  %s8235 = scalar_lea.vmem [#allocation1], 1
  %8236 = vst [vmem:[%s8235] ss:$4 sm:$0xff] %v7977
  %s8237 = scalar_lea.vmem [#allocation1], 2
  %8238 = vst [vmem:[%s8237] ss:$4 sm:$0xff] %v7978
  %s8239 = scalar_lea.vmem [#allocation1], 3
  %8240 = vst [vmem:[%s8239] ss:$4 sm:$0xff] %v7979
  %s8241 = scalar_lea.vmem [#allocation1], 32
  %8242 = vst [vmem:[%s8241] ss:$4 sm:$0xff] %v7980
  %s8243 = scalar_lea.vmem [#allocation1], 33
  %8244 = vst [vmem:[%s8243] ss:$4 sm:$0xff] %v7981
  %s8245 = scalar_lea.vmem [#allocation1], 34
  %8246 = vst [vmem:[%s8245] ss:$4 sm:$0xff] %v7982
  %s8247 = scalar_lea.vmem [#allocation1], 35
  %8248 = vst [vmem:[%s8247] ss:$4 sm:$0xff] %v7983
  %v8249 = vld.sshfl [vmem:[#allocation1] sm:$0xff pattern:$0x73625140]
  %v8250 = vld.sshfl [vmem:[#allocation1 + $0x20] sm:$0xff pattern:$0x73625140]
  %8251 = vst [vmem:[#allocation1] ss:$4 sm:$0xff] %v7984
  %8252 = vst [vmem:[%s8235] ss:$4 sm:$0xff] %v7985
  %8253 = vst [vmem:[%s8237] ss:$4 sm:$0xff] %v7986
  %8254 = vst [vmem:[%s8239] ss:$4 sm:$0xff] %v7987
  %8255 = vst [vmem:[%s8241] ss:$4 sm:$0xff] %v7988
  %8256 = vst [vmem:[%s8243] ss:$4 sm:$0xff] %v7989
  %8257 = vst [vmem:[%s8245] ss:$4 sm:$0xff] %v7990
  %8258 = vst [vmem:[%s8247] ss:$4 sm:$0xff] %v7991
  %v8259 = vld.sshfl [vmem:[#allocation1] sm:$0xff pattern:$0x73625140]
  %v8260 = vld.sshfl [vmem:[#allocation1 + $0x20] sm:$0xff pattern:$0x73625140]
  %8261 = vst [vmem:[#allocation1] ss:$4 sm:$0xff] %v7992
  %8262 = vst [vmem:[%s8235] ss:$4 sm:$0xff] %v7993
  %8263 = vst [vmem:[%s8237] ss:$4 sm:$0xff] %v7994
  %8264 = vst [vmem:[%s8239] ss:$4 sm:$0xff] %v7995
  %8265 = vst [vmem:[%s8241] ss:$4 sm:$0xff] %v7996
  %8266 = vst [vmem:[%s8243] ss:$4 sm:$0xff] %v7997
  %8267 = vst [vmem:[%s8245] ss:$4 sm:$0xff] %v7998
  %8268 = vst [vmem:[%s8247] ss:$4 sm:$0xff] %v7999
  %v8269 = vld.sshfl [vmem:[#allocation1] sm:$0xff pattern:$0x73625140]
  %v8270 = vld.sshfl [vmem:[#allocation1 + $0x20] sm:$0xff pattern:$0x73625140]
  %8271 = vst [vmem:[#allocation1] ss:$4 sm:$0xff] %v8000
  %8272 = vst [vmem:[%s8235] ss:$4 sm:$0xff] %v8001
  %8273 = vst [vmem:[%s8237] ss:$4 sm:$0xff] %v8002
  %8274 = vst [vmem:[%s8239] ss:$4 sm:$0xff] %v8003
  %8275 = vst [vmem:[%s8241] ss:$4 sm:$0xff] %v8004
  %8276 = vst [vmem:[%s8243] ss:$4 sm:$0xff] %v8005
  %8277 = vst [vmem:[%s8245] ss:$4 sm:$0xff] %v8006
  %8278 = vst [vmem:[%s8247] ss:$4 sm:$0xff] %v8007
  %v8279 = vld.sshfl [vmem:[#allocation1] sm:$0xff pattern:$0x73625140]
  %v8280 = vld.sshfl [vmem:[#allocation1 + $0x20] sm:$0xff pattern:$0x73625140]
  %8282 = vst [vmem:[#allocation1] ss:$4 sm:$0xff] %v8008
  %8284 = vst [vmem:[%s8235] ss:$4 sm:$0xff] %v8009
  %8286 = vst [vmem:[%s8237] ss:$4 sm:$0xff] %v8010
  %8288 = vst [vmem:[%s8239] ss:$4 sm:$0xff] %v8011
  %8290 = vst [vmem:[%s8241] ss:$4 sm:$0xff] %v8012
  %8292 = vst [vmem:[%s8243] ss:$4 sm:$0xff] %v8013
  %8294 = vst [vmem:[%s8245] ss:$4 sm:$0xff] %v8014
  %8296 = vst [vmem:[%s8247] ss:$4 sm:$0xff] %v8015
  %v8297 = vld.sshfl [vmem:[#allocation1] sm:$0xff pattern:$0x73625140]
  %v8298 = vld.sshfl [vmem:[#allocation1 + $0x20] sm:$0xff pattern:$0x73625140]
  %8300 = vst [vmem:[#allocation1] ss:$4 sm:$0xff] %v8016
  %8302 = vst [vmem:[%s8235] ss:$4 sm:$0xff] %v8017
  %8304 = vst [vmem:[%s8237] ss:$4 sm:$0xff] %v8018
  %8306 = vst [vmem:[%s8239] ss:$4 sm:$0xff] %v8019
  %8308 = vst [vmem:[%s8241] ss:$4 sm:$0xff] %v8020
  %8310 = vst [vmem:[%s8243] ss:$4 sm:$0xff] %v8021
  %8312 = vst [vmem:[%s8245] ss:$4 sm:$0xff] %v8022
  %8314 = vst [vmem:[%s8247] ss:$4 sm:$0xff] %v8023
  %v8315 = vld.sshfl [vmem:[#allocation1] sm:$0xff pattern:$0x73625140]
  %v8316 = vld.sshfl [vmem:[#allocation1 + $0x20] sm:$0xff pattern:$0x73625140]
  %8329 = vmatpush.bf16.msra.mxu0 %v8280
  %8330 = vmatpush.bf16.msra.mxu0 %v8279
  %8331 = vmatpush.bf16.msra.mxu0 %v8270
  %8332 = vmatpush.bf16.msra.mxu0 %v8269
  %8333 = vmatpush.bf16.msra.mxu0 %v8260
  %8334 = vmatpush.bf16.msra.mxu0 %v8259
  %8335 = vmatpush.bf16.msra.mxu0 %v8250
  %8336 = vmatpush.bf16.msra.mxu0 %v8249
  %8337 = vmatmul.bf16.gmra.mxu0 %v8052
  %v8338 = vpop.f32.mrf.mxu0
  %v8339 = vadd.f32 0.0, %v8338
  %v8340 = vpop.f32.mrf.mxu0
  %v8341 = vadd.f32 0.0, %v8340
  %8342 = vmatmul.bf16.gmra.mxu0 %v8054
  %v8343 = vpop.f32.mrf.mxu0
  %v8344 = vadd.f32 0.0, %v8343
  %v8345 = vpop.f32.mrf.mxu0
  %v8346 = vadd.f32 0.0, %v8345
  %8347 = vdwg.mxu0
  %8348 = vmatpush.bf16.msra.mxu0 0
  %8349 = vmatpush.bf16.msra.mxu0 0
  %8350 = vmatpush.bf16.msra.mxu0 0
  %8351 = vmatpush.bf16.msra.mxu0 0
  %8352 = vmatpush.bf16.msra.mxu0 %v8316
  %8353 = vmatpush.bf16.msra.mxu0 %v8315
  %8354 = vmatpush.bf16.msra.mxu0 %v8298
  %8355 = vmatpush.bf16.msra.mxu0 %v8297
  %8356 = vmatmul.bf16.gmra.mxu0 %v8171
  %v8357 = vpop.f32.mrf.mxu0
  %v8358 = vadd.f32 %v8339, %v8357
  %v8359 = vpop.f32.mrf.mxu0
  %v8360 = vadd.f32 %v8341, %v8359
  %8361 = vmatmul.bf16.gmra.mxu0 %v8174
  %v8362 = vpop.f32.mrf.mxu0
  %v8363 = vadd.f32 %v8344, %v8362
  %v8364 = vpop.f32.mrf.mxu0
  %v8365 = vadd.f32 %v8346, %v8364
  %8366 = vdwg.mxu0
  %8371 = vrot.lane.b32.xlu0 %v8358, 124
  %v8372 = vpop.permute.xlu0 %8371
  %8373 = vrot.lane.b32.xlu0 %v8360, 124
  %v8374 = vpop.permute.xlu0 %8373
  %8375 = vrot.lane.b32.xlu0 %v8363, 124
  %v8376 = vpop.permute.xlu0 %8375
  %8377 = vrot.lane.b32.xlu0 %v8365, 124
  %v8378 = vpop.permute.xlu0 %8377
  %v8383 = vmax.f32 %v8358, %v8372
  %v8384 = vmax.f32 %v8360, %v8374
  %v8385 = vmax.f32 %v8363, %v8376
  %v8386 = vmax.f32 %v8365, %v8378
  %v8387 = vmax.f32 %v8230, %v8383
  %v8388 = vmax.f32 %v8231, %v8384
  %v8389 = vmax.f32 %v8232, %v8385
  %v8390 = vmax.f32 %v8233, %v8386
  %8392 = vset.pattern.permute.xlu0 0
  %8393 = vperm.xlu0 %8392, %v6708
  %v8394 = vpop.permute.xlu0 %8393
  %8397 = vset.pattern.permute.xlu0 0
  %8398 = vperm.xlu0 %8397, %v6709
  %v8399 = vpop.permute.xlu0 %8398
  %8402 = vset.pattern.permute.xlu0 0
  %8403 = vperm.xlu0 %8402, %v6710
  %v8404 = vpop.permute.xlu0 %8403
  %8407 = vset.pattern.permute.xlu0 0
  %8408 = vperm.xlu0 %8407, %v6711
  %v8409 = vpop.permute.xlu0 %8408
  %v8411 = vadd.f32 %v8387, %v8394
  %v8412 = vadd.f32 %v8388, %v8399
  %v8413 = vadd.f32 %v8389, %v8404
  %v8414 = vadd.f32 %v8390, %v8409
  %v8415 = vmax.f32 %v8411, 0.0
  %v8416 = vmax.f32 %v8412, 0.0
  %v8417 = vmax.f32 %v8413, 0.0
  %v8418 = vmax.f32 %v8414, 0.0
  %8419 = vst [vmem:[#allocation1] ss:$4 sm:$0xff] %v7992
  %s8420 = scalar_lea.vmem [#allocation1], 1
  %8421 = vst [vmem:[%s8420] ss:$4 sm:$0xff] %v7993
  %s8422 = scalar_lea.vmem [#allocation1], 2
  %8423 = vst [vmem:[%s8422] ss:$4 sm:$0xff] %v7994
  %s8424 = scalar_lea.vmem [#allocation1], 3
  %8425 = vst [vmem:[%s8424] ss:$4 sm:$0xff] %v7995
  %s8426 = scalar_lea.vmem [#allocation1], 32
  %8427 = vst [vmem:[%s8426] ss:$4 sm:$0xff] %v7996
  %s8428 = scalar_lea.vmem [#allocation1], 33
  %8429 = vst [vmem:[%s8428] ss:$4 sm:$0xff] %v7997
  %s8430 = scalar_lea.vmem [#allocation1], 34
  %8431 = vst [vmem:[%s8430] ss:$4 sm:$0xff] %v7998
  %s8432 = scalar_lea.vmem [#allocation1], 35
  %8433 = vst [vmem:[%s8432] ss:$4 sm:$0xff] %v7999
  %v8434 = vld.sshfl [vmem:[#allocation1] sm:$0xff pattern:$0x73625140]
  %v8435 = vld.sshfl [vmem:[#allocation1 + $0x20] sm:$0xff pattern:$0x73625140]
  %8436 = vst [vmem:[#allocation1] ss:$4 sm:$0xff] %v8000
  %8437 = vst [vmem:[%s8420] ss:$4 sm:$0xff] %v8001
  %8438 = vst [vmem:[%s8422] ss:$4 sm:$0xff] %v8002
  %8439 = vst [vmem:[%s8424] ss:$4 sm:$0xff] %v8003
  %8440 = vst [vmem:[%s8426] ss:$4 sm:$0xff] %v8004
  %8441 = vst [vmem:[%s8428] ss:$4 sm:$0xff] %v8005
  %8442 = vst [vmem:[%s8430] ss:$4 sm:$0xff] %v8006
  %8443 = vst [vmem:[%s8432] ss:$4 sm:$0xff] %v8007
  %v8444 = vld.sshfl [vmem:[#allocation1] sm:$0xff pattern:$0x73625140]
  %v8445 = vld.sshfl [vmem:[#allocation1 + $0x20] sm:$0xff pattern:$0x73625140]
  %8446 = vst [vmem:[#allocation1] ss:$4 sm:$0xff] %v8008
  %8447 = vst [vmem:[%s8420] ss:$4 sm:$0xff] %v8009
  %8448 = vst [vmem:[%s8422] ss:$4 sm:$0xff] %v8010
  %8449 = vst [vmem:[%s8424] ss:$4 sm:$0xff] %v8011
  %8450 = vst [vmem:[%s8426] ss:$4 sm:$0xff] %v8012
  %8451 = vst [vmem:[%s8428] ss:$4 sm:$0xff] %v8013
  %8452 = vst [vmem:[%s8430] ss:$4 sm:$0xff] %v8014
  %8453 = vst [vmem:[%s8432] ss:$4 sm:$0xff] %v8015
  %v8454 = vld.sshfl [vmem:[#allocation1] sm:$0xff pattern:$0x73625140]
  %v8455 = vld.sshfl [vmem:[#allocation1 + $0x20] sm:$0xff pattern:$0x73625140]
  %8456 = vst [vmem:[#allocation1] ss:$4 sm:$0xff] %v8016
  %8457 = vst [vmem:[%s8420] ss:$4 sm:$0xff] %v8017
  %8458 = vst [vmem:[%s8422] ss:$4 sm:$0xff] %v8018
  %8459 = vst [vmem:[%s8424] ss:$4 sm:$0xff] %v8019
  %8460 = vst [vmem:[%s8426] ss:$4 sm:$0xff] %v8020
  %8461 = vst [vmem:[%s8428] ss:$4 sm:$0xff] %v8021
  %8462 = vst [vmem:[%s8430] ss:$4 sm:$0xff] %v8022
  %8463 = vst [vmem:[%s8432] ss:$4 sm:$0xff] %v8023
  %v8464 = vld.sshfl [vmem:[#allocation1] sm:$0xff pattern:$0x73625140]
  %v8465 = vld.sshfl [vmem:[#allocation1 + $0x20] sm:$0xff pattern:$0x73625140]
  %8467 = vst [vmem:[#allocation1] ss:$4 sm:$0xff] %v8024
  %8469 = vst [vmem:[%s8420] ss:$4 sm:$0xff] %v8025
  %8471 = vst [vmem:[%s8422] ss:$4 sm:$0xff] %v8026
  %8473 = vst [vmem:[%s8424] ss:$4 sm:$0xff] %v8027
  %8475 = vst [vmem:[%s8426] ss:$4 sm:$0xff] %v8028
  %8477 = vst [vmem:[%s8428] ss:$4 sm:$0xff] %v8029
  %8479 = vst [vmem:[%s8430] ss:$4 sm:$0xff] %v8030
  %8481 = vst [vmem:[%s8432] ss:$4 sm:$0xff] %v8031
  %v8482 = vld.sshfl [vmem:[#allocation1] sm:$0xff pattern:$0x73625140]
  %v8483 = vld.sshfl [vmem:[#allocation1 + $0x20] sm:$0xff pattern:$0x73625140]
  %8485 = vst [vmem:[#allocation1] ss:$4 sm:$0xff] %v8032
  %8487 = vst [vmem:[%s8420] ss:$4 sm:$0xff] %v8033
  %8489 = vst [vmem:[%s8422] ss:$4 sm:$0xff] %v8034
  %8491 = vst [vmem:[%s8424] ss:$4 sm:$0xff] %v8035
  %8493 = vst [vmem:[%s8426] ss:$4 sm:$0xff] %v8036
  %8495 = vst [vmem:[%s8428] ss:$4 sm:$0xff] %v8037
  %8497 = vst [vmem:[%s8430] ss:$4 sm:$0xff] %v8038
  %8499 = vst [vmem:[%s8432] ss:$4 sm:$0xff] %v8039
  %v8500 = vld.sshfl [vmem:[#allocation1] sm:$0xff pattern:$0x73625140]
  %v8501 = vld.sshfl [vmem:[#allocation1 + $0x20] sm:$0xff pattern:$0x73625140]
  %8514 = vmatpush.bf16.msra.mxu0 %v8465
  %8515 = vmatpush.bf16.msra.mxu0 %v8464
  %8516 = vmatpush.bf16.msra.mxu0 %v8455
  %8517 = vmatpush.bf16.msra.mxu0 %v8454
  %8518 = vmatpush.bf16.msra.mxu0 %v8445
  %8519 = vmatpush.bf16.msra.mxu0 %v8444
  %8520 = vmatpush.bf16.msra.mxu0 %v8435
  %8521 = vmatpush.bf16.msra.mxu0 %v8434
  %8522 = vmatmul.bf16.gmra.mxu0 %v8052
  %v8523 = vpop.f32.mrf.mxu0
  %v8524 = vadd.f32 0.0, %v8523
  %v8525 = vpop.f32.mrf.mxu0
  %v8526 = vadd.f32 0.0, %v8525
  %8527 = vmatmul.bf16.gmra.mxu0 %v8054
  %v8528 = vpop.f32.mrf.mxu0
  %v8529 = vadd.f32 0.0, %v8528
  %v8530 = vpop.f32.mrf.mxu0
  %v8531 = vadd.f32 0.0, %v8530
  %8532 = vdwg.mxu0
  %8533 = vmatpush.bf16.msra.mxu0 0
  %8534 = vmatpush.bf16.msra.mxu0 0
  %8535 = vmatpush.bf16.msra.mxu0 0
  %8536 = vmatpush.bf16.msra.mxu0 0
  %8537 = vmatpush.bf16.msra.mxu0 %v8501
  %8538 = vmatpush.bf16.msra.mxu0 %v8500
  %8539 = vmatpush.bf16.msra.mxu0 %v8483
  %8540 = vmatpush.bf16.msra.mxu0 %v8482
  %8541 = vmatmul.bf16.gmra.mxu0 %v8171
  %v8542 = vpop.f32.mrf.mxu0
  %v8543 = vadd.f32 %v8524, %v8542
  %v8544 = vpop.f32.mrf.mxu0
  %v8545 = vadd.f32 %v8526, %v8544
  %8546 = vmatmul.bf16.gmra.mxu0 %v8174
  %v8547 = vpop.f32.mrf.mxu0
  %v8548 = vadd.f32 %v8529, %v8547
  %v8549 = vpop.f32.mrf.mxu0
  %v8550 = vadd.f32 %v8531, %v8549
  %8551 = vdwg.mxu0
  %8556 = vrot.lane.b32.xlu0 %v8543, 124
  %v8557 = vpop.permute.xlu0 %8556
  %8558 = vrot.lane.b32.xlu0 %v8545, 124
  %v8559 = vpop.permute.xlu0 %8558
  %8560 = vrot.lane.b32.xlu0 %v8548, 124
  %v8561 = vpop.permute.xlu0 %8560
  %8562 = vrot.lane.b32.xlu0 %v8550, 124
  %v8563 = vpop.permute.xlu0 %8562
  %v8568 = vmax.f32 %v8543, %v8557
  %v8569 = vmax.f32 %v8545, %v8559
  %v8570 = vmax.f32 %v8548, %v8561
  %v8571 = vmax.f32 %v8550, %v8563
  %8572 = vst [vmem:[#allocation1] ss:$4 sm:$0xff] %v8008
  %s8573 = scalar_lea.vmem [#allocation1], 1
  %8574 = vst [vmem:[%s8573] ss:$4 sm:$0xff] %v8009
  %s8575 = scalar_lea.vmem [#allocation1], 2
  %8576 = vst [vmem:[%s8575] ss:$4 sm:$0xff] %v8010
  %s8577 = scalar_lea.vmem [#allocation1], 3
  %8578 = vst [vmem:[%s8577] ss:$4 sm:$0xff] %v8011
  %s8579 = scalar_lea.vmem [#allocation1], 32
  %8580 = vst [vmem:[%s8579] ss:$4 sm:$0xff] %v8012
  %s8581 = scalar_lea.vmem [#allocation1], 33
  %8582 = vst [vmem:[%s8581] ss:$4 sm:$0xff] %v8013
  %s8583 = scalar_lea.vmem [#allocation1], 34
  %8584 = vst [vmem:[%s8583] ss:$4 sm:$0xff] %v8014
  %s8585 = scalar_lea.vmem [#allocation1], 35
  %8586 = vst [vmem:[%s8585] ss:$4 sm:$0xff] %v8015
  %v8587 = vld.sshfl [vmem:[#allocation1] sm:$0xff pattern:$0x73625140]
  %v8588 = vld.sshfl [vmem:[#allocation1 + $0x20] sm:$0xff pattern:$0x73625140]
  %8589 = vst [vmem:[#allocation1] ss:$4 sm:$0xff] %v8016
  %8590 = vst [vmem:[%s8573] ss:$4 sm:$0xff] %v8017
  %8591 = vst [vmem:[%s8575] ss:$4 sm:$0xff] %v8018
  %8592 = vst [vmem:[%s8577] ss:$4 sm:$0xff] %v8019
  %8593 = vst [vmem:[%s8579] ss:$4 sm:$0xff] %v8020
  %8594 = vst [vmem:[%s8581] ss:$4 sm:$0xff] %v8021
  %8595 = vst [vmem:[%s8583] ss:$4 sm:$0xff] %v8022
  %8596 = vst [vmem:[%s8585] ss:$4 sm:$0xff] %v8023
  %v8597 = vld.sshfl [vmem:[#allocation1] sm:$0xff pattern:$0x73625140]
  %v8598 = vld.sshfl [vmem:[#allocation1 + $0x20] sm:$0xff pattern:$0x73625140]
  %8599 = vst [vmem:[#allocation1] ss:$4 sm:$0xff] %v8024
  %8600 = vst [vmem:[%s8573] ss:$4 sm:$0xff] %v8025
  %8601 = vst [vmem:[%s8575] ss:$4 sm:$0xff] %v8026
  %8602 = vst [vmem:[%s8577] ss:$4 sm:$0xff] %v8027
  %8603 = vst [vmem:[%s8579] ss:$4 sm:$0xff] %v8028
  %8604 = vst [vmem:[%s8581] ss:$4 sm:$0xff] %v8029
  %8605 = vst [vmem:[%s8583] ss:$4 sm:$0xff] %v8030
  %8606 = vst [vmem:[%s8585] ss:$4 sm:$0xff] %v8031
  %v8607 = vld.sshfl [vmem:[#allocation1] sm:$0xff pattern:$0x73625140]
  %v8608 = vld.sshfl [vmem:[#allocation1 + $0x20] sm:$0xff pattern:$0x73625140]
  %8609 = vst [vmem:[#allocation1] ss:$4 sm:$0xff] %v8032
  %8610 = vst [vmem:[%s8573] ss:$4 sm:$0xff] %v8033
  %8611 = vst [vmem:[%s8575] ss:$4 sm:$0xff] %v8034
  %8612 = vst [vmem:[%s8577] ss:$4 sm:$0xff] %v8035
  %8613 = vst [vmem:[%s8579] ss:$4 sm:$0xff] %v8036
  %8614 = vst [vmem:[%s8581] ss:$4 sm:$0xff] %v8037
  %8615 = vst [vmem:[%s8583] ss:$4 sm:$0xff] %v8038
  %8616 = vst [vmem:[%s8585] ss:$4 sm:$0xff] %v8039
  %v8617 = vld.sshfl [vmem:[#allocation1] sm:$0xff pattern:$0x73625140]
  %v8618 = vld.sshfl [vmem:[#allocation1 + $0x20] sm:$0xff pattern:$0x73625140]
  %8619 = vst [vmem:[#allocation1] ss:$4 sm:$0xff] 0
  %8620 = vst [vmem:[%s8573] ss:$4 sm:$0xff] 0
  %8621 = vst [vmem:[%s8575] ss:$4 sm:$0xff] 0
  %8622 = vst [vmem:[%s8577] ss:$4 sm:$0xff] 0
  %8623 = vst [vmem:[%s8579] ss:$4 sm:$0xff] 0
  %8624 = vst [vmem:[%s8581] ss:$4 sm:$0xff] 0
  %8625 = vst [vmem:[%s8583] ss:$4 sm:$0xff] 0
  %8626 = vst [vmem:[%s8585] ss:$4 sm:$0xff] 0
  %v8627 = vld.sshfl [vmem:[#allocation1] sm:$0xff pattern:$0x73625140]
  %v8628 = vld.sshfl [vmem:[#allocation1 + $0x20] sm:$0xff pattern:$0x73625140]
  %8629 = vst [vmem:[#allocation1] ss:$4 sm:$0xff] 0
  %8630 = vst [vmem:[%s8573] ss:$4 sm:$0xff] 0
  %8631 = vst [vmem:[%s8575] ss:$4 sm:$0xff] 0
  %8632 = vst [vmem:[%s8577] ss:$4 sm:$0xff] 0
  %8633 = vst [vmem:[%s8579] ss:$4 sm:$0xff] 0
  %8634 = vst [vmem:[%s8581] ss:$4 sm:$0xff] 0
  %8635 = vst [vmem:[%s8583] ss:$4 sm:$0xff] 0
  %8636 = vst [vmem:[%s8585] ss:$4 sm:$0xff] 0
  %v8637 = vld.sshfl [vmem:[#allocation1] sm:$0xff pattern:$0x73625140]
  %v8638 = vld.sshfl [vmem:[#allocation1 + $0x20] sm:$0xff pattern:$0x73625140]
  %8651 = vmatpush.bf16.msra.mxu0 %v8618
  %8652 = vmatpush.bf16.msra.mxu0 %v8617
  %8653 = vmatpush.bf16.msra.mxu0 %v8608
  %8654 = vmatpush.bf16.msra.mxu0 %v8607
  %8655 = vmatpush.bf16.msra.mxu0 %v8598
  %8656 = vmatpush.bf16.msra.mxu0 %v8597
  %8657 = vmatpush.bf16.msra.mxu0 %v8588
  %8658 = vmatpush.bf16.msra.mxu0 %v8587
  %8659 = vmatmul.bf16.gmra.mxu0 %v8052
  %v8660 = vpop.f32.mrf.mxu0
  %v8661 = vadd.f32 0.0, %v8660
  %v8662 = vpop.f32.mrf.mxu0
  %v8663 = vadd.f32 0.0, %v8662
  %8664 = vmatmul.bf16.gmra.mxu0 %v8054
  %v8665 = vpop.f32.mrf.mxu0
  %v8666 = vadd.f32 0.0, %v8665
  %v8667 = vpop.f32.mrf.mxu0
  %v8668 = vadd.f32 0.0, %v8667
  %8669 = vdwg.mxu0
  %8670 = vmatpush.bf16.msra.mxu0 0
  %8671 = vmatpush.bf16.msra.mxu0 0
  %8672 = vmatpush.bf16.msra.mxu0 0
  %8673 = vmatpush.bf16.msra.mxu0 0
  %8674 = vmatpush.bf16.msra.mxu0 %v8638
  %8675 = vmatpush.bf16.msra.mxu0 %v8637
  %8676 = vmatpush.bf16.msra.mxu0 %v8628
  %8677 = vmatpush.bf16.msra.mxu0 %v8627
  %8678 = vmatmul.bf16.gmra.mxu0 %v8171
  %v8679 = vpop.f32.mrf.mxu0
  %v8680 = vadd.f32 %v8661, %v8679
  %v8681 = vpop.f32.mrf.mxu0
  %v8682 = vadd.f32 %v8663, %v8681
  %8683 = vmatmul.bf16.gmra.mxu0 %v8174
  %v8684 = vpop.f32.mrf.mxu0
  %v8685 = vadd.f32 %v8666, %v8684
  %v8686 = vpop.f32.mrf.mxu0
  %v8687 = vadd.f32 %v8668, %v8686
  %8688 = vdwg.mxu0
  %8693 = vrot.lane.b32.xlu0 %v8680, 124
  %v8694 = vpop.permute.xlu0 %8693
  %8695 = vrot.lane.b32.xlu0 %v8682, 124
  %v8696 = vpop.permute.xlu0 %8695
  %8697 = vrot.lane.b32.xlu0 %v8685, 124
  %v8698 = vpop.permute.xlu0 %8697
  %8699 = vrot.lane.b32.xlu0 %v8687, 124
  %v8700 = vpop.permute.xlu0 %8699
  %v8705 = vmax.f32 %v8680, %v8694
  %v8706 = vmax.f32 %v8682, %v8696
  %v8707 = vmax.f32 %v8685, %v8698
  %v8708 = vmax.f32 %v8687, %v8700
  %v8709 = vmax.f32 %v8568, %v8705
  %v8710 = vmax.f32 %v8569, %v8706
  %v8711 = vmax.f32 %v8570, %v8707
  %v8712 = vmax.f32 %v8571, %v8708
  %v8713 = vadd.f32 %v8709, %v8394
  %v8714 = vadd.f32 %v8710, %v8399
  %v8715 = vadd.f32 %v8711, %v8404
  %v8716 = vadd.f32 %v8712, %v8409
  %v8717 = vmax.f32 %v8713, 0.0
  %v8718 = vmax.f32 %v8714, 0.0
  %v8719 = vmax.f32 %v8715, 0.0
  %v8720 = vmax.f32 %v8716, 0.0
  %8729 = vrot.lane.b32.xlu0 %v8415, 127
  %v8730 = vpop.permute.xlu0 %8729
  %8731 = vrot.lane.b32.xlu0 %v8416, 127
  %v8732 = vpop.permute.xlu0 %8731
  %8733 = vrot.lane.b32.xlu0 %v8417, 127
  %v8734 = vpop.permute.xlu0 %8733
  %8735 = vrot.lane.b32.xlu0 %v8418, 127
  %v8736 = vpop.permute.xlu0 %8735
  %8737 = vrot.lane.b32.xlu0 %v8717, 127
  %v8738 = vpop.permute.xlu0 %8737
  %8739 = vrot.lane.b32.xlu0 %v8718, 127
  %v8740 = vpop.permute.xlu0 %8739
  %8741 = vrot.lane.b32.xlu0 %v8719, 127
  %v8742 = vpop.permute.xlu0 %8741
  %8743 = vrot.lane.b32.xlu0 %v8720, 127
  %v8744 = vpop.permute.xlu0 %8743
  %8753 = vrot.lane.b32.xlu0 %v8415, 126
  %v8754 = vpop.permute.xlu0 %8753
  %8755 = vrot.lane.b32.xlu0 %v8416, 126
  %v8756 = vpop.permute.xlu0 %8755
  %8757 = vrot.lane.b32.xlu0 %v8417, 126
  %v8758 = vpop.permute.xlu0 %8757
  %8759 = vrot.lane.b32.xlu0 %v8418, 126
  %v8760 = vpop.permute.xlu0 %8759
  %8761 = vrot.lane.b32.xlu0 %v8717, 126
  %v8762 = vpop.permute.xlu0 %8761
  %8763 = vrot.lane.b32.xlu0 %v8718, 126
  %v8764 = vpop.permute.xlu0 %8763
  %8765 = vrot.lane.b32.xlu0 %v8719, 126
  %v8766 = vpop.permute.xlu0 %8765
  %8767 = vrot.lane.b32.xlu0 %v8720, 126
  %v8768 = vpop.permute.xlu0 %8767
  %8777 = vrot.lane.b32.xlu0 %v8415, 125
  %v8778 = vpop.permute.xlu0 %8777
  %8779 = vrot.lane.b32.xlu0 %v8416, 125
  %v8780 = vpop.permute.xlu0 %8779
  %8781 = vrot.lane.b32.xlu0 %v8417, 125
  %v8782 = vpop.permute.xlu0 %8781
  %8783 = vrot.lane.b32.xlu0 %v8418, 125
  %v8784 = vpop.permute.xlu0 %8783
  %8785 = vrot.lane.b32.xlu0 %v8717, 125
  %v8786 = vpop.permute.xlu0 %8785
  %8787 = vrot.lane.b32.xlu0 %v8718, 125
  %v8788 = vpop.permute.xlu0 %8787
  %8789 = vrot.lane.b32.xlu0 %v8719, 125
  %v8790 = vpop.permute.xlu0 %8789
  %8791 = vrot.lane.b32.xlu0 %v8720, 125
  %v8792 = vpop.permute.xlu0 %8791
  %v8801 = vld [vmem:[%s10] sm:$0xff]
  %v8802 = vld [vmem:[%s10 + $0x8] sm:$0xff]
  %v8803 = vld [vmem:[%s10 + $0x10] sm:$0xff]
  %v8804 = vld [vmem:[%s10 + $0x18] sm:$0xff]
  %v8805 = vld [vmem:[%s10 + $0x20] sm:$0xff]
  %v8806 = vld [vmem:[%s10 + $0x28] sm:$0xff]
  %v8807 = vld [vmem:[%s10 + $0x30] sm:$0xff]
  %v8808 = vld [vmem:[%s10 + $0x38] sm:$0xff]
  %v8809 = vld [vmem:[%s10 + $0x40] sm:$0xff]
  %v8810 = vld [vmem:[%s10 + $0x48] sm:$0xff]
  %v8811 = vld [vmem:[%s10 + $0x50] sm:$0xff]
  %v8812 = vld [vmem:[%s10 + $0x58] sm:$0xff]
  %v8813 = vld [vmem:[%s10 + $0x60] sm:$0xff]
  %v8814 = vld [vmem:[%s10 + $0x68] sm:$0xff]
  %v8815 = vld [vmem:[%s10 + $0x70] sm:$0xff]
  %v8816 = vld [vmem:[%s10 + $0x78] sm:$0xff]
  %v8817 = vld [vmem:[%s11] sm:$0xff]
  %v8818 = vld [vmem:[%s11 + $0x8] sm:$0xff]
  %v8819 = vld [vmem:[%s11 + $0x10] sm:$0xff]
  %v8820 = vld [vmem:[%s11 + $0x18] sm:$0xff]
  %v8821 = vld [vmem:[%s11 + $0x20] sm:$0xff]
  %v8822 = vld [vmem:[%s11 + $0x28] sm:$0xff]
  %v8823 = vld [vmem:[%s11 + $0x30] sm:$0xff]
  %v8824 = vld [vmem:[%s11 + $0x38] sm:$0xff]
  %8825 = vmatpush.msra.mxu0 %v8744
  %8826 = vmatpush.msra.mxu0 %v8742
  %8827 = vmatpush.msra.mxu0 %v8740
  %8828 = vmatpush.msra.mxu0 %v8738
  %8829 = vmatpush.msra.mxu0 %v8736
  %8830 = vmatpush.msra.mxu0 %v8734
  %8831 = vmatpush.msra.mxu0 %v8732
  %8832 = vmatpush.msra.mxu0 %v8730
  %8833 = vmatpush.msra.mxu0 %v8720
  %8834 = vmatpush.msra.mxu0 %v8719
  %8835 = vmatpush.msra.mxu0 %v8718
  %8836 = vmatpush.msra.mxu0 %v8717
  %8837 = vmatpush.msra.mxu0 %v8418
  %8838 = vmatpush.msra.mxu0 %v8417
  %8839 = vmatpush.msra.mxu0 %v8416
  %8840 = vmatpush.msra.mxu0 %v8415
  %8841 = vmatmul.f32.gmra.mxu0 %v8801
  %v8842 = vpop.f32.mrf.mxu0
  %v8843 = vadd.f32 %v8817, %v8842
  %8844 = vmatmul.f32.gmra.mxu0 %v8803
  %v8845 = vpop.f32.mrf.mxu0
  %v8846 = vadd.f32 %v8818, %v8845
  %8847 = vmatmul.f32.gmra.mxu0 %v8805
  %v8848 = vpop.f32.mrf.mxu0
  %v8849 = vadd.f32 %v8819, %v8848
  %8850 = vmatmul.f32.gmra.mxu0 %v8807
  %v8851 = vpop.f32.mrf.mxu0
  %v8852 = vadd.f32 %v8820, %v8851
  %8853 = vmatmul.f32.gmra.mxu0 %v8809
  %v8854 = vpop.f32.mrf.mxu0
  %v8855 = vadd.f32 %v8821, %v8854
  %8856 = vmatmul.f32.gmra.mxu0 %v8811
  %v8857 = vpop.f32.mrf.mxu0
  %v8858 = vadd.f32 %v8822, %v8857
  %8859 = vmatmul.f32.gmra.mxu0 %v8813
  %v8860 = vpop.f32.mrf.mxu0
  %v8861 = vadd.f32 %v8823, %v8860
  %8862 = vmatmul.f32.gmra.mxu0 %v8815
  %v8863 = vpop.f32.mrf.mxu0
  %v8864 = vadd.f32 %v8824, %v8863
  %8865 = vdwg.mxu0
  %8866 = vmatpush.msra.mxu0 %v8792
  %8867 = vmatpush.msra.mxu0 %v8790
  %8868 = vmatpush.msra.mxu0 %v8788
  %8869 = vmatpush.msra.mxu0 %v8786
  %8870 = vmatpush.msra.mxu0 %v8784
  %8871 = vmatpush.msra.mxu0 %v8782
  %8872 = vmatpush.msra.mxu0 %v8780
  %8873 = vmatpush.msra.mxu0 %v8778
  %8874 = vmatpush.msra.mxu0 %v8768
  %8875 = vmatpush.msra.mxu0 %v8766
  %8876 = vmatpush.msra.mxu0 %v8764
  %8877 = vmatpush.msra.mxu0 %v8762
  %8878 = vmatpush.msra.mxu0 %v8760
  %8879 = vmatpush.msra.mxu0 %v8758
  %8880 = vmatpush.msra.mxu0 %v8756
  %8881 = vmatpush.msra.mxu0 %v8754
  %8882 = vmatmul.f32.gmra.mxu0 %v8802
  %v8883 = vpop.f32.mrf.mxu0
  %v8884 = vadd.f32 %v8843, %v8883
  %8885 = vmatmul.f32.gmra.mxu0 %v8804
  %v8886 = vpop.f32.mrf.mxu0
  %v8887 = vadd.f32 %v8846, %v8886
  %8888 = vmatmul.f32.gmra.mxu0 %v8806
  %v8889 = vpop.f32.mrf.mxu0
  %v8890 = vadd.f32 %v8849, %v8889
  %8891 = vmatmul.f32.gmra.mxu0 %v8808
  %v8892 = vpop.f32.mrf.mxu0
  %v8893 = vadd.f32 %v8852, %v8892
  %8894 = vmatmul.f32.gmra.mxu0 %v8810
  %v8895 = vpop.f32.mrf.mxu0
  %v8896 = vadd.f32 %v8855, %v8895
  %8897 = vmatmul.f32.gmra.mxu0 %v8812
  %v8898 = vpop.f32.mrf.mxu0
  %v8899 = vadd.f32 %v8858, %v8898
  %8900 = vmatmul.f32.gmra.mxu0 %v8814
  %v8901 = vpop.f32.mrf.mxu0
  %v8902 = vadd.f32 %v8861, %v8901
  %8903 = vmatmul.f32.gmra.mxu0 %v8816
  %v8904 = vpop.f32.mrf.mxu0
  %v8905 = vadd.f32 %v8864, %v8904
  %8906 = vdwg.mxu0
  %v8907 = vld [vmem:[%s12] sm:$0x7]
  %v8908 = vld [vmem:[%s13] sm:$0x7]
  %v8910 = vsel %vm8169, %v8907, 0
  %8912 = vmatpush.msra.mxu0 0.0
  %8913 = vmatpush.msra.mxu0 0.0
  %8914 = vmatpush.msra.mxu0 0.0
  %8915 = vmatpush.msra.mxu0 0.0
  %8916 = vmatpush.msra.mxu0 0.0
  %8917 = vmatpush.msra.mxu0 0.0
  %8918 = vmatpush.msra.mxu0 0.0
  %8919 = vmatpush.msra.mxu0 0.0
  %8920 = vmatpush.msra.mxu0 %v8905
  %8921 = vmatpush.msra.mxu0 %v8902
  %8922 = vmatpush.msra.mxu0 %v8899
  %8923 = vmatpush.msra.mxu0 %v8896
  %8924 = vmatpush.msra.mxu0 %v8893
  %8925 = vmatpush.msra.mxu0 %v8890
  %8926 = vmatpush.msra.mxu0 %v8887
  %8927 = vmatpush.msra.mxu0 %v8884
  %8928 = vmatmul.f32.gmra.mxu0 %v8910
  %v8929 = vpop.f32.mrf.mxu0
  %v8930 = vadd.f32 %v8908, %v8929
  %8931 = vdwg.mxu0
  %vm8932 = vcmask 2048
  %v8933 = vsel %vm8932, %v8930, -inf
  %v8934 = vrot.slane %v8933, 4
  %v8935 = vmax.f32 %v8933, %v8934
  %v8936 = vrot.slane %v8935, 2
  %v8937 = vmax.f32 %v8935, %v8936
  %v8938 = vrot.slane %v8937, 1
  %v8939 = vmax.f32 %v8937, %v8938
  %v8940 = vsub.f32 %v8930, %v8939
  %v8941 = vmul.f32 %v8940, 1.442695
  %v8942 = vpow.pop %v8941
  %v8943 = vsel %vm8932, %v8942, 0.0
  %v8944 = vrot.slane %v8943, 4
  %v8945 = vadd.f32 %v8943, %v8944
  %v8946 = vrot.slane %v8945, 2
  %v8947 = vadd.f32 %v8945, %v8946
  %v8948 = vrot.slane %v8947, 1
  %v8949 = vadd.f32 %v8947, %v8948
  %v8950 = vrcp.pop %v8949
  %v8951 = vmul.f32 %v8949, %v8950
  %v8952 = vsub.f32 1.0, %v8951
  %v8953 = vmul.f32 %v8950, %v8952
  %v8954 = vadd.f32 %v8950, %v8953
  %vm8955 = vweird.f32 %v8949
  %vm8956 = vweird.f32 %v8950
  %vm8957 = vmor %vm8955, %vm8956
  %v8958 = vsel %vm8957, %v8950, %v8954
  %v8959 = vand.u32 2147483647, %v8949
  %vm8960 = vcmp.eq.f32.partialorder %v8959, 8.507059e+37
  %v8961 = vand.u32 %v8949, 2147483648
  %v8962 = vor.u32 1.1754944e-38, %v8961
  %v8963 = vsel %vm8960, %v8962, %v8958
  %v8964 = vmul.f32 %v8942, %v8963
  %8965 = vst.msk [vmem:[%s14] sm:$0x7] %vm8932, %v8964
  // Predicated region
  $region58: #{wave_lead_conv_forward.1} parent=0 // pred_check
    _
  $region59: #{wave_lead_conv_forward.1} parent=0 // pred_check_branch
    %8967 = sbr.rel (0) target = $region61
  $region60: #{wave_lead_conv_forward.1} parent=0 // pred_region
    _
  $region61: #{wave_lead_conv_forward.1} parent=0 // pred_fallthru
    _
  // Predicated region
  $region62: #{wave_lead_conv_forward.1} parent=0 // pred_check
    _
  $region63: #{wave_lead_conv_forward.1} parent=0 // pred_check_branch
    %8969 = sbr.rel (0) target = $region65
  $region64: #{wave_lead_conv_forward.1} parent=0 // pred_region
    _
  $region65: #{wave_lead_conv_forward.1} parent=0 // pred_fallthru
    _

</llo_original>
